<compile_context>
chip_gen: v5e
topology: v5e:2x2
jax: 0.10.0
libtpu: 0.0.40
codegen_flags: <defaults>
</compile_context>

<pallas_src>
import jax
import jax.numpy as jnp
from jax.experimental import pallas as pl
from jax.experimental.pallas import tpu as pltpu

# ----------------------------- small Llama config -----------------------------
VOCAB = 256
HIDDEN = 128
N_HEADS = 4
N_KV_HEADS = 2
HEAD_DIM = HIDDEN // N_HEADS          # 32
HALF = HEAD_DIM // 2                  # 16
GROUP = N_HEADS // N_KV_HEADS         # 2
Q_SIZE = N_HEADS * HEAD_DIM           # 128
KV_SIZE = N_KV_HEADS * HEAD_DIM       # 64
QKV_OUT = Q_SIZE + 2 * KV_SIZE        # 256
INTER = 256
N_LAYERS = 2
EPS = 1e-6
ROPE_THETA = 10000.0
SCALE = HEAD_DIM ** -0.5
DTYPE = jnp.float32
NEG_INF = -1e30
BIG_W_COLS = QKV_OUT + HIDDEN + 2 * INTER   # 896 = qkv | o | gate_up columns


# ------------------------------- kernel helpers --------------------------------
def _rms(x, w):
    # x: [T, H] f32, w broadcastable to [T, H] f32
    var = jnp.mean(x * x, axis=-1, keepdims=True)
    return x * jax.lax.rsqrt(var + EPS) * w


def _rope(x, cos, sinp, sinm):
    # NeoX RoPE on a lane-dense [T, n_heads*HEAD_DIM] slab.
    # out = x*cos + roll(x,+HALF)*sinp + roll(x,-HALF)*sinm ; sinp/sinm are
    # zero on the lanes where the roll wraps into a neighbouring head, so only
    # within-head terms survive.  pltpu.roll = XLU lane rotation (idle slot).
    n = x.shape[-1]
    return (x * cos
            + pltpu.roll(x, HALF, axis=1) * sinp
            + pltpu.roll(x, n - HALF, axis=1) * sinm)


# ------------------------- fused whole-model kernel -----------------------------
def _llama_stack_kernel(
    h0_ref, rope_ref, big_w_ref, down_w_ref, ln_ref, final_ln_ref,
    out_ref,
    s_vmem, mask_vmem,
):
    layer = pl.program_id(0)
    n_layers = pl.num_programs(0)
    t = s_vmem.shape[0]

    # --- layer 0: load embedding into the single VMEM-resident activation and
    #     build the (layer-invariant) additive causal mask once.
    @pl.when(layer == 0)
    def _init():
        s_vmem[...] = h0_ref[...].astype(jnp.float32)
        row = jax.lax.broadcasted_iota(jnp.int32, (GROUP, t, t), 1)
        col = jax.lax.broadcasted_iota(jnp.int32, (GROUP, t, t), 2)
        mask_vmem[...] = jnp.where(col <= row, 0.0, NEG_INF).reshape(GROUP * t, t)

    # ---- input RMSNorm on the residual-sum carried from the previous layer ----
    s = s_vmem[...]                                             # [T, HIDDEN] f32
    lnw = ln_ref[0]                                             # [2, HIDDEN]
    xb = _rms(s, lnw[0:1, :]).astype(jnp.bfloat16)              # MXU input

    # ---- QKV projection (bf16 MXU inputs, fp32 accumulate) ----
    qkv = jnp.dot(xb, big_w_ref[0, :, 0:QKV_OUT],
                  preferred_element_type=jnp.float32)           # [T, 256]
    q = qkv[:, 0:Q_SIZE]                                        # [T, 128]
    k = qkv[:, Q_SIZE:Q_SIZE + KV_SIZE]                         # [T, 64]
    v = qkv[:, Q_SIZE + KV_SIZE:QKV_OUT]                        # [T, 64]

    # ---- NeoX RoPE on lane-dense slabs; SCALE folded into q (not the scores) ----
    cos = rope_ref[0]                                           # [T, 128]
    sinp = rope_ref[1]
    sinm = rope_ref[2]
    q = _rope(q, cos, sinp, sinm) * SCALE
    k = _rope(k, cos[:, :KV_SIZE], sinp[:, :KV_SIZE], sinm[:, :KV_SIZE])

    # ---- causal GQA attention (K/V contracted once per KV head) ----
    # TODO(synk): RadixAttention's paged/radix KV-cache reuse is not modeled;
    # this is standard causal prefill over the full sequence.
    d = HEAD_DIM
    qb = q.astype(jnp.bfloat16)
    kb = k.astype(jnp.bfloat16)
    vb = v.astype(jnp.bfloat16)
    # q: [T,128] -> [H,T,D] -> [KV, GROUP*T, D]   (head h uses kv head h//GROUP)
    qh = qb.reshape(t, N_HEADS, d).transpose(1, 0, 2).reshape(
        N_KV_HEADS, GROUP * t, d)
    kh = kb.reshape(t, N_KV_HEADS, d).transpose(1, 0, 2)        # [KV, T, D]
    vh = vb.reshape(t, N_KV_HEADS, d).transpose(1, 0, 2)        # [KV, T, D]

    scores = jnp.einsum('kmd,ksd->kms', qh, kh,
                        preferred_element_type=jnp.float32)     # [KV, G*T, T]
    scores = scores + mask_vmem[...]                            # additive causal mask
    m = jnp.max(scores, axis=-1, keepdims=True)
    p = jnp.exp(scores - m)
    p = p * pl.reciprocal(jnp.sum(p, axis=-1, keepdims=True), approx=True)
    ctx = jnp.einsum('kms,ksd->kmd', p.astype(jnp.bfloat16), vh,
                     preferred_element_type=jnp.float32)        # [KV, G*T, D]
    attn = (ctx.astype(jnp.bfloat16)
            .reshape(N_HEADS, t, d).transpose(1, 0, 2).reshape(t, Q_SIZE))

    # ---- output projection ----
    h_attn = jnp.dot(attn, big_w_ref[0, :, QKV_OUT:QKV_OUT + HIDDEN],
                     preferred_element_type=jnp.float32)        # [T, HIDDEN]

    # ---- fused residual-add + post-attention RMSNorm ----
    s2 = h_attn + s
    x2 = _rms(s2, lnw[1:2, :]).astype(jnp.bfloat16)

    # ---- MLP: gate_up matmul -> SiLU*up -> down matmul ----
    gate_up = jnp.dot(x2, big_w_ref[0, :, QKV_OUT + HIDDEN:BIG_W_COLS],
                      preferred_element_type=jnp.float32)       # [T, 2*INTER]
    gate = gate_up[:, :INTER]
    up = gate_up[:, INTER:]
    inter = (gate * jax.lax.logistic(gate) * up).astype(jnp.bfloat16)
    h_mlp = jnp.dot(inter, down_w_ref[0],
                    preferred_element_type=jnp.float32)         # [T, HIDDEN]

    # single resident activation: store the residual-sum for the next layer
    s_next = h_mlp + s2
    s_vmem[...] = s_next

    # ---- final RMSNorm (fused residual add) after the last layer ----
    @pl.when(layer == n_layers - 1)
    def _finalize():
        out_ref[...] = _rms(s_next, final_ln_ref[...]).astype(out_ref.dtype)


# --------------------------------- wrappers ------------------------------------
def rope_tables(positions, dtype=jnp.float32):
    """Packed [3, T, Q_SIZE] cos / sin(+roll) / sin(-roll) tables, head-tiled."""
    inv_freq = 1.0 / (ROPE_THETA ** (jnp.arange(HALF, dtype=jnp.float32) / HALF))
    freqs = positions.astype(jnp.float32)[:, None] * inv_freq[None, :]   # [T, HALF]
    cosf = jnp.cos(freqs)
    sinf = jnp.sin(freqs)
    zero = jnp.zeros_like(sinf)
    cos_blk = jnp.concatenate([cosf, cosf], axis=-1)     # [T, HEAD_DIM]
    sinp_blk = jnp.concatenate([zero, sinf], axis=-1)    # coeff of roll(x, +HALF)
    sinm_blk = jnp.concatenate([-sinf, zero], axis=-1)   # coeff of roll(x, -HALF)
    tile = lambda a: jnp.tile(a, (1, N_HEADS)).astype(dtype)             # [T, Q_SIZE]
    return jnp.stack([tile(cos_blk), tile(sinp_blk), tile(sinm_blk)], axis=0)


def llama_forward(params, input_ids, positions):
    # embedding lookup (data-dependent gather) kept as JAX glue
    h0 = jnp.take(params["embed"], input_ids, axis=0)            # [T, HIDDEN]
    T = h0.shape[0]
    rope_tab = rope_tables(positions)                            # [3, T, 128]
    # pack per-layer weights: fewer per-grid-step DMA descriptors
    big_w = jnp.concatenate(
        [params["qkv_w"], params["o_w"], params["gate_up_w"]], axis=-1)  # [L,128,896]
    ln_w = jnp.concatenate([params["input_ln"], params["post_ln"]], axis=1)  # [L,2,H]

    rep = lambda shape: pl.BlockSpec(shape, lambda l: (0,) * len(shape))
    per_layer = lambda shape: pl.BlockSpec(shape, lambda l: (l, 0, 0))

    out = pl.pallas_call(
        _llama_stack_kernel,
        grid=(N_LAYERS,),
        in_specs=[
            rep((T, HIDDEN)),                         # h0 (embedding)
            rep((3, T, Q_SIZE)),                      # packed rope tables
            per_layer((1, HIDDEN, BIG_W_COLS)),       # qkv | o | gate_up weights
            per_layer((1, INTER, HIDDEN)),            # down_w
            per_layer((1, 2, HIDDEN)),                # input_ln | post_ln
            rep((1, HIDDEN)),                         # final_ln
        ],
        out_specs=pl.BlockSpec((T, HIDDEN), lambda l: (0, 0)),
        out_shape=jax.ShapeDtypeStruct((T, HIDDEN), DTYPE),
        scratch_shapes=[
            pltpu.VMEM((T, HIDDEN), jnp.float32),     # resident residual-sum s
            pltpu.VMEM((GROUP * T, T), jnp.float32),  # additive causal mask
        ],
        compiler_params=pltpu.CompilerParams(
            dimension_semantics=("arbitrary",)),      # layers are sequential
    )(h0, rope_tab, big_w, params["down_w"], ln_w, params["final_ln"])
    return out


# --------------------------- pure-JAX fp32 reference ----------------------------
def llama_reference(params, input_ids, positions):
    h = jnp.take(params["embed"], input_ids, axis=0).astype(jnp.float32)
    T = h.shape[0]
    inv_freq = 1.0 / (ROPE_THETA ** (jnp.arange(HALF, dtype=jnp.float32) / HALF))
    freqs = positions.astype(jnp.float32)[:, None] * inv_freq[None, :]
    cos = jnp.concatenate([jnp.cos(freqs)] * 2, axis=-1)   # [T, HEAD_DIM]
    sin = jnp.concatenate([jnp.sin(freqs)] * 2, axis=-1)

    def rms(x, w):
        var = jnp.mean(x * x, axis=-1, keepdims=True)
        return x * jax.lax.rsqrt(var + EPS) * w

    def rope(x):  # [T, n, D]
        x1, x2 = x[..., :HALF], x[..., HALF:]
        rot = jnp.concatenate([-x2, x1], axis=-1)
        return x * cos[:, None, :] + rot * sin[:, None, :]

    residual = None
    for l in range(N_LAYERS):
        w_in = params["input_ln"][l, 0].astype(jnp.float32)
        if residual is None:
            residual = h
            x = rms(h, w_in)
        else:
            s = h + residual
            residual = s
            x = rms(s, w_in)
        qkv = x @ params["qkv_w"][l].astype(jnp.float32)
        q = qkv[:, :Q_SIZE].reshape(T, N_HEADS, HEAD_DIM)
        k = qkv[:, Q_SIZE:Q_SIZE + KV_SIZE].reshape(T, N_KV_HEADS, HEAD_DIM)
        v = qkv[:, Q_SIZE + KV_SIZE:].reshape(T, N_KV_HEADS, HEAD_DIM)
        q, k = rope(q), rope(k)
        kr = jnp.repeat(k, GROUP, axis=1)
        vr = jnp.repeat(v, GROUP, axis=1)
        scores = jnp.einsum('tnd,snd->nts', q, kr) * SCALE
        mask = jnp.tril(jnp.ones((T, T), bool))
        scores = jnp.where(mask[None], scores, NEG_INF)
        p = jax.nn.softmax(scores, axis=-1)
        ctx = jnp.einsum('nts,snd->tnd', p, vr).reshape(T, Q_SIZE)
        h = ctx @ params["o_w"][l].astype(jnp.float32)
        s = h + residual
        residual = s
        x = rms(s, params["post_ln"][l, 0].astype(jnp.float32))
        gu = x @ params["gate_up_w"][l].astype(jnp.float32)
        g, u = gu[:, :INTER], gu[:, INTER:]
        h = (g * jax.nn.sigmoid(g) * u) @ params["down_w"][l].astype(jnp.float32)
    return rms(h + residual, params["final_ln"][0].astype(jnp.float32))


# ------------------------------ param init -------------------------------------
def init_params(key):
    def w(k, shape, scale=0.02):
        # Matmul weights stored in bf16 (MXU-friendly); norms/embedding fp32.
        return (scale * jax.random.normal(k, shape, dtype=jnp.float32)
                ).astype(jnp.bfloat16)

    keys = jax.random.split(key, 5)
    return {
        "embed": (0.02 * jax.random.normal(keys[0], (VOCAB, HIDDEN),
                                           dtype=jnp.float32)).astype(DTYPE),
        "qkv_w": w(keys[1], (N_LAYERS, HIDDEN, QKV_OUT)),
        "o_w": w(keys[2], (N_LAYERS, Q_SIZE, HIDDEN)),
        "gate_up_w": w(keys[3], (N_LAYERS, HIDDEN, 2 * INTER)),
        "down_w": w(keys[4], (N_LAYERS, INTER, HIDDEN)),
        "input_ln": jnp.ones((N_LAYERS, 1, HIDDEN), jnp.float32),
        "post_ln": jnp.ones((N_LAYERS, 1, HIDDEN), jnp.float32),
        "final_ln": jnp.ones((1, HIDDEN), jnp.float32),
    }


# ---------------------------------- main ----------------------------------------
if __name__ == "__main__":
    root = jax.random.PRNGKey(0)
    pkey, ikey = jax.random.split(root)
    params = init_params(pkey)

    # T = 128 tokens: fills the matmul M dim and keeps the score/softmax
    # sequence axis lane-dense (per v6e/v7x feedback) while staying small.
    T = 128
    input_ids = jax.random.randint(ikey, (T,), 0, VOCAB, dtype=jnp.int32)
    positions = jnp.arange(T, dtype=jnp.int32)

    out = jax.jit(llama_forward)(params, input_ids, positions)
    out = jax.block_until_ready(out)

    ref = llama_reference(params, input_ids, positions)

    assert out.shape == (T, HIDDEN) and out.dtype == DTYPE
    assert bool(jnp.all(jnp.isfinite(out)))
    # kernel uses bf16 MXU inputs + approx reciprocal -> loose tolerance vs fp32 ref
    assert bool(jnp.allclose(out, ref, atol=5e-2, rtol=5e-2))
    print("KERNEL_OK")
</pallas_src>

<mosaic_0001>
module attributes {stable_mosaic.version = 11 : i64} {
  func.func @_llama_stack_kernel(%arg0: i32, %arg1: memref<128x128xf32, #tpu.memory_space<vmem>>, %arg2: memref<3x128x128xf32, #tpu.memory_space<vmem>>, %arg3: memref<1x128x896xbf16, #tpu.memory_space<vmem>>, %arg4: memref<1x256x128xbf16, #tpu.memory_space<vmem>>, %arg5: memref<1x2x128xf32, #tpu.memory_space<vmem>>, %arg6: memref<1x128xf32, #tpu.memory_space<vmem>>, %arg7: memref<128x128xf32, #tpu.memory_space<vmem>>, %arg8: memref<128x128xf32, #tpu.memory_space<vmem>>, %arg9: memref<256x128xf32, #tpu.memory_space<vmem>>) attributes {dimension_semantics = [#tpu.dimension_semantics<arbitrary>], iteration_bounds = array<i64: 2>, scalar_prefetch = 0 : i64, scratch_operands = 2 : i64, tpu.core_type = #tpu.core_type<tc>, window_params = [{pipeline_mode = #tpu.pipeline_mode<synchronous>, transform_indices = @transform_0, window_bounds = array<i64: 128, 128>}, {pipeline_mode = #tpu.pipeline_mode<synchronous>, transform_indices = @transform_1, window_bounds = array<i64: 3, 128, 128>}, {transform_indices = @transform_2, window_bounds = array<i64: 1, 128, 896>}, {transform_indices = @transform_3, window_bounds = array<i64: 1, 256, 128>}, {transform_indices = @transform_4, window_bounds = array<i64: 1, 2, 128>}, {pipeline_mode = #tpu.pipeline_mode<synchronous>, transform_indices = @transform_5, window_bounds = array<i64: 1, 128>}, {pipeline_mode = #tpu.pipeline_mode<synchronous>, transform_indices = @transform_6, window_bounds = array<i64: 128, 128>}]} {
    %c0_i32 = arith.constant 0 : i32
    %0 = arith.cmpi eq, %arg0, %c0_i32 : i32
    %1 = arith.extui %0 : i1 to i32
    %c0_i32_0 = arith.constant 0 : i32
    %2 = arith.cmpi ne, %1, %c0_i32_0 : i32
    scf.if %2 {
      %c0_43 = arith.constant 0 : index
      %c0_44 = arith.constant 0 : index
      %121 = vector.load %arg1[%c0_43, %c0_44] : memref<128x128xf32, #tpu.memory_space<vmem>>, vector<128x128xf32>
      %c0_45 = arith.constant 0 : index
      %c0_46 = arith.constant 0 : index
      %122 = vector.load %arg8[%c0_45, %c0_46] : memref<128x128xf32, #tpu.memory_space<vmem>>, vector<128x128xf32>
      tpu.vector_store %arg8[%c0_45, %c0_46], %121 {strides = array<i32>} : memref<128x128xf32, #tpu.memory_space<vmem>>, vector<128x128xf32>,
      %123 = tpu.iota {dimensions = array<i32: 1>} : vector<2x128x128xi32>
      %124 = tpu.iota {dimensions = array<i32: 2>} : vector<2x128x128xi32>
      %125 = arith.cmpi sle, %124, %123 : vector<2x128x128xi32>
      %cst_47 = arith.constant 0.000000e+00 : f32
      %cst_48 = arith.constant -1.000000e+30 : f32
      %126 = vector.broadcast %cst_47 : f32 to vector<2x128x128xf32>
      %127 = vector.broadcast %cst_48 : f32 to vector<2x128x128xf32>
      %128 = arith.select %125, %126, %127 : vector<2x128x128xi1>, vector<2x128x128xf32>
      %129 = vector.shape_cast %128 : vector<2x128x128xf32> to vector<256x128xf32>
      %c0_49 = arith.constant 0 : index
      %c0_50 = arith.constant 0 : index
      %130 = vector.load %arg9[%c0_49, %c0_50] : memref<256x128xf32, #tpu.memory_space<vmem>>, vector<256x128xf32>
      tpu.vector_store %arg9[%c0_49, %c0_50], %129 {strides = array<i32>} : memref<256x128xf32, #tpu.memory_space<vmem>>, vector<256x128xf32>,
    } else {
    }
    %c0 = arith.constant 0 : index
    %c0_1 = arith.constant 0 : index
    %3 = vector.load %arg8[%c0, %c0_1] : memref<128x128xf32, #tpu.memory_space<vmem>>, vector<128x128xf32>
    %c0_2 = arith.constant 0 : index
    %c0_3 = arith.constant 0 : index
    %c0_4 = arith.constant 0 : index
    %4 = vector.load %arg5[%c0_2, %c0_3, %c0_4] : memref<1x2x128xf32, #tpu.memory_space<vmem>>, vector<1x2x128xf32>
    %5 = vector.shape_cast %4 : vector<1x2x128xf32> to vector<2x128xf32>
    %6 = vector.extract_strided_slice %5 {offsets = [0, 0], sizes = [1, 128], strides = [1, 1]} : vector<2x128xf32> to vector<1x128xf32>
    %7 = arith.mulf %3, %3 : vector<128x128xf32>
    %cst = arith.constant dense<0.000000e+00> : vector<128xf32>
    %8 = vector.multi_reduction <add>, %7, %cst [1] : vector<128x128xf32> to vector<128xf32>
    %9 = vector.shape_cast %8 : vector<128xf32> to vector<128x1xf32>
    %cst_5 = arith.constant 1.280000e+02 : f32
    %10 = vector.broadcast %cst_5 : f32 to vector<128x1xf32>
    %11 = arith.divf %9, %10 : vector<128x1xf32>
    %cst_6 = arith.constant 9.99999997E-7 : f32
    %12 = vector.broadcast %cst_6 : f32 to vector<128x1xf32>
    %13 = arith.addf %11, %12 : vector<128x1xf32>
    %14 = math.rsqrt %13 : vector<128x1xf32>
    %15 = vector.broadcast %14 : vector<128x1xf32> to vector<128x128xf32>
    %16 = arith.mulf %3, %15 : vector<128x128xf32>
    %17 = vector.broadcast %6 : vector<1x128xf32> to vector<128x128xf32>
    %18 = arith.mulf %16, %17 : vector<128x128xf32>
    %19 = arith.truncf %18 : vector<128x128xf32> to vector<128x128xbf16>
    %c0_7 = arith.constant 0 : index
    %c0_8 = arith.constant 0 : index
    %c0_9 = arith.constant 0 : index
    %20 = vector.load %arg3[%c0_7, %c0_8, %c0_9] : memref<1x128x896xbf16, #tpu.memory_space<vmem>>, vector<1x128x256xbf16>
    %21 = vector.shape_cast %20 : vector<1x128x256xbf16> to vector<128x256xbf16>
    %cst_10 = arith.constant dense<0.000000e+00> : vector<128x256xf32>
    %22 = tpu.matmul %19, %21, %cst_10 {dimension_numbers = #tpu.dot_dimension_numbers<[1], [0], [0], [1], [0, 0, 1, 1], [], []>} : vector<128x128xbf16>, vector<128x256xbf16>, vector<128x256xf32> -> vector<128x256xf32>
    %23 = vector.extract_strided_slice %22 {offsets = [0, 0], sizes = [128, 128], strides = [1, 1]} : vector<128x256xf32> to vector<128x128xf32>
    %24 = vector.extract_strided_slice %22 {offsets = [0, 128], sizes = [128, 64], strides = [1, 1]} : vector<128x256xf32> to vector<128x64xf32>
    %25 = vector.extract_strided_slice %22 {offsets = [0, 192], sizes = [128, 64], strides = [1, 1]} : vector<128x256xf32> to vector<128x64xf32>
    %c0_11 = arith.constant 0 : index
    %c0_12 = arith.constant 0 : index
    %c0_13 = arith.constant 0 : index
    %26 = vector.load %arg2[%c0_11, %c0_12, %c0_13] : memref<3x128x128xf32, #tpu.memory_space<vmem>>, vector<1x128x128xf32>
    %27 = vector.shape_cast %26 : vector<1x128x128xf32> to vector<128x128xf32>
    %c1 = arith.constant 1 : index
    %c0_14 = arith.constant 0 : index
    %c0_15 = arith.constant 0 : index
    %28 = vector.load %arg2[%c1, %c0_14, %c0_15] : memref<3x128x128xf32, #tpu.memory_space<vmem>>, vector<1x128x128xf32>
    %29 = vector.shape_cast %28 : vector<1x128x128xf32> to vector<128x128xf32>
    %c2 = arith.constant 2 : index
    %c0_16 = arith.constant 0 : index
    %c0_17 = arith.constant 0 : index
    %30 = vector.load %arg2[%c2, %c0_16, %c0_17] : memref<3x128x128xf32, #tpu.memory_space<vmem>>, vector<1x128x128xf32>
    %31 = vector.shape_cast %30 : vector<1x128x128xf32> to vector<128x128xf32>
    %32 = arith.mulf %23, %27 : vector<128x128xf32>
    %c16_i32 = arith.constant 16 : i32
    %33 = tpu.dynamic_rotate %23 by %c16_i32 dim 1 : vector<128x128xf32>, i32 -> vector<128x128xf32>
    %34 = arith.mulf %33, %29 : vector<128x128xf32>
    %35 = arith.addf %32, %34 : vector<128x128xf32>
    %c112_i32 = arith.constant 112 : i32
    %36 = tpu.dynamic_rotate %23 by %c112_i32 dim 1 : vector<128x128xf32>, i32 -> vector<128x128xf32>
    %37 = arith.mulf %36, %31 : vector<128x128xf32>
    %38 = arith.addf %35, %37 : vector<128x128xf32>
    %cst_18 = arith.constant 0.176776692 : f32
    %39 = vector.broadcast %cst_18 : f32 to vector<128x128xf32>
    %40 = arith.mulf %38, %39 : vector<128x128xf32>
    %41 = vector.extract_strided_slice %27 {offsets = [0, 0], sizes = [128, 64], strides = [1, 1]} : vector<128x128xf32> to vector<128x64xf32>
    %42 = vector.extract_strided_slice %29 {offsets = [0, 0], sizes = [128, 64], strides = [1, 1]} : vector<128x128xf32> to vector<128x64xf32>
    %43 = vector.extract_strided_slice %31 {offsets = [0, 0], sizes = [128, 64], strides = [1, 1]} : vector<128x128xf32> to vector<128x64xf32>
    %44 = arith.mulf %24, %41 : vector<128x64xf32>
    %c16_i32_19 = arith.constant 16 : i32
    %45 = tpu.dynamic_rotate %24 by %c16_i32_19 dim 1 : vector<128x64xf32>, i32 -> vector<128x64xf32>
    %46 = arith.mulf %45, %42 : vector<128x64xf32>
    %47 = arith.addf %44, %46 : vector<128x64xf32>
    %c48_i32 = arith.constant 48 : i32
    %48 = tpu.dynamic_rotate %24 by %c48_i32 dim 1 : vector<128x64xf32>, i32 -> vector<128x64xf32>
    %49 = arith.mulf %48, %43 : vector<128x64xf32>
    %50 = arith.addf %47, %49 : vector<128x64xf32>
    %51 = arith.truncf %40 : vector<128x128xf32> to vector<128x128xbf16>
    %52 = arith.truncf %50 : vector<128x64xf32> to vector<128x64xbf16>
    %53 = arith.truncf %25 : vector<128x64xf32> to vector<128x64xbf16>
    %54 = vector.shape_cast %51 : vector<128x128xbf16> to vector<128x4x32xbf16>
    %55 = tpu.transpose %54, [1, 0, 2] : vector<128x4x32xbf16> -> vector<4x128x32xbf16>
    %56 = vector.shape_cast %55 : vector<4x128x32xbf16> to vector<2x256x32xbf16>
    %57 = vector.shape_cast %52 : vector<128x64xbf16> to vector<128x2x32xbf16>
    %58 = tpu.transpose %57, [1, 0, 2] : vector<128x2x32xbf16> -> vector<2x128x32xbf16>
    %59 = vector.shape_cast %53 : vector<128x64xbf16> to vector<128x2x32xbf16>
    %60 = tpu.transpose %59, [1, 0, 2] : vector<128x2x32xbf16> -> vector<2x128x32xbf16>
    "tpu.trace_start"() <{level = 10 : i32, message = "kmd,ksd->kms"}> : () -> ()
    %cst_20 = arith.constant dense<0.000000e+00> : vector<2x256x128xf32>
    %61 = tpu.matmul %56, %58, %cst_20 {dimension_numbers = #tpu.dot_dimension_numbers<[2], [2], [1], [1], [0, 0, 0, 1, 1, 1], [0], [0]>} : vector<2x256x32xbf16>, vector<2x128x32xbf16>, vector<2x256x128xf32> -> vector<2x256x128xf32>
    "tpu.trace_stop"() : () -> ()
    %c0_21 = arith.constant 0 : index
    %c0_22 = arith.constant 0 : index
    %62 = vector.load %arg9[%c0_21, %c0_22] : memref<256x128xf32, #tpu.memory_space<vmem>>, vector<256x128xf32>
    %63 = vector.shape_cast %62 : vector<256x128xf32> to vector<1x256x128xf32>
    %64 = vector.broadcast %63 : vector<1x256x128xf32> to vector<2x256x128xf32>
    %65 = arith.addf %61, %64 : vector<2x256x128xf32>
    %cst_23 = arith.constant dense<0xFF800000> : vector<2x256xf32>
    %66 = vector.multi_reduction <maximumf>, %65, %cst_23 [2] : vector<2x256x128xf32> to vector<2x256xf32>
    %67 = vector.shape_cast %66 : vector<2x256xf32> to vector<2x256x1xf32>
    %68 = vector.broadcast %67 : vector<2x256x1xf32> to vector<2x256x128xf32>
    %69 = arith.subf %65, %68 : vector<2x256x128xf32>
    %70 = math.exp %69 : vector<2x256x128xf32>
    %cst_24 = arith.constant dense<0.000000e+00> : vector<2x256xf32>
    %71 = vector.multi_reduction <add>, %70, %cst_24 [2] : vector<2x256x128xf32> to vector<2x256xf32>
    %72 = vector.shape_cast %71 : vector<2x256xf32> to vector<2x256x1xf32>
    %73 = tpu.reciprocal %72 {approx = true} : vector<2x256x1xf32> -> vector<2x256x1xf32>
    %74 = vector.broadcast %73 : vector<2x256x1xf32> to vector<2x256x128xf32>
    %75 = arith.mulf %70, %74 : vector<2x256x128xf32>
    %76 = arith.truncf %75 : vector<2x256x128xf32> to vector<2x256x128xbf16>
    "tpu.trace_start"() <{level = 10 : i32, message = "kms,ksd->kmd"}> : () -> ()
    %cst_25 = arith.constant dense<0.000000e+00> : vector<2x256x32xf32>
    %77 = tpu.matmul %76, %60, %cst_25 {dimension_numbers = #tpu.dot_dimension_numbers<[2], [1], [1], [2], [0, 0, 0, 1, 1, 2], [0], [0]>} : vector<2x256x128xbf16>, vector<2x128x32xbf16>, vector<2x256x32xf32> -> vector<2x256x32xf32>
    "tpu.trace_stop"() : () -> ()
    %78 = arith.truncf %77 : vector<2x256x32xf32> to vector<2x256x32xbf16>
    %79 = vector.shape_cast %78 : vector<2x256x32xbf16> to vector<4x128x32xbf16>
    %80 = tpu.transpose %79, [1, 0, 2] : vector<4x128x32xbf16> -> vector<128x4x32xbf16>
    %81 = vector.shape_cast %80 : vector<128x4x32xbf16> to vector<128x128xbf16>
    %c0_26 = arith.constant 0 : index
    %c0_27 = arith.constant 0 : index
    %c256 = arith.constant 256 : index
    %82 = vector.load %arg3[%c0_26, %c0_27, %c256] : memref<1x128x896xbf16, #tpu.memory_space<vmem>>, vector<1x128x128xbf16>
    %83 = vector.shape_cast %82 : vector<1x128x128xbf16> to vector<128x128xbf16>
    %cst_28 = arith.constant dense<0.000000e+00> : vector<128x128xf32>
    %84 = tpu.matmul %81, %83, %cst_28 {dimension_numbers = #tpu.dot_dimension_numbers<[1], [0], [0], [1], [0, 0, 1, 1], [], []>} : vector<128x128xbf16>, vector<128x128xbf16>, vector<128x128xf32> -> vector<128x128xf32>
    %85 = arith.addf %84, %3 : vector<128x128xf32>
    %86 = vector.extract_strided_slice %5 {offsets = [1, 0], sizes = [1, 128], strides = [1, 1]} : vector<2x128xf32> to vector<1x128xf32>
    %87 = arith.mulf %85, %85 : vector<128x128xf32>
    %cst_29 = arith.constant dense<0.000000e+00> : vector<128xf32>
    %88 = vector.multi_reduction <add>, %87, %cst_29 [1] : vector<128x128xf32> to vector<128xf32>
    %89 = vector.shape_cast %88 : vector<128xf32> to vector<128x1xf32>
    %cst_30 = arith.constant 1.280000e+02 : f32
    %90 = vector.broadcast %cst_30 : f32 to vector<128x1xf32>
    %91 = arith.divf %89, %90 : vector<128x1xf32>
    %cst_31 = arith.constant 9.99999997E-7 : f32
    %92 = vector.broadcast %cst_31 : f32 to vector<128x1xf32>
    %93 = arith.addf %91, %92 : vector<128x1xf32>
    %94 = math.rsqrt %93 : vector<128x1xf32>
    %95 = vector.broadcast %94 : vector<128x1xf32> to vector<128x128xf32>
    %96 = arith.mulf %85, %95 : vector<128x128xf32>
    %97 = vector.broadcast %86 : vector<1x128xf32> to vector<128x128xf32>
    %98 = arith.mulf %96, %97 : vector<128x128xf32>
    %99 = arith.truncf %98 : vector<128x128xf32> to vector<128x128xbf16>
    %c0_32 = arith.constant 0 : index
    %c0_33 = arith.constant 0 : index
    %c384 = arith.constant 384 : index
    %100 = vector.load %arg3[%c0_32, %c0_33, %c384] : memref<1x128x896xbf16, #tpu.memory_space<vmem>>, vector<1x128x512xbf16>
    %101 = vector.shape_cast %100 : vector<1x128x512xbf16> to vector<128x512xbf16>
    %cst_34 = arith.constant dense<0.000000e+00> : vector<128x512xf32>
    %102 = tpu.matmul %99, %101, %cst_34 {dimension_numbers = #tpu.dot_dimension_numbers<[1], [0], [0], [1], [0, 0, 1, 1], [], []>} : vector<128x128xbf16>, vector<128x512xbf16>, vector<128x512xf32> -> vector<128x512xf32>
    %103 = vector.extract_strided_slice %102 {offsets = [0, 0], sizes = [128, 256], strides = [1, 1]} : vector<128x512xf32> to vector<128x256xf32>
    %104 = vector.extract_strided_slice %102 {offsets = [0, 256], sizes = [128, 256], strides = [1, 1]} : vector<128x512xf32> to vector<128x256xf32>
    %105 = arith.negf %103 : vector<128x256xf32>
    %106 = math.exp %105 : vector<128x256xf32>
    %cst_35 = arith.constant 1.000000e+00 : f32
    %107 = vector.broadcast %cst_35 : f32 to vector<128x256xf32>
    %108 = arith.addf %107, %106 : vector<128x256xf32>
    %109 = arith.divf %107, %108 : vector<128x256xf32>
    %110 = arith.mulf %103, %109 : vector<128x256xf32>
    %111 = arith.mulf %110, %104 : vector<128x256xf32>
    %112 = arith.truncf %111 : vector<128x256xf32> to vector<128x256xbf16>
    %c0_36 = arith.constant 0 : index
    %c0_37 = arith.constant 0 : index
    %c0_38 = arith.constant 0 : index
    %113 = vector.load %arg4[%c0_36, %c0_37, %c0_38] : memref<1x256x128xbf16, #tpu.memory_space<vmem>>, vector<1x256x128xbf16>
    %114 = vector.shape_cast %113 : vector<1x256x128xbf16> to vector<256x128xbf16>
    %cst_39 = arith.constant dense<0.000000e+00> : vector<128x128xf32>
    %115 = tpu.matmul %112, %114, %cst_39 {dimension_numbers = #tpu.dot_dimension_numbers<[1], [0], [0], [1], [0, 0, 1, 1], [], []>} : vector<128x256xbf16>, vector<256x128xbf16>, vector<128x128xf32> -> vector<128x128xf32>
    %116 = arith.addf %115, %85 : vector<128x128xf32>
    %c0_40 = arith.constant 0 : index
    %c0_41 = arith.constant 0 : index
    %117 = vector.load %arg8[%c0_40, %c0_41] : memref<128x128xf32, #tpu.memory_space<vmem>>, vector<128x128xf32>
    tpu.vector_store %arg8[%c0_40, %c0_41], %116 {strides = array<i32>} : memref<128x128xf32, #tpu.memory_space<vmem>>, vector<128x128xf32>,
    %c1_i32 = arith.constant 1 : i32
    %118 = arith.cmpi eq, %arg0, %c1_i32 : i32
    %119 = arith.extui %118 : i1 to i32
    %c0_i32_42 = arith.constant 0 : i32
    %120 = arith.cmpi ne, %119, %c0_i32_42 : i32
    scf.if %120 {
      %c0_43 = arith.constant 0 : index
      %c0_44 = arith.constant 0 : index
      %121 = vector.load %arg6[%c0_43, %c0_44] : memref<1x128xf32, #tpu.memory_space<vmem>>, vector<1x128xf32>
      %122 = arith.mulf %116, %116 : vector<128x128xf32>
      %cst_45 = arith.constant dense<0.000000e+00> : vector<128xf32>
      %123 = vector.multi_reduction <add>, %122, %cst_45 [1] : vector<128x128xf32> to vector<128xf32>
      %124 = vector.shape_cast %123 : vector<128xf32> to vector<128x1xf32>
      %cst_46 = arith.constant 1.280000e+02 : f32
      %125 = vector.broadcast %cst_46 : f32 to vector<128x1xf32>
      %126 = arith.divf %124, %125 : vector<128x1xf32>
      %cst_47 = arith.constant 9.99999997E-7 : f32
      %127 = vector.broadcast %cst_47 : f32 to vector<128x1xf32>
      %128 = arith.addf %126, %127 : vector<128x1xf32>
      %129 = math.rsqrt %128 : vector<128x1xf32>
      %130 = vector.broadcast %129 : vector<128x1xf32> to vector<128x128xf32>
      %131 = arith.mulf %116, %130 : vector<128x128xf32>
      %132 = vector.broadcast %121 : vector<1x128xf32> to vector<128x128xf32>
      %133 = arith.mulf %131, %132 : vector<128x128xf32>
      %c0_48 = arith.constant 0 : index
      %c0_49 = arith.constant 0 : index
      %134 = vector.load %arg7[%c0_48, %c0_49] : memref<128x128xf32, #tpu.memory_space<vmem>>, vector<128x128xf32>
      tpu.vector_store %arg7[%c0_48, %c0_49], %133 {strides = array<i32>} : memref<128x128xf32, #tpu.memory_space<vmem>>, vector<128x128xf32>,
    } else {
    }
    return
  }
  func.func @transform_0(%arg0: i32) -> (i32, i32) {
    %c0_i32 = arith.constant 0 : i32
    %c0_i32_0 = arith.constant 0 : i32
    %c0_i32_1 = arith.constant 0 : i32
    return %c0_i32, %c0_i32_0 : i32, i32
  }
  func.func @transform_1(%arg0: i32) -> (i32, i32, i32) {
    %c0_i32 = arith.constant 0 : i32
    %c0_i32_0 = arith.constant 0 : i32
    %c0_i32_1 = arith.constant 0 : i32
    %c0_i32_2 = arith.constant 0 : i32
    return %c0_i32, %c0_i32_0, %c0_i32_1 : i32, i32, i32
  }
  func.func @transform_2(%arg0: i32) -> (i32, i32, i32) {
    %c0_i32 = arith.constant 0 : i32
    %c0_i32_0 = arith.constant 0 : i32
    %c0_i32_1 = arith.constant 0 : i32
    return %arg0, %c0_i32, %c0_i32_0 : i32, i32, i32
  }
  func.func @transform_3(%arg0: i32) -> (i32, i32, i32) {
    %c0_i32 = arith.constant 0 : i32
    %c0_i32_0 = arith.constant 0 : i32
    %c0_i32_1 = arith.constant 0 : i32
    return %arg0, %c0_i32, %c0_i32_0 : i32, i32, i32
  }
  func.func @transform_4(%arg0: i32) -> (i32, i32, i32) {
    %c0_i32 = arith.constant 0 : i32
    %c0_i32_0 = arith.constant 0 : i32
    %c0_i32_1 = arith.constant 0 : i32
    return %arg0, %c0_i32, %c0_i32_0 : i32, i32, i32
  }
  func.func @transform_5(%arg0: i32) -> (i32, i32) {
    %c0_i32 = arith.constant 0 : i32
    %c0_i32_0 = arith.constant 0 : i32
    %c0_i32_1 = arith.constant 0 : i32
    return %c0_i32, %c0_i32_0 : i32, i32
  }
  func.func @transform_6(%arg0: i32) -> (i32, i32) {
    %c0_i32 = arith.constant 0 : i32
    %c0_i32_0 = arith.constant 0 : i32
    %c0_i32_1 = arith.constant 0 : i32
    return %c0_i32, %c0_i32_0 : i32, i32
  }
}

</mosaic_0001>

<llo_original>
// kernel: llama_forward.1
$region0: #{llama_forward.1}
  #allocation0 [shape = 'u32[]', space=smem, size = 0x4, offset = 0x4, fixed_abs, tag = 'smem constant byte address 0x4 - core index']
  #allocation1 [shape = 'u32[72,128]{1,0:T(1,128)}', space=vmem, size = 0x9000, scoped, tag = 'internal scratch']
  #allocation2 [shape = 'f32[128,128]{1,0:T(8,128)}', space=vmem, size = 0x10000, scoped, tag = 'scratch operand']
  #allocation3 [shape = 'f32[256,128]{1,0:T(8,128)}', space=vmem, size = 0x20000, scoped, tag = 'scratch operand']
  %s0 = inlined_call_operand.vmem [shape: f32[128,128], index: 0, kind: input, shape index: {}]
  %s1 = inlined_call_operand.vmem [shape: f32[3,128,128], index: 1, kind: input, shape index: {}]
  %s2 = inlined_call_operand.vmem [shape: bf16[2,128,896], index: 2, kind: input, shape index: {}]
  %s3 = inlined_call_operand.vmem [shape: bf16[2,256,128], index: 3, kind: input, shape index: {}]
  %s4 = inlined_call_operand.vmem [shape: f32[2,2,128], index: 4, kind: input, shape index: {}]
  %s5 = inlined_call_operand.vmem [shape: f32[1,128], index: 5, kind: input, shape index: {}]
  %s6 = inlined_call_operand.hbm [shape: f32[128,128], index: 6, kind: output, shape index: {}]
  %s7 = sld [smem:[#allocation0]]
  $region65: #{llama_forward.1} parent=0
    _
  %s9 = ssub.s32 1, %s7
  %s10 = scalar_select 0, %s9, %s7
  $region1: #{llama_forward.1} parent=0
    #allocation4 [shape = 'u8[65536]{0}', space=vmem, size = 0x10000, scoped, tag = 'output window, operand 0, single buffered']
    #allocation5 [shape = 's32[2]{0}', space=sflag, size = 0x8, scoped, tag = 'scoped memory for llama_forward.1']
    %11 = vsyncpa [#allocation5], 0
    loop: start=0, step=1, limit=4
    $region2: #{llama_forward.1} parent=1 // loop_pre_header
      _
    $region3: #{llama_forward.1} parent=1 // loop_header
      %s13 = sphi 0, %s17
      %p14 = scmp.ge.s32.totalorder %s13, 4
      %s21 = sphi 0, %s21
      %s23 = sphi 0, %s21
      %s24 = sphi 0, %s23
      %s38 = sphi 0, %s24
      %s42 = sphi 0, %s42
      %s44 = sphi 0, %s42
      %s45 = sphi 0, %s44
      %s59 = sphi 0, %s45
      %s65 = sphi 0, %s67
      %s68 = sphi 0, %s65
      %s69 = sphi 0, %s68
      %s85 = sphi 0, %s69
      %s91 = sphi 0, %s93
      %s94 = sphi 0, %s91
      %s95 = sphi 0, %s94
      %s111 = sphi 0, %s95
      %s117 = sphi 0, %s119
      %s120 = sphi 0, %s117
      %s121 = sphi 0, %s120
      %s137 = sphi 0, %s121
      %s141 = sphi 0, %s141
      %s143 = sphi 0, %s141
      %s144 = sphi 0, %s143
      %s158 = sphi 0, %s144
      %s162 = sphi 0, %s162
      %s164 = sphi 0, %s162
      %s165 = sphi 0, %s164
      %s179 = sphi 0, %s165
    $region4: #{llama_forward.1} parent=1 // loop_header_branch
      %16 = sbr.rel (%p14) target = $region8
    $region5: #{llama_forward.1} parent=1 // loop_body
      %s18 = ssub.s32 %s13, 1
      %s19 = ssub.s32 %s13, 2
      %s20 = sadd.s32 %s13, 1
      %s22 = sadd.s32 %s21, 1
      %p25 = scmp.eq.s32.totalorder %s13, 1
      %p26 = scmp.ne.s32.totalorder %s21, %s23
      %p27 = scmp.eq.s32.totalorder %s13, 0
      %p28 = por %p26, %p27
      %p29 = scmp.ne.s32.totalorder %s21, %s23
      %p30 = scmp.eq.s32.totalorder %s18, 1
      %p31 = por %p29, %p30
      %p32 = scmp.ne.s32.totalorder %s23, %s24
      %p33 = scmp.eq.s32.totalorder %s18, 0
      %p34 = por %p32, %p33
      %p35 = scmp.ne.s32.totalorder %s23, %s24
      %p36 = scmp.eq.s32.totalorder %s19, 1
      %p37 = por %p35, %p36
      %p39 = scmp.ne.s32.totalorder %s24, %s38
      %p40 = scmp.eq.s32.totalorder %s19, 0
      %p41 = por %p39, %p40
      %s43 = sadd.s32 %s42, 1
      %p46 = scmp.eq.s32.totalorder %s13, 1
      %p47 = scmp.ne.s32.totalorder %s42, %s44
      %p48 = scmp.eq.s32.totalorder %s13, 0
      %p49 = por %p47, %p48
      %p50 = scmp.ne.s32.totalorder %s42, %s44
      %p51 = scmp.eq.s32.totalorder %s18, 1
      %p52 = por %p50, %p51
      %p53 = scmp.ne.s32.totalorder %s44, %s45
      %p54 = scmp.eq.s32.totalorder %s18, 0
      %p55 = por %p53, %p54
      %p56 = scmp.ne.s32.totalorder %s44, %s45
      %p57 = scmp.eq.s32.totalorder %s19, 1
      %p58 = por %p56, %p57
      %p60 = scmp.ne.s32.totalorder %s45, %s59
      %p61 = scmp.eq.s32.totalorder %s19, 0
      %p62 = por %p60, %p61
      %s63 = ssub.s32 %s13, %s20
      %p64 = scmp.eq.s32.totalorder %s63, 0
      %s66 = sadd.s32 %s65, 1
      %s67 = scalar_select %p64, %s65, %s66
      %p70 = pneg %p64
      %p71 = scmp.eq.s32.totalorder %s13, 1
      %p72 = por %p70, %p71
      %p73 = scmp.ne.s32.totalorder %s65, %s68
      %p74 = scmp.eq.s32.totalorder %s13, 0
      %p75 = por %p73, %p74
      %p76 = scmp.ne.s32.totalorder %s65, %s68
      %p77 = scmp.eq.s32.totalorder %s18, 1
      %p78 = por %p76, %p77
      %p79 = scmp.ne.s32.totalorder %s68, %s69
      %p80 = scmp.eq.s32.totalorder %s18, 0
      %p81 = por %p79, %p80
      %p82 = scmp.ne.s32.totalorder %s68, %s69
      %p83 = scmp.eq.s32.totalorder %s19, 1
      %p84 = por %p82, %p83
      %p86 = scmp.ne.s32.totalorder %s69, %s85
      %p87 = scmp.eq.s32.totalorder %s19, 0
      %p88 = por %p86, %p87
      %s89 = ssub.s32 %s13, %s20
      %p90 = scmp.eq.s32.totalorder %s89, 0
      %s92 = sadd.s32 %s91, 1
      %s93 = scalar_select %p90, %s91, %s92
      %p96 = pneg %p90
      %p97 = scmp.eq.s32.totalorder %s13, 1
      %p98 = por %p96, %p97
      %p99 = scmp.ne.s32.totalorder %s91, %s94
      %p100 = scmp.eq.s32.totalorder %s13, 0
      %p101 = por %p99, %p100
      %p102 = scmp.ne.s32.totalorder %s91, %s94
      %p103 = scmp.eq.s32.totalorder %s18, 1
      %p104 = por %p102, %p103
      %p105 = scmp.ne.s32.totalorder %s94, %s95
      %p106 = scmp.eq.s32.totalorder %s18, 0
      %p107 = por %p105, %p106
      %p108 = scmp.ne.s32.totalorder %s94, %s95
      %p109 = scmp.eq.s32.totalorder %s19, 1
      %p110 = por %p108, %p109
      %p112 = scmp.ne.s32.totalorder %s95, %s111
      %p113 = scmp.eq.s32.totalorder %s19, 0
      %p114 = por %p112, %p113
      %s115 = ssub.s32 %s13, %s20
      %p116 = scmp.eq.s32.totalorder %s115, 0
      %s118 = sadd.s32 %s117, 1
      %s119 = scalar_select %p116, %s117, %s118
      %p122 = pneg %p116
      %p123 = scmp.eq.s32.totalorder %s13, 1
      %p124 = por %p122, %p123
      %p125 = scmp.ne.s32.totalorder %s117, %s120
      %p126 = scmp.eq.s32.totalorder %s13, 0
      %p127 = por %p125, %p126
      %p128 = scmp.ne.s32.totalorder %s117, %s120
      %p129 = scmp.eq.s32.totalorder %s18, 1
      %p130 = por %p128, %p129
      %p131 = scmp.ne.s32.totalorder %s120, %s121
      %p132 = scmp.eq.s32.totalorder %s18, 0
      %p133 = por %p131, %p132
      %p134 = scmp.ne.s32.totalorder %s120, %s121
      %p135 = scmp.eq.s32.totalorder %s19, 1
      %p136 = por %p134, %p135
      %p138 = scmp.ne.s32.totalorder %s121, %s137
      %p139 = scmp.eq.s32.totalorder %s19, 0
      %p140 = por %p138, %p139
      %s142 = sadd.s32 %s141, 1
      %p145 = scmp.eq.s32.totalorder %s13, 1
      %p146 = scmp.ne.s32.totalorder %s141, %s143
      %p147 = scmp.eq.s32.totalorder %s13, 0
      %p148 = por %p146, %p147
      %p149 = scmp.ne.s32.totalorder %s141, %s143
      %p150 = scmp.eq.s32.totalorder %s18, 1
      %p151 = por %p149, %p150
      %p152 = scmp.ne.s32.totalorder %s143, %s144
      %p153 = scmp.eq.s32.totalorder %s18, 0
      %p154 = por %p152, %p153
      %p155 = scmp.ne.s32.totalorder %s143, %s144
      %p156 = scmp.eq.s32.totalorder %s19, 1
      %p157 = por %p155, %p156
      %p159 = scmp.ne.s32.totalorder %s144, %s158
      %p160 = scmp.eq.s32.totalorder %s19, 0
      %p161 = por %p159, %p160
      %s163 = sadd.s32 %s162, 1
      %p166 = scmp.eq.s32.totalorder %s13, 1
      %p167 = scmp.ne.s32.totalorder %s162, %s164
      %p168 = scmp.eq.s32.totalorder %s13, 0
      %p169 = por %p167, %p168
      %p170 = scmp.ne.s32.totalorder %s162, %s164
      %p171 = scmp.eq.s32.totalorder %s18, 1
      %p172 = por %p170, %p171
      %p173 = scmp.ne.s32.totalorder %s164, %s165
      %p174 = scmp.eq.s32.totalorder %s18, 0
      %p175 = por %p173, %p174
      %p176 = scmp.ne.s32.totalorder %s164, %s165
      %p177 = scmp.eq.s32.totalorder %s19, 1
      %p178 = por %p176, %p177
      %p180 = scmp.ne.s32.totalorder %s165, %s179
      %p181 = scmp.eq.s32.totalorder %s19, 0
      %p182 = por %p180, %p181
      %p183 = scmp.le.s32.totalorder 1, %s13
      %p184 = scmp.lt.s32.totalorder %s13, 3
      %p185 = pnand %p183, %p184
      %p186 = pneg %p185
      // Predicated region
      $region9: #{llama_forward.1} parent=5 // pred_check
        _
      $region10: #{llama_forward.1} parent=5 // pred_check_branch
        %188 = sbr.rel (%p185) target = $region12
      $region11: #{llama_forward.1} parent=5 // pred_region
        %s189 = ssub.s32 %s13, 1
        // Predicated region
        $region13: #{llama_forward.1} parent=11 // pred_check
          %p190 = pneg %p34
        $region14: #{llama_forward.1} parent=11 // pred_check_branch
          %192 = sbr.rel (%p190) target = $region16
        $region15: #{llama_forward.1} parent=11 // pred_region
          _
        $region16: #{llama_forward.1} parent=11 // pred_fallthru
          _
        // Predicated region
        $region17: #{llama_forward.1} parent=11 // pred_check
          %p193 = pneg %p55
        $region18: #{llama_forward.1} parent=11 // pred_check_branch
          %195 = sbr.rel (%p193) target = $region20
        $region19: #{llama_forward.1} parent=11 // pred_region
          _
        $region20: #{llama_forward.1} parent=11 // pred_fallthru
          _
        // Predicated region
        $region21: #{llama_forward.1} parent=11 // pred_check
          %p196 = pneg %p154
        $region22: #{llama_forward.1} parent=11 // pred_check_branch
          %198 = sbr.rel (%p196) target = $region24
        $region23: #{llama_forward.1} parent=11 // pred_region
          _
        $region24: #{llama_forward.1} parent=11 // pred_fallthru
          _
      $region12: #{llama_forward.1} parent=5 // pred_fallthru
        _
      %p199 = scmp.lt.s32.totalorder %s13, 2
      // Predicated region
      $region25: #{llama_forward.1} parent=5 // pred_check
        %p200 = pneg %p199
      $region26: #{llama_forward.1} parent=5 // pred_check_branch
        %202 = sbr.rel (%p200) target = $region28
      $region27: #{llama_forward.1} parent=5 // pred_region
        // Predicated region
        $region29: #{llama_forward.1} parent=27 // pred_check
          %p203 = pneg %p75
        $region30: #{llama_forward.1} parent=27 // pred_check_branch
          %205 = sbr.rel (%p203) target = $region32
        $region31: #{llama_forward.1} parent=27 // pred_region
          %p206 = scmp.lt.s32.totalorder %s13, 1
          %s207 = scalar_select %p206, %s13, 1
          %s208 = smul.addr %s207, 112
          %s209 = smul.addr %s208, 4
          %s210 = scalar_lea.vmem %s2, %s209
        $region32: #{llama_forward.1} parent=27 // pred_fallthru
          _
        // Predicated region
        $region33: #{llama_forward.1} parent=27 // pred_check
          %p211 = pneg %p101
        $region34: #{llama_forward.1} parent=27 // pred_check_branch
          %213 = sbr.rel (%p211) target = $region36
        $region35: #{llama_forward.1} parent=27 // pred_region
          %p214 = scmp.lt.s32.totalorder %s13, 1
          %s215 = scalar_select %p214, %s13, 1
          %s216 = smul.addr %s215, 32
          %s217 = smul.addr %s216, 4
          %s218 = scalar_lea.vmem %s3, %s217
        $region36: #{llama_forward.1} parent=27 // pred_fallthru
          _
        // Predicated region
        $region37: #{llama_forward.1} parent=27 // pred_check
          %p219 = pneg %p127
        $region38: #{llama_forward.1} parent=27 // pred_check_branch
          %221 = sbr.rel (%p219) target = $region40
        $region39: #{llama_forward.1} parent=27 // pred_region
          %p222 = scmp.lt.s32.totalorder %s13, 1
          %s223 = scalar_select %p222, %s13, 1
          %s224 = smul.addr %s223, 2
          %s225 = scalar_lea.vmem %s4, %s224
        $region40: #{llama_forward.1} parent=27 // pred_fallthru
          _
      $region28: #{llama_forward.1} parent=5 // pred_fallthru
        _
      %p226 = scmp.le.s32.totalorder 1, %s13
      %p227 = scmp.lt.s32.totalorder %s13, 3
      %p228 = pnand %p226, %p227
      %p229 = pneg %p228
      // Predicated region
      $region41: #{llama_forward.1} parent=5 // pred_check
        _
      $region42: #{llama_forward.1} parent=5 // pred_check_branch
        %231 = sbr.rel (%p228) target = $region44
      $region43: #{llama_forward.1} parent=5 // pred_region
        %s232 = ssub.s32 %s13, 1
        %p233 = pneg %p34
        %p234 = pneg %p31
        %p235 = pneg %p55
        %p236 = pneg %p52
        %p237 = scmp.lt.s32.totalorder %s18, 1
        %s238 = scalar_select %p237, %s18, 1
        %s239 = smul.addr %s238, 112
        %s240 = smul.addr %s239, 4
        %s241 = scalar_lea.vmem %s2, %s240
        %p242 = pneg %p81
        %p243 = pneg %p78
        %p244 = scmp.lt.s32.totalorder %s18, 1
        %s245 = scalar_select %p244, %s18, 1
        %s246 = smul.addr %s245, 32
        %s247 = smul.addr %s246, 4
        %s248 = scalar_lea.vmem %s3, %s247
        %p249 = pneg %p107
        %p250 = pneg %p104
        %p251 = scmp.lt.s32.totalorder %s18, 1
        %s252 = scalar_select %p251, %s18, 1
        %s253 = smul.addr %s252, 2
        %s254 = scalar_lea.vmem %s4, %s253
        %p255 = pneg %p133
        %p256 = pneg %p130
        %p257 = pneg %p154
        %p258 = pneg %p151
        %p259 = pneg %p175
        %p260 = pneg %p172
        %p261 = scmp.lt.s32.totalorder %s18, 1
        %s262 = scalar_select %p261, %s18, 1
        %s263 = smul.addr %s262, 112
        %s264 = smul.addr %s263, 4
        %s265 = scalar_lea.vmem %s2, %s264
        %p266 = scmp.lt.s32.totalorder %s18, 1
        %s267 = scalar_select %p266, %s18, 1
        %s268 = smul.addr %s267, 32
        %s269 = smul.addr %s268, 4
        %s270 = scalar_lea.vmem %s3, %s269
        %p271 = scmp.lt.s32.totalorder %s18, 1
        %s272 = scalar_select %p271, %s18, 1
        %s273 = smul.addr %s272, 2
        %s274 = scalar_lea.vmem %s4, %s273
        %p276 = scmp.eq.s32.totalorder %s18, 0
        // Predicated region
        $region45: #{llama_forward.1} parent=43 // pred_check
          %p277 = pneg %p276
        $region46: #{llama_forward.1} parent=43 // pred_check_branch
          %279 = sbr.rel (%p277) target = $region48
        $region47: #{llama_forward.1} parent=43 // pred_region
          %v280 = vld [vmem:[%s0] sm:$0xff]
          %v281 = vld [vmem:[%s0 + $0x8] sm:$0xff]
          %v282 = vld [vmem:[%s0 + $0x10] sm:$0xff]
          %v283 = vld [vmem:[%s0 + $0x18] sm:$0xff]
          %v284 = vld [vmem:[%s0 + $0x20] sm:$0xff]
          %v285 = vld [vmem:[%s0 + $0x28] sm:$0xff]
          %v286 = vld [vmem:[%s0 + $0x30] sm:$0xff]
          %v287 = vld [vmem:[%s0 + $0x38] sm:$0xff]
          %v288 = vld [vmem:[%s0 + $0x40] sm:$0xff]
          %v289 = vld [vmem:[%s0 + $0x48] sm:$0xff]
          %v290 = vld [vmem:[%s0 + $0x50] sm:$0xff]
          %v291 = vld [vmem:[%s0 + $0x58] sm:$0xff]
          %v292 = vld [vmem:[%s0 + $0x60] sm:$0xff]
          %v293 = vld [vmem:[%s0 + $0x68] sm:$0xff]
          %v294 = vld [vmem:[%s0 + $0x70] sm:$0xff]
          %v295 = vld [vmem:[%s0 + $0x78] sm:$0xff]
          %296 = vst [vmem:[#allocation2] sm:$0xff] %v280
          %297 = vst [vmem:[#allocation2 + $0x8] sm:$0xff] %v281
          %298 = vst [vmem:[#allocation2 + $0x10] sm:$0xff] %v282
          %299 = vst [vmem:[#allocation2 + $0x18] sm:$0xff] %v283
          %300 = vst [vmem:[#allocation2 + $0x20] sm:$0xff] %v284
          %301 = vst [vmem:[#allocation2 + $0x28] sm:$0xff] %v285
          %302 = vst [vmem:[#allocation2 + $0x30] sm:$0xff] %v286
          %303 = vst [vmem:[#allocation2 + $0x38] sm:$0xff] %v287
          %304 = vst [vmem:[#allocation2 + $0x40] sm:$0xff] %v288
          %305 = vst [vmem:[#allocation2 + $0x48] sm:$0xff] %v289
          %306 = vst [vmem:[#allocation2 + $0x50] sm:$0xff] %v290
          %307 = vst [vmem:[#allocation2 + $0x58] sm:$0xff] %v291
          %308 = vst [vmem:[#allocation2 + $0x60] sm:$0xff] %v292
          %309 = vst [vmem:[#allocation2 + $0x68] sm:$0xff] %v293
          %310 = vst [vmem:[#allocation2 + $0x70] sm:$0xff] %v294
          %311 = vst [vmem:[#allocation2 + $0x78] sm:$0xff] %v295
          %v312 = vlaneseq
          %v313 = vshrl.u32 %v312, 7
          %v314 = vadd.s32 %v313, 8
          %v315 = vadd.s32 %v313, 16
          %v316 = vadd.s32 %v313, 24
          %v317 = vadd.s32 %v313, 32
          %v318 = vadd.s32 %v313, 40
          %v319 = vadd.s32 %v313, 48
          %v320 = vadd.s32 %v313, 56
          %v321 = vadd.s32 %v313, 64
          %v322 = vadd.s32 %v313, 72
          %v323 = vadd.s32 %v313, 80
          %v324 = vadd.s32 %v313, 88
          %v325 = vadd.s32 %v313, 96
          %v326 = vadd.s32 %v313, 104
          %v327 = vadd.s32 %v313, 112
          %v328 = vadd.s32 %v313, 120
          %v329 = vlaneseq
          %v330 = vand.u32 %v329, 127
          %vm331 = vcmp.le.s32.totalorder %v330, %v313
          %vm332 = vcmp.le.s32.totalorder %v330, %v314
          %vm333 = vcmp.le.s32.totalorder %v330, %v315
          %vm334 = vcmp.le.s32.totalorder %v330, %v316
          %vm335 = vcmp.le.s32.totalorder %v330, %v317
          %vm336 = vcmp.le.s32.totalorder %v330, %v318
          %vm337 = vcmp.le.s32.totalorder %v330, %v319
          %vm338 = vcmp.le.s32.totalorder %v330, %v320
          %vm339 = vcmp.le.s32.totalorder %v330, %v321
          %vm340 = vcmp.le.s32.totalorder %v330, %v322
          %vm341 = vcmp.le.s32.totalorder %v330, %v323
          %vm342 = vcmp.le.s32.totalorder %v330, %v324
          %vm343 = vcmp.le.s32.totalorder %v330, %v325
          %vm344 = vcmp.le.s32.totalorder %v330, %v326
          %vm345 = vcmp.le.s32.totalorder %v330, %v327
          %vm346 = vcmp.le.s32.totalorder %v330, %v328
          %v347 = vsel %vm331, 0.0, -1e+30
          %v348 = vsel %vm332, 0.0, -1e+30
          %v349 = vsel %vm333, 0.0, -1e+30
          %v350 = vsel %vm334, 0.0, -1e+30
          %v351 = vsel %vm335, 0.0, -1e+30
          %v352 = vsel %vm336, 0.0, -1e+30
          %v353 = vsel %vm337, 0.0, -1e+30
          %v354 = vsel %vm338, 0.0, -1e+30
          %v355 = vsel %vm339, 0.0, -1e+30
          %v356 = vsel %vm340, 0.0, -1e+30
          %v357 = vsel %vm341, 0.0, -1e+30
          %v358 = vsel %vm342, 0.0, -1e+30
          %v359 = vsel %vm343, 0.0, -1e+30
          %v360 = vsel %vm344, 0.0, -1e+30
          %v361 = vsel %vm345, 0.0, -1e+30
          %v362 = vsel %vm346, 0.0, -1e+30
          %363 = vst [vmem:[#allocation3] sm:$0xff] %v347
          %364 = vst [vmem:[#allocation3 + $0x8] sm:$0xff] %v348
          %365 = vst [vmem:[#allocation3 + $0x10] sm:$0xff] %v349
          %366 = vst [vmem:[#allocation3 + $0x18] sm:$0xff] %v350
          %367 = vst [vmem:[#allocation3 + $0x20] sm:$0xff] %v351
          %368 = vst [vmem:[#allocation3 + $0x28] sm:$0xff] %v352
          %369 = vst [vmem:[#allocation3 + $0x30] sm:$0xff] %v353
          %370 = vst [vmem:[#allocation3 + $0x38] sm:$0xff] %v354
          %371 = vst [vmem:[#allocation3 + $0x40] sm:$0xff] %v355
          %372 = vst [vmem:[#allocation3 + $0x48] sm:$0xff] %v356
          %373 = vst [vmem:[#allocation3 + $0x50] sm:$0xff] %v357
          %374 = vst [vmem:[#allocation3 + $0x58] sm:$0xff] %v358
          %375 = vst [vmem:[#allocation3 + $0x60] sm:$0xff] %v359
          %376 = vst [vmem:[#allocation3 + $0x68] sm:$0xff] %v360
          %377 = vst [vmem:[#allocation3 + $0x70] sm:$0xff] %v361
          %378 = vst [vmem:[#allocation3 + $0x78] sm:$0xff] %v362
          %379 = vst [vmem:[#allocation3 + $0x80] sm:$0xff] %v347
          %380 = vst [vmem:[#allocation3 + $0x88] sm:$0xff] %v348
          %381 = vst [vmem:[#allocation3 + $0x90] sm:$0xff] %v349
          %382 = vst [vmem:[#allocation3 + $0x98] sm:$0xff] %v350
          %383 = vst [vmem:[#allocation3 + $0xa0] sm:$0xff] %v351
          %384 = vst [vmem:[#allocation3 + $0xa8] sm:$0xff] %v352
          %385 = vst [vmem:[#allocation3 + $0xb0] sm:$0xff] %v353
          %386 = vst [vmem:[#allocation3 + $0xb8] sm:$0xff] %v354
          %387 = vst [vmem:[#allocation3 + $0xc0] sm:$0xff] %v355
          %388 = vst [vmem:[#allocation3 + $0xc8] sm:$0xff] %v356
          %389 = vst [vmem:[#allocation3 + $0xd0] sm:$0xff] %v357
          %390 = vst [vmem:[#allocation3 + $0xd8] sm:$0xff] %v358
          %391 = vst [vmem:[#allocation3 + $0xe0] sm:$0xff] %v359
          %392 = vst [vmem:[#allocation3 + $0xe8] sm:$0xff] %v360
          %393 = vst [vmem:[#allocation3 + $0xf0] sm:$0xff] %v361
          %394 = vst [vmem:[#allocation3 + $0xf8] sm:$0xff] %v362
        $region48: #{llama_forward.1} parent=43 // pred_fallthru
          _
        %v395 = vld [vmem:[#allocation2] sm:$0xff]
        %v396 = vld [vmem:[#allocation2 + $0x8] sm:$0xff]
        %v397 = vld [vmem:[#allocation2 + $0x10] sm:$0xff]
        %v398 = vld [vmem:[#allocation2 + $0x18] sm:$0xff]
        %v399 = vld [vmem:[#allocation2 + $0x20] sm:$0xff]
        %v400 = vld [vmem:[#allocation2 + $0x28] sm:$0xff]
        %v401 = vld [vmem:[#allocation2 + $0x30] sm:$0xff]
        %v402 = vld [vmem:[#allocation2 + $0x38] sm:$0xff]
        %v403 = vld [vmem:[#allocation2 + $0x40] sm:$0xff]
        %v404 = vld [vmem:[#allocation2 + $0x48] sm:$0xff]
        %v405 = vld [vmem:[#allocation2 + $0x50] sm:$0xff]
        %v406 = vld [vmem:[#allocation2 + $0x58] sm:$0xff]
        %v407 = vld [vmem:[#allocation2 + $0x60] sm:$0xff]
        %v408 = vld [vmem:[#allocation2 + $0x68] sm:$0xff]
        %v409 = vld [vmem:[#allocation2 + $0x70] sm:$0xff]
        %v410 = vld [vmem:[#allocation2 + $0x78] sm:$0xff]
        %v411 = vld [vmem:[%s274] sm:$0x3]
        %v412 = vmul.f32 %v395, %v395
        %v413 = vmul.f32 %v396, %v396
        %v414 = vmul.f32 %v397, %v397
        %v415 = vmul.f32 %v398, %v398
        %v416 = vmul.f32 %v399, %v399
        %v417 = vmul.f32 %v400, %v400
        %v418 = vmul.f32 %v401, %v401
        %v419 = vmul.f32 %v402, %v402
        %v420 = vmul.f32 %v403, %v403
        %v421 = vmul.f32 %v404, %v404
        %v422 = vmul.f32 %v405, %v405
        %v423 = vmul.f32 %v406, %v406
        %v424 = vmul.f32 %v407, %v407
        %v425 = vmul.f32 %v408, %v408
        %v426 = vmul.f32 %v409, %v409
        %v427 = vmul.f32 %v410, %v410
        %428 = vadd.xlane.f32.xlu0 %v412
        %v429 = vpop.xlane.xlu0 %428
        %430 = vadd.xlane.f32.xlu0 %v413
        %v431 = vpop.xlane.xlu0 %430
        %432 = vadd.xlane.f32.xlu0 %v414
        %v433 = vpop.xlane.xlu0 %432
        %434 = vadd.xlane.f32.xlu0 %v415
        %v435 = vpop.xlane.xlu0 %434
        %436 = vadd.xlane.f32.xlu0 %v416
        %v437 = vpop.xlane.xlu0 %436
        %438 = vadd.xlane.f32.xlu0 %v417
        %v439 = vpop.xlane.xlu0 %438
        %440 = vadd.xlane.f32.xlu0 %v418
        %v441 = vpop.xlane.xlu0 %440
        %442 = vadd.xlane.f32.xlu0 %v419
        %v443 = vpop.xlane.xlu0 %442
        %444 = vadd.xlane.f32.xlu0 %v420
        %v445 = vpop.xlane.xlu0 %444
        %446 = vadd.xlane.f32.xlu0 %v421
        %v447 = vpop.xlane.xlu0 %446
        %448 = vadd.xlane.f32.xlu0 %v422
        %v449 = vpop.xlane.xlu0 %448
        %450 = vadd.xlane.f32.xlu0 %v423
        %v451 = vpop.xlane.xlu0 %450
        %452 = vadd.xlane.f32.xlu0 %v424
        %v453 = vpop.xlane.xlu0 %452
        %454 = vadd.xlane.f32.xlu0 %v425
        %v455 = vpop.xlane.xlu0 %454
        %456 = vadd.xlane.f32.xlu0 %v426
        %v457 = vpop.xlane.xlu0 %456
        %458 = vadd.xlane.f32.xlu0 %v427
        %v459 = vpop.xlane.xlu0 %458
        %v460 = vrcp.pop 128.0
        %v461 = vmul.f32 128.0, %v460
        %v462 = vsub.f32 1.0, %v461
        %v463 = vmul.f32 %v460, %v462
        %v464 = vadd.f32 %v460, %v463
        %vm465 = vweird.f32 %v460
        %v466 = vsel %vm465, %v460, %v464
        %v467 = vmul.f32 %v429, %v466
        %v468 = vmul.f32 %v431, %v466
        %v469 = vmul.f32 %v433, %v466
        %v470 = vmul.f32 %v435, %v466
        %v471 = vmul.f32 %v437, %v466
        %v472 = vmul.f32 %v439, %v466
        %v473 = vmul.f32 %v441, %v466
        %v474 = vmul.f32 %v443, %v466
        %v475 = vmul.f32 %v445, %v466
        %v476 = vmul.f32 %v447, %v466
        %v477 = vmul.f32 %v449, %v466
        %v478 = vmul.f32 %v451, %v466
        %v479 = vmul.f32 %v453, %v466
        %v480 = vmul.f32 %v455, %v466
        %v481 = vmul.f32 %v457, %v466
        %v482 = vmul.f32 %v459, %v466
        %v483 = vadd.f32 %v467, 1e-06
        %v484 = vadd.f32 %v468, 1e-06
        %v485 = vadd.f32 %v469, 1e-06
        %v486 = vadd.f32 %v470, 1e-06
        %v487 = vadd.f32 %v471, 1e-06
        %v488 = vadd.f32 %v472, 1e-06
        %v489 = vadd.f32 %v473, 1e-06
        %v490 = vadd.f32 %v474, 1e-06
        %v491 = vadd.f32 %v475, 1e-06
        %v492 = vadd.f32 %v476, 1e-06
        %v493 = vadd.f32 %v477, 1e-06
        %v494 = vadd.f32 %v478, 1e-06
        %v495 = vadd.f32 %v479, 1e-06
        %v496 = vadd.f32 %v480, 1e-06
        %v497 = vadd.f32 %v481, 1e-06
        %v498 = vadd.f32 %v482, 1e-06
        %v499 = vrsqrt.pop %v483
        %v500 = vmul.f32 %v499, %v483
        %v501 = vmul.f32 %v500, %v499
        %v502 = vmul.f32 0.5, %v501
        %v503 = vsub.f32 1.5, %v502
        %v504 = vmul.f32 %v499, %v503
        %vm505 = vweird.f32 %v483
        %vm506 = vweird.f32 %v499
        %vm507 = vmor %vm505, %vm506
        %v508 = vsel %vm507, %v499, %v504
        %v509 = vrsqrt.pop %v484
        %v510 = vmul.f32 %v509, %v484
        %v511 = vmul.f32 %v510, %v509
        %v512 = vmul.f32 0.5, %v511
        %v513 = vsub.f32 1.5, %v512
        %v514 = vmul.f32 %v509, %v513
        %vm515 = vweird.f32 %v484
        %vm516 = vweird.f32 %v509
        %vm517 = vmor %vm515, %vm516
        %v518 = vsel %vm517, %v509, %v514
        %v519 = vrsqrt.pop %v485
        %v520 = vmul.f32 %v519, %v485
        %v521 = vmul.f32 %v520, %v519
        %v522 = vmul.f32 0.5, %v521
        %v523 = vsub.f32 1.5, %v522
        %v524 = vmul.f32 %v519, %v523
        %vm525 = vweird.f32 %v485
        %vm526 = vweird.f32 %v519
        %vm527 = vmor %vm525, %vm526
        %v528 = vsel %vm527, %v519, %v524
        %v529 = vrsqrt.pop %v486
        %v530 = vmul.f32 %v529, %v486
        %v531 = vmul.f32 %v530, %v529
        %v532 = vmul.f32 0.5, %v531
        %v533 = vsub.f32 1.5, %v532
        %v534 = vmul.f32 %v529, %v533
        %vm535 = vweird.f32 %v486
        %vm536 = vweird.f32 %v529
        %vm537 = vmor %vm535, %vm536
        %v538 = vsel %vm537, %v529, %v534
        %v539 = vrsqrt.pop %v487
        %v540 = vmul.f32 %v539, %v487
        %v541 = vmul.f32 %v540, %v539
        %v542 = vmul.f32 0.5, %v541
        %v543 = vsub.f32 1.5, %v542
        %v544 = vmul.f32 %v539, %v543
        %vm545 = vweird.f32 %v487
        %vm546 = vweird.f32 %v539
        %vm547 = vmor %vm545, %vm546
        %v548 = vsel %vm547, %v539, %v544
        %v549 = vrsqrt.pop %v488
        %v550 = vmul.f32 %v549, %v488
        %v551 = vmul.f32 %v550, %v549
        %v552 = vmul.f32 0.5, %v551
        %v553 = vsub.f32 1.5, %v552
        %v554 = vmul.f32 %v549, %v553
        %vm555 = vweird.f32 %v488
        %vm556 = vweird.f32 %v549
        %vm557 = vmor %vm555, %vm556
        %v558 = vsel %vm557, %v549, %v554
        %v559 = vrsqrt.pop %v489
        %v560 = vmul.f32 %v559, %v489
        %v561 = vmul.f32 %v560, %v559
        %v562 = vmul.f32 0.5, %v561
        %v563 = vsub.f32 1.5, %v562
        %v564 = vmul.f32 %v559, %v563
        %vm565 = vweird.f32 %v489
        %vm566 = vweird.f32 %v559
        %vm567 = vmor %vm565, %vm566
        %v568 = vsel %vm567, %v559, %v564
        %v569 = vrsqrt.pop %v490
        %v570 = vmul.f32 %v569, %v490
        %v571 = vmul.f32 %v570, %v569
        %v572 = vmul.f32 0.5, %v571
        %v573 = vsub.f32 1.5, %v572
        %v574 = vmul.f32 %v569, %v573
        %vm575 = vweird.f32 %v490
        %vm576 = vweird.f32 %v569
        %vm577 = vmor %vm575, %vm576
        %v578 = vsel %vm577, %v569, %v574
        %v579 = vrsqrt.pop %v491
        %v580 = vmul.f32 %v579, %v491
        %v581 = vmul.f32 %v580, %v579
        %v582 = vmul.f32 0.5, %v581
        %v583 = vsub.f32 1.5, %v582
        %v584 = vmul.f32 %v579, %v583
        %vm585 = vweird.f32 %v491
        %vm586 = vweird.f32 %v579
        %vm587 = vmor %vm585, %vm586
        %v588 = vsel %vm587, %v579, %v584
        %v589 = vrsqrt.pop %v492
        %v590 = vmul.f32 %v589, %v492
        %v591 = vmul.f32 %v590, %v589
        %v592 = vmul.f32 0.5, %v591
        %v593 = vsub.f32 1.5, %v592
        %v594 = vmul.f32 %v589, %v593
        %vm595 = vweird.f32 %v492
        %vm596 = vweird.f32 %v589
        %vm597 = vmor %vm595, %vm596
        %v598 = vsel %vm597, %v589, %v594
        %v599 = vrsqrt.pop %v493
        %v600 = vmul.f32 %v599, %v493
        %v601 = vmul.f32 %v600, %v599
        %v602 = vmul.f32 0.5, %v601
        %v603 = vsub.f32 1.5, %v602
        %v604 = vmul.f32 %v599, %v603
        %vm605 = vweird.f32 %v493
        %vm606 = vweird.f32 %v599
        %vm607 = vmor %vm605, %vm606
        %v608 = vsel %vm607, %v599, %v604
        %v609 = vrsqrt.pop %v494
        %v610 = vmul.f32 %v609, %v494
        %v611 = vmul.f32 %v610, %v609
        %v612 = vmul.f32 0.5, %v611
        %v613 = vsub.f32 1.5, %v612
        %v614 = vmul.f32 %v609, %v613
        %vm615 = vweird.f32 %v494
        %vm616 = vweird.f32 %v609
        %vm617 = vmor %vm615, %vm616
        %v618 = vsel %vm617, %v609, %v614
        %v619 = vrsqrt.pop %v495
        %v620 = vmul.f32 %v619, %v495
        %v621 = vmul.f32 %v620, %v619
        %v622 = vmul.f32 0.5, %v621
        %v623 = vsub.f32 1.5, %v622
        %v624 = vmul.f32 %v619, %v623
        %vm625 = vweird.f32 %v495
        %vm626 = vweird.f32 %v619
        %vm627 = vmor %vm625, %vm626
        %v628 = vsel %vm627, %v619, %v624
        %v629 = vrsqrt.pop %v496
        %v630 = vmul.f32 %v629, %v496
        %v631 = vmul.f32 %v630, %v629
        %v632 = vmul.f32 0.5, %v631
        %v633 = vsub.f32 1.5, %v632
        %v634 = vmul.f32 %v629, %v633
        %vm635 = vweird.f32 %v496
        %vm636 = vweird.f32 %v629
        %vm637 = vmor %vm635, %vm636
        %v638 = vsel %vm637, %v629, %v634
        %v639 = vrsqrt.pop %v497
        %v640 = vmul.f32 %v639, %v497
        %v641 = vmul.f32 %v640, %v639
        %v642 = vmul.f32 0.5, %v641
        %v643 = vsub.f32 1.5, %v642
        %v644 = vmul.f32 %v639, %v643
        %vm645 = vweird.f32 %v497
        %vm646 = vweird.f32 %v639
        %vm647 = vmor %vm645, %vm646
        %v648 = vsel %vm647, %v639, %v644
        %v649 = vrsqrt.pop %v498
        %v650 = vmul.f32 %v649, %v498
        %v651 = vmul.f32 %v650, %v649
        %v652 = vmul.f32 0.5, %v651
        %v653 = vsub.f32 1.5, %v652
        %v654 = vmul.f32 %v649, %v653
        %vm655 = vweird.f32 %v498
        %vm656 = vweird.f32 %v649
        %vm657 = vmor %vm655, %vm656
        %v658 = vsel %vm657, %v649, %v654
        %v659 = vmul.f32 %v395, %v508
        %v660 = vmul.f32 %v396, %v518
        %v661 = vmul.f32 %v397, %v528
        %v662 = vmul.f32 %v398, %v538
        %v663 = vmul.f32 %v399, %v548
        %v664 = vmul.f32 %v400, %v558
        %v665 = vmul.f32 %v401, %v568
        %v666 = vmul.f32 %v402, %v578
        %v667 = vmul.f32 %v403, %v588
        %v668 = vmul.f32 %v404, %v598
        %v669 = vmul.f32 %v405, %v608
        %v670 = vmul.f32 %v406, %v618
        %v671 = vmul.f32 %v407, %v628
        %v672 = vmul.f32 %v408, %v638
        %v673 = vmul.f32 %v409, %v648
        %v674 = vmul.f32 %v410, %v658
        %v675 = vperm.slane %v411, 0
        %v676 = vmul.f32 %v659, %v675
        %v677 = vmul.f32 %v660, %v675
        %v678 = vmul.f32 %v661, %v675
        %v679 = vmul.f32 %v662, %v675
        %v680 = vmul.f32 %v663, %v675
        %v681 = vmul.f32 %v664, %v675
        %v682 = vmul.f32 %v665, %v675
        %v683 = vmul.f32 %v666, %v675
        %v684 = vmul.f32 %v667, %v675
        %v685 = vmul.f32 %v668, %v675
        %v686 = vmul.f32 %v669, %v675
        %v687 = vmul.f32 %v670, %v675
        %v688 = vmul.f32 %v671, %v675
        %v689 = vmul.f32 %v672, %v675
        %v690 = vmul.f32 %v673, %v675
        %v691 = vmul.f32 %v674, %v675
        %v692 = vpack.c.bf16 %v677, %v676
        %v693 = vpack.c.bf16 %v679, %v678
        %v694 = vpack.c.bf16 %v681, %v680
        %v695 = vpack.c.bf16 %v683, %v682
        %v696 = vpack.c.bf16 %v685, %v684
        %v697 = vpack.c.bf16 %v687, %v686
        %v698 = vpack.c.bf16 %v689, %v688
        %v699 = vpack.c.bf16 %v691, %v690
        %v700 = vld [vmem:[%s265] sm:$0xff]
        %v701 = vld [vmem:[%s265 + $0x1c] sm:$0xff]
        %v702 = vld [vmem:[%s265 + $0x38] sm:$0xff]
        %v703 = vld [vmem:[%s265 + $0x54] sm:$0xff]
        %v704 = vld [vmem:[%s265 + $0x70] sm:$0xff]
        %v705 = vld [vmem:[%s265 + $0x8c] sm:$0xff]
        %v706 = vld [vmem:[%s265 + $0xa8] sm:$0xff]
        %v707 = vld [vmem:[%s265 + $0xc4] sm:$0xff]
        %v708 = vld [vmem:[%s265 + $0xe0] sm:$0xff]
        %v709 = vld [vmem:[%s265 + $0xfc] sm:$0xff]
        %v710 = vld [vmem:[%s265 + $0x118] sm:$0xff]
        %v711 = vld [vmem:[%s265 + $0x134] sm:$0xff]
        %v712 = vld [vmem:[%s265 + $0x150] sm:$0xff]
        %v713 = vld [vmem:[%s265 + $0x16c] sm:$0xff]
        %v714 = vld [vmem:[%s265 + $0x188] sm:$0xff]
        %v715 = vld [vmem:[%s265 + $0x1a4] sm:$0xff]
        %v732 = vunpack.c.l.b16 %v700
        %v733 = vunpack.c.h.b16 %v700
        %v734 = vunpack.c.l.b16 %v701
        %v735 = vunpack.c.h.b16 %v701
        %v736 = vunpack.c.l.b16 %v702
        %v737 = vunpack.c.h.b16 %v702
        %v738 = vunpack.c.l.b16 %v703
        %v739 = vunpack.c.h.b16 %v703
        %v740 = vunpack.c.l.b16 %v704
        %v741 = vunpack.c.h.b16 %v704
        %v742 = vunpack.c.l.b16 %v705
        %v743 = vunpack.c.h.b16 %v705
        %v744 = vunpack.c.l.b16 %v706
        %v745 = vunpack.c.h.b16 %v706
        %v746 = vunpack.c.l.b16 %v707
        %v747 = vunpack.c.h.b16 %v707
        %v748 = vunpack.c.l.b16 %v708
        %v749 = vunpack.c.h.b16 %v708
        %v750 = vunpack.c.l.b16 %v709
        %v751 = vunpack.c.h.b16 %v709
        %v752 = vunpack.c.l.b16 %v710
        %v753 = vunpack.c.h.b16 %v710
        %v754 = vunpack.c.l.b16 %v711
        %v755 = vunpack.c.h.b16 %v711
        %v756 = vunpack.c.l.b16 %v712
        %v757 = vunpack.c.h.b16 %v712
        %v758 = vunpack.c.l.b16 %v713
        %v759 = vunpack.c.h.b16 %v713
        %v760 = vunpack.c.l.b16 %v714
        %v761 = vunpack.c.h.b16 %v714
        %v762 = vunpack.c.l.b16 %v715
        %v763 = vunpack.c.h.b16 %v715
        %v764 = vpack.c.b16 %v734, %v732
        %v765 = vpack.c.b16 %v735, %v733
        %v766 = vpack.c.b16 %v738, %v736
        %v767 = vpack.c.b16 %v739, %v737
        %v768 = vpack.c.b16 %v742, %v740
        %v769 = vpack.c.b16 %v743, %v741
        %v770 = vpack.c.b16 %v746, %v744
        %v771 = vpack.c.b16 %v747, %v745
        %v772 = vpack.c.b16 %v750, %v748
        %v773 = vpack.c.b16 %v751, %v749
        %v774 = vpack.c.b16 %v754, %v752
        %v775 = vpack.c.b16 %v755, %v753
        %v776 = vpack.c.b16 %v758, %v756
        %v777 = vpack.c.b16 %v759, %v757
        %v778 = vpack.c.b16 %v762, %v760
        %v779 = vpack.c.b16 %v763, %v761
        %796 = vmatpush.bf16.msra.mxu0 %v778
        %797 = vmatpush.bf16.msra.mxu0 %v776
        %798 = vmatpush.bf16.msra.mxu0 %v774
        %799 = vmatpush.bf16.msra.mxu0 %v772
        %800 = vmatpush.bf16.msra.mxu0 %v770
        %801 = vmatpush.bf16.msra.mxu0 %v768
        %802 = vmatpush.bf16.msra.mxu0 %v766
        %803 = vmatpush.bf16.msra.mxu0 %v764
        %804 = vmatmul.bf16.gmra.mxu0 %v692
        %v805 = vpop.f32.mrf.mxu0
        %v806 = vadd.f32 0.0, %v805
        %v807 = vpop.f32.mrf.mxu0
        %v808 = vadd.f32 0.0, %v807
        %809 = vmatmul.bf16.gmra.mxu0 %v693
        %v810 = vpop.f32.mrf.mxu0
        %v811 = vadd.f32 0.0, %v810
        %v812 = vpop.f32.mrf.mxu0
        %v813 = vadd.f32 0.0, %v812
        %814 = vmatmul.bf16.gmra.mxu0 %v694
        %v815 = vpop.f32.mrf.mxu0
        %v816 = vadd.f32 0.0, %v815
        %v817 = vpop.f32.mrf.mxu0
        %v818 = vadd.f32 0.0, %v817
        %819 = vmatmul.bf16.gmra.mxu0 %v695
        %v820 = vpop.f32.mrf.mxu0
        %v821 = vadd.f32 0.0, %v820
        %v822 = vpop.f32.mrf.mxu0
        %v823 = vadd.f32 0.0, %v822
        %824 = vmatmul.bf16.gmra.mxu0 %v696
        %v825 = vpop.f32.mrf.mxu0
        %v826 = vadd.f32 0.0, %v825
        %v827 = vpop.f32.mrf.mxu0
        %v828 = vadd.f32 0.0, %v827
        %829 = vmatmul.bf16.gmra.mxu0 %v697
        %v830 = vpop.f32.mrf.mxu0
        %v831 = vadd.f32 0.0, %v830
        %v832 = vpop.f32.mrf.mxu0
        %v833 = vadd.f32 0.0, %v832
        %834 = vmatmul.bf16.gmra.mxu0 %v698
        %v835 = vpop.f32.mrf.mxu0
        %v836 = vadd.f32 0.0, %v835
        %v837 = vpop.f32.mrf.mxu0
        %v838 = vadd.f32 0.0, %v837
        %839 = vmatmul.bf16.gmra.mxu0 %v699
        %v840 = vpop.f32.mrf.mxu0
        %v841 = vadd.f32 0.0, %v840
        %v842 = vpop.f32.mrf.mxu0
        %v843 = vadd.f32 0.0, %v842
        %844 = vdwg.mxu0
        %845 = vmatpush.bf16.msra.mxu0 %v779
        %846 = vmatpush.bf16.msra.mxu0 %v777
        %847 = vmatpush.bf16.msra.mxu0 %v775
        %848 = vmatpush.bf16.msra.mxu0 %v773
        %849 = vmatpush.bf16.msra.mxu0 %v771
        %850 = vmatpush.bf16.msra.mxu0 %v769
        %851 = vmatpush.bf16.msra.mxu0 %v767
        %852 = vmatpush.bf16.msra.mxu0 %v765
        %853 = vmatmul.bf16.gmra.mxu0 %v692
        %v854 = vpop.f32.mrf.mxu0
        %v855 = vadd.f32 0.0, %v854
        %v856 = vpop.f32.mrf.mxu0
        %v857 = vadd.f32 0.0, %v856
        %858 = vmatmul.bf16.gmra.mxu0 %v693
        %v859 = vpop.f32.mrf.mxu0
        %v860 = vadd.f32 0.0, %v859
        %v861 = vpop.f32.mrf.mxu0
        %v862 = vadd.f32 0.0, %v861
        %863 = vmatmul.bf16.gmra.mxu0 %v694
        %v864 = vpop.f32.mrf.mxu0
        %v865 = vadd.f32 0.0, %v864
        %v866 = vpop.f32.mrf.mxu0
        %v867 = vadd.f32 0.0, %v866
        %868 = vmatmul.bf16.gmra.mxu0 %v695
        %v869 = vpop.f32.mrf.mxu0
        %v870 = vadd.f32 0.0, %v869
        %v871 = vpop.f32.mrf.mxu0
        %v872 = vadd.f32 0.0, %v871
        %873 = vmatmul.bf16.gmra.mxu0 %v696
        %v874 = vpop.f32.mrf.mxu0
        %v875 = vadd.f32 0.0, %v874
        %v876 = vpop.f32.mrf.mxu0
        %v877 = vadd.f32 0.0, %v876
        %878 = vmatmul.bf16.gmra.mxu0 %v697
        %v879 = vpop.f32.mrf.mxu0
        %v880 = vadd.f32 0.0, %v879
        %v881 = vpop.f32.mrf.mxu0
        %v882 = vadd.f32 0.0, %v881
        %883 = vmatmul.bf16.gmra.mxu0 %v698
        %v884 = vpop.f32.mrf.mxu0
        %v885 = vadd.f32 0.0, %v884
        %v886 = vpop.f32.mrf.mxu0
        %v887 = vadd.f32 0.0, %v886
        %888 = vmatmul.bf16.gmra.mxu0 %v699
        %v889 = vpop.f32.mrf.mxu0
        %v890 = vadd.f32 0.0, %v889
        %v891 = vpop.f32.mrf.mxu0
        %v892 = vadd.f32 0.0, %v891
        %893 = vdwg.mxu0
        %v894 = vld [vmem:[%s1] sm:$0xff]
        %v895 = vld [vmem:[%s1 + $0x8] sm:$0xff]
        %v896 = vld [vmem:[%s1 + $0x10] sm:$0xff]
        %v897 = vld [vmem:[%s1 + $0x18] sm:$0xff]
        %v898 = vld [vmem:[%s1 + $0x20] sm:$0xff]
        %v899 = vld [vmem:[%s1 + $0x28] sm:$0xff]
        %v900 = vld [vmem:[%s1 + $0x30] sm:$0xff]
        %v901 = vld [vmem:[%s1 + $0x38] sm:$0xff]
        %v902 = vld [vmem:[%s1 + $0x40] sm:$0xff]
        %v903 = vld [vmem:[%s1 + $0x48] sm:$0xff]
        %v904 = vld [vmem:[%s1 + $0x50] sm:$0xff]
        %v905 = vld [vmem:[%s1 + $0x58] sm:$0xff]
        %v906 = vld [vmem:[%s1 + $0x60] sm:$0xff]
        %v907 = vld [vmem:[%s1 + $0x68] sm:$0xff]
        %v908 = vld [vmem:[%s1 + $0x70] sm:$0xff]
        %v909 = vld [vmem:[%s1 + $0x78] sm:$0xff]
        %s910 = scalar_lea.vmem %s1, 128
        %v911 = vld [vmem:[%s910] sm:$0xff]
        %v912 = vld [vmem:[%s910 + $0x8] sm:$0xff]
        %v913 = vld [vmem:[%s910 + $0x10] sm:$0xff]
        %v914 = vld [vmem:[%s910 + $0x18] sm:$0xff]
        %v915 = vld [vmem:[%s910 + $0x20] sm:$0xff]
        %v916 = vld [vmem:[%s910 + $0x28] sm:$0xff]
        %v917 = vld [vmem:[%s910 + $0x30] sm:$0xff]
        %v918 = vld [vmem:[%s910 + $0x38] sm:$0xff]
        %v919 = vld [vmem:[%s910 + $0x40] sm:$0xff]
        %v920 = vld [vmem:[%s910 + $0x48] sm:$0xff]
        %v921 = vld [vmem:[%s910 + $0x50] sm:$0xff]
        %v922 = vld [vmem:[%s910 + $0x58] sm:$0xff]
        %v923 = vld [vmem:[%s910 + $0x60] sm:$0xff]
        %v924 = vld [vmem:[%s910 + $0x68] sm:$0xff]
        %v925 = vld [vmem:[%s910 + $0x70] sm:$0xff]
        %v926 = vld [vmem:[%s910 + $0x78] sm:$0xff]
        %s927 = scalar_lea.vmem %s1, 256
        %v928 = vld [vmem:[%s927] sm:$0xff]
        %v929 = vld [vmem:[%s927 + $0x8] sm:$0xff]
        %v930 = vld [vmem:[%s927 + $0x10] sm:$0xff]
        %v931 = vld [vmem:[%s927 + $0x18] sm:$0xff]
        %v932 = vld [vmem:[%s927 + $0x20] sm:$0xff]
        %v933 = vld [vmem:[%s927 + $0x28] sm:$0xff]
        %v934 = vld [vmem:[%s927 + $0x30] sm:$0xff]
        %v935 = vld [vmem:[%s927 + $0x38] sm:$0xff]
        %v936 = vld [vmem:[%s927 + $0x40] sm:$0xff]
        %v937 = vld [vmem:[%s927 + $0x48] sm:$0xff]
        %v938 = vld [vmem:[%s927 + $0x50] sm:$0xff]
        %v939 = vld [vmem:[%s927 + $0x58] sm:$0xff]
        %v940 = vld [vmem:[%s927 + $0x60] sm:$0xff]
        %v941 = vld [vmem:[%s927 + $0x68] sm:$0xff]
        %v942 = vld [vmem:[%s927 + $0x70] sm:$0xff]
        %v943 = vld [vmem:[%s927 + $0x78] sm:$0xff]
        %v944 = vmul.f32 %v806, %v894
        %v945 = vmul.f32 %v808, %v895
        %v946 = vmul.f32 %v811, %v896
        %v947 = vmul.f32 %v813, %v897
        %v948 = vmul.f32 %v816, %v898
        %v949 = vmul.f32 %v818, %v899
        %v950 = vmul.f32 %v821, %v900
        %v951 = vmul.f32 %v823, %v901
        %v952 = vmul.f32 %v826, %v902
        %v953 = vmul.f32 %v828, %v903
        %v954 = vmul.f32 %v831, %v904
        %v955 = vmul.f32 %v833, %v905
        %v956 = vmul.f32 %v836, %v906
        %v957 = vmul.f32 %v838, %v907
        %v958 = vmul.f32 %v841, %v908
        %v959 = vmul.f32 %v843, %v909
        %960 = vrot.lane.b32.xlu0 %v806, 16
        %v961 = vpop.permute.xlu0 %960
        %962 = vrot.lane.b32.xlu0 %v808, 16
        %v963 = vpop.permute.xlu0 %962
        %964 = vrot.lane.b32.xlu0 %v811, 16
        %v965 = vpop.permute.xlu0 %964
        %966 = vrot.lane.b32.xlu0 %v813, 16
        %v967 = vpop.permute.xlu0 %966
        %968 = vrot.lane.b32.xlu0 %v816, 16
        %v969 = vpop.permute.xlu0 %968
        %970 = vrot.lane.b32.xlu0 %v818, 16
        %v971 = vpop.permute.xlu0 %970
        %972 = vrot.lane.b32.xlu0 %v821, 16
        %v973 = vpop.permute.xlu0 %972
        %974 = vrot.lane.b32.xlu0 %v823, 16
        %v975 = vpop.permute.xlu0 %974
        %976 = vrot.lane.b32.xlu0 %v826, 16
        %v977 = vpop.permute.xlu0 %976
        %978 = vrot.lane.b32.xlu0 %v828, 16
        %v979 = vpop.permute.xlu0 %978
        %980 = vrot.lane.b32.xlu0 %v831, 16
        %v981 = vpop.permute.xlu0 %980
        %982 = vrot.lane.b32.xlu0 %v833, 16
        %v983 = vpop.permute.xlu0 %982
        %984 = vrot.lane.b32.xlu0 %v836, 16
        %v985 = vpop.permute.xlu0 %984
        %986 = vrot.lane.b32.xlu0 %v838, 16
        %v987 = vpop.permute.xlu0 %986
        %988 = vrot.lane.b32.xlu0 %v841, 16
        %v989 = vpop.permute.xlu0 %988
        %990 = vrot.lane.b32.xlu0 %v843, 16
        %v991 = vpop.permute.xlu0 %990
        %v992 = vmul.f32 %v961, %v911
        %v993 = vmul.f32 %v963, %v912
        %v994 = vmul.f32 %v965, %v913
        %v995 = vmul.f32 %v967, %v914
        %v996 = vmul.f32 %v969, %v915
        %v997 = vmul.f32 %v971, %v916
        %v998 = vmul.f32 %v973, %v917
        %v999 = vmul.f32 %v975, %v918
        %v1000 = vmul.f32 %v977, %v919
        %v1001 = vmul.f32 %v979, %v920
        %v1002 = vmul.f32 %v981, %v921
        %v1003 = vmul.f32 %v983, %v922
        %v1004 = vmul.f32 %v985, %v923
        %v1005 = vmul.f32 %v987, %v924
        %v1006 = vmul.f32 %v989, %v925
        %v1007 = vmul.f32 %v991, %v926
        %v1008 = vadd.f32 %v944, %v992
        %v1009 = vadd.f32 %v945, %v993
        %v1010 = vadd.f32 %v946, %v994
        %v1011 = vadd.f32 %v947, %v995
        %v1012 = vadd.f32 %v948, %v996
        %v1013 = vadd.f32 %v949, %v997
        %v1014 = vadd.f32 %v950, %v998
        %v1015 = vadd.f32 %v951, %v999
        %v1016 = vadd.f32 %v952, %v1000
        %v1017 = vadd.f32 %v953, %v1001
        %v1018 = vadd.f32 %v954, %v1002
        %v1019 = vadd.f32 %v955, %v1003
        %v1020 = vadd.f32 %v956, %v1004
        %v1021 = vadd.f32 %v957, %v1005
        %v1022 = vadd.f32 %v958, %v1006
        %v1023 = vadd.f32 %v959, %v1007
        %1024 = vrot.lane.b32.xlu0 %v806, 112
        %v1025 = vpop.permute.xlu0 %1024
        %1026 = vrot.lane.b32.xlu0 %v808, 112
        %v1027 = vpop.permute.xlu0 %1026
        %1028 = vrot.lane.b32.xlu0 %v811, 112
        %v1029 = vpop.permute.xlu0 %1028
        %1030 = vrot.lane.b32.xlu0 %v813, 112
        %v1031 = vpop.permute.xlu0 %1030
        %1032 = vrot.lane.b32.xlu0 %v816, 112
        %v1033 = vpop.permute.xlu0 %1032
        %1034 = vrot.lane.b32.xlu0 %v818, 112
        %v1035 = vpop.permute.xlu0 %1034
        %1036 = vrot.lane.b32.xlu0 %v821, 112
        %v1037 = vpop.permute.xlu0 %1036
        %1038 = vrot.lane.b32.xlu0 %v823, 112
        %v1039 = vpop.permute.xlu0 %1038
        %1040 = vrot.lane.b32.xlu0 %v826, 112
        %v1041 = vpop.permute.xlu0 %1040
        %1042 = vrot.lane.b32.xlu0 %v828, 112
        %v1043 = vpop.permute.xlu0 %1042
        %1044 = vrot.lane.b32.xlu0 %v831, 112
        %v1045 = vpop.permute.xlu0 %1044
        %1046 = vrot.lane.b32.xlu0 %v833, 112
        %v1047 = vpop.permute.xlu0 %1046
        %1048 = vrot.lane.b32.xlu0 %v836, 112
        %v1049 = vpop.permute.xlu0 %1048
        %1050 = vrot.lane.b32.xlu0 %v838, 112
        %v1051 = vpop.permute.xlu0 %1050
        %1052 = vrot.lane.b32.xlu0 %v841, 112
        %v1053 = vpop.permute.xlu0 %1052
        %1054 = vrot.lane.b32.xlu0 %v843, 112
        %v1055 = vpop.permute.xlu0 %1054
        %v1056 = vmul.f32 %v1025, %v928
        %v1057 = vmul.f32 %v1027, %v929
        %v1058 = vmul.f32 %v1029, %v930
        %v1059 = vmul.f32 %v1031, %v931
        %v1060 = vmul.f32 %v1033, %v932
        %v1061 = vmul.f32 %v1035, %v933
        %v1062 = vmul.f32 %v1037, %v934
        %v1063 = vmul.f32 %v1039, %v935
        %v1064 = vmul.f32 %v1041, %v936
        %v1065 = vmul.f32 %v1043, %v937
        %v1066 = vmul.f32 %v1045, %v938
        %v1067 = vmul.f32 %v1047, %v939
        %v1068 = vmul.f32 %v1049, %v940
        %v1069 = vmul.f32 %v1051, %v941
        %v1070 = vmul.f32 %v1053, %v942
        %v1071 = vmul.f32 %v1055, %v943
        %v1072 = vadd.f32 %v1008, %v1056
        %v1073 = vadd.f32 %v1009, %v1057
        %v1074 = vadd.f32 %v1010, %v1058
        %v1075 = vadd.f32 %v1011, %v1059
        %v1076 = vadd.f32 %v1012, %v1060
        %v1077 = vadd.f32 %v1013, %v1061
        %v1078 = vadd.f32 %v1014, %v1062
        %v1079 = vadd.f32 %v1015, %v1063
        %v1080 = vadd.f32 %v1016, %v1064
        %v1081 = vadd.f32 %v1017, %v1065
        %v1082 = vadd.f32 %v1018, %v1066
        %v1083 = vadd.f32 %v1019, %v1067
        %v1084 = vadd.f32 %v1020, %v1068
        %v1085 = vadd.f32 %v1021, %v1069
        %v1086 = vadd.f32 %v1022, %v1070
        %v1087 = vadd.f32 %v1023, %v1071
        %v1088 = vmul.f32 %v1072, 0.17677669
        %v1089 = vmul.f32 %v1073, 0.17677669
        %v1090 = vmul.f32 %v1074, 0.17677669
        %v1091 = vmul.f32 %v1075, 0.17677669
        %v1092 = vmul.f32 %v1076, 0.17677669
        %v1093 = vmul.f32 %v1077, 0.17677669
        %v1094 = vmul.f32 %v1078, 0.17677669
        %v1095 = vmul.f32 %v1079, 0.17677669
        %v1096 = vmul.f32 %v1080, 0.17677669
        %v1097 = vmul.f32 %v1081, 0.17677669
        %v1098 = vmul.f32 %v1082, 0.17677669
        %v1099 = vmul.f32 %v1083, 0.17677669
        %v1100 = vmul.f32 %v1084, 0.17677669
        %v1101 = vmul.f32 %v1085, 0.17677669
        %v1102 = vmul.f32 %v1086, 0.17677669
        %v1103 = vmul.f32 %v1087, 0.17677669
        %v1104 = vmul.f32 %v855, %v894
        %v1105 = vmul.f32 %v857, %v895
        %v1106 = vmul.f32 %v860, %v896
        %v1107 = vmul.f32 %v862, %v897
        %v1108 = vmul.f32 %v865, %v898
        %v1109 = vmul.f32 %v867, %v899
        %v1110 = vmul.f32 %v870, %v900
        %v1111 = vmul.f32 %v872, %v901
        %v1112 = vmul.f32 %v875, %v902
        %v1113 = vmul.f32 %v877, %v903
        %v1114 = vmul.f32 %v880, %v904
        %v1115 = vmul.f32 %v882, %v905
        %v1116 = vmul.f32 %v885, %v906
        %v1117 = vmul.f32 %v887, %v907
        %v1118 = vmul.f32 %v890, %v908
        %v1119 = vmul.f32 %v892, %v909
        %vm1120 = vcmask 1048064
        %1121 = vrot.lane.b32.xlu0 %v855, 64
        %v1122 = vpop.permute.xlu0 %1121
        %v1123 = vsel %vm1120, %v1122, %v855
        %1124 = vrot.lane.b32.xlu0 %v857, 64
        %v1125 = vpop.permute.xlu0 %1124
        %v1126 = vsel %vm1120, %v1125, %v857
        %1127 = vrot.lane.b32.xlu0 %v860, 64
        %v1128 = vpop.permute.xlu0 %1127
        %v1129 = vsel %vm1120, %v1128, %v860
        %1130 = vrot.lane.b32.xlu0 %v862, 64
        %v1131 = vpop.permute.xlu0 %1130
        %v1132 = vsel %vm1120, %v1131, %v862
        %1133 = vrot.lane.b32.xlu0 %v865, 64
        %v1134 = vpop.permute.xlu0 %1133
        %v1135 = vsel %vm1120, %v1134, %v865
        %1136 = vrot.lane.b32.xlu0 %v867, 64
        %v1137 = vpop.permute.xlu0 %1136
        %v1138 = vsel %vm1120, %v1137, %v867
        %1139 = vrot.lane.b32.xlu0 %v870, 64
        %v1140 = vpop.permute.xlu0 %1139
        %v1141 = vsel %vm1120, %v1140, %v870
        %1142 = vrot.lane.b32.xlu0 %v872, 64
        %v1143 = vpop.permute.xlu0 %1142
        %v1144 = vsel %vm1120, %v1143, %v872
        %1145 = vrot.lane.b32.xlu0 %v875, 64
        %v1146 = vpop.permute.xlu0 %1145
        %v1147 = vsel %vm1120, %v1146, %v875
        %1148 = vrot.lane.b32.xlu0 %v877, 64
        %v1149 = vpop.permute.xlu0 %1148
        %v1150 = vsel %vm1120, %v1149, %v877
        %1151 = vrot.lane.b32.xlu0 %v880, 64
        %v1152 = vpop.permute.xlu0 %1151
        %v1153 = vsel %vm1120, %v1152, %v880
        %1154 = vrot.lane.b32.xlu0 %v882, 64
        %v1155 = vpop.permute.xlu0 %1154
        %v1156 = vsel %vm1120, %v1155, %v882
        %1157 = vrot.lane.b32.xlu0 %v885, 64
        %v1158 = vpop.permute.xlu0 %1157
        %v1159 = vsel %vm1120, %v1158, %v885
        %1160 = vrot.lane.b32.xlu0 %v887, 64
        %v1161 = vpop.permute.xlu0 %1160
        %v1162 = vsel %vm1120, %v1161, %v887
        %1163 = vrot.lane.b32.xlu0 %v890, 64
        %v1164 = vpop.permute.xlu0 %1163
        %v1165 = vsel %vm1120, %v1164, %v890
        %1166 = vrot.lane.b32.xlu0 %v892, 64
        %v1167 = vpop.permute.xlu0 %1166
        %v1168 = vsel %vm1120, %v1167, %v892
        %1169 = vrot.lane.b32.xlu0 %v1123, 64
        %v1170 = vpop.permute.xlu0 %1169
        %1171 = vrot.lane.b32.xlu0 %v1126, 64
        %v1172 = vpop.permute.xlu0 %1171
        %1173 = vrot.lane.b32.xlu0 %v1129, 64
        %v1174 = vpop.permute.xlu0 %1173
        %1175 = vrot.lane.b32.xlu0 %v1132, 64
        %v1176 = vpop.permute.xlu0 %1175
        %1177 = vrot.lane.b32.xlu0 %v1135, 64
        %v1178 = vpop.permute.xlu0 %1177
        %1179 = vrot.lane.b32.xlu0 %v1138, 64
        %v1180 = vpop.permute.xlu0 %1179
        %1181 = vrot.lane.b32.xlu0 %v1141, 64
        %v1182 = vpop.permute.xlu0 %1181
        %1183 = vrot.lane.b32.xlu0 %v1144, 64
        %v1184 = vpop.permute.xlu0 %1183
        %1185 = vrot.lane.b32.xlu0 %v1147, 64
        %v1186 = vpop.permute.xlu0 %1185
        %1187 = vrot.lane.b32.xlu0 %v1150, 64
        %v1188 = vpop.permute.xlu0 %1187
        %1189 = vrot.lane.b32.xlu0 %v1153, 64
        %v1190 = vpop.permute.xlu0 %1189
        %1191 = vrot.lane.b32.xlu0 %v1156, 64
        %v1192 = vpop.permute.xlu0 %1191
        %1193 = vrot.lane.b32.xlu0 %v1159, 64
        %v1194 = vpop.permute.xlu0 %1193
        %1195 = vrot.lane.b32.xlu0 %v1162, 64
        %v1196 = vpop.permute.xlu0 %1195
        %1197 = vrot.lane.b32.xlu0 %v1165, 64
        %v1198 = vpop.permute.xlu0 %1197
        %1199 = vrot.lane.b32.xlu0 %v1168, 64
        %v1200 = vpop.permute.xlu0 %1199
        %v1201 = vsel %vm1120, %v1170, %v855
        %v1202 = vsel %vm1120, %v1172, %v857
        %v1203 = vsel %vm1120, %v1174, %v860
        %v1204 = vsel %vm1120, %v1176, %v862
        %v1205 = vsel %vm1120, %v1178, %v865
        %v1206 = vsel %vm1120, %v1180, %v867
        %v1207 = vsel %vm1120, %v1182, %v870
        %v1208 = vsel %vm1120, %v1184, %v872
        %v1209 = vsel %vm1120, %v1186, %v875
        %v1210 = vsel %vm1120, %v1188, %v877
        %v1211 = vsel %vm1120, %v1190, %v880
        %v1212 = vsel %vm1120, %v1192, %v882
        %v1213 = vsel %vm1120, %v1194, %v885
        %v1214 = vsel %vm1120, %v1196, %v887
        %v1215 = vsel %vm1120, %v1198, %v890
        %v1216 = vsel %vm1120, %v1200, %v892
        %1233 = vrot.lane.b32.xlu0 %v911, 48
        %v1234 = vpop.permute.xlu0 %1233
        %1235 = vrot.lane.b32.xlu0 %v912, 48
        %v1236 = vpop.permute.xlu0 %1235
        %1237 = vrot.lane.b32.xlu0 %v913, 48
        %v1238 = vpop.permute.xlu0 %1237
        %1239 = vrot.lane.b32.xlu0 %v914, 48
        %v1240 = vpop.permute.xlu0 %1239
        %1241 = vrot.lane.b32.xlu0 %v915, 48
        %v1242 = vpop.permute.xlu0 %1241
        %1243 = vrot.lane.b32.xlu0 %v916, 48
        %v1244 = vpop.permute.xlu0 %1243
        %1245 = vrot.lane.b32.xlu0 %v917, 48
        %v1246 = vpop.permute.xlu0 %1245
        %1247 = vrot.lane.b32.xlu0 %v918, 48
        %v1248 = vpop.permute.xlu0 %1247
        %1249 = vrot.lane.b32.xlu0 %v919, 48
        %v1250 = vpop.permute.xlu0 %1249
        %1251 = vrot.lane.b32.xlu0 %v920, 48
        %v1252 = vpop.permute.xlu0 %1251
        %1253 = vrot.lane.b32.xlu0 %v921, 48
        %v1254 = vpop.permute.xlu0 %1253
        %1255 = vrot.lane.b32.xlu0 %v922, 48
        %v1256 = vpop.permute.xlu0 %1255
        %1257 = vrot.lane.b32.xlu0 %v923, 48
        %v1258 = vpop.permute.xlu0 %1257
        %1259 = vrot.lane.b32.xlu0 %v924, 48
        %v1260 = vpop.permute.xlu0 %1259
        %1261 = vrot.lane.b32.xlu0 %v925, 48
        %v1262 = vpop.permute.xlu0 %1261
        %1263 = vrot.lane.b32.xlu0 %v926, 48
        %v1264 = vpop.permute.xlu0 %1263
        %v1281 = vmul.f32 %v1201, %v1234
        %v1282 = vmul.f32 %v1202, %v1236
        %v1283 = vmul.f32 %v1203, %v1238
        %v1284 = vmul.f32 %v1204, %v1240
        %v1285 = vmul.f32 %v1205, %v1242
        %v1286 = vmul.f32 %v1206, %v1244
        %v1287 = vmul.f32 %v1207, %v1246
        %v1288 = vmul.f32 %v1208, %v1248
        %v1289 = vmul.f32 %v1209, %v1250
        %v1290 = vmul.f32 %v1210, %v1252
        %v1291 = vmul.f32 %v1211, %v1254
        %v1292 = vmul.f32 %v1212, %v1256
        %v1293 = vmul.f32 %v1213, %v1258
        %v1294 = vmul.f32 %v1214, %v1260
        %v1295 = vmul.f32 %v1215, %v1262
        %v1296 = vmul.f32 %v1216, %v1264
        %1313 = vrot.lane.b32.xlu0 %v1281, 80
        %v1314 = vpop.permute.xlu0 %1313
        %1315 = vrot.lane.b32.xlu0 %v1282, 80
        %v1316 = vpop.permute.xlu0 %1315
        %1317 = vrot.lane.b32.xlu0 %v1283, 80
        %v1318 = vpop.permute.xlu0 %1317
        %1319 = vrot.lane.b32.xlu0 %v1284, 80
        %v1320 = vpop.permute.xlu0 %1319
        %1321 = vrot.lane.b32.xlu0 %v1285, 80
        %v1322 = vpop.permute.xlu0 %1321
        %1323 = vrot.lane.b32.xlu0 %v1286, 80
        %v1324 = vpop.permute.xlu0 %1323
        %1325 = vrot.lane.b32.xlu0 %v1287, 80
        %v1326 = vpop.permute.xlu0 %1325
        %1327 = vrot.lane.b32.xlu0 %v1288, 80
        %v1328 = vpop.permute.xlu0 %1327
        %1329 = vrot.lane.b32.xlu0 %v1289, 80
        %v1330 = vpop.permute.xlu0 %1329
        %1331 = vrot.lane.b32.xlu0 %v1290, 80
        %v1332 = vpop.permute.xlu0 %1331
        %1333 = vrot.lane.b32.xlu0 %v1291, 80
        %v1334 = vpop.permute.xlu0 %1333
        %1335 = vrot.lane.b32.xlu0 %v1292, 80
        %v1336 = vpop.permute.xlu0 %1335
        %1337 = vrot.lane.b32.xlu0 %v1293, 80
        %v1338 = vpop.permute.xlu0 %1337
        %1339 = vrot.lane.b32.xlu0 %v1294, 80
        %v1340 = vpop.permute.xlu0 %1339
        %1341 = vrot.lane.b32.xlu0 %v1295, 80
        %v1342 = vpop.permute.xlu0 %1341
        %1343 = vrot.lane.b32.xlu0 %v1296, 80
        %v1344 = vpop.permute.xlu0 %1343
        %v1361 = vadd.f32 %v1104, %v1314
        %v1362 = vadd.f32 %v1105, %v1316
        %v1363 = vadd.f32 %v1106, %v1318
        %v1364 = vadd.f32 %v1107, %v1320
        %v1365 = vadd.f32 %v1108, %v1322
        %v1366 = vadd.f32 %v1109, %v1324
        %v1367 = vadd.f32 %v1110, %v1326
        %v1368 = vadd.f32 %v1111, %v1328
        %v1369 = vadd.f32 %v1112, %v1330
        %v1370 = vadd.f32 %v1113, %v1332
        %v1371 = vadd.f32 %v1114, %v1334
        %v1372 = vadd.f32 %v1115, %v1336
        %v1373 = vadd.f32 %v1116, %v1338
        %v1374 = vadd.f32 %v1117, %v1340
        %v1375 = vadd.f32 %v1118, %v1342
        %v1376 = vadd.f32 %v1119, %v1344
        %1393 = vrot.lane.b32.xlu0 %v928, 16
        %v1394 = vpop.permute.xlu0 %1393
        %1395 = vrot.lane.b32.xlu0 %v929, 16
        %v1396 = vpop.permute.xlu0 %1395
        %1397 = vrot.lane.b32.xlu0 %v930, 16
        %v1398 = vpop.permute.xlu0 %1397
        %1399 = vrot.lane.b32.xlu0 %v931, 16
        %v1400 = vpop.permute.xlu0 %1399
        %1401 = vrot.lane.b32.xlu0 %v932, 16
        %v1402 = vpop.permute.xlu0 %1401
        %1403 = vrot.lane.b32.xlu0 %v933, 16
        %v1404 = vpop.permute.xlu0 %1403
        %1405 = vrot.lane.b32.xlu0 %v934, 16
        %v1406 = vpop.permute.xlu0 %1405
        %1407 = vrot.lane.b32.xlu0 %v935, 16
        %v1408 = vpop.permute.xlu0 %1407
        %1409 = vrot.lane.b32.xlu0 %v936, 16
        %v1410 = vpop.permute.xlu0 %1409
        %1411 = vrot.lane.b32.xlu0 %v937, 16
        %v1412 = vpop.permute.xlu0 %1411
        %1413 = vrot.lane.b32.xlu0 %v938, 16
        %v1414 = vpop.permute.xlu0 %1413
        %1415 = vrot.lane.b32.xlu0 %v939, 16
        %v1416 = vpop.permute.xlu0 %1415
        %1417 = vrot.lane.b32.xlu0 %v940, 16
        %v1418 = vpop.permute.xlu0 %1417
        %1419 = vrot.lane.b32.xlu0 %v941, 16
        %v1420 = vpop.permute.xlu0 %1419
        %1421 = vrot.lane.b32.xlu0 %v942, 16
        %v1422 = vpop.permute.xlu0 %1421
        %1423 = vrot.lane.b32.xlu0 %v943, 16
        %v1424 = vpop.permute.xlu0 %1423
        %v1441 = vmul.f32 %v1201, %v1394
        %v1442 = vmul.f32 %v1202, %v1396
        %v1443 = vmul.f32 %v1203, %v1398
        %v1444 = vmul.f32 %v1204, %v1400
        %v1445 = vmul.f32 %v1205, %v1402
        %v1446 = vmul.f32 %v1206, %v1404
        %v1447 = vmul.f32 %v1207, %v1406
        %v1448 = vmul.f32 %v1208, %v1408
        %v1449 = vmul.f32 %v1209, %v1410
        %v1450 = vmul.f32 %v1210, %v1412
        %v1451 = vmul.f32 %v1211, %v1414
        %v1452 = vmul.f32 %v1212, %v1416
        %v1453 = vmul.f32 %v1213, %v1418
        %v1454 = vmul.f32 %v1214, %v1420
        %v1455 = vmul.f32 %v1215, %v1422
        %v1456 = vmul.f32 %v1216, %v1424
        %1473 = vrot.lane.b32.xlu0 %v1441, 112
        %v1474 = vpop.permute.xlu0 %1473
        %1475 = vrot.lane.b32.xlu0 %v1442, 112
        %v1476 = vpop.permute.xlu0 %1475
        %1477 = vrot.lane.b32.xlu0 %v1443, 112
        %v1478 = vpop.permute.xlu0 %1477
        %1479 = vrot.lane.b32.xlu0 %v1444, 112
        %v1480 = vpop.permute.xlu0 %1479
        %1481 = vrot.lane.b32.xlu0 %v1445, 112
        %v1482 = vpop.permute.xlu0 %1481
        %1483 = vrot.lane.b32.xlu0 %v1446, 112
        %v1484 = vpop.permute.xlu0 %1483
        %1485 = vrot.lane.b32.xlu0 %v1447, 112
        %v1486 = vpop.permute.xlu0 %1485
        %1487 = vrot.lane.b32.xlu0 %v1448, 112
        %v1488 = vpop.permute.xlu0 %1487
        %1489 = vrot.lane.b32.xlu0 %v1449, 112
        %v1490 = vpop.permute.xlu0 %1489
        %1491 = vrot.lane.b32.xlu0 %v1450, 112
        %v1492 = vpop.permute.xlu0 %1491
        %1493 = vrot.lane.b32.xlu0 %v1451, 112
        %v1494 = vpop.permute.xlu0 %1493
        %1495 = vrot.lane.b32.xlu0 %v1452, 112
        %v1496 = vpop.permute.xlu0 %1495
        %1497 = vrot.lane.b32.xlu0 %v1453, 112
        %v1498 = vpop.permute.xlu0 %1497
        %1499 = vrot.lane.b32.xlu0 %v1454, 112
        %v1500 = vpop.permute.xlu0 %1499
        %1501 = vrot.lane.b32.xlu0 %v1455, 112
        %v1502 = vpop.permute.xlu0 %1501
        %1503 = vrot.lane.b32.xlu0 %v1456, 112
        %v1504 = vpop.permute.xlu0 %1503
        %v1521 = vadd.f32 %v1361, %v1474
        %v1522 = vadd.f32 %v1362, %v1476
        %v1523 = vadd.f32 %v1363, %v1478
        %v1524 = vadd.f32 %v1364, %v1480
        %v1525 = vadd.f32 %v1365, %v1482
        %v1526 = vadd.f32 %v1366, %v1484
        %v1527 = vadd.f32 %v1367, %v1486
        %v1528 = vadd.f32 %v1368, %v1488
        %v1529 = vadd.f32 %v1369, %v1490
        %v1530 = vadd.f32 %v1370, %v1492
        %v1531 = vadd.f32 %v1371, %v1494
        %v1532 = vadd.f32 %v1372, %v1496
        %v1533 = vadd.f32 %v1373, %v1498
        %v1534 = vadd.f32 %v1374, %v1500
        %v1535 = vadd.f32 %v1375, %v1502
        %v1536 = vadd.f32 %v1376, %v1504
        %v1537 = vpack.c.bf16 %v1088, %v1088
        %v1538 = vpack.c.bf16 %v1089, %v1089
        %v1539 = vpack.c.bf16 %v1090, %v1090
        %v1540 = vpack.c.bf16 %v1091, %v1091
        %v1541 = vpack.c.bf16 %v1092, %v1092
        %v1542 = vpack.c.bf16 %v1093, %v1093
        %v1543 = vpack.c.bf16 %v1094, %v1094
        %v1544 = vpack.c.bf16 %v1095, %v1095
        %v1545 = vpack.c.bf16 %v1096, %v1096
        %v1546 = vpack.c.bf16 %v1097, %v1097
        %v1547 = vpack.c.bf16 %v1098, %v1098
        %v1548 = vpack.c.bf16 %v1099, %v1099
        %v1549 = vpack.c.bf16 %v1100, %v1100
        %v1550 = vpack.c.bf16 %v1101, %v1101
        %v1551 = vpack.c.bf16 %v1102, %v1102
        %v1552 = vpack.c.bf16 %v1103, %v1103
        %v1553 = vpack.c.bf16 %v1521, %v1521
        %v1554 = vpack.c.bf16 %v1522, %v1522
        %v1555 = vpack.c.bf16 %v1523, %v1523
        %v1556 = vpack.c.bf16 %v1524, %v1524
        %v1557 = vpack.c.bf16 %v1525, %v1525
        %v1558 = vpack.c.bf16 %v1526, %v1526
        %v1559 = vpack.c.bf16 %v1527, %v1527
        %v1560 = vpack.c.bf16 %v1528, %v1528
        %v1561 = vpack.c.bf16 %v1529, %v1529
        %v1562 = vpack.c.bf16 %v1530, %v1530
        %v1563 = vpack.c.bf16 %v1531, %v1531
        %v1564 = vpack.c.bf16 %v1532, %v1532
        %v1565 = vpack.c.bf16 %v1533, %v1533
        %v1566 = vpack.c.bf16 %v1534, %v1534
        %v1567 = vpack.c.bf16 %v1535, %v1535
        %v1568 = vpack.c.bf16 %v1536, %v1536
        %v1569 = vpack.c.bf16 %v855, %v855
        %v1570 = vpack.c.bf16 %v857, %v857
        %v1571 = vpack.c.bf16 %v860, %v860
        %v1572 = vpack.c.bf16 %v862, %v862
        %v1573 = vpack.c.bf16 %v865, %v865
        %v1574 = vpack.c.bf16 %v867, %v867
        %v1575 = vpack.c.bf16 %v870, %v870
        %v1576 = vpack.c.bf16 %v872, %v872
        %v1577 = vpack.c.bf16 %v875, %v875
        %v1578 = vpack.c.bf16 %v877, %v877
        %v1579 = vpack.c.bf16 %v880, %v880
        %v1580 = vpack.c.bf16 %v882, %v882
        %v1581 = vpack.c.bf16 %v885, %v885
        %v1582 = vpack.c.bf16 %v887, %v887
        %v1583 = vpack.c.bf16 %v890, %v890
        %v1584 = vpack.c.bf16 %v892, %v892
        %1601 = vrot.lane.b32.xlu0 %v1537, 96
        %v1602 = vpop.permute.xlu0 %1601
        %1603 = vrot.lane.b32.xlu0 %v1538, 96
        %v1604 = vpop.permute.xlu0 %1603
        %1605 = vrot.lane.b32.xlu0 %v1539, 96
        %v1606 = vpop.permute.xlu0 %1605
        %1607 = vrot.lane.b32.xlu0 %v1540, 96
        %v1608 = vpop.permute.xlu0 %1607
        %1609 = vrot.lane.b32.xlu0 %v1541, 96
        %v1610 = vpop.permute.xlu0 %1609
        %1611 = vrot.lane.b32.xlu0 %v1542, 96
        %v1612 = vpop.permute.xlu0 %1611
        %1613 = vrot.lane.b32.xlu0 %v1543, 96
        %v1614 = vpop.permute.xlu0 %1613
        %1615 = vrot.lane.b32.xlu0 %v1544, 96
        %v1616 = vpop.permute.xlu0 %1615
        %1617 = vrot.lane.b32.xlu0 %v1545, 96
        %v1618 = vpop.permute.xlu0 %1617
        %1619 = vrot.lane.b32.xlu0 %v1546, 96
        %v1620 = vpop.permute.xlu0 %1619
        %1621 = vrot.lane.b32.xlu0 %v1547, 96
        %v1622 = vpop.permute.xlu0 %1621
        %1623 = vrot.lane.b32.xlu0 %v1548, 96
        %v1624 = vpop.permute.xlu0 %1623
        %1625 = vrot.lane.b32.xlu0 %v1549, 96
        %v1626 = vpop.permute.xlu0 %1625
        %1627 = vrot.lane.b32.xlu0 %v1550, 96
        %v1628 = vpop.permute.xlu0 %1627
        %1629 = vrot.lane.b32.xlu0 %v1551, 96
        %v1630 = vpop.permute.xlu0 %1629
        %1631 = vrot.lane.b32.xlu0 %v1552, 96
        %v1632 = vpop.permute.xlu0 %1631
        %1633 = vrot.lane.b32.xlu0 %v1537, 64
        %v1634 = vpop.permute.xlu0 %1633
        %1635 = vrot.lane.b32.xlu0 %v1538, 64
        %v1636 = vpop.permute.xlu0 %1635
        %1637 = vrot.lane.b32.xlu0 %v1539, 64
        %v1638 = vpop.permute.xlu0 %1637
        %1639 = vrot.lane.b32.xlu0 %v1540, 64
        %v1640 = vpop.permute.xlu0 %1639
        %1641 = vrot.lane.b32.xlu0 %v1541, 64
        %v1642 = vpop.permute.xlu0 %1641
        %1643 = vrot.lane.b32.xlu0 %v1542, 64
        %v1644 = vpop.permute.xlu0 %1643
        %1645 = vrot.lane.b32.xlu0 %v1543, 64
        %v1646 = vpop.permute.xlu0 %1645
        %1647 = vrot.lane.b32.xlu0 %v1544, 64
        %v1648 = vpop.permute.xlu0 %1647
        %1649 = vrot.lane.b32.xlu0 %v1545, 64
        %v1650 = vpop.permute.xlu0 %1649
        %1651 = vrot.lane.b32.xlu0 %v1546, 64
        %v1652 = vpop.permute.xlu0 %1651
        %1653 = vrot.lane.b32.xlu0 %v1547, 64
        %v1654 = vpop.permute.xlu0 %1653
        %1655 = vrot.lane.b32.xlu0 %v1548, 64
        %v1656 = vpop.permute.xlu0 %1655
        %1657 = vrot.lane.b32.xlu0 %v1549, 64
        %v1658 = vpop.permute.xlu0 %1657
        %1659 = vrot.lane.b32.xlu0 %v1550, 64
        %v1660 = vpop.permute.xlu0 %1659
        %1661 = vrot.lane.b32.xlu0 %v1551, 64
        %v1662 = vpop.permute.xlu0 %1661
        %1663 = vrot.lane.b32.xlu0 %v1552, 64
        %v1664 = vpop.permute.xlu0 %1663
        %1665 = vrot.lane.b32.xlu0 %v1537, 32
        %v1666 = vpop.permute.xlu0 %1665
        %1667 = vrot.lane.b32.xlu0 %v1538, 32
        %v1668 = vpop.permute.xlu0 %1667
        %1669 = vrot.lane.b32.xlu0 %v1539, 32
        %v1670 = vpop.permute.xlu0 %1669
        %1671 = vrot.lane.b32.xlu0 %v1540, 32
        %v1672 = vpop.permute.xlu0 %1671
        %1673 = vrot.lane.b32.xlu0 %v1541, 32
        %v1674 = vpop.permute.xlu0 %1673
        %1675 = vrot.lane.b32.xlu0 %v1542, 32
        %v1676 = vpop.permute.xlu0 %1675
        %1677 = vrot.lane.b32.xlu0 %v1543, 32
        %v1678 = vpop.permute.xlu0 %1677
        %1679 = vrot.lane.b32.xlu0 %v1544, 32
        %v1680 = vpop.permute.xlu0 %1679
        %1681 = vrot.lane.b32.xlu0 %v1545, 32
        %v1682 = vpop.permute.xlu0 %1681
        %1683 = vrot.lane.b32.xlu0 %v1546, 32
        %v1684 = vpop.permute.xlu0 %1683
        %1685 = vrot.lane.b32.xlu0 %v1547, 32
        %v1686 = vpop.permute.xlu0 %1685
        %1687 = vrot.lane.b32.xlu0 %v1548, 32
        %v1688 = vpop.permute.xlu0 %1687
        %1689 = vrot.lane.b32.xlu0 %v1549, 32
        %v1690 = vpop.permute.xlu0 %1689
        %1691 = vrot.lane.b32.xlu0 %v1550, 32
        %v1692 = vpop.permute.xlu0 %1691
        %1693 = vrot.lane.b32.xlu0 %v1551, 32
        %v1694 = vpop.permute.xlu0 %1693
        %1695 = vrot.lane.b32.xlu0 %v1552, 32
        %v1696 = vpop.permute.xlu0 %1695
        %v1699 = vpack.i.b16 %v1602, %v1537
        %v1700 = vshrl.u32 %v1537, 16
        %v1701 = vshrl.u32 %v1602, 16
        %v1702 = vpack.i.b16 %v1701, %v1700
        %v1705 = vpack.i.b16 %v1666, %v1634
        %v1706 = vshrl.u32 %v1634, 16
        %v1707 = vshrl.u32 %v1666, 16
        %v1708 = vpack.i.b16 %v1707, %v1706
        %v1711 = vpack.i.b16 %v1604, %v1538
        %v1712 = vshrl.u32 %v1538, 16
        %v1713 = vshrl.u32 %v1604, 16
        %v1714 = vpack.i.b16 %v1713, %v1712
        %v1717 = vpack.i.b16 %v1668, %v1636
        %v1718 = vshrl.u32 %v1636, 16
        %v1719 = vshrl.u32 %v1668, 16
        %v1720 = vpack.i.b16 %v1719, %v1718
        %v1723 = vpack.i.b16 %v1606, %v1539
        %v1724 = vshrl.u32 %v1539, 16
        %v1725 = vshrl.u32 %v1606, 16
        %v1726 = vpack.i.b16 %v1725, %v1724
        %v1729 = vpack.i.b16 %v1670, %v1638
        %v1730 = vshrl.u32 %v1638, 16
        %v1731 = vshrl.u32 %v1670, 16
        %v1732 = vpack.i.b16 %v1731, %v1730
        %v1735 = vpack.i.b16 %v1608, %v1540
        %v1736 = vshrl.u32 %v1540, 16
        %v1737 = vshrl.u32 %v1608, 16
        %v1738 = vpack.i.b16 %v1737, %v1736
        %v1741 = vpack.i.b16 %v1672, %v1640
        %v1742 = vshrl.u32 %v1640, 16
        %v1743 = vshrl.u32 %v1672, 16
        %v1744 = vpack.i.b16 %v1743, %v1742
        %v1747 = vpack.i.b16 %v1610, %v1541
        %v1748 = vshrl.u32 %v1541, 16
        %v1749 = vshrl.u32 %v1610, 16
        %v1750 = vpack.i.b16 %v1749, %v1748
        %v1753 = vpack.i.b16 %v1674, %v1642
        %v1754 = vshrl.u32 %v1642, 16
        %v1755 = vshrl.u32 %v1674, 16
        %v1756 = vpack.i.b16 %v1755, %v1754
        %v1759 = vpack.i.b16 %v1612, %v1542
        %v1760 = vshrl.u32 %v1542, 16
        %v1761 = vshrl.u32 %v1612, 16
        %v1762 = vpack.i.b16 %v1761, %v1760
        %v1765 = vpack.i.b16 %v1676, %v1644
        %v1766 = vshrl.u32 %v1644, 16
        %v1767 = vshrl.u32 %v1676, 16
        %v1768 = vpack.i.b16 %v1767, %v1766
        %v1771 = vpack.i.b16 %v1614, %v1543
        %v1772 = vshrl.u32 %v1543, 16
        %v1773 = vshrl.u32 %v1614, 16
        %v1774 = vpack.i.b16 %v1773, %v1772
        %v1777 = vpack.i.b16 %v1678, %v1646
        %v1778 = vshrl.u32 %v1646, 16
        %v1779 = vshrl.u32 %v1678, 16
        %v1780 = vpack.i.b16 %v1779, %v1778
        %v1783 = vpack.i.b16 %v1616, %v1544
        %v1784 = vshrl.u32 %v1544, 16
        %v1785 = vshrl.u32 %v1616, 16
        %v1786 = vpack.i.b16 %v1785, %v1784
        %v1789 = vpack.i.b16 %v1680, %v1648
        %v1790 = vshrl.u32 %v1648, 16
        %v1791 = vshrl.u32 %v1680, 16
        %v1792 = vpack.i.b16 %v1791, %v1790
        %v1795 = vpack.i.b16 %v1618, %v1545
        %v1796 = vshrl.u32 %v1545, 16
        %v1797 = vshrl.u32 %v1618, 16
        %v1798 = vpack.i.b16 %v1797, %v1796
        %v1801 = vpack.i.b16 %v1682, %v1650
        %v1802 = vshrl.u32 %v1650, 16
        %v1803 = vshrl.u32 %v1682, 16
        %v1804 = vpack.i.b16 %v1803, %v1802
        %v1807 = vpack.i.b16 %v1620, %v1546
        %v1808 = vshrl.u32 %v1546, 16
        %v1809 = vshrl.u32 %v1620, 16
        %v1810 = vpack.i.b16 %v1809, %v1808
        %v1813 = vpack.i.b16 %v1684, %v1652
        %v1814 = vshrl.u32 %v1652, 16
        %v1815 = vshrl.u32 %v1684, 16
        %v1816 = vpack.i.b16 %v1815, %v1814
        %v1819 = vpack.i.b16 %v1622, %v1547
        %v1820 = vshrl.u32 %v1547, 16
        %v1821 = vshrl.u32 %v1622, 16
        %v1822 = vpack.i.b16 %v1821, %v1820
        %v1825 = vpack.i.b16 %v1686, %v1654
        %v1826 = vshrl.u32 %v1654, 16
        %v1827 = vshrl.u32 %v1686, 16
        %v1828 = vpack.i.b16 %v1827, %v1826
        %v1831 = vpack.i.b16 %v1624, %v1548
        %v1832 = vshrl.u32 %v1548, 16
        %v1833 = vshrl.u32 %v1624, 16
        %v1834 = vpack.i.b16 %v1833, %v1832
        %v1837 = vpack.i.b16 %v1688, %v1656
        %v1838 = vshrl.u32 %v1656, 16
        %v1839 = vshrl.u32 %v1688, 16
        %v1840 = vpack.i.b16 %v1839, %v1838
        %v1843 = vpack.i.b16 %v1626, %v1549
        %v1844 = vshrl.u32 %v1549, 16
        %v1845 = vshrl.u32 %v1626, 16
        %v1846 = vpack.i.b16 %v1845, %v1844
        %v1849 = vpack.i.b16 %v1690, %v1658
        %v1850 = vshrl.u32 %v1658, 16
        %v1851 = vshrl.u32 %v1690, 16
        %v1852 = vpack.i.b16 %v1851, %v1850
        %v1855 = vpack.i.b16 %v1628, %v1550
        %v1856 = vshrl.u32 %v1550, 16
        %v1857 = vshrl.u32 %v1628, 16
        %v1858 = vpack.i.b16 %v1857, %v1856
        %v1861 = vpack.i.b16 %v1692, %v1660
        %v1862 = vshrl.u32 %v1660, 16
        %v1863 = vshrl.u32 %v1692, 16
        %v1864 = vpack.i.b16 %v1863, %v1862
        %v1867 = vpack.i.b16 %v1630, %v1551
        %v1868 = vshrl.u32 %v1551, 16
        %v1869 = vshrl.u32 %v1630, 16
        %v1870 = vpack.i.b16 %v1869, %v1868
        %v1873 = vpack.i.b16 %v1694, %v1662
        %v1874 = vshrl.u32 %v1662, 16
        %v1875 = vshrl.u32 %v1694, 16
        %v1876 = vpack.i.b16 %v1875, %v1874
        %v1879 = vpack.i.b16 %v1632, %v1552
        %v1880 = vshrl.u32 %v1552, 16
        %v1881 = vshrl.u32 %v1632, 16
        %v1882 = vpack.i.b16 %v1881, %v1880
        %v1885 = vpack.i.b16 %v1696, %v1664
        %v1886 = vshrl.u32 %v1664, 16
        %v1887 = vshrl.u32 %v1696, 16
        %v1888 = vpack.i.b16 %v1887, %v1886
        %v1891 = vunpack.c.l.s4 1983009808
        %v1892 = vunpack.c.0.s8 %v1891
        %v1893 = vperm.slane %v1699, %v1892
        %v1896 = vunpack.c.l.s4 1983009808
        %v1897 = vunpack.c.0.s8 %v1896
        %v1898 = vperm.slane %v1705, %v1897
        %v1899 = vrot.slane %v1898, 4
        %vm1900 = vcmask 1047556
        %v1901 = vsel %vm1900, %v1899, %v1893
        %v1902 = vrot.slane %v1893, 4
        %v1903 = vsel %vm1900, %v1898, %v1902
        %v1905 = vunpack.c.l.s4 1934713408
        %v1906 = vunpack.c.0.s8 %v1905
        %v1907 = vperm.slane %v1901, %v1906
        %v1909 = vunpack.c.l.s4 1934713408
        %v1910 = vunpack.c.0.s8 %v1909
        %v1911 = vperm.slane %v1903, %v1910
        %v1912 = vrot.slane %v1907, 4
        %v1913 = vsel %vm1900, 0, %v1912
        %v1914 = vrot.slane %v1911, 4
        %v1915 = vsel %vm1900, 0, %v1914
        %v1918 = vunpack.c.l.s4 1983009808
        %v1919 = vunpack.c.0.s8 %v1918
        %v1920 = vperm.slane %v1702, %v1919
        %v1923 = vunpack.c.l.s4 1983009808
        %v1924 = vunpack.c.0.s8 %v1923
        %v1925 = vperm.slane %v1708, %v1924
        %v1926 = vrot.slane %v1925, 4
        %v1927 = vsel %vm1900, %v1926, %v1920
        %v1928 = vrot.slane %v1920, 4
        %v1929 = vsel %vm1900, %v1925, %v1928
        %v1931 = vunpack.c.l.s4 1934713408
        %v1932 = vunpack.c.0.s8 %v1931
        %v1933 = vperm.slane %v1927, %v1932
        %v1935 = vunpack.c.l.s4 1934713408
        %v1936 = vunpack.c.0.s8 %v1935
        %v1937 = vperm.slane %v1929, %v1936
        %v1938 = vrot.slane %v1933, 4
        %v1939 = vsel %vm1900, 0, %v1938
        %v1940 = vrot.slane %v1937, 4
        %v1941 = vsel %vm1900, 0, %v1940
        %v1944 = vunpack.c.l.s4 1983009808
        %v1945 = vunpack.c.0.s8 %v1944
        %v1946 = vperm.slane %v1711, %v1945
        %v1949 = vunpack.c.l.s4 1983009808
        %v1950 = vunpack.c.0.s8 %v1949
        %v1951 = vperm.slane %v1717, %v1950
        %v1952 = vrot.slane %v1951, 4
        %v1953 = vsel %vm1900, %v1952, %v1946
        %v1954 = vrot.slane %v1946, 4
        %v1955 = vsel %vm1900, %v1951, %v1954
        %v1957 = vunpack.c.l.s4 1934713408
        %v1958 = vunpack.c.0.s8 %v1957
        %v1959 = vperm.slane %v1953, %v1958
        %v1961 = vunpack.c.l.s4 1934713408
        %v1962 = vunpack.c.0.s8 %v1961
        %v1963 = vperm.slane %v1955, %v1962
        %v1964 = vrot.slane %v1959, 4
        %v1965 = vsel %vm1900, 0, %v1964
        %v1966 = vrot.slane %v1963, 4
        %v1967 = vsel %vm1900, 0, %v1966
        %v1970 = vunpack.c.l.s4 1983009808
        %v1971 = vunpack.c.0.s8 %v1970
        %v1972 = vperm.slane %v1714, %v1971
        %v1975 = vunpack.c.l.s4 1983009808
        %v1976 = vunpack.c.0.s8 %v1975
        %v1977 = vperm.slane %v1720, %v1976
        %v1978 = vrot.slane %v1977, 4
        %v1979 = vsel %vm1900, %v1978, %v1972
        %v1980 = vrot.slane %v1972, 4
        %v1981 = vsel %vm1900, %v1977, %v1980
        %v1983 = vunpack.c.l.s4 1934713408
        %v1984 = vunpack.c.0.s8 %v1983
        %v1985 = vperm.slane %v1979, %v1984
        %v1987 = vunpack.c.l.s4 1934713408
        %v1988 = vunpack.c.0.s8 %v1987
        %v1989 = vperm.slane %v1981, %v1988
        %v1990 = vrot.slane %v1985, 4
        %v1991 = vsel %vm1900, 0, %v1990
        %v1992 = vrot.slane %v1989, 4
        %v1993 = vsel %vm1900, 0, %v1992
        %v1996 = vunpack.c.l.s4 1983009808
        %v1997 = vunpack.c.0.s8 %v1996
        %v1998 = vperm.slane %v1723, %v1997
        %v2001 = vunpack.c.l.s4 1983009808
        %v2002 = vunpack.c.0.s8 %v2001
        %v2003 = vperm.slane %v1729, %v2002
        %v2004 = vrot.slane %v2003, 4
        %v2005 = vsel %vm1900, %v2004, %v1998
        %v2006 = vrot.slane %v1998, 4
        %v2007 = vsel %vm1900, %v2003, %v2006
        %v2009 = vunpack.c.l.s4 1934713408
        %v2010 = vunpack.c.0.s8 %v2009
        %v2011 = vperm.slane %v2005, %v2010
        %v2013 = vunpack.c.l.s4 1934713408
        %v2014 = vunpack.c.0.s8 %v2013
        %v2015 = vperm.slane %v2007, %v2014
        %v2016 = vrot.slane %v2011, 4
        %v2017 = vsel %vm1900, 0, %v2016
        %v2018 = vrot.slane %v2015, 4
        %v2019 = vsel %vm1900, 0, %v2018
        %v2022 = vunpack.c.l.s4 1983009808
        %v2023 = vunpack.c.0.s8 %v2022
        %v2024 = vperm.slane %v1726, %v2023
        %v2027 = vunpack.c.l.s4 1983009808
        %v2028 = vunpack.c.0.s8 %v2027
        %v2029 = vperm.slane %v1732, %v2028
        %v2030 = vrot.slane %v2029, 4
        %v2031 = vsel %vm1900, %v2030, %v2024
        %v2032 = vrot.slane %v2024, 4
        %v2033 = vsel %vm1900, %v2029, %v2032
        %v2035 = vunpack.c.l.s4 1934713408
        %v2036 = vunpack.c.0.s8 %v2035
        %v2037 = vperm.slane %v2031, %v2036
        %v2039 = vunpack.c.l.s4 1934713408
        %v2040 = vunpack.c.0.s8 %v2039
        %v2041 = vperm.slane %v2033, %v2040
        %v2042 = vrot.slane %v2037, 4
        %v2043 = vsel %vm1900, 0, %v2042
        %v2044 = vrot.slane %v2041, 4
        %v2045 = vsel %vm1900, 0, %v2044
        %v2048 = vunpack.c.l.s4 1983009808
        %v2049 = vunpack.c.0.s8 %v2048
        %v2050 = vperm.slane %v1735, %v2049
        %v2053 = vunpack.c.l.s4 1983009808
        %v2054 = vunpack.c.0.s8 %v2053
        %v2055 = vperm.slane %v1741, %v2054
        %v2056 = vrot.slane %v2055, 4
        %v2057 = vsel %vm1900, %v2056, %v2050
        %v2058 = vrot.slane %v2050, 4
        %v2059 = vsel %vm1900, %v2055, %v2058
        %v2061 = vunpack.c.l.s4 1934713408
        %v2062 = vunpack.c.0.s8 %v2061
        %v2063 = vperm.slane %v2057, %v2062
        %v2065 = vunpack.c.l.s4 1934713408
        %v2066 = vunpack.c.0.s8 %v2065
        %v2067 = vperm.slane %v2059, %v2066
        %v2068 = vrot.slane %v2063, 4
        %v2069 = vsel %vm1900, 0, %v2068
        %v2070 = vrot.slane %v2067, 4
        %v2071 = vsel %vm1900, 0, %v2070
        %v2074 = vunpack.c.l.s4 1983009808
        %v2075 = vunpack.c.0.s8 %v2074
        %v2076 = vperm.slane %v1738, %v2075
        %v2079 = vunpack.c.l.s4 1983009808
        %v2080 = vunpack.c.0.s8 %v2079
        %v2081 = vperm.slane %v1744, %v2080
        %v2082 = vrot.slane %v2081, 4
        %v2083 = vsel %vm1900, %v2082, %v2076
        %v2084 = vrot.slane %v2076, 4
        %v2085 = vsel %vm1900, %v2081, %v2084
        %v2087 = vunpack.c.l.s4 1934713408
        %v2088 = vunpack.c.0.s8 %v2087
        %v2089 = vperm.slane %v2083, %v2088
        %v2091 = vunpack.c.l.s4 1934713408
        %v2092 = vunpack.c.0.s8 %v2091
        %v2093 = vperm.slane %v2085, %v2092
        %v2094 = vrot.slane %v2089, 4
        %v2095 = vsel %vm1900, 0, %v2094
        %v2096 = vrot.slane %v2093, 4
        %v2097 = vsel %vm1900, 0, %v2096
        %v2100 = vunpack.c.l.s4 1983009808
        %v2101 = vunpack.c.0.s8 %v2100
        %v2102 = vperm.slane %v1747, %v2101
        %v2105 = vunpack.c.l.s4 1983009808
        %v2106 = vunpack.c.0.s8 %v2105
        %v2107 = vperm.slane %v1753, %v2106
        %v2108 = vrot.slane %v2107, 4
        %v2109 = vsel %vm1900, %v2108, %v2102
        %v2110 = vrot.slane %v2102, 4
        %v2111 = vsel %vm1900, %v2107, %v2110
        %v2113 = vunpack.c.l.s4 1934713408
        %v2114 = vunpack.c.0.s8 %v2113
        %v2115 = vperm.slane %v2109, %v2114
        %v2117 = vunpack.c.l.s4 1934713408
        %v2118 = vunpack.c.0.s8 %v2117
        %v2119 = vperm.slane %v2111, %v2118
        %v2120 = vrot.slane %v2115, 4
        %v2121 = vsel %vm1900, 0, %v2120
        %v2122 = vrot.slane %v2119, 4
        %v2123 = vsel %vm1900, 0, %v2122
        %v2126 = vunpack.c.l.s4 1983009808
        %v2127 = vunpack.c.0.s8 %v2126
        %v2128 = vperm.slane %v1750, %v2127
        %v2131 = vunpack.c.l.s4 1983009808
        %v2132 = vunpack.c.0.s8 %v2131
        %v2133 = vperm.slane %v1756, %v2132
        %v2134 = vrot.slane %v2133, 4
        %v2135 = vsel %vm1900, %v2134, %v2128
        %v2136 = vrot.slane %v2128, 4
        %v2137 = vsel %vm1900, %v2133, %v2136
        %v2139 = vunpack.c.l.s4 1934713408
        %v2140 = vunpack.c.0.s8 %v2139
        %v2141 = vperm.slane %v2135, %v2140
        %v2143 = vunpack.c.l.s4 1934713408
        %v2144 = vunpack.c.0.s8 %v2143
        %v2145 = vperm.slane %v2137, %v2144
        %v2146 = vrot.slane %v2141, 4
        %v2147 = vsel %vm1900, 0, %v2146
        %v2148 = vrot.slane %v2145, 4
        %v2149 = vsel %vm1900, 0, %v2148
        %v2152 = vunpack.c.l.s4 1983009808
        %v2153 = vunpack.c.0.s8 %v2152
        %v2154 = vperm.slane %v1759, %v2153
        %v2157 = vunpack.c.l.s4 1983009808
        %v2158 = vunpack.c.0.s8 %v2157
        %v2159 = vperm.slane %v1765, %v2158
        %v2160 = vrot.slane %v2159, 4
        %v2161 = vsel %vm1900, %v2160, %v2154
        %v2162 = vrot.slane %v2154, 4
        %v2163 = vsel %vm1900, %v2159, %v2162
        %v2165 = vunpack.c.l.s4 1934713408
        %v2166 = vunpack.c.0.s8 %v2165
        %v2167 = vperm.slane %v2161, %v2166
        %v2169 = vunpack.c.l.s4 1934713408
        %v2170 = vunpack.c.0.s8 %v2169
        %v2171 = vperm.slane %v2163, %v2170
        %v2172 = vrot.slane %v2167, 4
        %v2173 = vsel %vm1900, 0, %v2172
        %v2174 = vrot.slane %v2171, 4
        %v2175 = vsel %vm1900, 0, %v2174
        %v2178 = vunpack.c.l.s4 1983009808
        %v2179 = vunpack.c.0.s8 %v2178
        %v2180 = vperm.slane %v1762, %v2179
        %v2183 = vunpack.c.l.s4 1983009808
        %v2184 = vunpack.c.0.s8 %v2183
        %v2185 = vperm.slane %v1768, %v2184
        %v2186 = vrot.slane %v2185, 4
        %v2187 = vsel %vm1900, %v2186, %v2180
        %v2188 = vrot.slane %v2180, 4
        %v2189 = vsel %vm1900, %v2185, %v2188
        %v2191 = vunpack.c.l.s4 1934713408
        %v2192 = vunpack.c.0.s8 %v2191
        %v2193 = vperm.slane %v2187, %v2192
        %v2195 = vunpack.c.l.s4 1934713408
        %v2196 = vunpack.c.0.s8 %v2195
        %v2197 = vperm.slane %v2189, %v2196
        %v2198 = vrot.slane %v2193, 4
        %v2199 = vsel %vm1900, 0, %v2198
        %v2200 = vrot.slane %v2197, 4
        %v2201 = vsel %vm1900, 0, %v2200
        %v2204 = vunpack.c.l.s4 1983009808
        %v2205 = vunpack.c.0.s8 %v2204
        %v2206 = vperm.slane %v1771, %v2205
        %v2209 = vunpack.c.l.s4 1983009808
        %v2210 = vunpack.c.0.s8 %v2209
        %v2211 = vperm.slane %v1777, %v2210
        %v2212 = vrot.slane %v2211, 4
        %v2213 = vsel %vm1900, %v2212, %v2206
        %v2214 = vrot.slane %v2206, 4
        %v2215 = vsel %vm1900, %v2211, %v2214
        %v2217 = vunpack.c.l.s4 1934713408
        %v2218 = vunpack.c.0.s8 %v2217
        %v2219 = vperm.slane %v2213, %v2218
        %v2221 = vunpack.c.l.s4 1934713408
        %v2222 = vunpack.c.0.s8 %v2221
        %v2223 = vperm.slane %v2215, %v2222
        %v2224 = vrot.slane %v2219, 4
        %v2225 = vsel %vm1900, 0, %v2224
        %v2226 = vrot.slane %v2223, 4
        %v2227 = vsel %vm1900, 0, %v2226
        %v2230 = vunpack.c.l.s4 1983009808
        %v2231 = vunpack.c.0.s8 %v2230
        %v2232 = vperm.slane %v1774, %v2231
        %v2235 = vunpack.c.l.s4 1983009808
        %v2236 = vunpack.c.0.s8 %v2235
        %v2237 = vperm.slane %v1780, %v2236
        %v2238 = vrot.slane %v2237, 4
        %v2239 = vsel %vm1900, %v2238, %v2232
        %v2240 = vrot.slane %v2232, 4
        %v2241 = vsel %vm1900, %v2237, %v2240
        %v2243 = vunpack.c.l.s4 1934713408
        %v2244 = vunpack.c.0.s8 %v2243
        %v2245 = vperm.slane %v2239, %v2244
        %v2247 = vunpack.c.l.s4 1934713408
        %v2248 = vunpack.c.0.s8 %v2247
        %v2249 = vperm.slane %v2241, %v2248
        %v2250 = vrot.slane %v2245, 4
        %v2251 = vsel %vm1900, 0, %v2250
        %v2252 = vrot.slane %v2249, 4
        %v2253 = vsel %vm1900, 0, %v2252
        %v2256 = vunpack.c.l.s4 1983009808
        %v2257 = vunpack.c.0.s8 %v2256
        %v2258 = vperm.slane %v1783, %v2257
        %v2261 = vunpack.c.l.s4 1983009808
        %v2262 = vunpack.c.0.s8 %v2261
        %v2263 = vperm.slane %v1789, %v2262
        %v2264 = vrot.slane %v2263, 4
        %v2265 = vsel %vm1900, %v2264, %v2258
        %v2266 = vrot.slane %v2258, 4
        %v2267 = vsel %vm1900, %v2263, %v2266
        %v2269 = vunpack.c.l.s4 1934713408
        %v2270 = vunpack.c.0.s8 %v2269
        %v2271 = vperm.slane %v2265, %v2270
        %v2273 = vunpack.c.l.s4 1934713408
        %v2274 = vunpack.c.0.s8 %v2273
        %v2275 = vperm.slane %v2267, %v2274
        %v2276 = vrot.slane %v2271, 4
        %v2277 = vsel %vm1900, 0, %v2276
        %v2278 = vrot.slane %v2275, 4
        %v2279 = vsel %vm1900, 0, %v2278
        %v2282 = vunpack.c.l.s4 1983009808
        %v2283 = vunpack.c.0.s8 %v2282
        %v2284 = vperm.slane %v1786, %v2283
        %v2287 = vunpack.c.l.s4 1983009808
        %v2288 = vunpack.c.0.s8 %v2287
        %v2289 = vperm.slane %v1792, %v2288
        %v2290 = vrot.slane %v2289, 4
        %v2291 = vsel %vm1900, %v2290, %v2284
        %v2292 = vrot.slane %v2284, 4
        %v2293 = vsel %vm1900, %v2289, %v2292
        %v2295 = vunpack.c.l.s4 1934713408
        %v2296 = vunpack.c.0.s8 %v2295
        %v2297 = vperm.slane %v2291, %v2296
        %v2299 = vunpack.c.l.s4 1934713408
        %v2300 = vunpack.c.0.s8 %v2299
        %v2301 = vperm.slane %v2293, %v2300
        %v2302 = vrot.slane %v2297, 4
        %v2303 = vsel %vm1900, 0, %v2302
        %v2304 = vrot.slane %v2301, 4
        %v2305 = vsel %vm1900, 0, %v2304
        %v2308 = vunpack.c.l.s4 1983009808
        %v2309 = vunpack.c.0.s8 %v2308
        %v2310 = vperm.slane %v1795, %v2309
        %v2313 = vunpack.c.l.s4 1983009808
        %v2314 = vunpack.c.0.s8 %v2313
        %v2315 = vperm.slane %v1801, %v2314
        %v2316 = vrot.slane %v2315, 4
        %v2317 = vsel %vm1900, %v2316, %v2310
        %v2318 = vrot.slane %v2310, 4
        %v2319 = vsel %vm1900, %v2315, %v2318
        %v2321 = vunpack.c.l.s4 1934713408
        %v2322 = vunpack.c.0.s8 %v2321
        %v2323 = vperm.slane %v2317, %v2322
        %v2325 = vunpack.c.l.s4 1934713408
        %v2326 = vunpack.c.0.s8 %v2325
        %v2327 = vperm.slane %v2319, %v2326
        %v2328 = vrot.slane %v2323, 4
        %v2329 = vsel %vm1900, 0, %v2328
        %v2330 = vrot.slane %v2327, 4
        %v2331 = vsel %vm1900, 0, %v2330
        %v2334 = vunpack.c.l.s4 1983009808
        %v2335 = vunpack.c.0.s8 %v2334
        %v2336 = vperm.slane %v1798, %v2335
        %v2339 = vunpack.c.l.s4 1983009808
        %v2340 = vunpack.c.0.s8 %v2339
        %v2341 = vperm.slane %v1804, %v2340
        %v2342 = vrot.slane %v2341, 4
        %v2343 = vsel %vm1900, %v2342, %v2336
        %v2344 = vrot.slane %v2336, 4
        %v2345 = vsel %vm1900, %v2341, %v2344
        %v2347 = vunpack.c.l.s4 1934713408
        %v2348 = vunpack.c.0.s8 %v2347
        %v2349 = vperm.slane %v2343, %v2348
        %v2351 = vunpack.c.l.s4 1934713408
        %v2352 = vunpack.c.0.s8 %v2351
        %v2353 = vperm.slane %v2345, %v2352
        %v2354 = vrot.slane %v2349, 4
        %v2355 = vsel %vm1900, 0, %v2354
        %v2356 = vrot.slane %v2353, 4
        %v2357 = vsel %vm1900, 0, %v2356
        %v2360 = vunpack.c.l.s4 1983009808
        %v2361 = vunpack.c.0.s8 %v2360
        %v2362 = vperm.slane %v1807, %v2361
        %v2365 = vunpack.c.l.s4 1983009808
        %v2366 = vunpack.c.0.s8 %v2365
        %v2367 = vperm.slane %v1813, %v2366
        %v2368 = vrot.slane %v2367, 4
        %v2369 = vsel %vm1900, %v2368, %v2362
        %v2370 = vrot.slane %v2362, 4
        %v2371 = vsel %vm1900, %v2367, %v2370
        %v2373 = vunpack.c.l.s4 1934713408
        %v2374 = vunpack.c.0.s8 %v2373
        %v2375 = vperm.slane %v2369, %v2374
        %v2377 = vunpack.c.l.s4 1934713408
        %v2378 = vunpack.c.0.s8 %v2377
        %v2379 = vperm.slane %v2371, %v2378
        %v2380 = vrot.slane %v2375, 4
        %v2381 = vsel %vm1900, 0, %v2380
        %v2382 = vrot.slane %v2379, 4
        %v2383 = vsel %vm1900, 0, %v2382
        %v2386 = vunpack.c.l.s4 1983009808
        %v2387 = vunpack.c.0.s8 %v2386
        %v2388 = vperm.slane %v1810, %v2387
        %v2391 = vunpack.c.l.s4 1983009808
        %v2392 = vunpack.c.0.s8 %v2391
        %v2393 = vperm.slane %v1816, %v2392
        %v2394 = vrot.slane %v2393, 4
        %v2395 = vsel %vm1900, %v2394, %v2388
        %v2396 = vrot.slane %v2388, 4
        %v2397 = vsel %vm1900, %v2393, %v2396
        %v2399 = vunpack.c.l.s4 1934713408
        %v2400 = vunpack.c.0.s8 %v2399
        %v2401 = vperm.slane %v2395, %v2400
        %v2403 = vunpack.c.l.s4 1934713408
        %v2404 = vunpack.c.0.s8 %v2403
        %v2405 = vperm.slane %v2397, %v2404
        %v2406 = vrot.slane %v2401, 4
        %v2407 = vsel %vm1900, 0, %v2406
        %v2408 = vrot.slane %v2405, 4
        %v2409 = vsel %vm1900, 0, %v2408
        %v2412 = vunpack.c.l.s4 1983009808
        %v2413 = vunpack.c.0.s8 %v2412
        %v2414 = vperm.slane %v1819, %v2413
        %v2417 = vunpack.c.l.s4 1983009808
        %v2418 = vunpack.c.0.s8 %v2417
        %v2419 = vperm.slane %v1825, %v2418
        %v2420 = vrot.slane %v2419, 4
        %v2421 = vsel %vm1900, %v2420, %v2414
        %v2422 = vrot.slane %v2414, 4
        %v2423 = vsel %vm1900, %v2419, %v2422
        %v2425 = vunpack.c.l.s4 1934713408
        %v2426 = vunpack.c.0.s8 %v2425
        %v2427 = vperm.slane %v2421, %v2426
        %v2429 = vunpack.c.l.s4 1934713408
        %v2430 = vunpack.c.0.s8 %v2429
        %v2431 = vperm.slane %v2423, %v2430
        %v2432 = vrot.slane %v2427, 4
        %v2433 = vsel %vm1900, 0, %v2432
        %v2434 = vrot.slane %v2431, 4
        %v2435 = vsel %vm1900, 0, %v2434
        %v2438 = vunpack.c.l.s4 1983009808
        %v2439 = vunpack.c.0.s8 %v2438
        %v2440 = vperm.slane %v1822, %v2439
        %v2443 = vunpack.c.l.s4 1983009808
        %v2444 = vunpack.c.0.s8 %v2443
        %v2445 = vperm.slane %v1828, %v2444
        %v2446 = vrot.slane %v2445, 4
        %v2447 = vsel %vm1900, %v2446, %v2440
        %v2448 = vrot.slane %v2440, 4
        %v2449 = vsel %vm1900, %v2445, %v2448
        %v2451 = vunpack.c.l.s4 1934713408
        %v2452 = vunpack.c.0.s8 %v2451
        %v2453 = vperm.slane %v2447, %v2452
        %v2455 = vunpack.c.l.s4 1934713408
        %v2456 = vunpack.c.0.s8 %v2455
        %v2457 = vperm.slane %v2449, %v2456
        %v2458 = vrot.slane %v2453, 4
        %v2459 = vsel %vm1900, 0, %v2458
        %v2460 = vrot.slane %v2457, 4
        %v2461 = vsel %vm1900, 0, %v2460
        %v2464 = vunpack.c.l.s4 1983009808
        %v2465 = vunpack.c.0.s8 %v2464
        %v2466 = vperm.slane %v1831, %v2465
        %v2469 = vunpack.c.l.s4 1983009808
        %v2470 = vunpack.c.0.s8 %v2469
        %v2471 = vperm.slane %v1837, %v2470
        %v2472 = vrot.slane %v2471, 4
        %v2473 = vsel %vm1900, %v2472, %v2466
        %v2474 = vrot.slane %v2466, 4
        %v2475 = vsel %vm1900, %v2471, %v2474
        %v2477 = vunpack.c.l.s4 1934713408
        %v2478 = vunpack.c.0.s8 %v2477
        %v2479 = vperm.slane %v2473, %v2478
        %v2481 = vunpack.c.l.s4 1934713408
        %v2482 = vunpack.c.0.s8 %v2481
        %v2483 = vperm.slane %v2475, %v2482
        %v2484 = vrot.slane %v2479, 4
        %v2485 = vsel %vm1900, 0, %v2484
        %v2486 = vrot.slane %v2483, 4
        %v2487 = vsel %vm1900, 0, %v2486
        %v2490 = vunpack.c.l.s4 1983009808
        %v2491 = vunpack.c.0.s8 %v2490
        %v2492 = vperm.slane %v1834, %v2491
        %v2495 = vunpack.c.l.s4 1983009808
        %v2496 = vunpack.c.0.s8 %v2495
        %v2497 = vperm.slane %v1840, %v2496
        %v2498 = vrot.slane %v2497, 4
        %v2499 = vsel %vm1900, %v2498, %v2492
        %v2500 = vrot.slane %v2492, 4
        %v2501 = vsel %vm1900, %v2497, %v2500
        %v2503 = vunpack.c.l.s4 1934713408
        %v2504 = vunpack.c.0.s8 %v2503
        %v2505 = vperm.slane %v2499, %v2504
        %v2507 = vunpack.c.l.s4 1934713408
        %v2508 = vunpack.c.0.s8 %v2507
        %v2509 = vperm.slane %v2501, %v2508
        %v2510 = vrot.slane %v2505, 4
        %v2511 = vsel %vm1900, 0, %v2510
        %v2512 = vrot.slane %v2509, 4
        %v2513 = vsel %vm1900, 0, %v2512
        %v2516 = vunpack.c.l.s4 1983009808
        %v2517 = vunpack.c.0.s8 %v2516
        %v2518 = vperm.slane %v1843, %v2517
        %v2521 = vunpack.c.l.s4 1983009808
        %v2522 = vunpack.c.0.s8 %v2521
        %v2523 = vperm.slane %v1849, %v2522
        %v2524 = vrot.slane %v2523, 4
        %v2525 = vsel %vm1900, %v2524, %v2518
        %v2526 = vrot.slane %v2518, 4
        %v2527 = vsel %vm1900, %v2523, %v2526
        %v2529 = vunpack.c.l.s4 1934713408
        %v2530 = vunpack.c.0.s8 %v2529
        %v2531 = vperm.slane %v2525, %v2530
        %v2533 = vunpack.c.l.s4 1934713408
        %v2534 = vunpack.c.0.s8 %v2533
        %v2535 = vperm.slane %v2527, %v2534
        %v2536 = vrot.slane %v2531, 4
        %v2537 = vsel %vm1900, 0, %v2536
        %v2538 = vrot.slane %v2535, 4
        %v2539 = vsel %vm1900, 0, %v2538
        %v2542 = vunpack.c.l.s4 1983009808
        %v2543 = vunpack.c.0.s8 %v2542
        %v2544 = vperm.slane %v1846, %v2543
        %v2547 = vunpack.c.l.s4 1983009808
        %v2548 = vunpack.c.0.s8 %v2547
        %v2549 = vperm.slane %v1852, %v2548
        %v2550 = vrot.slane %v2549, 4
        %v2551 = vsel %vm1900, %v2550, %v2544
        %v2552 = vrot.slane %v2544, 4
        %v2553 = vsel %vm1900, %v2549, %v2552
        %v2555 = vunpack.c.l.s4 1934713408
        %v2556 = vunpack.c.0.s8 %v2555
        %v2557 = vperm.slane %v2551, %v2556
        %v2559 = vunpack.c.l.s4 1934713408
        %v2560 = vunpack.c.0.s8 %v2559
        %v2561 = vperm.slane %v2553, %v2560
        %v2562 = vrot.slane %v2557, 4
        %v2563 = vsel %vm1900, 0, %v2562
        %v2564 = vrot.slane %v2561, 4
        %v2565 = vsel %vm1900, 0, %v2564
        %v2568 = vunpack.c.l.s4 1983009808
        %v2569 = vunpack.c.0.s8 %v2568
        %v2570 = vperm.slane %v1855, %v2569
        %v2573 = vunpack.c.l.s4 1983009808
        %v2574 = vunpack.c.0.s8 %v2573
        %v2575 = vperm.slane %v1861, %v2574
        %v2576 = vrot.slane %v2575, 4
        %v2577 = vsel %vm1900, %v2576, %v2570
        %v2578 = vrot.slane %v2570, 4
        %v2579 = vsel %vm1900, %v2575, %v2578
        %v2581 = vunpack.c.l.s4 1934713408
        %v2582 = vunpack.c.0.s8 %v2581
        %v2583 = vperm.slane %v2577, %v2582
        %v2585 = vunpack.c.l.s4 1934713408
        %v2586 = vunpack.c.0.s8 %v2585
        %v2587 = vperm.slane %v2579, %v2586
        %v2588 = vrot.slane %v2583, 4
        %v2589 = vsel %vm1900, 0, %v2588
        %v2590 = vrot.slane %v2587, 4
        %v2591 = vsel %vm1900, 0, %v2590
        %v2594 = vunpack.c.l.s4 1983009808
        %v2595 = vunpack.c.0.s8 %v2594
        %v2596 = vperm.slane %v1858, %v2595
        %v2599 = vunpack.c.l.s4 1983009808
        %v2600 = vunpack.c.0.s8 %v2599
        %v2601 = vperm.slane %v1864, %v2600
        %v2602 = vrot.slane %v2601, 4
        %v2603 = vsel %vm1900, %v2602, %v2596
        %v2604 = vrot.slane %v2596, 4
        %v2605 = vsel %vm1900, %v2601, %v2604
        %v2607 = vunpack.c.l.s4 1934713408
        %v2608 = vunpack.c.0.s8 %v2607
        %v2609 = vperm.slane %v2603, %v2608
        %v2611 = vunpack.c.l.s4 1934713408
        %v2612 = vunpack.c.0.s8 %v2611
        %v2613 = vperm.slane %v2605, %v2612
        %v2614 = vrot.slane %v2609, 4
        %v2615 = vsel %vm1900, 0, %v2614
        %v2616 = vrot.slane %v2613, 4
        %v2617 = vsel %vm1900, 0, %v2616
        %v2620 = vunpack.c.l.s4 1983009808
        %v2621 = vunpack.c.0.s8 %v2620
        %v2622 = vperm.slane %v1867, %v2621
        %v2625 = vunpack.c.l.s4 1983009808
        %v2626 = vunpack.c.0.s8 %v2625
        %v2627 = vperm.slane %v1873, %v2626
        %v2628 = vrot.slane %v2627, 4
        %v2629 = vsel %vm1900, %v2628, %v2622
        %v2630 = vrot.slane %v2622, 4
        %v2631 = vsel %vm1900, %v2627, %v2630
        %v2633 = vunpack.c.l.s4 1934713408
        %v2634 = vunpack.c.0.s8 %v2633
        %v2635 = vperm.slane %v2629, %v2634
        %v2637 = vunpack.c.l.s4 1934713408
        %v2638 = vunpack.c.0.s8 %v2637
        %v2639 = vperm.slane %v2631, %v2638
        %v2640 = vrot.slane %v2635, 4
        %v2641 = vsel %vm1900, 0, %v2640
        %v2642 = vrot.slane %v2639, 4
        %v2643 = vsel %vm1900, 0, %v2642
        %v2646 = vunpack.c.l.s4 1983009808
        %v2647 = vunpack.c.0.s8 %v2646
        %v2648 = vperm.slane %v1870, %v2647
        %v2651 = vunpack.c.l.s4 1983009808
        %v2652 = vunpack.c.0.s8 %v2651
        %v2653 = vperm.slane %v1876, %v2652
        %v2654 = vrot.slane %v2653, 4
        %v2655 = vsel %vm1900, %v2654, %v2648
        %v2656 = vrot.slane %v2648, 4
        %v2657 = vsel %vm1900, %v2653, %v2656
        %v2659 = vunpack.c.l.s4 1934713408
        %v2660 = vunpack.c.0.s8 %v2659
        %v2661 = vperm.slane %v2655, %v2660
        %v2663 = vunpack.c.l.s4 1934713408
        %v2664 = vunpack.c.0.s8 %v2663
        %v2665 = vperm.slane %v2657, %v2664
        %v2666 = vrot.slane %v2661, 4
        %v2667 = vsel %vm1900, 0, %v2666
        %v2668 = vrot.slane %v2665, 4
        %v2669 = vsel %vm1900, 0, %v2668
        %v2672 = vunpack.c.l.s4 1983009808
        %v2673 = vunpack.c.0.s8 %v2672
        %v2674 = vperm.slane %v1879, %v2673
        %v2677 = vunpack.c.l.s4 1983009808
        %v2678 = vunpack.c.0.s8 %v2677
        %v2679 = vperm.slane %v1885, %v2678
        %v2680 = vrot.slane %v2679, 4
        %v2681 = vsel %vm1900, %v2680, %v2674
        %v2682 = vrot.slane %v2674, 4
        %v2683 = vsel %vm1900, %v2679, %v2682
        %v2685 = vunpack.c.l.s4 1934713408
        %v2686 = vunpack.c.0.s8 %v2685
        %v2687 = vperm.slane %v2681, %v2686
        %v2689 = vunpack.c.l.s4 1934713408
        %v2690 = vunpack.c.0.s8 %v2689
        %v2691 = vperm.slane %v2683, %v2690
        %v2692 = vrot.slane %v2687, 4
        %v2693 = vsel %vm1900, 0, %v2692
        %v2694 = vrot.slane %v2691, 4
        %v2695 = vsel %vm1900, 0, %v2694
        %v2698 = vunpack.c.l.s4 1983009808
        %v2699 = vunpack.c.0.s8 %v2698
        %v2700 = vperm.slane %v1882, %v2699
        %v2703 = vunpack.c.l.s4 1983009808
        %v2704 = vunpack.c.0.s8 %v2703
        %v2705 = vperm.slane %v1888, %v2704
        %v2706 = vrot.slane %v2705, 4
        %v2707 = vsel %vm1900, %v2706, %v2700
        %v2708 = vrot.slane %v2700, 4
        %v2709 = vsel %vm1900, %v2705, %v2708
        %v2711 = vunpack.c.l.s4 1934713408
        %v2712 = vunpack.c.0.s8 %v2711
        %v2713 = vperm.slane %v2707, %v2712
        %v2715 = vunpack.c.l.s4 1934713408
        %v2716 = vunpack.c.0.s8 %v2715
        %v2717 = vperm.slane %v2709, %v2716
        %v2718 = vrot.slane %v2713, 4
        %v2719 = vsel %vm1900, 0, %v2718
        %v2720 = vrot.slane %v2717, 4
        %v2721 = vsel %vm1900, 0, %v2720
        %v2722 = vsel %vm1900, %v1914, %v1907
        %v2724 = vunpack.c.l.s4 1983009808
        %v2725 = vunpack.c.0.s8 %v2724
        %v2726 = vperm.slane %v2722, %v2725
        %v2727 = vrot.slane %v1915, 4
        %v2728 = vsel %vm1900, %v2727, %v1913
        %v2730 = vunpack.c.l.s4 1983009808
        %v2731 = vunpack.c.0.s8 %v2730
        %v2732 = vperm.slane %v2728, %v2731
        %v2733 = vrot.slane %v2732, 4
        %v2734 = vsel %vm1900, %v2733, %v2726
        %v2736 = vunpack.c.l.s4 1934713408
        %v2737 = vunpack.c.0.s8 %v2736
        %v2738 = vperm.slane %v2734, %v2737
        %v2739 = vrot.slane %v2738, 4
        %v2740 = vsel %vm1900, 0, %v2739
        %v2741 = vsel %vm1900, %v1940, %v1933
        %v2743 = vunpack.c.l.s4 1983009808
        %v2744 = vunpack.c.0.s8 %v2743
        %v2745 = vperm.slane %v2741, %v2744
        %v2746 = vrot.slane %v1941, 4
        %v2747 = vsel %vm1900, %v2746, %v1939
        %v2749 = vunpack.c.l.s4 1983009808
        %v2750 = vunpack.c.0.s8 %v2749
        %v2751 = vperm.slane %v2747, %v2750
        %v2752 = vrot.slane %v2751, 4
        %v2753 = vsel %vm1900, %v2752, %v2745
        %v2755 = vunpack.c.l.s4 1934713408
        %v2756 = vunpack.c.0.s8 %v2755
        %v2757 = vperm.slane %v2753, %v2756
        %v2758 = vrot.slane %v2757, 4
        %v2759 = vsel %vm1900, 0, %v2758
        %v2760 = vsel %vm1900, %v1966, %v1959
        %v2762 = vunpack.c.l.s4 1983009808
        %v2763 = vunpack.c.0.s8 %v2762
        %v2764 = vperm.slane %v2760, %v2763
        %v2765 = vrot.slane %v1967, 4
        %v2766 = vsel %vm1900, %v2765, %v1965
        %v2768 = vunpack.c.l.s4 1983009808
        %v2769 = vunpack.c.0.s8 %v2768
        %v2770 = vperm.slane %v2766, %v2769
        %v2771 = vrot.slane %v2770, 4
        %v2772 = vsel %vm1900, %v2771, %v2764
        %v2774 = vunpack.c.l.s4 1934713408
        %v2775 = vunpack.c.0.s8 %v2774
        %v2776 = vperm.slane %v2772, %v2775
        %v2777 = vrot.slane %v2776, 4
        %v2778 = vsel %vm1900, 0, %v2777
        %v2779 = vsel %vm1900, %v1992, %v1985
        %v2781 = vunpack.c.l.s4 1983009808
        %v2782 = vunpack.c.0.s8 %v2781
        %v2783 = vperm.slane %v2779, %v2782
        %v2784 = vrot.slane %v1993, 4
        %v2785 = vsel %vm1900, %v2784, %v1991
        %v2787 = vunpack.c.l.s4 1983009808
        %v2788 = vunpack.c.0.s8 %v2787
        %v2789 = vperm.slane %v2785, %v2788
        %v2790 = vrot.slane %v2789, 4
        %v2791 = vsel %vm1900, %v2790, %v2783
        %v2793 = vunpack.c.l.s4 1934713408
        %v2794 = vunpack.c.0.s8 %v2793
        %v2795 = vperm.slane %v2791, %v2794
        %v2796 = vrot.slane %v2795, 4
        %v2797 = vsel %vm1900, 0, %v2796
        %v2798 = vsel %vm1900, %v2018, %v2011
        %v2800 = vunpack.c.l.s4 1983009808
        %v2801 = vunpack.c.0.s8 %v2800
        %v2802 = vperm.slane %v2798, %v2801
        %v2803 = vrot.slane %v2019, 4
        %v2804 = vsel %vm1900, %v2803, %v2017
        %v2806 = vunpack.c.l.s4 1983009808
        %v2807 = vunpack.c.0.s8 %v2806
        %v2808 = vperm.slane %v2804, %v2807
        %v2809 = vrot.slane %v2808, 4
        %v2810 = vsel %vm1900, %v2809, %v2802
        %v2812 = vunpack.c.l.s4 1934713408
        %v2813 = vunpack.c.0.s8 %v2812
        %v2814 = vperm.slane %v2810, %v2813
        %v2815 = vrot.slane %v2814, 4
        %v2816 = vsel %vm1900, 0, %v2815
        %v2817 = vsel %vm1900, %v2044, %v2037
        %v2819 = vunpack.c.l.s4 1983009808
        %v2820 = vunpack.c.0.s8 %v2819
        %v2821 = vperm.slane %v2817, %v2820
        %v2822 = vrot.slane %v2045, 4
        %v2823 = vsel %vm1900, %v2822, %v2043
        %v2825 = vunpack.c.l.s4 1983009808
        %v2826 = vunpack.c.0.s8 %v2825
        %v2827 = vperm.slane %v2823, %v2826
        %v2828 = vrot.slane %v2827, 4
        %v2829 = vsel %vm1900, %v2828, %v2821
        %v2831 = vunpack.c.l.s4 1934713408
        %v2832 = vunpack.c.0.s8 %v2831
        %v2833 = vperm.slane %v2829, %v2832
        %v2834 = vrot.slane %v2833, 4
        %v2835 = vsel %vm1900, 0, %v2834
        %v2836 = vsel %vm1900, %v2070, %v2063
        %v2838 = vunpack.c.l.s4 1983009808
        %v2839 = vunpack.c.0.s8 %v2838
        %v2840 = vperm.slane %v2836, %v2839
        %v2841 = vrot.slane %v2071, 4
        %v2842 = vsel %vm1900, %v2841, %v2069
        %v2844 = vunpack.c.l.s4 1983009808
        %v2845 = vunpack.c.0.s8 %v2844
        %v2846 = vperm.slane %v2842, %v2845
        %v2847 = vrot.slane %v2846, 4
        %v2848 = vsel %vm1900, %v2847, %v2840
        %v2850 = vunpack.c.l.s4 1934713408
        %v2851 = vunpack.c.0.s8 %v2850
        %v2852 = vperm.slane %v2848, %v2851
        %v2853 = vrot.slane %v2852, 4
        %v2854 = vsel %vm1900, 0, %v2853
        %v2855 = vsel %vm1900, %v2096, %v2089
        %v2857 = vunpack.c.l.s4 1983009808
        %v2858 = vunpack.c.0.s8 %v2857
        %v2859 = vperm.slane %v2855, %v2858
        %v2860 = vrot.slane %v2097, 4
        %v2861 = vsel %vm1900, %v2860, %v2095
        %v2863 = vunpack.c.l.s4 1983009808
        %v2864 = vunpack.c.0.s8 %v2863
        %v2865 = vperm.slane %v2861, %v2864
        %v2866 = vrot.slane %v2865, 4
        %v2867 = vsel %vm1900, %v2866, %v2859
        %v2869 = vunpack.c.l.s4 1934713408
        %v2870 = vunpack.c.0.s8 %v2869
        %v2871 = vperm.slane %v2867, %v2870
        %v2872 = vrot.slane %v2871, 4
        %v2873 = vsel %vm1900, 0, %v2872
        %v2874 = vsel %vm1900, %v2122, %v2115
        %v2876 = vunpack.c.l.s4 1983009808
        %v2877 = vunpack.c.0.s8 %v2876
        %v2878 = vperm.slane %v2874, %v2877
        %v2879 = vrot.slane %v2123, 4
        %v2880 = vsel %vm1900, %v2879, %v2121
        %v2882 = vunpack.c.l.s4 1983009808
        %v2883 = vunpack.c.0.s8 %v2882
        %v2884 = vperm.slane %v2880, %v2883
        %v2885 = vrot.slane %v2884, 4
        %v2886 = vsel %vm1900, %v2885, %v2878
        %v2888 = vunpack.c.l.s4 1934713408
        %v2889 = vunpack.c.0.s8 %v2888
        %v2890 = vperm.slane %v2886, %v2889
        %v2891 = vrot.slane %v2890, 4
        %v2892 = vsel %vm1900, 0, %v2891
        %v2893 = vsel %vm1900, %v2148, %v2141
        %v2895 = vunpack.c.l.s4 1983009808
        %v2896 = vunpack.c.0.s8 %v2895
        %v2897 = vperm.slane %v2893, %v2896
        %v2898 = vrot.slane %v2149, 4
        %v2899 = vsel %vm1900, %v2898, %v2147
        %v2901 = vunpack.c.l.s4 1983009808
        %v2902 = vunpack.c.0.s8 %v2901
        %v2903 = vperm.slane %v2899, %v2902
        %v2904 = vrot.slane %v2903, 4
        %v2905 = vsel %vm1900, %v2904, %v2897
        %v2907 = vunpack.c.l.s4 1934713408
        %v2908 = vunpack.c.0.s8 %v2907
        %v2909 = vperm.slane %v2905, %v2908
        %v2910 = vrot.slane %v2909, 4
        %v2911 = vsel %vm1900, 0, %v2910
        %v2912 = vsel %vm1900, %v2174, %v2167
        %v2914 = vunpack.c.l.s4 1983009808
        %v2915 = vunpack.c.0.s8 %v2914
        %v2916 = vperm.slane %v2912, %v2915
        %v2917 = vrot.slane %v2175, 4
        %v2918 = vsel %vm1900, %v2917, %v2173
        %v2920 = vunpack.c.l.s4 1983009808
        %v2921 = vunpack.c.0.s8 %v2920
        %v2922 = vperm.slane %v2918, %v2921
        %v2923 = vrot.slane %v2922, 4
        %v2924 = vsel %vm1900, %v2923, %v2916
        %v2926 = vunpack.c.l.s4 1934713408
        %v2927 = vunpack.c.0.s8 %v2926
        %v2928 = vperm.slane %v2924, %v2927
        %v2929 = vrot.slane %v2928, 4
        %v2930 = vsel %vm1900, 0, %v2929
        %v2931 = vsel %vm1900, %v2200, %v2193
        %v2933 = vunpack.c.l.s4 1983009808
        %v2934 = vunpack.c.0.s8 %v2933
        %v2935 = vperm.slane %v2931, %v2934
        %v2936 = vrot.slane %v2201, 4
        %v2937 = vsel %vm1900, %v2936, %v2199
        %v2939 = vunpack.c.l.s4 1983009808
        %v2940 = vunpack.c.0.s8 %v2939
        %v2941 = vperm.slane %v2937, %v2940
        %v2942 = vrot.slane %v2941, 4
        %v2943 = vsel %vm1900, %v2942, %v2935
        %v2945 = vunpack.c.l.s4 1934713408
        %v2946 = vunpack.c.0.s8 %v2945
        %v2947 = vperm.slane %v2943, %v2946
        %v2948 = vrot.slane %v2947, 4
        %v2949 = vsel %vm1900, 0, %v2948
        %v2950 = vsel %vm1900, %v2226, %v2219
        %v2952 = vunpack.c.l.s4 1983009808
        %v2953 = vunpack.c.0.s8 %v2952
        %v2954 = vperm.slane %v2950, %v2953
        %v2955 = vrot.slane %v2227, 4
        %v2956 = vsel %vm1900, %v2955, %v2225
        %v2958 = vunpack.c.l.s4 1983009808
        %v2959 = vunpack.c.0.s8 %v2958
        %v2960 = vperm.slane %v2956, %v2959
        %v2961 = vrot.slane %v2960, 4
        %v2962 = vsel %vm1900, %v2961, %v2954
        %v2964 = vunpack.c.l.s4 1934713408
        %v2965 = vunpack.c.0.s8 %v2964
        %v2966 = vperm.slane %v2962, %v2965
        %v2967 = vrot.slane %v2966, 4
        %v2968 = vsel %vm1900, 0, %v2967
        %v2969 = vsel %vm1900, %v2252, %v2245
        %v2971 = vunpack.c.l.s4 1983009808
        %v2972 = vunpack.c.0.s8 %v2971
        %v2973 = vperm.slane %v2969, %v2972
        %v2974 = vrot.slane %v2253, 4
        %v2975 = vsel %vm1900, %v2974, %v2251
        %v2977 = vunpack.c.l.s4 1983009808
        %v2978 = vunpack.c.0.s8 %v2977
        %v2979 = vperm.slane %v2975, %v2978
        %v2980 = vrot.slane %v2979, 4
        %v2981 = vsel %vm1900, %v2980, %v2973
        %v2983 = vunpack.c.l.s4 1934713408
        %v2984 = vunpack.c.0.s8 %v2983
        %v2985 = vperm.slane %v2981, %v2984
        %v2986 = vrot.slane %v2985, 4
        %v2987 = vsel %vm1900, 0, %v2986
        %v2988 = vsel %vm1900, %v2278, %v2271
        %v2990 = vunpack.c.l.s4 1983009808
        %v2991 = vunpack.c.0.s8 %v2990
        %v2992 = vperm.slane %v2988, %v2991
        %v2993 = vrot.slane %v2279, 4
        %v2994 = vsel %vm1900, %v2993, %v2277
        %v2996 = vunpack.c.l.s4 1983009808
        %v2997 = vunpack.c.0.s8 %v2996
        %v2998 = vperm.slane %v2994, %v2997
        %v2999 = vrot.slane %v2998, 4
        %v3000 = vsel %vm1900, %v2999, %v2992
        %v3002 = vunpack.c.l.s4 1934713408
        %v3003 = vunpack.c.0.s8 %v3002
        %v3004 = vperm.slane %v3000, %v3003
        %v3005 = vrot.slane %v3004, 4
        %v3006 = vsel %vm1900, 0, %v3005
        %v3007 = vsel %vm1900, %v2304, %v2297
        %v3009 = vunpack.c.l.s4 1983009808
        %v3010 = vunpack.c.0.s8 %v3009
        %v3011 = vperm.slane %v3007, %v3010
        %v3012 = vrot.slane %v2305, 4
        %v3013 = vsel %vm1900, %v3012, %v2303
        %v3015 = vunpack.c.l.s4 1983009808
        %v3016 = vunpack.c.0.s8 %v3015
        %v3017 = vperm.slane %v3013, %v3016
        %v3018 = vrot.slane %v3017, 4
        %v3019 = vsel %vm1900, %v3018, %v3011
        %v3021 = vunpack.c.l.s4 1934713408
        %v3022 = vunpack.c.0.s8 %v3021
        %v3023 = vperm.slane %v3019, %v3022
        %v3024 = vrot.slane %v3023, 4
        %v3025 = vsel %vm1900, 0, %v3024
        %v3026 = vsel %vm1900, %v2330, %v2323
        %v3028 = vunpack.c.l.s4 1983009808
        %v3029 = vunpack.c.0.s8 %v3028
        %v3030 = vperm.slane %v3026, %v3029
        %v3031 = vrot.slane %v2331, 4
        %v3032 = vsel %vm1900, %v3031, %v2329
        %v3034 = vunpack.c.l.s4 1983009808
        %v3035 = vunpack.c.0.s8 %v3034
        %v3036 = vperm.slane %v3032, %v3035
        %v3037 = vrot.slane %v3036, 4
        %v3038 = vsel %vm1900, %v3037, %v3030
        %v3040 = vunpack.c.l.s4 1934713408
        %v3041 = vunpack.c.0.s8 %v3040
        %v3042 = vperm.slane %v3038, %v3041
        %v3043 = vrot.slane %v3042, 4
        %v3044 = vsel %vm1900, 0, %v3043
        %v3045 = vsel %vm1900, %v2356, %v2349
        %v3047 = vunpack.c.l.s4 1983009808
        %v3048 = vunpack.c.0.s8 %v3047
        %v3049 = vperm.slane %v3045, %v3048
        %v3050 = vrot.slane %v2357, 4
        %v3051 = vsel %vm1900, %v3050, %v2355
        %v3053 = vunpack.c.l.s4 1983009808
        %v3054 = vunpack.c.0.s8 %v3053
        %v3055 = vperm.slane %v3051, %v3054
        %v3056 = vrot.slane %v3055, 4
        %v3057 = vsel %vm1900, %v3056, %v3049
        %v3059 = vunpack.c.l.s4 1934713408
        %v3060 = vunpack.c.0.s8 %v3059
        %v3061 = vperm.slane %v3057, %v3060
        %v3062 = vrot.slane %v3061, 4
        %v3063 = vsel %vm1900, 0, %v3062
        %v3064 = vsel %vm1900, %v2382, %v2375
        %v3066 = vunpack.c.l.s4 1983009808
        %v3067 = vunpack.c.0.s8 %v3066
        %v3068 = vperm.slane %v3064, %v3067
        %v3069 = vrot.slane %v2383, 4
        %v3070 = vsel %vm1900, %v3069, %v2381
        %v3072 = vunpack.c.l.s4 1983009808
        %v3073 = vunpack.c.0.s8 %v3072
        %v3074 = vperm.slane %v3070, %v3073
        %v3075 = vrot.slane %v3074, 4
        %v3076 = vsel %vm1900, %v3075, %v3068
        %v3078 = vunpack.c.l.s4 1934713408
        %v3079 = vunpack.c.0.s8 %v3078
        %v3080 = vperm.slane %v3076, %v3079
        %v3081 = vrot.slane %v3080, 4
        %v3082 = vsel %vm1900, 0, %v3081
        %v3083 = vsel %vm1900, %v2408, %v2401
        %v3085 = vunpack.c.l.s4 1983009808
        %v3086 = vunpack.c.0.s8 %v3085
        %v3087 = vperm.slane %v3083, %v3086
        %v3088 = vrot.slane %v2409, 4
        %v3089 = vsel %vm1900, %v3088, %v2407
        %v3091 = vunpack.c.l.s4 1983009808
        %v3092 = vunpack.c.0.s8 %v3091
        %v3093 = vperm.slane %v3089, %v3092
        %v3094 = vrot.slane %v3093, 4
        %v3095 = vsel %vm1900, %v3094, %v3087
        %v3097 = vunpack.c.l.s4 1934713408
        %v3098 = vunpack.c.0.s8 %v3097
        %v3099 = vperm.slane %v3095, %v3098
        %v3100 = vrot.slane %v3099, 4
        %v3101 = vsel %vm1900, 0, %v3100
        %v3102 = vsel %vm1900, %v2434, %v2427
        %v3104 = vunpack.c.l.s4 1983009808
        %v3105 = vunpack.c.0.s8 %v3104
        %v3106 = vperm.slane %v3102, %v3105
        %v3107 = vrot.slane %v2435, 4
        %v3108 = vsel %vm1900, %v3107, %v2433
        %v3110 = vunpack.c.l.s4 1983009808
        %v3111 = vunpack.c.0.s8 %v3110
        %v3112 = vperm.slane %v3108, %v3111
        %v3113 = vrot.slane %v3112, 4
        %v3114 = vsel %vm1900, %v3113, %v3106
        %v3116 = vunpack.c.l.s4 1934713408
        %v3117 = vunpack.c.0.s8 %v3116
        %v3118 = vperm.slane %v3114, %v3117
        %v3119 = vrot.slane %v3118, 4
        %v3120 = vsel %vm1900, 0, %v3119
        %v3121 = vsel %vm1900, %v2460, %v2453
        %v3123 = vunpack.c.l.s4 1983009808
        %v3124 = vunpack.c.0.s8 %v3123
        %v3125 = vperm.slane %v3121, %v3124
        %v3126 = vrot.slane %v2461, 4
        %v3127 = vsel %vm1900, %v3126, %v2459
        %v3129 = vunpack.c.l.s4 1983009808
        %v3130 = vunpack.c.0.s8 %v3129
        %v3131 = vperm.slane %v3127, %v3130
        %v3132 = vrot.slane %v3131, 4
        %v3133 = vsel %vm1900, %v3132, %v3125
        %v3135 = vunpack.c.l.s4 1934713408
        %v3136 = vunpack.c.0.s8 %v3135
        %v3137 = vperm.slane %v3133, %v3136
        %v3138 = vrot.slane %v3137, 4
        %v3139 = vsel %vm1900, 0, %v3138
        %v3140 = vsel %vm1900, %v2486, %v2479
        %v3142 = vunpack.c.l.s4 1983009808
        %v3143 = vunpack.c.0.s8 %v3142
        %v3144 = vperm.slane %v3140, %v3143
        %v3145 = vrot.slane %v2487, 4
        %v3146 = vsel %vm1900, %v3145, %v2485
        %v3148 = vunpack.c.l.s4 1983009808
        %v3149 = vunpack.c.0.s8 %v3148
        %v3150 = vperm.slane %v3146, %v3149
        %v3151 = vrot.slane %v3150, 4
        %v3152 = vsel %vm1900, %v3151, %v3144
        %v3154 = vunpack.c.l.s4 1934713408
        %v3155 = vunpack.c.0.s8 %v3154
        %v3156 = vperm.slane %v3152, %v3155
        %v3157 = vrot.slane %v3156, 4
        %v3158 = vsel %vm1900, 0, %v3157
        %v3159 = vsel %vm1900, %v2512, %v2505
        %v3161 = vunpack.c.l.s4 1983009808
        %v3162 = vunpack.c.0.s8 %v3161
        %v3163 = vperm.slane %v3159, %v3162
        %v3164 = vrot.slane %v2513, 4
        %v3165 = vsel %vm1900, %v3164, %v2511
        %v3167 = vunpack.c.l.s4 1983009808
        %v3168 = vunpack.c.0.s8 %v3167
        %v3169 = vperm.slane %v3165, %v3168
        %v3170 = vrot.slane %v3169, 4
        %v3171 = vsel %vm1900, %v3170, %v3163
        %v3173 = vunpack.c.l.s4 1934713408
        %v3174 = vunpack.c.0.s8 %v3173
        %v3175 = vperm.slane %v3171, %v3174
        %v3176 = vrot.slane %v3175, 4
        %v3177 = vsel %vm1900, 0, %v3176
        %v3178 = vsel %vm1900, %v2538, %v2531
        %v3180 = vunpack.c.l.s4 1983009808
        %v3181 = vunpack.c.0.s8 %v3180
        %v3182 = vperm.slane %v3178, %v3181
        %v3183 = vrot.slane %v2539, 4
        %v3184 = vsel %vm1900, %v3183, %v2537
        %v3186 = vunpack.c.l.s4 1983009808
        %v3187 = vunpack.c.0.s8 %v3186
        %v3188 = vperm.slane %v3184, %v3187
        %v3189 = vrot.slane %v3188, 4
        %v3190 = vsel %vm1900, %v3189, %v3182
        %v3192 = vunpack.c.l.s4 1934713408
        %v3193 = vunpack.c.0.s8 %v3192
        %v3194 = vperm.slane %v3190, %v3193
        %v3195 = vrot.slane %v3194, 4
        %v3196 = vsel %vm1900, 0, %v3195
        %v3197 = vsel %vm1900, %v2564, %v2557
        %v3199 = vunpack.c.l.s4 1983009808
        %v3200 = vunpack.c.0.s8 %v3199
        %v3201 = vperm.slane %v3197, %v3200
        %v3202 = vrot.slane %v2565, 4
        %v3203 = vsel %vm1900, %v3202, %v2563
        %v3205 = vunpack.c.l.s4 1983009808
        %v3206 = vunpack.c.0.s8 %v3205
        %v3207 = vperm.slane %v3203, %v3206
        %v3208 = vrot.slane %v3207, 4
        %v3209 = vsel %vm1900, %v3208, %v3201
        %v3211 = vunpack.c.l.s4 1934713408
        %v3212 = vunpack.c.0.s8 %v3211
        %v3213 = vperm.slane %v3209, %v3212
        %v3214 = vrot.slane %v3213, 4
        %v3215 = vsel %vm1900, 0, %v3214
        %v3216 = vsel %vm1900, %v2590, %v2583
        %v3218 = vunpack.c.l.s4 1983009808
        %v3219 = vunpack.c.0.s8 %v3218
        %v3220 = vperm.slane %v3216, %v3219
        %v3221 = vrot.slane %v2591, 4
        %v3222 = vsel %vm1900, %v3221, %v2589
        %v3224 = vunpack.c.l.s4 1983009808
        %v3225 = vunpack.c.0.s8 %v3224
        %v3226 = vperm.slane %v3222, %v3225
        %v3227 = vrot.slane %v3226, 4
        %v3228 = vsel %vm1900, %v3227, %v3220
        %v3230 = vunpack.c.l.s4 1934713408
        %v3231 = vunpack.c.0.s8 %v3230
        %v3232 = vperm.slane %v3228, %v3231
        %v3233 = vrot.slane %v3232, 4
        %v3234 = vsel %vm1900, 0, %v3233
        %v3235 = vsel %vm1900, %v2616, %v2609
        %v3237 = vunpack.c.l.s4 1983009808
        %v3238 = vunpack.c.0.s8 %v3237
        %v3239 = vperm.slane %v3235, %v3238
        %v3240 = vrot.slane %v2617, 4
        %v3241 = vsel %vm1900, %v3240, %v2615
        %v3243 = vunpack.c.l.s4 1983009808
        %v3244 = vunpack.c.0.s8 %v3243
        %v3245 = vperm.slane %v3241, %v3244
        %v3246 = vrot.slane %v3245, 4
        %v3247 = vsel %vm1900, %v3246, %v3239
        %v3249 = vunpack.c.l.s4 1934713408
        %v3250 = vunpack.c.0.s8 %v3249
        %v3251 = vperm.slane %v3247, %v3250
        %v3252 = vrot.slane %v3251, 4
        %v3253 = vsel %vm1900, 0, %v3252
        %v3254 = vsel %vm1900, %v2642, %v2635
        %v3256 = vunpack.c.l.s4 1983009808
        %v3257 = vunpack.c.0.s8 %v3256
        %v3258 = vperm.slane %v3254, %v3257
        %v3259 = vrot.slane %v2643, 4
        %v3260 = vsel %vm1900, %v3259, %v2641
        %v3262 = vunpack.c.l.s4 1983009808
        %v3263 = vunpack.c.0.s8 %v3262
        %v3264 = vperm.slane %v3260, %v3263
        %v3265 = vrot.slane %v3264, 4
        %v3266 = vsel %vm1900, %v3265, %v3258
        %v3268 = vunpack.c.l.s4 1934713408
        %v3269 = vunpack.c.0.s8 %v3268
        %v3270 = vperm.slane %v3266, %v3269
        %v3271 = vrot.slane %v3270, 4
        %v3272 = vsel %vm1900, 0, %v3271
        %v3273 = vsel %vm1900, %v2668, %v2661
        %v3275 = vunpack.c.l.s4 1983009808
        %v3276 = vunpack.c.0.s8 %v3275
        %v3277 = vperm.slane %v3273, %v3276
        %v3278 = vrot.slane %v2669, 4
        %v3279 = vsel %vm1900, %v3278, %v2667
        %v3281 = vunpack.c.l.s4 1983009808
        %v3282 = vunpack.c.0.s8 %v3281
        %v3283 = vperm.slane %v3279, %v3282
        %v3284 = vrot.slane %v3283, 4
        %v3285 = vsel %vm1900, %v3284, %v3277
        %v3287 = vunpack.c.l.s4 1934713408
        %v3288 = vunpack.c.0.s8 %v3287
        %v3289 = vperm.slane %v3285, %v3288
        %v3290 = vrot.slane %v3289, 4
        %v3291 = vsel %vm1900, 0, %v3290
        %v3292 = vsel %vm1900, %v2694, %v2687
        %v3294 = vunpack.c.l.s4 1983009808
        %v3295 = vunpack.c.0.s8 %v3294
        %v3296 = vperm.slane %v3292, %v3295
        %v3297 = vrot.slane %v2695, 4
        %v3298 = vsel %vm1900, %v3297, %v2693
        %v3300 = vunpack.c.l.s4 1983009808
        %v3301 = vunpack.c.0.s8 %v3300
        %v3302 = vperm.slane %v3298, %v3301
        %v3303 = vrot.slane %v3302, 4
        %v3304 = vsel %vm1900, %v3303, %v3296
        %v3306 = vunpack.c.l.s4 1934713408
        %v3307 = vunpack.c.0.s8 %v3306
        %v3308 = vperm.slane %v3304, %v3307
        %v3309 = vrot.slane %v3308, 4
        %v3310 = vsel %vm1900, 0, %v3309
        %v3311 = vsel %vm1900, %v2720, %v2713
        %v3313 = vunpack.c.l.s4 1983009808
        %v3314 = vunpack.c.0.s8 %v3313
        %v3315 = vperm.slane %v3311, %v3314
        %v3316 = vrot.slane %v2721, 4
        %v3317 = vsel %vm1900, %v3316, %v2719
        %v3319 = vunpack.c.l.s4 1983009808
        %v3320 = vunpack.c.0.s8 %v3319
        %v3321 = vperm.slane %v3317, %v3320
        %v3322 = vrot.slane %v3321, 4
        %v3323 = vsel %vm1900, %v3322, %v3315
        %v3325 = vunpack.c.l.s4 1934713408
        %v3326 = vunpack.c.0.s8 %v3325
        %v3327 = vperm.slane %v3323, %v3326
        %v3328 = vrot.slane %v3327, 4
        %v3329 = vsel %vm1900, 0, %v3328
        %v3332 = vpack.i.b16 %v2757, %v2738
        %v3333 = vshrl.u32 %v2738, 16
        %v3334 = vshrl.u32 %v2757, 16
        %v3335 = vpack.i.b16 %v3334, %v3333
        %v3338 = vpack.i.b16 %v2759, %v2740
        %v3339 = vshrl.u32 %v2740, 16
        %v3340 = vshrl.u32 %v2759, 16
        %v3341 = vpack.i.b16 %v3340, %v3339
        %v3344 = vpack.i.b16 %v2795, %v2776
        %v3345 = vshrl.u32 %v2776, 16
        %v3346 = vshrl.u32 %v2795, 16
        %v3347 = vpack.i.b16 %v3346, %v3345
        %v3350 = vpack.i.b16 %v2797, %v2778
        %v3351 = vshrl.u32 %v2778, 16
        %v3352 = vshrl.u32 %v2797, 16
        %v3353 = vpack.i.b16 %v3352, %v3351
        %v3356 = vpack.i.b16 %v2833, %v2814
        %v3357 = vshrl.u32 %v2814, 16
        %v3358 = vshrl.u32 %v2833, 16
        %v3359 = vpack.i.b16 %v3358, %v3357
        %v3362 = vpack.i.b16 %v2835, %v2816
        %v3363 = vshrl.u32 %v2816, 16
        %v3364 = vshrl.u32 %v2835, 16
        %v3365 = vpack.i.b16 %v3364, %v3363
        %v3368 = vpack.i.b16 %v2871, %v2852
        %v3369 = vshrl.u32 %v2852, 16
        %v3370 = vshrl.u32 %v2871, 16
        %v3371 = vpack.i.b16 %v3370, %v3369
        %v3374 = vpack.i.b16 %v2873, %v2854
        %v3375 = vshrl.u32 %v2854, 16
        %v3376 = vshrl.u32 %v2873, 16
        %v3377 = vpack.i.b16 %v3376, %v3375
        %v3380 = vpack.i.b16 %v2909, %v2890
        %v3381 = vshrl.u32 %v2890, 16
        %v3382 = vshrl.u32 %v2909, 16
        %v3383 = vpack.i.b16 %v3382, %v3381
        %v3386 = vpack.i.b16 %v2911, %v2892
        %v3387 = vshrl.u32 %v2892, 16
        %v3388 = vshrl.u32 %v2911, 16
        %v3389 = vpack.i.b16 %v3388, %v3387
        %v3392 = vpack.i.b16 %v2947, %v2928
        %v3393 = vshrl.u32 %v2928, 16
        %v3394 = vshrl.u32 %v2947, 16
        %v3395 = vpack.i.b16 %v3394, %v3393
        %v3398 = vpack.i.b16 %v2949, %v2930
        %v3399 = vshrl.u32 %v2930, 16
        %v3400 = vshrl.u32 %v2949, 16
        %v3401 = vpack.i.b16 %v3400, %v3399
        %v3404 = vpack.i.b16 %v2985, %v2966
        %v3405 = vshrl.u32 %v2966, 16
        %v3406 = vshrl.u32 %v2985, 16
        %v3407 = vpack.i.b16 %v3406, %v3405
        %v3410 = vpack.i.b16 %v2987, %v2968
        %v3411 = vshrl.u32 %v2968, 16
        %v3412 = vshrl.u32 %v2987, 16
        %v3413 = vpack.i.b16 %v3412, %v3411
        %v3416 = vpack.i.b16 %v3023, %v3004
        %v3417 = vshrl.u32 %v3004, 16
        %v3418 = vshrl.u32 %v3023, 16
        %v3419 = vpack.i.b16 %v3418, %v3417
        %v3422 = vpack.i.b16 %v3025, %v3006
        %v3423 = vshrl.u32 %v3006, 16
        %v3424 = vshrl.u32 %v3025, 16
        %v3425 = vpack.i.b16 %v3424, %v3423
        %v3428 = vpack.i.b16 %v3061, %v3042
        %v3429 = vshrl.u32 %v3042, 16
        %v3430 = vshrl.u32 %v3061, 16
        %v3431 = vpack.i.b16 %v3430, %v3429
        %v3434 = vpack.i.b16 %v3063, %v3044
        %v3435 = vshrl.u32 %v3044, 16
        %v3436 = vshrl.u32 %v3063, 16
        %v3437 = vpack.i.b16 %v3436, %v3435
        %v3440 = vpack.i.b16 %v3099, %v3080
        %v3441 = vshrl.u32 %v3080, 16
        %v3442 = vshrl.u32 %v3099, 16
        %v3443 = vpack.i.b16 %v3442, %v3441
        %v3446 = vpack.i.b16 %v3101, %v3082
        %v3447 = vshrl.u32 %v3082, 16
        %v3448 = vshrl.u32 %v3101, 16
        %v3449 = vpack.i.b16 %v3448, %v3447
        %v3452 = vpack.i.b16 %v3137, %v3118
        %v3453 = vshrl.u32 %v3118, 16
        %v3454 = vshrl.u32 %v3137, 16
        %v3455 = vpack.i.b16 %v3454, %v3453
        %v3458 = vpack.i.b16 %v3139, %v3120
        %v3459 = vshrl.u32 %v3120, 16
        %v3460 = vshrl.u32 %v3139, 16
        %v3461 = vpack.i.b16 %v3460, %v3459
        %v3464 = vpack.i.b16 %v3175, %v3156
        %v3465 = vshrl.u32 %v3156, 16
        %v3466 = vshrl.u32 %v3175, 16
        %v3467 = vpack.i.b16 %v3466, %v3465
        %v3470 = vpack.i.b16 %v3177, %v3158
        %v3471 = vshrl.u32 %v3158, 16
        %v3472 = vshrl.u32 %v3177, 16
        %v3473 = vpack.i.b16 %v3472, %v3471
        %v3476 = vpack.i.b16 %v3213, %v3194
        %v3477 = vshrl.u32 %v3194, 16
        %v3478 = vshrl.u32 %v3213, 16
        %v3479 = vpack.i.b16 %v3478, %v3477
        %v3482 = vpack.i.b16 %v3215, %v3196
        %v3483 = vshrl.u32 %v3196, 16
        %v3484 = vshrl.u32 %v3215, 16
        %v3485 = vpack.i.b16 %v3484, %v3483
        %v3488 = vpack.i.b16 %v3251, %v3232
        %v3489 = vshrl.u32 %v3232, 16
        %v3490 = vshrl.u32 %v3251, 16
        %v3491 = vpack.i.b16 %v3490, %v3489
        %v3494 = vpack.i.b16 %v3253, %v3234
        %v3495 = vshrl.u32 %v3234, 16
        %v3496 = vshrl.u32 %v3253, 16
        %v3497 = vpack.i.b16 %v3496, %v3495
        %v3500 = vpack.i.b16 %v3289, %v3270
        %v3501 = vshrl.u32 %v3270, 16
        %v3502 = vshrl.u32 %v3289, 16
        %v3503 = vpack.i.b16 %v3502, %v3501
        %v3506 = vpack.i.b16 %v3291, %v3272
        %v3507 = vshrl.u32 %v3272, 16
        %v3508 = vshrl.u32 %v3291, 16
        %v3509 = vpack.i.b16 %v3508, %v3507
        %v3512 = vpack.i.b16 %v3327, %v3308
        %v3513 = vshrl.u32 %v3308, 16
        %v3514 = vshrl.u32 %v3327, 16
        %v3515 = vpack.i.b16 %v3514, %v3513
        %v3518 = vpack.i.b16 %v3329, %v3310
        %v3519 = vshrl.u32 %v3310, 16
        %v3520 = vshrl.u32 %v3329, 16
        %v3521 = vpack.i.b16 %v3520, %v3519
        %3538 = vrot.lane.b32.xlu0 %v1553, 96
        %v3539 = vpop.permute.xlu0 %3538
        %3540 = vrot.lane.b32.xlu0 %v1554, 96
        %v3541 = vpop.permute.xlu0 %3540
        %3542 = vrot.lane.b32.xlu0 %v1555, 96
        %v3543 = vpop.permute.xlu0 %3542
        %3544 = vrot.lane.b32.xlu0 %v1556, 96
        %v3545 = vpop.permute.xlu0 %3544
        %3546 = vrot.lane.b32.xlu0 %v1557, 96
        %v3547 = vpop.permute.xlu0 %3546
        %3548 = vrot.lane.b32.xlu0 %v1558, 96
        %v3549 = vpop.permute.xlu0 %3548
        %3550 = vrot.lane.b32.xlu0 %v1559, 96
        %v3551 = vpop.permute.xlu0 %3550
        %3552 = vrot.lane.b32.xlu0 %v1560, 96
        %v3553 = vpop.permute.xlu0 %3552
        %3554 = vrot.lane.b32.xlu0 %v1561, 96
        %v3555 = vpop.permute.xlu0 %3554
        %3556 = vrot.lane.b32.xlu0 %v1562, 96
        %v3557 = vpop.permute.xlu0 %3556
        %3558 = vrot.lane.b32.xlu0 %v1563, 96
        %v3559 = vpop.permute.xlu0 %3558
        %3560 = vrot.lane.b32.xlu0 %v1564, 96
        %v3561 = vpop.permute.xlu0 %3560
        %3562 = vrot.lane.b32.xlu0 %v1565, 96
        %v3563 = vpop.permute.xlu0 %3562
        %3564 = vrot.lane.b32.xlu0 %v1566, 96
        %v3565 = vpop.permute.xlu0 %3564
        %3566 = vrot.lane.b32.xlu0 %v1567, 96
        %v3567 = vpop.permute.xlu0 %3566
        %3568 = vrot.lane.b32.xlu0 %v1568, 96
        %v3569 = vpop.permute.xlu0 %3568
        %v3572 = vpack.i.b16 %v3539, %v1553
        %v3573 = vshrl.u32 %v1553, 16
        %v3574 = vshrl.u32 %v3539, 16
        %v3575 = vpack.i.b16 %v3574, %v3573
        %v3578 = vpack.i.b16 %v3541, %v1554
        %v3579 = vshrl.u32 %v1554, 16
        %v3580 = vshrl.u32 %v3541, 16
        %v3581 = vpack.i.b16 %v3580, %v3579
        %v3584 = vpack.i.b16 %v3543, %v1555
        %v3585 = vshrl.u32 %v1555, 16
        %v3586 = vshrl.u32 %v3543, 16
        %v3587 = vpack.i.b16 %v3586, %v3585
        %v3590 = vpack.i.b16 %v3545, %v1556
        %v3591 = vshrl.u32 %v1556, 16
        %v3592 = vshrl.u32 %v3545, 16
        %v3593 = vpack.i.b16 %v3592, %v3591
        %v3596 = vpack.i.b16 %v3547, %v1557
        %v3597 = vshrl.u32 %v1557, 16
        %v3598 = vshrl.u32 %v3547, 16
        %v3599 = vpack.i.b16 %v3598, %v3597
        %v3602 = vpack.i.b16 %v3549, %v1558
        %v3603 = vshrl.u32 %v1558, 16
        %v3604 = vshrl.u32 %v3549, 16
        %v3605 = vpack.i.b16 %v3604, %v3603
        %v3608 = vpack.i.b16 %v3551, %v1559
        %v3609 = vshrl.u32 %v1559, 16
        %v3610 = vshrl.u32 %v3551, 16
        %v3611 = vpack.i.b16 %v3610, %v3609
        %v3614 = vpack.i.b16 %v3553, %v1560
        %v3615 = vshrl.u32 %v1560, 16
        %v3616 = vshrl.u32 %v3553, 16
        %v3617 = vpack.i.b16 %v3616, %v3615
        %v3620 = vpack.i.b16 %v3555, %v1561
        %v3621 = vshrl.u32 %v1561, 16
        %v3622 = vshrl.u32 %v3555, 16
        %v3623 = vpack.i.b16 %v3622, %v3621
        %v3626 = vpack.i.b16 %v3557, %v1562
        %v3627 = vshrl.u32 %v1562, 16
        %v3628 = vshrl.u32 %v3557, 16
        %v3629 = vpack.i.b16 %v3628, %v3627
        %v3632 = vpack.i.b16 %v3559, %v1563
        %v3633 = vshrl.u32 %v1563, 16
        %v3634 = vshrl.u32 %v3559, 16
        %v3635 = vpack.i.b16 %v3634, %v3633
        %v3638 = vpack.i.b16 %v3561, %v1564
        %v3639 = vshrl.u32 %v1564, 16
        %v3640 = vshrl.u32 %v3561, 16
        %v3641 = vpack.i.b16 %v3640, %v3639
        %v3644 = vpack.i.b16 %v3563, %v1565
        %v3645 = vshrl.u32 %v1565, 16
        %v3646 = vshrl.u32 %v3563, 16
        %v3647 = vpack.i.b16 %v3646, %v3645
        %v3650 = vpack.i.b16 %v3565, %v1566
        %v3651 = vshrl.u32 %v1566, 16
        %v3652 = vshrl.u32 %v3565, 16
        %v3653 = vpack.i.b16 %v3652, %v3651
        %v3656 = vpack.i.b16 %v3567, %v1567
        %v3657 = vshrl.u32 %v1567, 16
        %v3658 = vshrl.u32 %v3567, 16
        %v3659 = vpack.i.b16 %v3658, %v3657
        %v3662 = vpack.i.b16 %v3569, %v1568
        %v3663 = vshrl.u32 %v1568, 16
        %v3664 = vshrl.u32 %v3569, 16
        %v3665 = vpack.i.b16 %v3664, %v3663
        %v3668 = vunpack.c.l.s4 1983009808
        %v3669 = vunpack.c.0.s8 %v3668
        %v3670 = vperm.slane %v3572, %v3669
        %v3671 = vrot.slane %v3670, 4
        %v3672 = vsel %vm1900, 0, %v3671
        %v3674 = vunpack.c.l.s4 1934713408
        %v3675 = vunpack.c.0.s8 %v3674
        %v3676 = vperm.slane %v3670, %v3675
        %v3678 = vunpack.c.l.s4 1934713408
        %v3679 = vunpack.c.0.s8 %v3678
        %v3680 = vperm.slane %v3672, %v3679
        %v3681 = vrot.slane %v3676, 4
        %v3682 = vsel %vm1900, 0, %v3681
        %v3683 = vrot.slane %v3680, 4
        %v3684 = vsel %vm1900, 0, %v3683
        %v3687 = vunpack.c.l.s4 1983009808
        %v3688 = vunpack.c.0.s8 %v3687
        %v3689 = vperm.slane %v3575, %v3688
        %v3690 = vrot.slane %v3689, 4
        %v3691 = vsel %vm1900, 0, %v3690
        %v3693 = vunpack.c.l.s4 1934713408
        %v3694 = vunpack.c.0.s8 %v3693
        %v3695 = vperm.slane %v3689, %v3694
        %v3697 = vunpack.c.l.s4 1934713408
        %v3698 = vunpack.c.0.s8 %v3697
        %v3699 = vperm.slane %v3691, %v3698
        %v3700 = vrot.slane %v3695, 4
        %v3701 = vsel %vm1900, 0, %v3700
        %v3702 = vrot.slane %v3699, 4
        %v3703 = vsel %vm1900, 0, %v3702
        %v3706 = vunpack.c.l.s4 1983009808
        %v3707 = vunpack.c.0.s8 %v3706
        %v3708 = vperm.slane %v3578, %v3707
        %v3709 = vrot.slane %v3708, 4
        %v3710 = vsel %vm1900, 0, %v3709
        %v3712 = vunpack.c.l.s4 1934713408
        %v3713 = vunpack.c.0.s8 %v3712
        %v3714 = vperm.slane %v3708, %v3713
        %v3716 = vunpack.c.l.s4 1934713408
        %v3717 = vunpack.c.0.s8 %v3716
        %v3718 = vperm.slane %v3710, %v3717
        %v3719 = vrot.slane %v3714, 4
        %v3720 = vsel %vm1900, 0, %v3719
        %v3721 = vrot.slane %v3718, 4
        %v3722 = vsel %vm1900, 0, %v3721
        %v3725 = vunpack.c.l.s4 1983009808
        %v3726 = vunpack.c.0.s8 %v3725
        %v3727 = vperm.slane %v3581, %v3726
        %v3728 = vrot.slane %v3727, 4
        %v3729 = vsel %vm1900, 0, %v3728
        %v3731 = vunpack.c.l.s4 1934713408
        %v3732 = vunpack.c.0.s8 %v3731
        %v3733 = vperm.slane %v3727, %v3732
        %v3735 = vunpack.c.l.s4 1934713408
        %v3736 = vunpack.c.0.s8 %v3735
        %v3737 = vperm.slane %v3729, %v3736
        %v3738 = vrot.slane %v3733, 4
        %v3739 = vsel %vm1900, 0, %v3738
        %v3740 = vrot.slane %v3737, 4
        %v3741 = vsel %vm1900, 0, %v3740
        %v3744 = vunpack.c.l.s4 1983009808
        %v3745 = vunpack.c.0.s8 %v3744
        %v3746 = vperm.slane %v3584, %v3745
        %v3747 = vrot.slane %v3746, 4
        %v3748 = vsel %vm1900, 0, %v3747
        %v3750 = vunpack.c.l.s4 1934713408
        %v3751 = vunpack.c.0.s8 %v3750
        %v3752 = vperm.slane %v3746, %v3751
        %v3754 = vunpack.c.l.s4 1934713408
        %v3755 = vunpack.c.0.s8 %v3754
        %v3756 = vperm.slane %v3748, %v3755
        %v3757 = vrot.slane %v3752, 4
        %v3758 = vsel %vm1900, 0, %v3757
        %v3759 = vrot.slane %v3756, 4
        %v3760 = vsel %vm1900, 0, %v3759
        %v3763 = vunpack.c.l.s4 1983009808
        %v3764 = vunpack.c.0.s8 %v3763
        %v3765 = vperm.slane %v3587, %v3764
        %v3766 = vrot.slane %v3765, 4
        %v3767 = vsel %vm1900, 0, %v3766
        %v3769 = vunpack.c.l.s4 1934713408
        %v3770 = vunpack.c.0.s8 %v3769
        %v3771 = vperm.slane %v3765, %v3770
        %v3773 = vunpack.c.l.s4 1934713408
        %v3774 = vunpack.c.0.s8 %v3773
        %v3775 = vperm.slane %v3767, %v3774
        %v3776 = vrot.slane %v3771, 4
        %v3777 = vsel %vm1900, 0, %v3776
        %v3778 = vrot.slane %v3775, 4
        %v3779 = vsel %vm1900, 0, %v3778
        %v3782 = vunpack.c.l.s4 1983009808
        %v3783 = vunpack.c.0.s8 %v3782
        %v3784 = vperm.slane %v3590, %v3783
        %v3785 = vrot.slane %v3784, 4
        %v3786 = vsel %vm1900, 0, %v3785
        %v3788 = vunpack.c.l.s4 1934713408
        %v3789 = vunpack.c.0.s8 %v3788
        %v3790 = vperm.slane %v3784, %v3789
        %v3792 = vunpack.c.l.s4 1934713408
        %v3793 = vunpack.c.0.s8 %v3792
        %v3794 = vperm.slane %v3786, %v3793
        %v3795 = vrot.slane %v3790, 4
        %v3796 = vsel %vm1900, 0, %v3795
        %v3797 = vrot.slane %v3794, 4
        %v3798 = vsel %vm1900, 0, %v3797
        %v3801 = vunpack.c.l.s4 1983009808
        %v3802 = vunpack.c.0.s8 %v3801
        %v3803 = vperm.slane %v3593, %v3802
        %v3804 = vrot.slane %v3803, 4
        %v3805 = vsel %vm1900, 0, %v3804
        %v3807 = vunpack.c.l.s4 1934713408
        %v3808 = vunpack.c.0.s8 %v3807
        %v3809 = vperm.slane %v3803, %v3808
        %v3811 = vunpack.c.l.s4 1934713408
        %v3812 = vunpack.c.0.s8 %v3811
        %v3813 = vperm.slane %v3805, %v3812
        %v3814 = vrot.slane %v3809, 4
        %v3815 = vsel %vm1900, 0, %v3814
        %v3816 = vrot.slane %v3813, 4
        %v3817 = vsel %vm1900, 0, %v3816
        %v3820 = vunpack.c.l.s4 1983009808
        %v3821 = vunpack.c.0.s8 %v3820
        %v3822 = vperm.slane %v3596, %v3821
        %v3823 = vrot.slane %v3822, 4
        %v3824 = vsel %vm1900, 0, %v3823
        %v3826 = vunpack.c.l.s4 1934713408
        %v3827 = vunpack.c.0.s8 %v3826
        %v3828 = vperm.slane %v3822, %v3827
        %v3830 = vunpack.c.l.s4 1934713408
        %v3831 = vunpack.c.0.s8 %v3830
        %v3832 = vperm.slane %v3824, %v3831
        %v3833 = vrot.slane %v3828, 4
        %v3834 = vsel %vm1900, 0, %v3833
        %v3835 = vrot.slane %v3832, 4
        %v3836 = vsel %vm1900, 0, %v3835
        %v3839 = vunpack.c.l.s4 1983009808
        %v3840 = vunpack.c.0.s8 %v3839
        %v3841 = vperm.slane %v3599, %v3840
        %v3842 = vrot.slane %v3841, 4
        %v3843 = vsel %vm1900, 0, %v3842
        %v3845 = vunpack.c.l.s4 1934713408
        %v3846 = vunpack.c.0.s8 %v3845
        %v3847 = vperm.slane %v3841, %v3846
        %v3849 = vunpack.c.l.s4 1934713408
        %v3850 = vunpack.c.0.s8 %v3849
        %v3851 = vperm.slane %v3843, %v3850
        %v3852 = vrot.slane %v3847, 4
        %v3853 = vsel %vm1900, 0, %v3852
        %v3854 = vrot.slane %v3851, 4
        %v3855 = vsel %vm1900, 0, %v3854
        %v3858 = vunpack.c.l.s4 1983009808
        %v3859 = vunpack.c.0.s8 %v3858
        %v3860 = vperm.slane %v3602, %v3859
        %v3861 = vrot.slane %v3860, 4
        %v3862 = vsel %vm1900, 0, %v3861
        %v3864 = vunpack.c.l.s4 1934713408
        %v3865 = vunpack.c.0.s8 %v3864
        %v3866 = vperm.slane %v3860, %v3865
        %v3868 = vunpack.c.l.s4 1934713408
        %v3869 = vunpack.c.0.s8 %v3868
        %v3870 = vperm.slane %v3862, %v3869
        %v3871 = vrot.slane %v3866, 4
        %v3872 = vsel %vm1900, 0, %v3871
        %v3873 = vrot.slane %v3870, 4
        %v3874 = vsel %vm1900, 0, %v3873
        %v3877 = vunpack.c.l.s4 1983009808
        %v3878 = vunpack.c.0.s8 %v3877
        %v3879 = vperm.slane %v3605, %v3878
        %v3880 = vrot.slane %v3879, 4
        %v3881 = vsel %vm1900, 0, %v3880
        %v3883 = vunpack.c.l.s4 1934713408
        %v3884 = vunpack.c.0.s8 %v3883
        %v3885 = vperm.slane %v3879, %v3884
        %v3887 = vunpack.c.l.s4 1934713408
        %v3888 = vunpack.c.0.s8 %v3887
        %v3889 = vperm.slane %v3881, %v3888
        %v3890 = vrot.slane %v3885, 4
        %v3891 = vsel %vm1900, 0, %v3890
        %v3892 = vrot.slane %v3889, 4
        %v3893 = vsel %vm1900, 0, %v3892
        %v3896 = vunpack.c.l.s4 1983009808
        %v3897 = vunpack.c.0.s8 %v3896
        %v3898 = vperm.slane %v3608, %v3897
        %v3899 = vrot.slane %v3898, 4
        %v3900 = vsel %vm1900, 0, %v3899
        %v3902 = vunpack.c.l.s4 1934713408
        %v3903 = vunpack.c.0.s8 %v3902
        %v3904 = vperm.slane %v3898, %v3903
        %v3906 = vunpack.c.l.s4 1934713408
        %v3907 = vunpack.c.0.s8 %v3906
        %v3908 = vperm.slane %v3900, %v3907
        %v3909 = vrot.slane %v3904, 4
        %v3910 = vsel %vm1900, 0, %v3909
        %v3911 = vrot.slane %v3908, 4
        %v3912 = vsel %vm1900, 0, %v3911
        %v3915 = vunpack.c.l.s4 1983009808
        %v3916 = vunpack.c.0.s8 %v3915
        %v3917 = vperm.slane %v3611, %v3916
        %v3918 = vrot.slane %v3917, 4
        %v3919 = vsel %vm1900, 0, %v3918
        %v3921 = vunpack.c.l.s4 1934713408
        %v3922 = vunpack.c.0.s8 %v3921
        %v3923 = vperm.slane %v3917, %v3922
        %v3925 = vunpack.c.l.s4 1934713408
        %v3926 = vunpack.c.0.s8 %v3925
        %v3927 = vperm.slane %v3919, %v3926
        %v3928 = vrot.slane %v3923, 4
        %v3929 = vsel %vm1900, 0, %v3928
        %v3930 = vrot.slane %v3927, 4
        %v3931 = vsel %vm1900, 0, %v3930
        %v3934 = vunpack.c.l.s4 1983009808
        %v3935 = vunpack.c.0.s8 %v3934
        %v3936 = vperm.slane %v3614, %v3935
        %v3937 = vrot.slane %v3936, 4
        %v3938 = vsel %vm1900, 0, %v3937
        %v3940 = vunpack.c.l.s4 1934713408
        %v3941 = vunpack.c.0.s8 %v3940
        %v3942 = vperm.slane %v3936, %v3941
        %v3944 = vunpack.c.l.s4 1934713408
        %v3945 = vunpack.c.0.s8 %v3944
        %v3946 = vperm.slane %v3938, %v3945
        %v3947 = vrot.slane %v3942, 4
        %v3948 = vsel %vm1900, 0, %v3947
        %v3949 = vrot.slane %v3946, 4
        %v3950 = vsel %vm1900, 0, %v3949
        %v3953 = vunpack.c.l.s4 1983009808
        %v3954 = vunpack.c.0.s8 %v3953
        %v3955 = vperm.slane %v3617, %v3954
        %v3956 = vrot.slane %v3955, 4
        %v3957 = vsel %vm1900, 0, %v3956
        %v3959 = vunpack.c.l.s4 1934713408
        %v3960 = vunpack.c.0.s8 %v3959
        %v3961 = vperm.slane %v3955, %v3960
        %v3963 = vunpack.c.l.s4 1934713408
        %v3964 = vunpack.c.0.s8 %v3963
        %v3965 = vperm.slane %v3957, %v3964
        %v3966 = vrot.slane %v3961, 4
        %v3967 = vsel %vm1900, 0, %v3966
        %v3968 = vrot.slane %v3965, 4
        %v3969 = vsel %vm1900, 0, %v3968
        %v3972 = vunpack.c.l.s4 1983009808
        %v3973 = vunpack.c.0.s8 %v3972
        %v3974 = vperm.slane %v3620, %v3973
        %v3975 = vrot.slane %v3974, 4
        %v3976 = vsel %vm1900, 0, %v3975
        %v3978 = vunpack.c.l.s4 1934713408
        %v3979 = vunpack.c.0.s8 %v3978
        %v3980 = vperm.slane %v3974, %v3979
        %v3982 = vunpack.c.l.s4 1934713408
        %v3983 = vunpack.c.0.s8 %v3982
        %v3984 = vperm.slane %v3976, %v3983
        %v3985 = vrot.slane %v3980, 4
        %v3986 = vsel %vm1900, 0, %v3985
        %v3987 = vrot.slane %v3984, 4
        %v3988 = vsel %vm1900, 0, %v3987
        %v3991 = vunpack.c.l.s4 1983009808
        %v3992 = vunpack.c.0.s8 %v3991
        %v3993 = vperm.slane %v3623, %v3992
        %v3994 = vrot.slane %v3993, 4
        %v3995 = vsel %vm1900, 0, %v3994
        %v3997 = vunpack.c.l.s4 1934713408
        %v3998 = vunpack.c.0.s8 %v3997
        %v3999 = vperm.slane %v3993, %v3998
        %v4001 = vunpack.c.l.s4 1934713408
        %v4002 = vunpack.c.0.s8 %v4001
        %v4003 = vperm.slane %v3995, %v4002
        %v4004 = vrot.slane %v3999, 4
        %v4005 = vsel %vm1900, 0, %v4004
        %v4006 = vrot.slane %v4003, 4
        %v4007 = vsel %vm1900, 0, %v4006
        %v4010 = vunpack.c.l.s4 1983009808
        %v4011 = vunpack.c.0.s8 %v4010
        %v4012 = vperm.slane %v3626, %v4011
        %v4013 = vrot.slane %v4012, 4
        %v4014 = vsel %vm1900, 0, %v4013
        %v4016 = vunpack.c.l.s4 1934713408
        %v4017 = vunpack.c.0.s8 %v4016
        %v4018 = vperm.slane %v4012, %v4017
        %v4020 = vunpack.c.l.s4 1934713408
        %v4021 = vunpack.c.0.s8 %v4020
        %v4022 = vperm.slane %v4014, %v4021
        %v4023 = vrot.slane %v4018, 4
        %v4024 = vsel %vm1900, 0, %v4023
        %v4025 = vrot.slane %v4022, 4
        %v4026 = vsel %vm1900, 0, %v4025
        %v4029 = vunpack.c.l.s4 1983009808
        %v4030 = vunpack.c.0.s8 %v4029
        %v4031 = vperm.slane %v3629, %v4030
        %v4032 = vrot.slane %v4031, 4
        %v4033 = vsel %vm1900, 0, %v4032
        %v4035 = vunpack.c.l.s4 1934713408
        %v4036 = vunpack.c.0.s8 %v4035
        %v4037 = vperm.slane %v4031, %v4036
        %v4039 = vunpack.c.l.s4 1934713408
        %v4040 = vunpack.c.0.s8 %v4039
        %v4041 = vperm.slane %v4033, %v4040
        %v4042 = vrot.slane %v4037, 4
        %v4043 = vsel %vm1900, 0, %v4042
        %v4044 = vrot.slane %v4041, 4
        %v4045 = vsel %vm1900, 0, %v4044
        %v4048 = vunpack.c.l.s4 1983009808
        %v4049 = vunpack.c.0.s8 %v4048
        %v4050 = vperm.slane %v3632, %v4049
        %v4051 = vrot.slane %v4050, 4
        %v4052 = vsel %vm1900, 0, %v4051
        %v4054 = vunpack.c.l.s4 1934713408
        %v4055 = vunpack.c.0.s8 %v4054
        %v4056 = vperm.slane %v4050, %v4055
        %v4058 = vunpack.c.l.s4 1934713408
        %v4059 = vunpack.c.0.s8 %v4058
        %v4060 = vperm.slane %v4052, %v4059
        %v4061 = vrot.slane %v4056, 4
        %v4062 = vsel %vm1900, 0, %v4061
        %v4063 = vrot.slane %v4060, 4
        %v4064 = vsel %vm1900, 0, %v4063
        %v4067 = vunpack.c.l.s4 1983009808
        %v4068 = vunpack.c.0.s8 %v4067
        %v4069 = vperm.slane %v3635, %v4068
        %v4070 = vrot.slane %v4069, 4
        %v4071 = vsel %vm1900, 0, %v4070
        %v4073 = vunpack.c.l.s4 1934713408
        %v4074 = vunpack.c.0.s8 %v4073
        %v4075 = vperm.slane %v4069, %v4074
        %v4077 = vunpack.c.l.s4 1934713408
        %v4078 = vunpack.c.0.s8 %v4077
        %v4079 = vperm.slane %v4071, %v4078
        %v4080 = vrot.slane %v4075, 4
        %v4081 = vsel %vm1900, 0, %v4080
        %v4082 = vrot.slane %v4079, 4
        %v4083 = vsel %vm1900, 0, %v4082
        %v4086 = vunpack.c.l.s4 1983009808
        %v4087 = vunpack.c.0.s8 %v4086
        %v4088 = vperm.slane %v3638, %v4087
        %v4089 = vrot.slane %v4088, 4
        %v4090 = vsel %vm1900, 0, %v4089
        %v4092 = vunpack.c.l.s4 1934713408
        %v4093 = vunpack.c.0.s8 %v4092
        %v4094 = vperm.slane %v4088, %v4093
        %v4096 = vunpack.c.l.s4 1934713408
        %v4097 = vunpack.c.0.s8 %v4096
        %v4098 = vperm.slane %v4090, %v4097
        %v4099 = vrot.slane %v4094, 4
        %v4100 = vsel %vm1900, 0, %v4099
        %v4101 = vrot.slane %v4098, 4
        %v4102 = vsel %vm1900, 0, %v4101
        %v4105 = vunpack.c.l.s4 1983009808
        %v4106 = vunpack.c.0.s8 %v4105
        %v4107 = vperm.slane %v3641, %v4106
        %v4108 = vrot.slane %v4107, 4
        %v4109 = vsel %vm1900, 0, %v4108
        %v4111 = vunpack.c.l.s4 1934713408
        %v4112 = vunpack.c.0.s8 %v4111
        %v4113 = vperm.slane %v4107, %v4112
        %v4115 = vunpack.c.l.s4 1934713408
        %v4116 = vunpack.c.0.s8 %v4115
        %v4117 = vperm.slane %v4109, %v4116
        %v4118 = vrot.slane %v4113, 4
        %v4119 = vsel %vm1900, 0, %v4118
        %v4120 = vrot.slane %v4117, 4
        %v4121 = vsel %vm1900, 0, %v4120
        %v4124 = vunpack.c.l.s4 1983009808
        %v4125 = vunpack.c.0.s8 %v4124
        %v4126 = vperm.slane %v3644, %v4125
        %v4127 = vrot.slane %v4126, 4
        %v4128 = vsel %vm1900, 0, %v4127
        %v4130 = vunpack.c.l.s4 1934713408
        %v4131 = vunpack.c.0.s8 %v4130
        %v4132 = vperm.slane %v4126, %v4131
        %v4134 = vunpack.c.l.s4 1934713408
        %v4135 = vunpack.c.0.s8 %v4134
        %v4136 = vperm.slane %v4128, %v4135
        %v4137 = vrot.slane %v4132, 4
        %v4138 = vsel %vm1900, 0, %v4137
        %v4139 = vrot.slane %v4136, 4
        %v4140 = vsel %vm1900, 0, %v4139
        %v4143 = vunpack.c.l.s4 1983009808
        %v4144 = vunpack.c.0.s8 %v4143
        %v4145 = vperm.slane %v3647, %v4144
        %v4146 = vrot.slane %v4145, 4
        %v4147 = vsel %vm1900, 0, %v4146
        %v4149 = vunpack.c.l.s4 1934713408
        %v4150 = vunpack.c.0.s8 %v4149
        %v4151 = vperm.slane %v4145, %v4150
        %v4153 = vunpack.c.l.s4 1934713408
        %v4154 = vunpack.c.0.s8 %v4153
        %v4155 = vperm.slane %v4147, %v4154
        %v4156 = vrot.slane %v4151, 4
        %v4157 = vsel %vm1900, 0, %v4156
        %v4158 = vrot.slane %v4155, 4
        %v4159 = vsel %vm1900, 0, %v4158
        %v4162 = vunpack.c.l.s4 1983009808
        %v4163 = vunpack.c.0.s8 %v4162
        %v4164 = vperm.slane %v3650, %v4163
        %v4165 = vrot.slane %v4164, 4
        %v4166 = vsel %vm1900, 0, %v4165
        %v4168 = vunpack.c.l.s4 1934713408
        %v4169 = vunpack.c.0.s8 %v4168
        %v4170 = vperm.slane %v4164, %v4169
        %v4172 = vunpack.c.l.s4 1934713408
        %v4173 = vunpack.c.0.s8 %v4172
        %v4174 = vperm.slane %v4166, %v4173
        %v4175 = vrot.slane %v4170, 4
        %v4176 = vsel %vm1900, 0, %v4175
        %v4177 = vrot.slane %v4174, 4
        %v4178 = vsel %vm1900, 0, %v4177
        %v4181 = vunpack.c.l.s4 1983009808
        %v4182 = vunpack.c.0.s8 %v4181
        %v4183 = vperm.slane %v3653, %v4182
        %v4184 = vrot.slane %v4183, 4
        %v4185 = vsel %vm1900, 0, %v4184
        %v4187 = vunpack.c.l.s4 1934713408
        %v4188 = vunpack.c.0.s8 %v4187
        %v4189 = vperm.slane %v4183, %v4188
        %v4191 = vunpack.c.l.s4 1934713408
        %v4192 = vunpack.c.0.s8 %v4191
        %v4193 = vperm.slane %v4185, %v4192
        %v4194 = vrot.slane %v4189, 4
        %v4195 = vsel %vm1900, 0, %v4194
        %v4196 = vrot.slane %v4193, 4
        %v4197 = vsel %vm1900, 0, %v4196
        %v4200 = vunpack.c.l.s4 1983009808
        %v4201 = vunpack.c.0.s8 %v4200
        %v4202 = vperm.slane %v3656, %v4201
        %v4203 = vrot.slane %v4202, 4
        %v4204 = vsel %vm1900, 0, %v4203
        %v4206 = vunpack.c.l.s4 1934713408
        %v4207 = vunpack.c.0.s8 %v4206
        %v4208 = vperm.slane %v4202, %v4207
        %v4210 = vunpack.c.l.s4 1934713408
        %v4211 = vunpack.c.0.s8 %v4210
        %v4212 = vperm.slane %v4204, %v4211
        %v4213 = vrot.slane %v4208, 4
        %v4214 = vsel %vm1900, 0, %v4213
        %v4215 = vrot.slane %v4212, 4
        %v4216 = vsel %vm1900, 0, %v4215
        %v4219 = vunpack.c.l.s4 1983009808
        %v4220 = vunpack.c.0.s8 %v4219
        %v4221 = vperm.slane %v3659, %v4220
        %v4222 = vrot.slane %v4221, 4
        %v4223 = vsel %vm1900, 0, %v4222
        %v4225 = vunpack.c.l.s4 1934713408
        %v4226 = vunpack.c.0.s8 %v4225
        %v4227 = vperm.slane %v4221, %v4226
        %v4229 = vunpack.c.l.s4 1934713408
        %v4230 = vunpack.c.0.s8 %v4229
        %v4231 = vperm.slane %v4223, %v4230
        %v4232 = vrot.slane %v4227, 4
        %v4233 = vsel %vm1900, 0, %v4232
        %v4234 = vrot.slane %v4231, 4
        %v4235 = vsel %vm1900, 0, %v4234
        %v4238 = vunpack.c.l.s4 1983009808
        %v4239 = vunpack.c.0.s8 %v4238
        %v4240 = vperm.slane %v3662, %v4239
        %v4241 = vrot.slane %v4240, 4
        %v4242 = vsel %vm1900, 0, %v4241
        %v4244 = vunpack.c.l.s4 1934713408
        %v4245 = vunpack.c.0.s8 %v4244
        %v4246 = vperm.slane %v4240, %v4245
        %v4248 = vunpack.c.l.s4 1934713408
        %v4249 = vunpack.c.0.s8 %v4248
        %v4250 = vperm.slane %v4242, %v4249
        %v4251 = vrot.slane %v4246, 4
        %v4252 = vsel %vm1900, 0, %v4251
        %v4253 = vrot.slane %v4250, 4
        %v4254 = vsel %vm1900, 0, %v4253
        %v4257 = vunpack.c.l.s4 1983009808
        %v4258 = vunpack.c.0.s8 %v4257
        %v4259 = vperm.slane %v3665, %v4258
        %v4260 = vrot.slane %v4259, 4
        %v4261 = vsel %vm1900, 0, %v4260
        %v4263 = vunpack.c.l.s4 1934713408
        %v4264 = vunpack.c.0.s8 %v4263
        %v4265 = vperm.slane %v4259, %v4264
        %v4267 = vunpack.c.l.s4 1934713408
        %v4268 = vunpack.c.0.s8 %v4267
        %v4269 = vperm.slane %v4261, %v4268
        %v4270 = vrot.slane %v4265, 4
        %v4271 = vsel %vm1900, 0, %v4270
        %v4272 = vrot.slane %v4269, 4
        %v4273 = vsel %vm1900, 0, %v4272
        %v4274 = vsel %vm1900, %v3683, %v3676
        %v4276 = vunpack.c.l.s4 1983009808
        %v4277 = vunpack.c.0.s8 %v4276
        %v4278 = vperm.slane %v4274, %v4277
        %v4279 = vrot.slane %v3684, 4
        %v4280 = vsel %vm1900, %v4279, %v3682
        %v4282 = vunpack.c.l.s4 1983009808
        %v4283 = vunpack.c.0.s8 %v4282
        %v4284 = vperm.slane %v4280, %v4283
        %v4285 = vrot.slane %v4284, 4
        %v4286 = vsel %vm1900, %v4285, %v4278
        %v4288 = vunpack.c.l.s4 1934713408
        %v4289 = vunpack.c.0.s8 %v4288
        %v4290 = vperm.slane %v4286, %v4289
        %v4291 = vsel %vm1900, %v3702, %v3695
        %v4293 = vunpack.c.l.s4 1983009808
        %v4294 = vunpack.c.0.s8 %v4293
        %v4295 = vperm.slane %v4291, %v4294
        %v4296 = vrot.slane %v3703, 4
        %v4297 = vsel %vm1900, %v4296, %v3701
        %v4299 = vunpack.c.l.s4 1983009808
        %v4300 = vunpack.c.0.s8 %v4299
        %v4301 = vperm.slane %v4297, %v4300
        %v4302 = vrot.slane %v4301, 4
        %v4303 = vsel %vm1900, %v4302, %v4295
        %v4305 = vunpack.c.l.s4 1934713408
        %v4306 = vunpack.c.0.s8 %v4305
        %v4307 = vperm.slane %v4303, %v4306
        %v4308 = vsel %vm1900, %v3721, %v3714
        %v4310 = vunpack.c.l.s4 1983009808
        %v4311 = vunpack.c.0.s8 %v4310
        %v4312 = vperm.slane %v4308, %v4311
        %v4313 = vrot.slane %v3722, 4
        %v4314 = vsel %vm1900, %v4313, %v3720
        %v4316 = vunpack.c.l.s4 1983009808
        %v4317 = vunpack.c.0.s8 %v4316
        %v4318 = vperm.slane %v4314, %v4317
        %v4319 = vrot.slane %v4318, 4
        %v4320 = vsel %vm1900, %v4319, %v4312
        %v4322 = vunpack.c.l.s4 1934713408
        %v4323 = vunpack.c.0.s8 %v4322
        %v4324 = vperm.slane %v4320, %v4323
        %v4325 = vsel %vm1900, %v3740, %v3733
        %v4327 = vunpack.c.l.s4 1983009808
        %v4328 = vunpack.c.0.s8 %v4327
        %v4329 = vperm.slane %v4325, %v4328
        %v4330 = vrot.slane %v3741, 4
        %v4331 = vsel %vm1900, %v4330, %v3739
        %v4333 = vunpack.c.l.s4 1983009808
        %v4334 = vunpack.c.0.s8 %v4333
        %v4335 = vperm.slane %v4331, %v4334
        %v4336 = vrot.slane %v4335, 4
        %v4337 = vsel %vm1900, %v4336, %v4329
        %v4339 = vunpack.c.l.s4 1934713408
        %v4340 = vunpack.c.0.s8 %v4339
        %v4341 = vperm.slane %v4337, %v4340
        %v4342 = vsel %vm1900, %v3759, %v3752
        %v4344 = vunpack.c.l.s4 1983009808
        %v4345 = vunpack.c.0.s8 %v4344
        %v4346 = vperm.slane %v4342, %v4345
        %v4347 = vrot.slane %v3760, 4
        %v4348 = vsel %vm1900, %v4347, %v3758
        %v4350 = vunpack.c.l.s4 1983009808
        %v4351 = vunpack.c.0.s8 %v4350
        %v4352 = vperm.slane %v4348, %v4351
        %v4353 = vrot.slane %v4352, 4
        %v4354 = vsel %vm1900, %v4353, %v4346
        %v4356 = vunpack.c.l.s4 1934713408
        %v4357 = vunpack.c.0.s8 %v4356
        %v4358 = vperm.slane %v4354, %v4357
        %v4359 = vsel %vm1900, %v3778, %v3771
        %v4361 = vunpack.c.l.s4 1983009808
        %v4362 = vunpack.c.0.s8 %v4361
        %v4363 = vperm.slane %v4359, %v4362
        %v4364 = vrot.slane %v3779, 4
        %v4365 = vsel %vm1900, %v4364, %v3777
        %v4367 = vunpack.c.l.s4 1983009808
        %v4368 = vunpack.c.0.s8 %v4367
        %v4369 = vperm.slane %v4365, %v4368
        %v4370 = vrot.slane %v4369, 4
        %v4371 = vsel %vm1900, %v4370, %v4363
        %v4373 = vunpack.c.l.s4 1934713408
        %v4374 = vunpack.c.0.s8 %v4373
        %v4375 = vperm.slane %v4371, %v4374
        %v4376 = vsel %vm1900, %v3797, %v3790
        %v4378 = vunpack.c.l.s4 1983009808
        %v4379 = vunpack.c.0.s8 %v4378
        %v4380 = vperm.slane %v4376, %v4379
        %v4381 = vrot.slane %v3798, 4
        %v4382 = vsel %vm1900, %v4381, %v3796
        %v4384 = vunpack.c.l.s4 1983009808
        %v4385 = vunpack.c.0.s8 %v4384
        %v4386 = vperm.slane %v4382, %v4385
        %v4387 = vrot.slane %v4386, 4
        %v4388 = vsel %vm1900, %v4387, %v4380
        %v4390 = vunpack.c.l.s4 1934713408
        %v4391 = vunpack.c.0.s8 %v4390
        %v4392 = vperm.slane %v4388, %v4391
        %v4393 = vsel %vm1900, %v3816, %v3809
        %v4395 = vunpack.c.l.s4 1983009808
        %v4396 = vunpack.c.0.s8 %v4395
        %v4397 = vperm.slane %v4393, %v4396
        %v4398 = vrot.slane %v3817, 4
        %v4399 = vsel %vm1900, %v4398, %v3815
        %v4401 = vunpack.c.l.s4 1983009808
        %v4402 = vunpack.c.0.s8 %v4401
        %v4403 = vperm.slane %v4399, %v4402
        %v4404 = vrot.slane %v4403, 4
        %v4405 = vsel %vm1900, %v4404, %v4397
        %v4407 = vunpack.c.l.s4 1934713408
        %v4408 = vunpack.c.0.s8 %v4407
        %v4409 = vperm.slane %v4405, %v4408
        %v4410 = vsel %vm1900, %v3835, %v3828
        %v4412 = vunpack.c.l.s4 1983009808
        %v4413 = vunpack.c.0.s8 %v4412
        %v4414 = vperm.slane %v4410, %v4413
        %v4415 = vrot.slane %v3836, 4
        %v4416 = vsel %vm1900, %v4415, %v3834
        %v4418 = vunpack.c.l.s4 1983009808
        %v4419 = vunpack.c.0.s8 %v4418
        %v4420 = vperm.slane %v4416, %v4419
        %v4421 = vrot.slane %v4420, 4
        %v4422 = vsel %vm1900, %v4421, %v4414
        %v4424 = vunpack.c.l.s4 1934713408
        %v4425 = vunpack.c.0.s8 %v4424
        %v4426 = vperm.slane %v4422, %v4425
        %v4427 = vsel %vm1900, %v3854, %v3847
        %v4429 = vunpack.c.l.s4 1983009808
        %v4430 = vunpack.c.0.s8 %v4429
        %v4431 = vperm.slane %v4427, %v4430
        %v4432 = vrot.slane %v3855, 4
        %v4433 = vsel %vm1900, %v4432, %v3853
        %v4435 = vunpack.c.l.s4 1983009808
        %v4436 = vunpack.c.0.s8 %v4435
        %v4437 = vperm.slane %v4433, %v4436
        %v4438 = vrot.slane %v4437, 4
        %v4439 = vsel %vm1900, %v4438, %v4431
        %v4441 = vunpack.c.l.s4 1934713408
        %v4442 = vunpack.c.0.s8 %v4441
        %v4443 = vperm.slane %v4439, %v4442
        %v4444 = vsel %vm1900, %v3873, %v3866
        %v4446 = vunpack.c.l.s4 1983009808
        %v4447 = vunpack.c.0.s8 %v4446
        %v4448 = vperm.slane %v4444, %v4447
        %v4449 = vrot.slane %v3874, 4
        %v4450 = vsel %vm1900, %v4449, %v3872
        %v4452 = vunpack.c.l.s4 1983009808
        %v4453 = vunpack.c.0.s8 %v4452
        %v4454 = vperm.slane %v4450, %v4453
        %v4455 = vrot.slane %v4454, 4
        %v4456 = vsel %vm1900, %v4455, %v4448
        %v4458 = vunpack.c.l.s4 1934713408
        %v4459 = vunpack.c.0.s8 %v4458
        %v4460 = vperm.slane %v4456, %v4459
        %v4461 = vsel %vm1900, %v3892, %v3885
        %v4463 = vunpack.c.l.s4 1983009808
        %v4464 = vunpack.c.0.s8 %v4463
        %v4465 = vperm.slane %v4461, %v4464
        %v4466 = vrot.slane %v3893, 4
        %v4467 = vsel %vm1900, %v4466, %v3891
        %v4469 = vunpack.c.l.s4 1983009808
        %v4470 = vunpack.c.0.s8 %v4469
        %v4471 = vperm.slane %v4467, %v4470
        %v4472 = vrot.slane %v4471, 4
        %v4473 = vsel %vm1900, %v4472, %v4465
        %v4475 = vunpack.c.l.s4 1934713408
        %v4476 = vunpack.c.0.s8 %v4475
        %v4477 = vperm.slane %v4473, %v4476
        %v4478 = vsel %vm1900, %v3911, %v3904
        %v4480 = vunpack.c.l.s4 1983009808
        %v4481 = vunpack.c.0.s8 %v4480
        %v4482 = vperm.slane %v4478, %v4481
        %v4483 = vrot.slane %v3912, 4
        %v4484 = vsel %vm1900, %v4483, %v3910
        %v4486 = vunpack.c.l.s4 1983009808
        %v4487 = vunpack.c.0.s8 %v4486
        %v4488 = vperm.slane %v4484, %v4487
        %v4489 = vrot.slane %v4488, 4
        %v4490 = vsel %vm1900, %v4489, %v4482
        %v4492 = vunpack.c.l.s4 1934713408
        %v4493 = vunpack.c.0.s8 %v4492
        %v4494 = vperm.slane %v4490, %v4493
        %v4495 = vsel %vm1900, %v3930, %v3923
        %v4497 = vunpack.c.l.s4 1983009808
        %v4498 = vunpack.c.0.s8 %v4497
        %v4499 = vperm.slane %v4495, %v4498
        %v4500 = vrot.slane %v3931, 4
        %v4501 = vsel %vm1900, %v4500, %v3929
        %v4503 = vunpack.c.l.s4 1983009808
        %v4504 = vunpack.c.0.s8 %v4503
        %v4505 = vperm.slane %v4501, %v4504
        %v4506 = vrot.slane %v4505, 4
        %v4507 = vsel %vm1900, %v4506, %v4499
        %v4509 = vunpack.c.l.s4 1934713408
        %v4510 = vunpack.c.0.s8 %v4509
        %v4511 = vperm.slane %v4507, %v4510
        %v4512 = vsel %vm1900, %v3949, %v3942
        %v4514 = vunpack.c.l.s4 1983009808
        %v4515 = vunpack.c.0.s8 %v4514
        %v4516 = vperm.slane %v4512, %v4515
        %v4517 = vrot.slane %v3950, 4
        %v4518 = vsel %vm1900, %v4517, %v3948
        %v4520 = vunpack.c.l.s4 1983009808
        %v4521 = vunpack.c.0.s8 %v4520
        %v4522 = vperm.slane %v4518, %v4521
        %v4523 = vrot.slane %v4522, 4
        %v4524 = vsel %vm1900, %v4523, %v4516
        %v4526 = vunpack.c.l.s4 1934713408
        %v4527 = vunpack.c.0.s8 %v4526
        %v4528 = vperm.slane %v4524, %v4527
        %v4529 = vsel %vm1900, %v3968, %v3961
        %v4531 = vunpack.c.l.s4 1983009808
        %v4532 = vunpack.c.0.s8 %v4531
        %v4533 = vperm.slane %v4529, %v4532
        %v4534 = vrot.slane %v3969, 4
        %v4535 = vsel %vm1900, %v4534, %v3967
        %v4537 = vunpack.c.l.s4 1983009808
        %v4538 = vunpack.c.0.s8 %v4537
        %v4539 = vperm.slane %v4535, %v4538
        %v4540 = vrot.slane %v4539, 4
        %v4541 = vsel %vm1900, %v4540, %v4533
        %v4543 = vunpack.c.l.s4 1934713408
        %v4544 = vunpack.c.0.s8 %v4543
        %v4545 = vperm.slane %v4541, %v4544
        %v4546 = vsel %vm1900, %v3987, %v3980
        %v4548 = vunpack.c.l.s4 1983009808
        %v4549 = vunpack.c.0.s8 %v4548
        %v4550 = vperm.slane %v4546, %v4549
        %v4551 = vrot.slane %v3988, 4
        %v4552 = vsel %vm1900, %v4551, %v3986
        %v4554 = vunpack.c.l.s4 1983009808
        %v4555 = vunpack.c.0.s8 %v4554
        %v4556 = vperm.slane %v4552, %v4555
        %v4557 = vrot.slane %v4556, 4
        %v4558 = vsel %vm1900, %v4557, %v4550
        %v4560 = vunpack.c.l.s4 1934713408
        %v4561 = vunpack.c.0.s8 %v4560
        %v4562 = vperm.slane %v4558, %v4561
        %v4563 = vsel %vm1900, %v4006, %v3999
        %v4565 = vunpack.c.l.s4 1983009808
        %v4566 = vunpack.c.0.s8 %v4565
        %v4567 = vperm.slane %v4563, %v4566
        %v4568 = vrot.slane %v4007, 4
        %v4569 = vsel %vm1900, %v4568, %v4005
        %v4571 = vunpack.c.l.s4 1983009808
        %v4572 = vunpack.c.0.s8 %v4571
        %v4573 = vperm.slane %v4569, %v4572
        %v4574 = vrot.slane %v4573, 4
        %v4575 = vsel %vm1900, %v4574, %v4567
        %v4577 = vunpack.c.l.s4 1934713408
        %v4578 = vunpack.c.0.s8 %v4577
        %v4579 = vperm.slane %v4575, %v4578
        %v4580 = vsel %vm1900, %v4025, %v4018
        %v4582 = vunpack.c.l.s4 1983009808
        %v4583 = vunpack.c.0.s8 %v4582
        %v4584 = vperm.slane %v4580, %v4583
        %v4585 = vrot.slane %v4026, 4
        %v4586 = vsel %vm1900, %v4585, %v4024
        %v4588 = vunpack.c.l.s4 1983009808
        %v4589 = vunpack.c.0.s8 %v4588
        %v4590 = vperm.slane %v4586, %v4589
        %v4591 = vrot.slane %v4590, 4
        %v4592 = vsel %vm1900, %v4591, %v4584
        %v4594 = vunpack.c.l.s4 1934713408
        %v4595 = vunpack.c.0.s8 %v4594
        %v4596 = vperm.slane %v4592, %v4595
        %v4597 = vsel %vm1900, %v4044, %v4037
        %v4599 = vunpack.c.l.s4 1983009808
        %v4600 = vunpack.c.0.s8 %v4599
        %v4601 = vperm.slane %v4597, %v4600
        %v4602 = vrot.slane %v4045, 4
        %v4603 = vsel %vm1900, %v4602, %v4043
        %v4605 = vunpack.c.l.s4 1983009808
        %v4606 = vunpack.c.0.s8 %v4605
        %v4607 = vperm.slane %v4603, %v4606
        %v4608 = vrot.slane %v4607, 4
        %v4609 = vsel %vm1900, %v4608, %v4601
        %v4611 = vunpack.c.l.s4 1934713408
        %v4612 = vunpack.c.0.s8 %v4611
        %v4613 = vperm.slane %v4609, %v4612
        %v4614 = vsel %vm1900, %v4063, %v4056
        %v4616 = vunpack.c.l.s4 1983009808
        %v4617 = vunpack.c.0.s8 %v4616
        %v4618 = vperm.slane %v4614, %v4617
        %v4619 = vrot.slane %v4064, 4
        %v4620 = vsel %vm1900, %v4619, %v4062
        %v4622 = vunpack.c.l.s4 1983009808
        %v4623 = vunpack.c.0.s8 %v4622
        %v4624 = vperm.slane %v4620, %v4623
        %v4625 = vrot.slane %v4624, 4
        %v4626 = vsel %vm1900, %v4625, %v4618
        %v4628 = vunpack.c.l.s4 1934713408
        %v4629 = vunpack.c.0.s8 %v4628
        %v4630 = vperm.slane %v4626, %v4629
        %v4631 = vsel %vm1900, %v4082, %v4075
        %v4633 = vunpack.c.l.s4 1983009808
        %v4634 = vunpack.c.0.s8 %v4633
        %v4635 = vperm.slane %v4631, %v4634
        %v4636 = vrot.slane %v4083, 4
        %v4637 = vsel %vm1900, %v4636, %v4081
        %v4639 = vunpack.c.l.s4 1983009808
        %v4640 = vunpack.c.0.s8 %v4639
        %v4641 = vperm.slane %v4637, %v4640
        %v4642 = vrot.slane %v4641, 4
        %v4643 = vsel %vm1900, %v4642, %v4635
        %v4645 = vunpack.c.l.s4 1934713408
        %v4646 = vunpack.c.0.s8 %v4645
        %v4647 = vperm.slane %v4643, %v4646
        %v4648 = vsel %vm1900, %v4101, %v4094
        %v4650 = vunpack.c.l.s4 1983009808
        %v4651 = vunpack.c.0.s8 %v4650
        %v4652 = vperm.slane %v4648, %v4651
        %v4653 = vrot.slane %v4102, 4
        %v4654 = vsel %vm1900, %v4653, %v4100
        %v4656 = vunpack.c.l.s4 1983009808
        %v4657 = vunpack.c.0.s8 %v4656
        %v4658 = vperm.slane %v4654, %v4657
        %v4659 = vrot.slane %v4658, 4
        %v4660 = vsel %vm1900, %v4659, %v4652
        %v4662 = vunpack.c.l.s4 1934713408
        %v4663 = vunpack.c.0.s8 %v4662
        %v4664 = vperm.slane %v4660, %v4663
        %v4665 = vsel %vm1900, %v4120, %v4113
        %v4667 = vunpack.c.l.s4 1983009808
        %v4668 = vunpack.c.0.s8 %v4667
        %v4669 = vperm.slane %v4665, %v4668
        %v4670 = vrot.slane %v4121, 4
        %v4671 = vsel %vm1900, %v4670, %v4119
        %v4673 = vunpack.c.l.s4 1983009808
        %v4674 = vunpack.c.0.s8 %v4673
        %v4675 = vperm.slane %v4671, %v4674
        %v4676 = vrot.slane %v4675, 4
        %v4677 = vsel %vm1900, %v4676, %v4669
        %v4679 = vunpack.c.l.s4 1934713408
        %v4680 = vunpack.c.0.s8 %v4679
        %v4681 = vperm.slane %v4677, %v4680
        %v4682 = vsel %vm1900, %v4139, %v4132
        %v4684 = vunpack.c.l.s4 1983009808
        %v4685 = vunpack.c.0.s8 %v4684
        %v4686 = vperm.slane %v4682, %v4685
        %v4687 = vrot.slane %v4140, 4
        %v4688 = vsel %vm1900, %v4687, %v4138
        %v4690 = vunpack.c.l.s4 1983009808
        %v4691 = vunpack.c.0.s8 %v4690
        %v4692 = vperm.slane %v4688, %v4691
        %v4693 = vrot.slane %v4692, 4
        %v4694 = vsel %vm1900, %v4693, %v4686
        %v4696 = vunpack.c.l.s4 1934713408
        %v4697 = vunpack.c.0.s8 %v4696
        %v4698 = vperm.slane %v4694, %v4697
        %v4699 = vsel %vm1900, %v4158, %v4151
        %v4701 = vunpack.c.l.s4 1983009808
        %v4702 = vunpack.c.0.s8 %v4701
        %v4703 = vperm.slane %v4699, %v4702
        %v4704 = vrot.slane %v4159, 4
        %v4705 = vsel %vm1900, %v4704, %v4157
        %v4707 = vunpack.c.l.s4 1983009808
        %v4708 = vunpack.c.0.s8 %v4707
        %v4709 = vperm.slane %v4705, %v4708
        %v4710 = vrot.slane %v4709, 4
        %v4711 = vsel %vm1900, %v4710, %v4703
        %v4713 = vunpack.c.l.s4 1934713408
        %v4714 = vunpack.c.0.s8 %v4713
        %v4715 = vperm.slane %v4711, %v4714
        %v4716 = vsel %vm1900, %v4177, %v4170
        %v4718 = vunpack.c.l.s4 1983009808
        %v4719 = vunpack.c.0.s8 %v4718
        %v4720 = vperm.slane %v4716, %v4719
        %v4721 = vrot.slane %v4178, 4
        %v4722 = vsel %vm1900, %v4721, %v4176
        %v4724 = vunpack.c.l.s4 1983009808
        %v4725 = vunpack.c.0.s8 %v4724
        %v4726 = vperm.slane %v4722, %v4725
        %v4727 = vrot.slane %v4726, 4
        %v4728 = vsel %vm1900, %v4727, %v4720
        %v4730 = vunpack.c.l.s4 1934713408
        %v4731 = vunpack.c.0.s8 %v4730
        %v4732 = vperm.slane %v4728, %v4731
        %v4733 = vsel %vm1900, %v4196, %v4189
        %v4735 = vunpack.c.l.s4 1983009808
        %v4736 = vunpack.c.0.s8 %v4735
        %v4737 = vperm.slane %v4733, %v4736
        %v4738 = vrot.slane %v4197, 4
        %v4739 = vsel %vm1900, %v4738, %v4195
        %v4741 = vunpack.c.l.s4 1983009808
        %v4742 = vunpack.c.0.s8 %v4741
        %v4743 = vperm.slane %v4739, %v4742
        %v4744 = vrot.slane %v4743, 4
        %v4745 = vsel %vm1900, %v4744, %v4737
        %v4747 = vunpack.c.l.s4 1934713408
        %v4748 = vunpack.c.0.s8 %v4747
        %v4749 = vperm.slane %v4745, %v4748
        %v4750 = vsel %vm1900, %v4215, %v4208
        %v4752 = vunpack.c.l.s4 1983009808
        %v4753 = vunpack.c.0.s8 %v4752
        %v4754 = vperm.slane %v4750, %v4753
        %v4755 = vrot.slane %v4216, 4
        %v4756 = vsel %vm1900, %v4755, %v4214
        %v4758 = vunpack.c.l.s4 1983009808
        %v4759 = vunpack.c.0.s8 %v4758
        %v4760 = vperm.slane %v4756, %v4759
        %v4761 = vrot.slane %v4760, 4
        %v4762 = vsel %vm1900, %v4761, %v4754
        %v4764 = vunpack.c.l.s4 1934713408
        %v4765 = vunpack.c.0.s8 %v4764
        %v4766 = vperm.slane %v4762, %v4765
        %v4767 = vsel %vm1900, %v4234, %v4227
        %v4769 = vunpack.c.l.s4 1983009808
        %v4770 = vunpack.c.0.s8 %v4769
        %v4771 = vperm.slane %v4767, %v4770
        %v4772 = vrot.slane %v4235, 4
        %v4773 = vsel %vm1900, %v4772, %v4233
        %v4775 = vunpack.c.l.s4 1983009808
        %v4776 = vunpack.c.0.s8 %v4775
        %v4777 = vperm.slane %v4773, %v4776
        %v4778 = vrot.slane %v4777, 4
        %v4779 = vsel %vm1900, %v4778, %v4771
        %v4781 = vunpack.c.l.s4 1934713408
        %v4782 = vunpack.c.0.s8 %v4781
        %v4783 = vperm.slane %v4779, %v4782
        %v4784 = vsel %vm1900, %v4253, %v4246
        %v4786 = vunpack.c.l.s4 1983009808
        %v4787 = vunpack.c.0.s8 %v4786
        %v4788 = vperm.slane %v4784, %v4787
        %v4789 = vrot.slane %v4254, 4
        %v4790 = vsel %vm1900, %v4789, %v4252
        %v4792 = vunpack.c.l.s4 1983009808
        %v4793 = vunpack.c.0.s8 %v4792
        %v4794 = vperm.slane %v4790, %v4793
        %v4795 = vrot.slane %v4794, 4
        %v4796 = vsel %vm1900, %v4795, %v4788
        %v4798 = vunpack.c.l.s4 1934713408
        %v4799 = vunpack.c.0.s8 %v4798
        %v4800 = vperm.slane %v4796, %v4799
        %v4801 = vsel %vm1900, %v4272, %v4265
        %v4803 = vunpack.c.l.s4 1983009808
        %v4804 = vunpack.c.0.s8 %v4803
        %v4805 = vperm.slane %v4801, %v4804
        %v4806 = vrot.slane %v4273, 4
        %v4807 = vsel %vm1900, %v4806, %v4271
        %v4809 = vunpack.c.l.s4 1983009808
        %v4810 = vunpack.c.0.s8 %v4809
        %v4811 = vperm.slane %v4807, %v4810
        %v4812 = vrot.slane %v4811, 4
        %v4813 = vsel %vm1900, %v4812, %v4805
        %v4815 = vunpack.c.l.s4 1934713408
        %v4816 = vunpack.c.0.s8 %v4815
        %v4817 = vperm.slane %v4813, %v4816
        %v4820 = vpack.i.b16 %v4307, %v4290
        %v4821 = vshrl.u32 %v4290, 16
        %v4822 = vshrl.u32 %v4307, 16
        %v4823 = vpack.i.b16 %v4822, %v4821
        %v4826 = vpack.i.b16 %v4341, %v4324
        %v4827 = vshrl.u32 %v4324, 16
        %v4828 = vshrl.u32 %v4341, 16
        %v4829 = vpack.i.b16 %v4828, %v4827
        %v4832 = vpack.i.b16 %v4375, %v4358
        %v4833 = vshrl.u32 %v4358, 16
        %v4834 = vshrl.u32 %v4375, 16
        %v4835 = vpack.i.b16 %v4834, %v4833
        %v4838 = vpack.i.b16 %v4409, %v4392
        %v4839 = vshrl.u32 %v4392, 16
        %v4840 = vshrl.u32 %v4409, 16
        %v4841 = vpack.i.b16 %v4840, %v4839
        %v4844 = vpack.i.b16 %v4443, %v4426
        %v4845 = vshrl.u32 %v4426, 16
        %v4846 = vshrl.u32 %v4443, 16
        %v4847 = vpack.i.b16 %v4846, %v4845
        %v4850 = vpack.i.b16 %v4477, %v4460
        %v4851 = vshrl.u32 %v4460, 16
        %v4852 = vshrl.u32 %v4477, 16
        %v4853 = vpack.i.b16 %v4852, %v4851
        %v4856 = vpack.i.b16 %v4511, %v4494
        %v4857 = vshrl.u32 %v4494, 16
        %v4858 = vshrl.u32 %v4511, 16
        %v4859 = vpack.i.b16 %v4858, %v4857
        %v4862 = vpack.i.b16 %v4545, %v4528
        %v4863 = vshrl.u32 %v4528, 16
        %v4864 = vshrl.u32 %v4545, 16
        %v4865 = vpack.i.b16 %v4864, %v4863
        %v4868 = vpack.i.b16 %v4579, %v4562
        %v4869 = vshrl.u32 %v4562, 16
        %v4870 = vshrl.u32 %v4579, 16
        %v4871 = vpack.i.b16 %v4870, %v4869
        %v4874 = vpack.i.b16 %v4613, %v4596
        %v4875 = vshrl.u32 %v4596, 16
        %v4876 = vshrl.u32 %v4613, 16
        %v4877 = vpack.i.b16 %v4876, %v4875
        %v4880 = vpack.i.b16 %v4647, %v4630
        %v4881 = vshrl.u32 %v4630, 16
        %v4882 = vshrl.u32 %v4647, 16
        %v4883 = vpack.i.b16 %v4882, %v4881
        %v4886 = vpack.i.b16 %v4681, %v4664
        %v4887 = vshrl.u32 %v4664, 16
        %v4888 = vshrl.u32 %v4681, 16
        %v4889 = vpack.i.b16 %v4888, %v4887
        %v4892 = vpack.i.b16 %v4715, %v4698
        %v4893 = vshrl.u32 %v4698, 16
        %v4894 = vshrl.u32 %v4715, 16
        %v4895 = vpack.i.b16 %v4894, %v4893
        %v4898 = vpack.i.b16 %v4749, %v4732
        %v4899 = vshrl.u32 %v4732, 16
        %v4900 = vshrl.u32 %v4749, 16
        %v4901 = vpack.i.b16 %v4900, %v4899
        %v4904 = vpack.i.b16 %v4783, %v4766
        %v4905 = vshrl.u32 %v4766, 16
        %v4906 = vshrl.u32 %v4783, 16
        %v4907 = vpack.i.b16 %v4906, %v4905
        %v4910 = vpack.i.b16 %v4817, %v4800
        %v4911 = vshrl.u32 %v4800, 16
        %v4912 = vshrl.u32 %v4817, 16
        %v4913 = vpack.i.b16 %v4912, %v4911
        %4930 = vrot.lane.b32.xlu0 %v1569, 96
        %v4931 = vpop.permute.xlu0 %4930
        %4932 = vrot.lane.b32.xlu0 %v1570, 96
        %v4933 = vpop.permute.xlu0 %4932
        %4934 = vrot.lane.b32.xlu0 %v1571, 96
        %v4935 = vpop.permute.xlu0 %4934
        %4936 = vrot.lane.b32.xlu0 %v1572, 96
        %v4937 = vpop.permute.xlu0 %4936
        %4938 = vrot.lane.b32.xlu0 %v1573, 96
        %v4939 = vpop.permute.xlu0 %4938
        %4940 = vrot.lane.b32.xlu0 %v1574, 96
        %v4941 = vpop.permute.xlu0 %4940
        %4942 = vrot.lane.b32.xlu0 %v1575, 96
        %v4943 = vpop.permute.xlu0 %4942
        %4944 = vrot.lane.b32.xlu0 %v1576, 96
        %v4945 = vpop.permute.xlu0 %4944
        %4946 = vrot.lane.b32.xlu0 %v1577, 96
        %v4947 = vpop.permute.xlu0 %4946
        %4948 = vrot.lane.b32.xlu0 %v1578, 96
        %v4949 = vpop.permute.xlu0 %4948
        %4950 = vrot.lane.b32.xlu0 %v1579, 96
        %v4951 = vpop.permute.xlu0 %4950
        %4952 = vrot.lane.b32.xlu0 %v1580, 96
        %v4953 = vpop.permute.xlu0 %4952
        %4954 = vrot.lane.b32.xlu0 %v1581, 96
        %v4955 = vpop.permute.xlu0 %4954
        %4956 = vrot.lane.b32.xlu0 %v1582, 96
        %v4957 = vpop.permute.xlu0 %4956
        %4958 = vrot.lane.b32.xlu0 %v1583, 96
        %v4959 = vpop.permute.xlu0 %4958
        %4960 = vrot.lane.b32.xlu0 %v1584, 96
        %v4961 = vpop.permute.xlu0 %4960
        %4962 = vrot.lane.b32.xlu0 %v1569, 64
        %v4963 = vpop.permute.xlu0 %4962
        %4964 = vrot.lane.b32.xlu0 %v1570, 64
        %v4965 = vpop.permute.xlu0 %4964
        %4966 = vrot.lane.b32.xlu0 %v1571, 64
        %v4967 = vpop.permute.xlu0 %4966
        %4968 = vrot.lane.b32.xlu0 %v1572, 64
        %v4969 = vpop.permute.xlu0 %4968
        %4970 = vrot.lane.b32.xlu0 %v1573, 64
        %v4971 = vpop.permute.xlu0 %4970
        %4972 = vrot.lane.b32.xlu0 %v1574, 64
        %v4973 = vpop.permute.xlu0 %4972
        %4974 = vrot.lane.b32.xlu0 %v1575, 64
        %v4975 = vpop.permute.xlu0 %4974
        %4976 = vrot.lane.b32.xlu0 %v1576, 64
        %v4977 = vpop.permute.xlu0 %4976
        %4978 = vrot.lane.b32.xlu0 %v1577, 64
        %v4979 = vpop.permute.xlu0 %4978
        %4980 = vrot.lane.b32.xlu0 %v1578, 64
        %v4981 = vpop.permute.xlu0 %4980
        %4982 = vrot.lane.b32.xlu0 %v1579, 64
        %v4983 = vpop.permute.xlu0 %4982
        %4984 = vrot.lane.b32.xlu0 %v1580, 64
        %v4985 = vpop.permute.xlu0 %4984
        %4986 = vrot.lane.b32.xlu0 %v1581, 64
        %v4987 = vpop.permute.xlu0 %4986
        %4988 = vrot.lane.b32.xlu0 %v1582, 64
        %v4989 = vpop.permute.xlu0 %4988
        %4990 = vrot.lane.b32.xlu0 %v1583, 64
        %v4991 = vpop.permute.xlu0 %4990
        %4992 = vrot.lane.b32.xlu0 %v1584, 64
        %v4993 = vpop.permute.xlu0 %4992
        %4994 = vrot.lane.b32.xlu0 %v4931, 64
        %v4995 = vpop.permute.xlu0 %4994
        %4996 = vrot.lane.b32.xlu0 %v4933, 64
        %v4997 = vpop.permute.xlu0 %4996
        %4998 = vrot.lane.b32.xlu0 %v4935, 64
        %v4999 = vpop.permute.xlu0 %4998
        %5000 = vrot.lane.b32.xlu0 %v4937, 64
        %v5001 = vpop.permute.xlu0 %5000
        %5002 = vrot.lane.b32.xlu0 %v4939, 64
        %v5003 = vpop.permute.xlu0 %5002
        %5004 = vrot.lane.b32.xlu0 %v4941, 64
        %v5005 = vpop.permute.xlu0 %5004
        %5006 = vrot.lane.b32.xlu0 %v4943, 64
        %v5007 = vpop.permute.xlu0 %5006
        %5008 = vrot.lane.b32.xlu0 %v4945, 64
        %v5009 = vpop.permute.xlu0 %5008
        %5010 = vrot.lane.b32.xlu0 %v4947, 64
        %v5011 = vpop.permute.xlu0 %5010
        %5012 = vrot.lane.b32.xlu0 %v4949, 64
        %v5013 = vpop.permute.xlu0 %5012
        %5014 = vrot.lane.b32.xlu0 %v4951, 64
        %v5015 = vpop.permute.xlu0 %5014
        %5016 = vrot.lane.b32.xlu0 %v4953, 64
        %v5017 = vpop.permute.xlu0 %5016
        %5018 = vrot.lane.b32.xlu0 %v4955, 64
        %v5019 = vpop.permute.xlu0 %5018
        %5020 = vrot.lane.b32.xlu0 %v4957, 64
        %v5021 = vpop.permute.xlu0 %5020
        %5022 = vrot.lane.b32.xlu0 %v4959, 64
        %v5023 = vpop.permute.xlu0 %5022
        %5024 = vrot.lane.b32.xlu0 %v4961, 64
        %v5025 = vpop.permute.xlu0 %5024
        %v5028 = vpack.i.b16 %v4995, %v4963
        %v5029 = vshrl.u32 %v4963, 16
        %v5030 = vshrl.u32 %v4995, 16
        %v5031 = vpack.i.b16 %v5030, %v5029
        %v5034 = vpack.i.b16 %v4997, %v4965
        %v5035 = vshrl.u32 %v4965, 16
        %v5036 = vshrl.u32 %v4997, 16
        %v5037 = vpack.i.b16 %v5036, %v5035
        %v5040 = vpack.i.b16 %v4999, %v4967
        %v5041 = vshrl.u32 %v4967, 16
        %v5042 = vshrl.u32 %v4999, 16
        %v5043 = vpack.i.b16 %v5042, %v5041
        %v5046 = vpack.i.b16 %v5001, %v4969
        %v5047 = vshrl.u32 %v4969, 16
        %v5048 = vshrl.u32 %v5001, 16
        %v5049 = vpack.i.b16 %v5048, %v5047
        %v5052 = vpack.i.b16 %v5003, %v4971
        %v5053 = vshrl.u32 %v4971, 16
        %v5054 = vshrl.u32 %v5003, 16
        %v5055 = vpack.i.b16 %v5054, %v5053
        %v5058 = vpack.i.b16 %v5005, %v4973
        %v5059 = vshrl.u32 %v4973, 16
        %v5060 = vshrl.u32 %v5005, 16
        %v5061 = vpack.i.b16 %v5060, %v5059
        %v5064 = vpack.i.b16 %v5007, %v4975
        %v5065 = vshrl.u32 %v4975, 16
        %v5066 = vshrl.u32 %v5007, 16
        %v5067 = vpack.i.b16 %v5066, %v5065
        %v5070 = vpack.i.b16 %v5009, %v4977
        %v5071 = vshrl.u32 %v4977, 16
        %v5072 = vshrl.u32 %v5009, 16
        %v5073 = vpack.i.b16 %v5072, %v5071
        %v5076 = vpack.i.b16 %v5011, %v4979
        %v5077 = vshrl.u32 %v4979, 16
        %v5078 = vshrl.u32 %v5011, 16
        %v5079 = vpack.i.b16 %v5078, %v5077
        %v5082 = vpack.i.b16 %v5013, %v4981
        %v5083 = vshrl.u32 %v4981, 16
        %v5084 = vshrl.u32 %v5013, 16
        %v5085 = vpack.i.b16 %v5084, %v5083
        %v5088 = vpack.i.b16 %v5015, %v4983
        %v5089 = vshrl.u32 %v4983, 16
        %v5090 = vshrl.u32 %v5015, 16
        %v5091 = vpack.i.b16 %v5090, %v5089
        %v5094 = vpack.i.b16 %v5017, %v4985
        %v5095 = vshrl.u32 %v4985, 16
        %v5096 = vshrl.u32 %v5017, 16
        %v5097 = vpack.i.b16 %v5096, %v5095
        %v5100 = vpack.i.b16 %v5019, %v4987
        %v5101 = vshrl.u32 %v4987, 16
        %v5102 = vshrl.u32 %v5019, 16
        %v5103 = vpack.i.b16 %v5102, %v5101
        %v5106 = vpack.i.b16 %v5021, %v4989
        %v5107 = vshrl.u32 %v4989, 16
        %v5108 = vshrl.u32 %v5021, 16
        %v5109 = vpack.i.b16 %v5108, %v5107
        %v5112 = vpack.i.b16 %v5023, %v4991
        %v5113 = vshrl.u32 %v4991, 16
        %v5114 = vshrl.u32 %v5023, 16
        %v5115 = vpack.i.b16 %v5114, %v5113
        %v5118 = vpack.i.b16 %v5025, %v4993
        %v5119 = vshrl.u32 %v4993, 16
        %v5120 = vshrl.u32 %v5025, 16
        %v5121 = vpack.i.b16 %v5120, %v5119
        %v5124 = vunpack.c.l.s4 1983009808
        %v5125 = vunpack.c.0.s8 %v5124
        %v5126 = vperm.slane %v5028, %v5125
        %v5127 = vrot.slane %v5126, 4
        %v5128 = vsel %vm1900, 0, %v5127
        %v5130 = vunpack.c.l.s4 1934713408
        %v5131 = vunpack.c.0.s8 %v5130
        %v5132 = vperm.slane %v5126, %v5131
        %v5134 = vunpack.c.l.s4 1934713408
        %v5135 = vunpack.c.0.s8 %v5134
        %v5136 = vperm.slane %v5128, %v5135
        %v5137 = vrot.slane %v5132, 4
        %v5138 = vsel %vm1900, 0, %v5137
        %v5139 = vrot.slane %v5136, 4
        %v5140 = vsel %vm1900, 0, %v5139
        %v5143 = vunpack.c.l.s4 1983009808
        %v5144 = vunpack.c.0.s8 %v5143
        %v5145 = vperm.slane %v5031, %v5144
        %v5146 = vrot.slane %v5145, 4
        %v5147 = vsel %vm1900, 0, %v5146
        %v5149 = vunpack.c.l.s4 1934713408
        %v5150 = vunpack.c.0.s8 %v5149
        %v5151 = vperm.slane %v5145, %v5150
        %v5153 = vunpack.c.l.s4 1934713408
        %v5154 = vunpack.c.0.s8 %v5153
        %v5155 = vperm.slane %v5147, %v5154
        %v5156 = vrot.slane %v5151, 4
        %v5157 = vsel %vm1900, 0, %v5156
        %v5158 = vrot.slane %v5155, 4
        %v5159 = vsel %vm1900, 0, %v5158
        %v5162 = vunpack.c.l.s4 1983009808
        %v5163 = vunpack.c.0.s8 %v5162
        %v5164 = vperm.slane %v5034, %v5163
        %v5165 = vrot.slane %v5164, 4
        %v5166 = vsel %vm1900, 0, %v5165
        %v5168 = vunpack.c.l.s4 1934713408
        %v5169 = vunpack.c.0.s8 %v5168
        %v5170 = vperm.slane %v5164, %v5169
        %v5172 = vunpack.c.l.s4 1934713408
        %v5173 = vunpack.c.0.s8 %v5172
        %v5174 = vperm.slane %v5166, %v5173
        %v5175 = vrot.slane %v5170, 4
        %v5176 = vsel %vm1900, 0, %v5175
        %v5177 = vrot.slane %v5174, 4
        %v5178 = vsel %vm1900, 0, %v5177
        %v5181 = vunpack.c.l.s4 1983009808
        %v5182 = vunpack.c.0.s8 %v5181
        %v5183 = vperm.slane %v5037, %v5182
        %v5184 = vrot.slane %v5183, 4
        %v5185 = vsel %vm1900, 0, %v5184
        %v5187 = vunpack.c.l.s4 1934713408
        %v5188 = vunpack.c.0.s8 %v5187
        %v5189 = vperm.slane %v5183, %v5188
        %v5191 = vunpack.c.l.s4 1934713408
        %v5192 = vunpack.c.0.s8 %v5191
        %v5193 = vperm.slane %v5185, %v5192
        %v5194 = vrot.slane %v5189, 4
        %v5195 = vsel %vm1900, 0, %v5194
        %v5196 = vrot.slane %v5193, 4
        %v5197 = vsel %vm1900, 0, %v5196
        %v5200 = vunpack.c.l.s4 1983009808
        %v5201 = vunpack.c.0.s8 %v5200
        %v5202 = vperm.slane %v5040, %v5201
        %v5203 = vrot.slane %v5202, 4
        %v5204 = vsel %vm1900, 0, %v5203
        %v5206 = vunpack.c.l.s4 1934713408
        %v5207 = vunpack.c.0.s8 %v5206
        %v5208 = vperm.slane %v5202, %v5207
        %v5210 = vunpack.c.l.s4 1934713408
        %v5211 = vunpack.c.0.s8 %v5210
        %v5212 = vperm.slane %v5204, %v5211
        %v5213 = vrot.slane %v5208, 4
        %v5214 = vsel %vm1900, 0, %v5213
        %v5215 = vrot.slane %v5212, 4
        %v5216 = vsel %vm1900, 0, %v5215
        %v5219 = vunpack.c.l.s4 1983009808
        %v5220 = vunpack.c.0.s8 %v5219
        %v5221 = vperm.slane %v5043, %v5220
        %v5222 = vrot.slane %v5221, 4
        %v5223 = vsel %vm1900, 0, %v5222
        %v5225 = vunpack.c.l.s4 1934713408
        %v5226 = vunpack.c.0.s8 %v5225
        %v5227 = vperm.slane %v5221, %v5226
        %v5229 = vunpack.c.l.s4 1934713408
        %v5230 = vunpack.c.0.s8 %v5229
        %v5231 = vperm.slane %v5223, %v5230
        %v5232 = vrot.slane %v5227, 4
        %v5233 = vsel %vm1900, 0, %v5232
        %v5234 = vrot.slane %v5231, 4
        %v5235 = vsel %vm1900, 0, %v5234
        %v5238 = vunpack.c.l.s4 1983009808
        %v5239 = vunpack.c.0.s8 %v5238
        %v5240 = vperm.slane %v5046, %v5239
        %v5241 = vrot.slane %v5240, 4
        %v5242 = vsel %vm1900, 0, %v5241
        %v5244 = vunpack.c.l.s4 1934713408
        %v5245 = vunpack.c.0.s8 %v5244
        %v5246 = vperm.slane %v5240, %v5245
        %v5248 = vunpack.c.l.s4 1934713408
        %v5249 = vunpack.c.0.s8 %v5248
        %v5250 = vperm.slane %v5242, %v5249
        %v5251 = vrot.slane %v5246, 4
        %v5252 = vsel %vm1900, 0, %v5251
        %v5253 = vrot.slane %v5250, 4
        %v5254 = vsel %vm1900, 0, %v5253
        %v5257 = vunpack.c.l.s4 1983009808
        %v5258 = vunpack.c.0.s8 %v5257
        %v5259 = vperm.slane %v5049, %v5258
        %v5260 = vrot.slane %v5259, 4
        %v5261 = vsel %vm1900, 0, %v5260
        %v5263 = vunpack.c.l.s4 1934713408
        %v5264 = vunpack.c.0.s8 %v5263
        %v5265 = vperm.slane %v5259, %v5264
        %v5267 = vunpack.c.l.s4 1934713408
        %v5268 = vunpack.c.0.s8 %v5267
        %v5269 = vperm.slane %v5261, %v5268
        %v5270 = vrot.slane %v5265, 4
        %v5271 = vsel %vm1900, 0, %v5270
        %v5272 = vrot.slane %v5269, 4
        %v5273 = vsel %vm1900, 0, %v5272
        %v5276 = vunpack.c.l.s4 1983009808
        %v5277 = vunpack.c.0.s8 %v5276
        %v5278 = vperm.slane %v5052, %v5277
        %v5279 = vrot.slane %v5278, 4
        %v5280 = vsel %vm1900, 0, %v5279
        %v5282 = vunpack.c.l.s4 1934713408
        %v5283 = vunpack.c.0.s8 %v5282
        %v5284 = vperm.slane %v5278, %v5283
        %v5286 = vunpack.c.l.s4 1934713408
        %v5287 = vunpack.c.0.s8 %v5286
        %v5288 = vperm.slane %v5280, %v5287
        %v5289 = vrot.slane %v5284, 4
        %v5290 = vsel %vm1900, 0, %v5289
        %v5291 = vrot.slane %v5288, 4
        %v5292 = vsel %vm1900, 0, %v5291
        %v5295 = vunpack.c.l.s4 1983009808
        %v5296 = vunpack.c.0.s8 %v5295
        %v5297 = vperm.slane %v5055, %v5296
        %v5298 = vrot.slane %v5297, 4
        %v5299 = vsel %vm1900, 0, %v5298
        %v5301 = vunpack.c.l.s4 1934713408
        %v5302 = vunpack.c.0.s8 %v5301
        %v5303 = vperm.slane %v5297, %v5302
        %v5305 = vunpack.c.l.s4 1934713408
        %v5306 = vunpack.c.0.s8 %v5305
        %v5307 = vperm.slane %v5299, %v5306
        %v5308 = vrot.slane %v5303, 4
        %v5309 = vsel %vm1900, 0, %v5308
        %v5310 = vrot.slane %v5307, 4
        %v5311 = vsel %vm1900, 0, %v5310
        %v5314 = vunpack.c.l.s4 1983009808
        %v5315 = vunpack.c.0.s8 %v5314
        %v5316 = vperm.slane %v5058, %v5315
        %v5317 = vrot.slane %v5316, 4
        %v5318 = vsel %vm1900, 0, %v5317
        %v5320 = vunpack.c.l.s4 1934713408
        %v5321 = vunpack.c.0.s8 %v5320
        %v5322 = vperm.slane %v5316, %v5321
        %v5324 = vunpack.c.l.s4 1934713408
        %v5325 = vunpack.c.0.s8 %v5324
        %v5326 = vperm.slane %v5318, %v5325
        %v5327 = vrot.slane %v5322, 4
        %v5328 = vsel %vm1900, 0, %v5327
        %v5329 = vrot.slane %v5326, 4
        %v5330 = vsel %vm1900, 0, %v5329
        %v5333 = vunpack.c.l.s4 1983009808
        %v5334 = vunpack.c.0.s8 %v5333
        %v5335 = vperm.slane %v5061, %v5334
        %v5336 = vrot.slane %v5335, 4
        %v5337 = vsel %vm1900, 0, %v5336
        %v5339 = vunpack.c.l.s4 1934713408
        %v5340 = vunpack.c.0.s8 %v5339
        %v5341 = vperm.slane %v5335, %v5340
        %v5343 = vunpack.c.l.s4 1934713408
        %v5344 = vunpack.c.0.s8 %v5343
        %v5345 = vperm.slane %v5337, %v5344
        %v5346 = vrot.slane %v5341, 4
        %v5347 = vsel %vm1900, 0, %v5346
        %v5348 = vrot.slane %v5345, 4
        %v5349 = vsel %vm1900, 0, %v5348
        %v5352 = vunpack.c.l.s4 1983009808
        %v5353 = vunpack.c.0.s8 %v5352
        %v5354 = vperm.slane %v5064, %v5353
        %v5355 = vrot.slane %v5354, 4
        %v5356 = vsel %vm1900, 0, %v5355
        %v5358 = vunpack.c.l.s4 1934713408
        %v5359 = vunpack.c.0.s8 %v5358
        %v5360 = vperm.slane %v5354, %v5359
        %v5362 = vunpack.c.l.s4 1934713408
        %v5363 = vunpack.c.0.s8 %v5362
        %v5364 = vperm.slane %v5356, %v5363
        %v5365 = vrot.slane %v5360, 4
        %v5366 = vsel %vm1900, 0, %v5365
        %v5367 = vrot.slane %v5364, 4
        %v5368 = vsel %vm1900, 0, %v5367
        %v5371 = vunpack.c.l.s4 1983009808
        %v5372 = vunpack.c.0.s8 %v5371
        %v5373 = vperm.slane %v5067, %v5372
        %v5374 = vrot.slane %v5373, 4
        %v5375 = vsel %vm1900, 0, %v5374
        %v5377 = vunpack.c.l.s4 1934713408
        %v5378 = vunpack.c.0.s8 %v5377
        %v5379 = vperm.slane %v5373, %v5378
        %v5381 = vunpack.c.l.s4 1934713408
        %v5382 = vunpack.c.0.s8 %v5381
        %v5383 = vperm.slane %v5375, %v5382
        %v5384 = vrot.slane %v5379, 4
        %v5385 = vsel %vm1900, 0, %v5384
        %v5386 = vrot.slane %v5383, 4
        %v5387 = vsel %vm1900, 0, %v5386
        %v5390 = vunpack.c.l.s4 1983009808
        %v5391 = vunpack.c.0.s8 %v5390
        %v5392 = vperm.slane %v5070, %v5391
        %v5393 = vrot.slane %v5392, 4
        %v5394 = vsel %vm1900, 0, %v5393
        %v5396 = vunpack.c.l.s4 1934713408
        %v5397 = vunpack.c.0.s8 %v5396
        %v5398 = vperm.slane %v5392, %v5397
        %v5400 = vunpack.c.l.s4 1934713408
        %v5401 = vunpack.c.0.s8 %v5400
        %v5402 = vperm.slane %v5394, %v5401
        %v5403 = vrot.slane %v5398, 4
        %v5404 = vsel %vm1900, 0, %v5403
        %v5405 = vrot.slane %v5402, 4
        %v5406 = vsel %vm1900, 0, %v5405
        %v5409 = vunpack.c.l.s4 1983009808
        %v5410 = vunpack.c.0.s8 %v5409
        %v5411 = vperm.slane %v5073, %v5410
        %v5412 = vrot.slane %v5411, 4
        %v5413 = vsel %vm1900, 0, %v5412
        %v5415 = vunpack.c.l.s4 1934713408
        %v5416 = vunpack.c.0.s8 %v5415
        %v5417 = vperm.slane %v5411, %v5416
        %v5419 = vunpack.c.l.s4 1934713408
        %v5420 = vunpack.c.0.s8 %v5419
        %v5421 = vperm.slane %v5413, %v5420
        %v5422 = vrot.slane %v5417, 4
        %v5423 = vsel %vm1900, 0, %v5422
        %v5424 = vrot.slane %v5421, 4
        %v5425 = vsel %vm1900, 0, %v5424
        %v5428 = vunpack.c.l.s4 1983009808
        %v5429 = vunpack.c.0.s8 %v5428
        %v5430 = vperm.slane %v5076, %v5429
        %v5431 = vrot.slane %v5430, 4
        %v5432 = vsel %vm1900, 0, %v5431
        %v5434 = vunpack.c.l.s4 1934713408
        %v5435 = vunpack.c.0.s8 %v5434
        %v5436 = vperm.slane %v5430, %v5435
        %v5438 = vunpack.c.l.s4 1934713408
        %v5439 = vunpack.c.0.s8 %v5438
        %v5440 = vperm.slane %v5432, %v5439
        %v5441 = vrot.slane %v5436, 4
        %v5442 = vsel %vm1900, 0, %v5441
        %v5443 = vrot.slane %v5440, 4
        %v5444 = vsel %vm1900, 0, %v5443
        %v5447 = vunpack.c.l.s4 1983009808
        %v5448 = vunpack.c.0.s8 %v5447
        %v5449 = vperm.slane %v5079, %v5448
        %v5450 = vrot.slane %v5449, 4
        %v5451 = vsel %vm1900, 0, %v5450
        %v5453 = vunpack.c.l.s4 1934713408
        %v5454 = vunpack.c.0.s8 %v5453
        %v5455 = vperm.slane %v5449, %v5454
        %v5457 = vunpack.c.l.s4 1934713408
        %v5458 = vunpack.c.0.s8 %v5457
        %v5459 = vperm.slane %v5451, %v5458
        %v5460 = vrot.slane %v5455, 4
        %v5461 = vsel %vm1900, 0, %v5460
        %v5462 = vrot.slane %v5459, 4
        %v5463 = vsel %vm1900, 0, %v5462
        %v5466 = vunpack.c.l.s4 1983009808
        %v5467 = vunpack.c.0.s8 %v5466
        %v5468 = vperm.slane %v5082, %v5467
        %v5469 = vrot.slane %v5468, 4
        %v5470 = vsel %vm1900, 0, %v5469
        %v5472 = vunpack.c.l.s4 1934713408
        %v5473 = vunpack.c.0.s8 %v5472
        %v5474 = vperm.slane %v5468, %v5473
        %v5476 = vunpack.c.l.s4 1934713408
        %v5477 = vunpack.c.0.s8 %v5476
        %v5478 = vperm.slane %v5470, %v5477
        %v5479 = vrot.slane %v5474, 4
        %v5480 = vsel %vm1900, 0, %v5479
        %v5481 = vrot.slane %v5478, 4
        %v5482 = vsel %vm1900, 0, %v5481
        %v5485 = vunpack.c.l.s4 1983009808
        %v5486 = vunpack.c.0.s8 %v5485
        %v5487 = vperm.slane %v5085, %v5486
        %v5488 = vrot.slane %v5487, 4
        %v5489 = vsel %vm1900, 0, %v5488
        %v5491 = vunpack.c.l.s4 1934713408
        %v5492 = vunpack.c.0.s8 %v5491
        %v5493 = vperm.slane %v5487, %v5492
        %v5495 = vunpack.c.l.s4 1934713408
        %v5496 = vunpack.c.0.s8 %v5495
        %v5497 = vperm.slane %v5489, %v5496
        %v5498 = vrot.slane %v5493, 4
        %v5499 = vsel %vm1900, 0, %v5498
        %v5500 = vrot.slane %v5497, 4
        %v5501 = vsel %vm1900, 0, %v5500
        %v5504 = vunpack.c.l.s4 1983009808
        %v5505 = vunpack.c.0.s8 %v5504
        %v5506 = vperm.slane %v5088, %v5505
        %v5507 = vrot.slane %v5506, 4
        %v5508 = vsel %vm1900, 0, %v5507
        %v5510 = vunpack.c.l.s4 1934713408
        %v5511 = vunpack.c.0.s8 %v5510
        %v5512 = vperm.slane %v5506, %v5511
        %v5514 = vunpack.c.l.s4 1934713408
        %v5515 = vunpack.c.0.s8 %v5514
        %v5516 = vperm.slane %v5508, %v5515
        %v5517 = vrot.slane %v5512, 4
        %v5518 = vsel %vm1900, 0, %v5517
        %v5519 = vrot.slane %v5516, 4
        %v5520 = vsel %vm1900, 0, %v5519
        %v5523 = vunpack.c.l.s4 1983009808
        %v5524 = vunpack.c.0.s8 %v5523
        %v5525 = vperm.slane %v5091, %v5524
        %v5526 = vrot.slane %v5525, 4
        %v5527 = vsel %vm1900, 0, %v5526
        %v5529 = vunpack.c.l.s4 1934713408
        %v5530 = vunpack.c.0.s8 %v5529
        %v5531 = vperm.slane %v5525, %v5530
        %v5533 = vunpack.c.l.s4 1934713408
        %v5534 = vunpack.c.0.s8 %v5533
        %v5535 = vperm.slane %v5527, %v5534
        %v5536 = vrot.slane %v5531, 4
        %v5537 = vsel %vm1900, 0, %v5536
        %v5538 = vrot.slane %v5535, 4
        %v5539 = vsel %vm1900, 0, %v5538
        %v5542 = vunpack.c.l.s4 1983009808
        %v5543 = vunpack.c.0.s8 %v5542
        %v5544 = vperm.slane %v5094, %v5543
        %v5545 = vrot.slane %v5544, 4
        %v5546 = vsel %vm1900, 0, %v5545
        %v5548 = vunpack.c.l.s4 1934713408
        %v5549 = vunpack.c.0.s8 %v5548
        %v5550 = vperm.slane %v5544, %v5549
        %v5552 = vunpack.c.l.s4 1934713408
        %v5553 = vunpack.c.0.s8 %v5552
        %v5554 = vperm.slane %v5546, %v5553
        %v5555 = vrot.slane %v5550, 4
        %v5556 = vsel %vm1900, 0, %v5555
        %v5557 = vrot.slane %v5554, 4
        %v5558 = vsel %vm1900, 0, %v5557
        %v5561 = vunpack.c.l.s4 1983009808
        %v5562 = vunpack.c.0.s8 %v5561
        %v5563 = vperm.slane %v5097, %v5562
        %v5564 = vrot.slane %v5563, 4
        %v5565 = vsel %vm1900, 0, %v5564
        %v5567 = vunpack.c.l.s4 1934713408
        %v5568 = vunpack.c.0.s8 %v5567
        %v5569 = vperm.slane %v5563, %v5568
        %v5571 = vunpack.c.l.s4 1934713408
        %v5572 = vunpack.c.0.s8 %v5571
        %v5573 = vperm.slane %v5565, %v5572
        %v5574 = vrot.slane %v5569, 4
        %v5575 = vsel %vm1900, 0, %v5574
        %v5576 = vrot.slane %v5573, 4
        %v5577 = vsel %vm1900, 0, %v5576
        %v5580 = vunpack.c.l.s4 1983009808
        %v5581 = vunpack.c.0.s8 %v5580
        %v5582 = vperm.slane %v5100, %v5581
        %v5583 = vrot.slane %v5582, 4
        %v5584 = vsel %vm1900, 0, %v5583
        %v5586 = vunpack.c.l.s4 1934713408
        %v5587 = vunpack.c.0.s8 %v5586
        %v5588 = vperm.slane %v5582, %v5587
        %v5590 = vunpack.c.l.s4 1934713408
        %v5591 = vunpack.c.0.s8 %v5590
        %v5592 = vperm.slane %v5584, %v5591
        %v5593 = vrot.slane %v5588, 4
        %v5594 = vsel %vm1900, 0, %v5593
        %v5595 = vrot.slane %v5592, 4
        %v5596 = vsel %vm1900, 0, %v5595
        %v5599 = vunpack.c.l.s4 1983009808
        %v5600 = vunpack.c.0.s8 %v5599
        %v5601 = vperm.slane %v5103, %v5600
        %v5602 = vrot.slane %v5601, 4
        %v5603 = vsel %vm1900, 0, %v5602
        %v5605 = vunpack.c.l.s4 1934713408
        %v5606 = vunpack.c.0.s8 %v5605
        %v5607 = vperm.slane %v5601, %v5606
        %v5609 = vunpack.c.l.s4 1934713408
        %v5610 = vunpack.c.0.s8 %v5609
        %v5611 = vperm.slane %v5603, %v5610
        %v5612 = vrot.slane %v5607, 4
        %v5613 = vsel %vm1900, 0, %v5612
        %v5614 = vrot.slane %v5611, 4
        %v5615 = vsel %vm1900, 0, %v5614
        %v5618 = vunpack.c.l.s4 1983009808
        %v5619 = vunpack.c.0.s8 %v5618
        %v5620 = vperm.slane %v5106, %v5619
        %v5621 = vrot.slane %v5620, 4
        %v5622 = vsel %vm1900, 0, %v5621
        %v5624 = vunpack.c.l.s4 1934713408
        %v5625 = vunpack.c.0.s8 %v5624
        %v5626 = vperm.slane %v5620, %v5625
        %v5628 = vunpack.c.l.s4 1934713408
        %v5629 = vunpack.c.0.s8 %v5628
        %v5630 = vperm.slane %v5622, %v5629
        %v5631 = vrot.slane %v5626, 4
        %v5632 = vsel %vm1900, 0, %v5631
        %v5633 = vrot.slane %v5630, 4
        %v5634 = vsel %vm1900, 0, %v5633
        %v5637 = vunpack.c.l.s4 1983009808
        %v5638 = vunpack.c.0.s8 %v5637
        %v5639 = vperm.slane %v5109, %v5638
        %v5640 = vrot.slane %v5639, 4
        %v5641 = vsel %vm1900, 0, %v5640
        %v5643 = vunpack.c.l.s4 1934713408
        %v5644 = vunpack.c.0.s8 %v5643
        %v5645 = vperm.slane %v5639, %v5644
        %v5647 = vunpack.c.l.s4 1934713408
        %v5648 = vunpack.c.0.s8 %v5647
        %v5649 = vperm.slane %v5641, %v5648
        %v5650 = vrot.slane %v5645, 4
        %v5651 = vsel %vm1900, 0, %v5650
        %v5652 = vrot.slane %v5649, 4
        %v5653 = vsel %vm1900, 0, %v5652
        %v5656 = vunpack.c.l.s4 1983009808
        %v5657 = vunpack.c.0.s8 %v5656
        %v5658 = vperm.slane %v5112, %v5657
        %v5659 = vrot.slane %v5658, 4
        %v5660 = vsel %vm1900, 0, %v5659
        %v5662 = vunpack.c.l.s4 1934713408
        %v5663 = vunpack.c.0.s8 %v5662
        %v5664 = vperm.slane %v5658, %v5663
        %v5666 = vunpack.c.l.s4 1934713408
        %v5667 = vunpack.c.0.s8 %v5666
        %v5668 = vperm.slane %v5660, %v5667
        %v5669 = vrot.slane %v5664, 4
        %v5670 = vsel %vm1900, 0, %v5669
        %v5671 = vrot.slane %v5668, 4
        %v5672 = vsel %vm1900, 0, %v5671
        %v5675 = vunpack.c.l.s4 1983009808
        %v5676 = vunpack.c.0.s8 %v5675
        %v5677 = vperm.slane %v5115, %v5676
        %v5678 = vrot.slane %v5677, 4
        %v5679 = vsel %vm1900, 0, %v5678
        %v5681 = vunpack.c.l.s4 1934713408
        %v5682 = vunpack.c.0.s8 %v5681
        %v5683 = vperm.slane %v5677, %v5682
        %v5685 = vunpack.c.l.s4 1934713408
        %v5686 = vunpack.c.0.s8 %v5685
        %v5687 = vperm.slane %v5679, %v5686
        %v5688 = vrot.slane %v5683, 4
        %v5689 = vsel %vm1900, 0, %v5688
        %v5690 = vrot.slane %v5687, 4
        %v5691 = vsel %vm1900, 0, %v5690
        %v5694 = vunpack.c.l.s4 1983009808
        %v5695 = vunpack.c.0.s8 %v5694
        %v5696 = vperm.slane %v5118, %v5695
        %v5697 = vrot.slane %v5696, 4
        %v5698 = vsel %vm1900, 0, %v5697
        %v5700 = vunpack.c.l.s4 1934713408
        %v5701 = vunpack.c.0.s8 %v5700
        %v5702 = vperm.slane %v5696, %v5701
        %v5704 = vunpack.c.l.s4 1934713408
        %v5705 = vunpack.c.0.s8 %v5704
        %v5706 = vperm.slane %v5698, %v5705
        %v5707 = vrot.slane %v5702, 4
        %v5708 = vsel %vm1900, 0, %v5707
        %v5709 = vrot.slane %v5706, 4
        %v5710 = vsel %vm1900, 0, %v5709
        %v5713 = vunpack.c.l.s4 1983009808
        %v5714 = vunpack.c.0.s8 %v5713
        %v5715 = vperm.slane %v5121, %v5714
        %v5716 = vrot.slane %v5715, 4
        %v5717 = vsel %vm1900, 0, %v5716
        %v5719 = vunpack.c.l.s4 1934713408
        %v5720 = vunpack.c.0.s8 %v5719
        %v5721 = vperm.slane %v5715, %v5720
        %v5723 = vunpack.c.l.s4 1934713408
        %v5724 = vunpack.c.0.s8 %v5723
        %v5725 = vperm.slane %v5717, %v5724
        %v5726 = vrot.slane %v5721, 4
        %v5727 = vsel %vm1900, 0, %v5726
        %v5728 = vrot.slane %v5725, 4
        %v5729 = vsel %vm1900, 0, %v5728
        %v5730 = vsel %vm1900, %v5139, %v5132
        %v5732 = vunpack.c.l.s4 1983009808
        %v5733 = vunpack.c.0.s8 %v5732
        %v5734 = vperm.slane %v5730, %v5733
        %v5735 = vrot.slane %v5140, 4
        %v5736 = vsel %vm1900, %v5735, %v5138
        %v5738 = vunpack.c.l.s4 1983009808
        %v5739 = vunpack.c.0.s8 %v5738
        %v5740 = vperm.slane %v5736, %v5739
        %v5741 = vrot.slane %v5740, 4
        %v5742 = vsel %vm1900, %v5741, %v5734
        %v5744 = vunpack.c.l.s4 1934713408
        %v5745 = vunpack.c.0.s8 %v5744
        %v5746 = vperm.slane %v5742, %v5745
        %v5747 = vsel %vm1900, %v5158, %v5151
        %v5749 = vunpack.c.l.s4 1983009808
        %v5750 = vunpack.c.0.s8 %v5749
        %v5751 = vperm.slane %v5747, %v5750
        %v5752 = vrot.slane %v5159, 4
        %v5753 = vsel %vm1900, %v5752, %v5157
        %v5755 = vunpack.c.l.s4 1983009808
        %v5756 = vunpack.c.0.s8 %v5755
        %v5757 = vperm.slane %v5753, %v5756
        %v5758 = vrot.slane %v5757, 4
        %v5759 = vsel %vm1900, %v5758, %v5751
        %v5761 = vunpack.c.l.s4 1934713408
        %v5762 = vunpack.c.0.s8 %v5761
        %v5763 = vperm.slane %v5759, %v5762
        %v5764 = vsel %vm1900, %v5177, %v5170
        %v5766 = vunpack.c.l.s4 1983009808
        %v5767 = vunpack.c.0.s8 %v5766
        %v5768 = vperm.slane %v5764, %v5767
        %v5769 = vrot.slane %v5178, 4
        %v5770 = vsel %vm1900, %v5769, %v5176
        %v5772 = vunpack.c.l.s4 1983009808
        %v5773 = vunpack.c.0.s8 %v5772
        %v5774 = vperm.slane %v5770, %v5773
        %v5775 = vrot.slane %v5774, 4
        %v5776 = vsel %vm1900, %v5775, %v5768
        %v5778 = vunpack.c.l.s4 1934713408
        %v5779 = vunpack.c.0.s8 %v5778
        %v5780 = vperm.slane %v5776, %v5779
        %v5781 = vsel %vm1900, %v5196, %v5189
        %v5783 = vunpack.c.l.s4 1983009808
        %v5784 = vunpack.c.0.s8 %v5783
        %v5785 = vperm.slane %v5781, %v5784
        %v5786 = vrot.slane %v5197, 4
        %v5787 = vsel %vm1900, %v5786, %v5195
        %v5789 = vunpack.c.l.s4 1983009808
        %v5790 = vunpack.c.0.s8 %v5789
        %v5791 = vperm.slane %v5787, %v5790
        %v5792 = vrot.slane %v5791, 4
        %v5793 = vsel %vm1900, %v5792, %v5785
        %v5795 = vunpack.c.l.s4 1934713408
        %v5796 = vunpack.c.0.s8 %v5795
        %v5797 = vperm.slane %v5793, %v5796
        %v5798 = vsel %vm1900, %v5215, %v5208
        %v5800 = vunpack.c.l.s4 1983009808
        %v5801 = vunpack.c.0.s8 %v5800
        %v5802 = vperm.slane %v5798, %v5801
        %v5803 = vrot.slane %v5216, 4
        %v5804 = vsel %vm1900, %v5803, %v5214
        %v5806 = vunpack.c.l.s4 1983009808
        %v5807 = vunpack.c.0.s8 %v5806
        %v5808 = vperm.slane %v5804, %v5807
        %v5809 = vrot.slane %v5808, 4
        %v5810 = vsel %vm1900, %v5809, %v5802
        %v5812 = vunpack.c.l.s4 1934713408
        %v5813 = vunpack.c.0.s8 %v5812
        %v5814 = vperm.slane %v5810, %v5813
        %v5815 = vsel %vm1900, %v5234, %v5227
        %v5817 = vunpack.c.l.s4 1983009808
        %v5818 = vunpack.c.0.s8 %v5817
        %v5819 = vperm.slane %v5815, %v5818
        %v5820 = vrot.slane %v5235, 4
        %v5821 = vsel %vm1900, %v5820, %v5233
        %v5823 = vunpack.c.l.s4 1983009808
        %v5824 = vunpack.c.0.s8 %v5823
        %v5825 = vperm.slane %v5821, %v5824
        %v5826 = vrot.slane %v5825, 4
        %v5827 = vsel %vm1900, %v5826, %v5819
        %v5829 = vunpack.c.l.s4 1934713408
        %v5830 = vunpack.c.0.s8 %v5829
        %v5831 = vperm.slane %v5827, %v5830
        %v5832 = vsel %vm1900, %v5253, %v5246
        %v5834 = vunpack.c.l.s4 1983009808
        %v5835 = vunpack.c.0.s8 %v5834
        %v5836 = vperm.slane %v5832, %v5835
        %v5837 = vrot.slane %v5254, 4
        %v5838 = vsel %vm1900, %v5837, %v5252
        %v5840 = vunpack.c.l.s4 1983009808
        %v5841 = vunpack.c.0.s8 %v5840
        %v5842 = vperm.slane %v5838, %v5841
        %v5843 = vrot.slane %v5842, 4
        %v5844 = vsel %vm1900, %v5843, %v5836
        %v5846 = vunpack.c.l.s4 1934713408
        %v5847 = vunpack.c.0.s8 %v5846
        %v5848 = vperm.slane %v5844, %v5847
        %v5849 = vsel %vm1900, %v5272, %v5265
        %v5851 = vunpack.c.l.s4 1983009808
        %v5852 = vunpack.c.0.s8 %v5851
        %v5853 = vperm.slane %v5849, %v5852
        %v5854 = vrot.slane %v5273, 4
        %v5855 = vsel %vm1900, %v5854, %v5271
        %v5857 = vunpack.c.l.s4 1983009808
        %v5858 = vunpack.c.0.s8 %v5857
        %v5859 = vperm.slane %v5855, %v5858
        %v5860 = vrot.slane %v5859, 4
        %v5861 = vsel %vm1900, %v5860, %v5853
        %v5863 = vunpack.c.l.s4 1934713408
        %v5864 = vunpack.c.0.s8 %v5863
        %v5865 = vperm.slane %v5861, %v5864
        %v5866 = vsel %vm1900, %v5291, %v5284
        %v5868 = vunpack.c.l.s4 1983009808
        %v5869 = vunpack.c.0.s8 %v5868
        %v5870 = vperm.slane %v5866, %v5869
        %v5871 = vrot.slane %v5292, 4
        %v5872 = vsel %vm1900, %v5871, %v5290
        %v5874 = vunpack.c.l.s4 1983009808
        %v5875 = vunpack.c.0.s8 %v5874
        %v5876 = vperm.slane %v5872, %v5875
        %v5877 = vrot.slane %v5876, 4
        %v5878 = vsel %vm1900, %v5877, %v5870
        %v5880 = vunpack.c.l.s4 1934713408
        %v5881 = vunpack.c.0.s8 %v5880
        %v5882 = vperm.slane %v5878, %v5881
        %v5883 = vsel %vm1900, %v5310, %v5303
        %v5885 = vunpack.c.l.s4 1983009808
        %v5886 = vunpack.c.0.s8 %v5885
        %v5887 = vperm.slane %v5883, %v5886
        %v5888 = vrot.slane %v5311, 4
        %v5889 = vsel %vm1900, %v5888, %v5309
        %v5891 = vunpack.c.l.s4 1983009808
        %v5892 = vunpack.c.0.s8 %v5891
        %v5893 = vperm.slane %v5889, %v5892
        %v5894 = vrot.slane %v5893, 4
        %v5895 = vsel %vm1900, %v5894, %v5887
        %v5897 = vunpack.c.l.s4 1934713408
        %v5898 = vunpack.c.0.s8 %v5897
        %v5899 = vperm.slane %v5895, %v5898
        %v5900 = vsel %vm1900, %v5329, %v5322
        %v5902 = vunpack.c.l.s4 1983009808
        %v5903 = vunpack.c.0.s8 %v5902
        %v5904 = vperm.slane %v5900, %v5903
        %v5905 = vrot.slane %v5330, 4
        %v5906 = vsel %vm1900, %v5905, %v5328
        %v5908 = vunpack.c.l.s4 1983009808
        %v5909 = vunpack.c.0.s8 %v5908
        %v5910 = vperm.slane %v5906, %v5909
        %v5911 = vrot.slane %v5910, 4
        %v5912 = vsel %vm1900, %v5911, %v5904
        %v5914 = vunpack.c.l.s4 1934713408
        %v5915 = vunpack.c.0.s8 %v5914
        %v5916 = vperm.slane %v5912, %v5915
        %v5917 = vsel %vm1900, %v5348, %v5341
        %v5919 = vunpack.c.l.s4 1983009808
        %v5920 = vunpack.c.0.s8 %v5919
        %v5921 = vperm.slane %v5917, %v5920
        %v5922 = vrot.slane %v5349, 4
        %v5923 = vsel %vm1900, %v5922, %v5347
        %v5925 = vunpack.c.l.s4 1983009808
        %v5926 = vunpack.c.0.s8 %v5925
        %v5927 = vperm.slane %v5923, %v5926
        %v5928 = vrot.slane %v5927, 4
        %v5929 = vsel %vm1900, %v5928, %v5921
        %v5931 = vunpack.c.l.s4 1934713408
        %v5932 = vunpack.c.0.s8 %v5931
        %v5933 = vperm.slane %v5929, %v5932
        %v5934 = vsel %vm1900, %v5367, %v5360
        %v5936 = vunpack.c.l.s4 1983009808
        %v5937 = vunpack.c.0.s8 %v5936
        %v5938 = vperm.slane %v5934, %v5937
        %v5939 = vrot.slane %v5368, 4
        %v5940 = vsel %vm1900, %v5939, %v5366
        %v5942 = vunpack.c.l.s4 1983009808
        %v5943 = vunpack.c.0.s8 %v5942
        %v5944 = vperm.slane %v5940, %v5943
        %v5945 = vrot.slane %v5944, 4
        %v5946 = vsel %vm1900, %v5945, %v5938
        %v5948 = vunpack.c.l.s4 1934713408
        %v5949 = vunpack.c.0.s8 %v5948
        %v5950 = vperm.slane %v5946, %v5949
        %v5951 = vsel %vm1900, %v5386, %v5379
        %v5953 = vunpack.c.l.s4 1983009808
        %v5954 = vunpack.c.0.s8 %v5953
        %v5955 = vperm.slane %v5951, %v5954
        %v5956 = vrot.slane %v5387, 4
        %v5957 = vsel %vm1900, %v5956, %v5385
        %v5959 = vunpack.c.l.s4 1983009808
        %v5960 = vunpack.c.0.s8 %v5959
        %v5961 = vperm.slane %v5957, %v5960
        %v5962 = vrot.slane %v5961, 4
        %v5963 = vsel %vm1900, %v5962, %v5955
        %v5965 = vunpack.c.l.s4 1934713408
        %v5966 = vunpack.c.0.s8 %v5965
        %v5967 = vperm.slane %v5963, %v5966
        %v5968 = vsel %vm1900, %v5405, %v5398
        %v5970 = vunpack.c.l.s4 1983009808
        %v5971 = vunpack.c.0.s8 %v5970
        %v5972 = vperm.slane %v5968, %v5971
        %v5973 = vrot.slane %v5406, 4
        %v5974 = vsel %vm1900, %v5973, %v5404
        %v5976 = vunpack.c.l.s4 1983009808
        %v5977 = vunpack.c.0.s8 %v5976
        %v5978 = vperm.slane %v5974, %v5977
        %v5979 = vrot.slane %v5978, 4
        %v5980 = vsel %vm1900, %v5979, %v5972
        %v5982 = vunpack.c.l.s4 1934713408
        %v5983 = vunpack.c.0.s8 %v5982
        %v5984 = vperm.slane %v5980, %v5983
        %v5985 = vsel %vm1900, %v5424, %v5417
        %v5987 = vunpack.c.l.s4 1983009808
        %v5988 = vunpack.c.0.s8 %v5987
        %v5989 = vperm.slane %v5985, %v5988
        %v5990 = vrot.slane %v5425, 4
        %v5991 = vsel %vm1900, %v5990, %v5423
        %v5993 = vunpack.c.l.s4 1983009808
        %v5994 = vunpack.c.0.s8 %v5993
        %v5995 = vperm.slane %v5991, %v5994
        %v5996 = vrot.slane %v5995, 4
        %v5997 = vsel %vm1900, %v5996, %v5989
        %v5999 = vunpack.c.l.s4 1934713408
        %v6000 = vunpack.c.0.s8 %v5999
        %v6001 = vperm.slane %v5997, %v6000
        %v6002 = vsel %vm1900, %v5443, %v5436
        %v6004 = vunpack.c.l.s4 1983009808
        %v6005 = vunpack.c.0.s8 %v6004
        %v6006 = vperm.slane %v6002, %v6005
        %v6007 = vrot.slane %v5444, 4
        %v6008 = vsel %vm1900, %v6007, %v5442
        %v6010 = vunpack.c.l.s4 1983009808
        %v6011 = vunpack.c.0.s8 %v6010
        %v6012 = vperm.slane %v6008, %v6011
        %v6013 = vrot.slane %v6012, 4
        %v6014 = vsel %vm1900, %v6013, %v6006
        %v6016 = vunpack.c.l.s4 1934713408
        %v6017 = vunpack.c.0.s8 %v6016
        %v6018 = vperm.slane %v6014, %v6017
        %v6019 = vsel %vm1900, %v5462, %v5455
        %v6021 = vunpack.c.l.s4 1983009808
        %v6022 = vunpack.c.0.s8 %v6021
        %v6023 = vperm.slane %v6019, %v6022
        %v6024 = vrot.slane %v5463, 4
        %v6025 = vsel %vm1900, %v6024, %v5461
        %v6027 = vunpack.c.l.s4 1983009808
        %v6028 = vunpack.c.0.s8 %v6027
        %v6029 = vperm.slane %v6025, %v6028
        %v6030 = vrot.slane %v6029, 4
        %v6031 = vsel %vm1900, %v6030, %v6023
        %v6033 = vunpack.c.l.s4 1934713408
        %v6034 = vunpack.c.0.s8 %v6033
        %v6035 = vperm.slane %v6031, %v6034
        %v6036 = vsel %vm1900, %v5481, %v5474
        %v6038 = vunpack.c.l.s4 1983009808
        %v6039 = vunpack.c.0.s8 %v6038
        %v6040 = vperm.slane %v6036, %v6039
        %v6041 = vrot.slane %v5482, 4
        %v6042 = vsel %vm1900, %v6041, %v5480
        %v6044 = vunpack.c.l.s4 1983009808
        %v6045 = vunpack.c.0.s8 %v6044
        %v6046 = vperm.slane %v6042, %v6045
        %v6047 = vrot.slane %v6046, 4
        %v6048 = vsel %vm1900, %v6047, %v6040
        %v6050 = vunpack.c.l.s4 1934713408
        %v6051 = vunpack.c.0.s8 %v6050
        %v6052 = vperm.slane %v6048, %v6051
        %v6053 = vsel %vm1900, %v5500, %v5493
        %v6055 = vunpack.c.l.s4 1983009808
        %v6056 = vunpack.c.0.s8 %v6055
        %v6057 = vperm.slane %v6053, %v6056
        %v6058 = vrot.slane %v5501, 4
        %v6059 = vsel %vm1900, %v6058, %v5499
        %v6061 = vunpack.c.l.s4 1983009808
        %v6062 = vunpack.c.0.s8 %v6061
        %v6063 = vperm.slane %v6059, %v6062
        %v6064 = vrot.slane %v6063, 4
        %v6065 = vsel %vm1900, %v6064, %v6057
        %v6067 = vunpack.c.l.s4 1934713408
        %v6068 = vunpack.c.0.s8 %v6067
        %v6069 = vperm.slane %v6065, %v6068
        %v6070 = vsel %vm1900, %v5519, %v5512
        %v6072 = vunpack.c.l.s4 1983009808
        %v6073 = vunpack.c.0.s8 %v6072
        %v6074 = vperm.slane %v6070, %v6073
        %v6075 = vrot.slane %v5520, 4
        %v6076 = vsel %vm1900, %v6075, %v5518
        %v6078 = vunpack.c.l.s4 1983009808
        %v6079 = vunpack.c.0.s8 %v6078
        %v6080 = vperm.slane %v6076, %v6079
        %v6081 = vrot.slane %v6080, 4
        %v6082 = vsel %vm1900, %v6081, %v6074
        %v6084 = vunpack.c.l.s4 1934713408
        %v6085 = vunpack.c.0.s8 %v6084
        %v6086 = vperm.slane %v6082, %v6085
        %v6087 = vsel %vm1900, %v5538, %v5531
        %v6089 = vunpack.c.l.s4 1983009808
        %v6090 = vunpack.c.0.s8 %v6089
        %v6091 = vperm.slane %v6087, %v6090
        %v6092 = vrot.slane %v5539, 4
        %v6093 = vsel %vm1900, %v6092, %v5537
        %v6095 = vunpack.c.l.s4 1983009808
        %v6096 = vunpack.c.0.s8 %v6095
        %v6097 = vperm.slane %v6093, %v6096
        %v6098 = vrot.slane %v6097, 4
        %v6099 = vsel %vm1900, %v6098, %v6091
        %v6101 = vunpack.c.l.s4 1934713408
        %v6102 = vunpack.c.0.s8 %v6101
        %v6103 = vperm.slane %v6099, %v6102
        %v6104 = vsel %vm1900, %v5557, %v5550
        %v6106 = vunpack.c.l.s4 1983009808
        %v6107 = vunpack.c.0.s8 %v6106
        %v6108 = vperm.slane %v6104, %v6107
        %v6109 = vrot.slane %v5558, 4
        %v6110 = vsel %vm1900, %v6109, %v5556
        %v6112 = vunpack.c.l.s4 1983009808
        %v6113 = vunpack.c.0.s8 %v6112
        %v6114 = vperm.slane %v6110, %v6113
        %v6115 = vrot.slane %v6114, 4
        %v6116 = vsel %vm1900, %v6115, %v6108
        %v6118 = vunpack.c.l.s4 1934713408
        %v6119 = vunpack.c.0.s8 %v6118
        %v6120 = vperm.slane %v6116, %v6119
        %v6121 = vsel %vm1900, %v5576, %v5569
        %v6123 = vunpack.c.l.s4 1983009808
        %v6124 = vunpack.c.0.s8 %v6123
        %v6125 = vperm.slane %v6121, %v6124
        %v6126 = vrot.slane %v5577, 4
        %v6127 = vsel %vm1900, %v6126, %v5575
        %v6129 = vunpack.c.l.s4 1983009808
        %v6130 = vunpack.c.0.s8 %v6129
        %v6131 = vperm.slane %v6127, %v6130
        %v6132 = vrot.slane %v6131, 4
        %v6133 = vsel %vm1900, %v6132, %v6125
        %v6135 = vunpack.c.l.s4 1934713408
        %v6136 = vunpack.c.0.s8 %v6135
        %v6137 = vperm.slane %v6133, %v6136
        %v6138 = vsel %vm1900, %v5595, %v5588
        %v6140 = vunpack.c.l.s4 1983009808
        %v6141 = vunpack.c.0.s8 %v6140
        %v6142 = vperm.slane %v6138, %v6141
        %v6143 = vrot.slane %v5596, 4
        %v6144 = vsel %vm1900, %v6143, %v5594
        %v6146 = vunpack.c.l.s4 1983009808
        %v6147 = vunpack.c.0.s8 %v6146
        %v6148 = vperm.slane %v6144, %v6147
        %v6149 = vrot.slane %v6148, 4
        %v6150 = vsel %vm1900, %v6149, %v6142
        %v6152 = vunpack.c.l.s4 1934713408
        %v6153 = vunpack.c.0.s8 %v6152
        %v6154 = vperm.slane %v6150, %v6153
        %v6155 = vsel %vm1900, %v5614, %v5607
        %v6157 = vunpack.c.l.s4 1983009808
        %v6158 = vunpack.c.0.s8 %v6157
        %v6159 = vperm.slane %v6155, %v6158
        %v6160 = vrot.slane %v5615, 4
        %v6161 = vsel %vm1900, %v6160, %v5613
        %v6163 = vunpack.c.l.s4 1983009808
        %v6164 = vunpack.c.0.s8 %v6163
        %v6165 = vperm.slane %v6161, %v6164
        %v6166 = vrot.slane %v6165, 4
        %v6167 = vsel %vm1900, %v6166, %v6159
        %v6169 = vunpack.c.l.s4 1934713408
        %v6170 = vunpack.c.0.s8 %v6169
        %v6171 = vperm.slane %v6167, %v6170
        %v6172 = vsel %vm1900, %v5633, %v5626
        %v6174 = vunpack.c.l.s4 1983009808
        %v6175 = vunpack.c.0.s8 %v6174
        %v6176 = vperm.slane %v6172, %v6175
        %v6177 = vrot.slane %v5634, 4
        %v6178 = vsel %vm1900, %v6177, %v5632
        %v6180 = vunpack.c.l.s4 1983009808
        %v6181 = vunpack.c.0.s8 %v6180
        %v6182 = vperm.slane %v6178, %v6181
        %v6183 = vrot.slane %v6182, 4
        %v6184 = vsel %vm1900, %v6183, %v6176
        %v6186 = vunpack.c.l.s4 1934713408
        %v6187 = vunpack.c.0.s8 %v6186
        %v6188 = vperm.slane %v6184, %v6187
        %v6189 = vsel %vm1900, %v5652, %v5645
        %v6191 = vunpack.c.l.s4 1983009808
        %v6192 = vunpack.c.0.s8 %v6191
        %v6193 = vperm.slane %v6189, %v6192
        %v6194 = vrot.slane %v5653, 4
        %v6195 = vsel %vm1900, %v6194, %v5651
        %v6197 = vunpack.c.l.s4 1983009808
        %v6198 = vunpack.c.0.s8 %v6197
        %v6199 = vperm.slane %v6195, %v6198
        %v6200 = vrot.slane %v6199, 4
        %v6201 = vsel %vm1900, %v6200, %v6193
        %v6203 = vunpack.c.l.s4 1934713408
        %v6204 = vunpack.c.0.s8 %v6203
        %v6205 = vperm.slane %v6201, %v6204
        %v6206 = vsel %vm1900, %v5671, %v5664
        %v6208 = vunpack.c.l.s4 1983009808
        %v6209 = vunpack.c.0.s8 %v6208
        %v6210 = vperm.slane %v6206, %v6209
        %v6211 = vrot.slane %v5672, 4
        %v6212 = vsel %vm1900, %v6211, %v5670
        %v6214 = vunpack.c.l.s4 1983009808
        %v6215 = vunpack.c.0.s8 %v6214
        %v6216 = vperm.slane %v6212, %v6215
        %v6217 = vrot.slane %v6216, 4
        %v6218 = vsel %vm1900, %v6217, %v6210
        %v6220 = vunpack.c.l.s4 1934713408
        %v6221 = vunpack.c.0.s8 %v6220
        %v6222 = vperm.slane %v6218, %v6221
        %v6223 = vsel %vm1900, %v5690, %v5683
        %v6225 = vunpack.c.l.s4 1983009808
        %v6226 = vunpack.c.0.s8 %v6225
        %v6227 = vperm.slane %v6223, %v6226
        %v6228 = vrot.slane %v5691, 4
        %v6229 = vsel %vm1900, %v6228, %v5689
        %v6231 = vunpack.c.l.s4 1983009808
        %v6232 = vunpack.c.0.s8 %v6231
        %v6233 = vperm.slane %v6229, %v6232
        %v6234 = vrot.slane %v6233, 4
        %v6235 = vsel %vm1900, %v6234, %v6227
        %v6237 = vunpack.c.l.s4 1934713408
        %v6238 = vunpack.c.0.s8 %v6237
        %v6239 = vperm.slane %v6235, %v6238
        %v6240 = vsel %vm1900, %v5709, %v5702
        %v6242 = vunpack.c.l.s4 1983009808
        %v6243 = vunpack.c.0.s8 %v6242
        %v6244 = vperm.slane %v6240, %v6243
        %v6245 = vrot.slane %v5710, 4
        %v6246 = vsel %vm1900, %v6245, %v5708
        %v6248 = vunpack.c.l.s4 1983009808
        %v6249 = vunpack.c.0.s8 %v6248
        %v6250 = vperm.slane %v6246, %v6249
        %v6251 = vrot.slane %v6250, 4
        %v6252 = vsel %vm1900, %v6251, %v6244
        %v6254 = vunpack.c.l.s4 1934713408
        %v6255 = vunpack.c.0.s8 %v6254
        %v6256 = vperm.slane %v6252, %v6255
        %v6257 = vsel %vm1900, %v5728, %v5721
        %v6259 = vunpack.c.l.s4 1983009808
        %v6260 = vunpack.c.0.s8 %v6259
        %v6261 = vperm.slane %v6257, %v6260
        %v6262 = vrot.slane %v5729, 4
        %v6263 = vsel %vm1900, %v6262, %v5727
        %v6265 = vunpack.c.l.s4 1983009808
        %v6266 = vunpack.c.0.s8 %v6265
        %v6267 = vperm.slane %v6263, %v6266
        %v6268 = vrot.slane %v6267, 4
        %v6269 = vsel %vm1900, %v6268, %v6261
        %v6271 = vunpack.c.l.s4 1934713408
        %v6272 = vunpack.c.0.s8 %v6271
        %v6273 = vperm.slane %v6269, %v6272
        %v6276 = vpack.i.b16 %v5763, %v5746
        %v6277 = vshrl.u32 %v5746, 16
        %v6278 = vshrl.u32 %v5763, 16
        %v6279 = vpack.i.b16 %v6278, %v6277
        %v6282 = vpack.i.b16 %v5797, %v5780
        %v6283 = vshrl.u32 %v5780, 16
        %v6284 = vshrl.u32 %v5797, 16
        %v6285 = vpack.i.b16 %v6284, %v6283
        %v6288 = vpack.i.b16 %v5831, %v5814
        %v6289 = vshrl.u32 %v5814, 16
        %v6290 = vshrl.u32 %v5831, 16
        %v6291 = vpack.i.b16 %v6290, %v6289
        %v6294 = vpack.i.b16 %v5865, %v5848
        %v6295 = vshrl.u32 %v5848, 16
        %v6296 = vshrl.u32 %v5865, 16
        %v6297 = vpack.i.b16 %v6296, %v6295
        %v6300 = vpack.i.b16 %v5899, %v5882
        %v6301 = vshrl.u32 %v5882, 16
        %v6302 = vshrl.u32 %v5899, 16
        %v6303 = vpack.i.b16 %v6302, %v6301
        %v6306 = vpack.i.b16 %v5933, %v5916
        %v6307 = vshrl.u32 %v5916, 16
        %v6308 = vshrl.u32 %v5933, 16
        %v6309 = vpack.i.b16 %v6308, %v6307
        %v6312 = vpack.i.b16 %v5967, %v5950
        %v6313 = vshrl.u32 %v5950, 16
        %v6314 = vshrl.u32 %v5967, 16
        %v6315 = vpack.i.b16 %v6314, %v6313
        %v6318 = vpack.i.b16 %v6001, %v5984
        %v6319 = vshrl.u32 %v5984, 16
        %v6320 = vshrl.u32 %v6001, 16
        %v6321 = vpack.i.b16 %v6320, %v6319
        %v6324 = vpack.i.b16 %v6035, %v6018
        %v6325 = vshrl.u32 %v6018, 16
        %v6326 = vshrl.u32 %v6035, 16
        %v6327 = vpack.i.b16 %v6326, %v6325
        %v6330 = vpack.i.b16 %v6069, %v6052
        %v6331 = vshrl.u32 %v6052, 16
        %v6332 = vshrl.u32 %v6069, 16
        %v6333 = vpack.i.b16 %v6332, %v6331
        %v6336 = vpack.i.b16 %v6103, %v6086
        %v6337 = vshrl.u32 %v6086, 16
        %v6338 = vshrl.u32 %v6103, 16
        %v6339 = vpack.i.b16 %v6338, %v6337
        %v6342 = vpack.i.b16 %v6137, %v6120
        %v6343 = vshrl.u32 %v6120, 16
        %v6344 = vshrl.u32 %v6137, 16
        %v6345 = vpack.i.b16 %v6344, %v6343
        %v6348 = vpack.i.b16 %v6171, %v6154
        %v6349 = vshrl.u32 %v6154, 16
        %v6350 = vshrl.u32 %v6171, 16
        %v6351 = vpack.i.b16 %v6350, %v6349
        %v6354 = vpack.i.b16 %v6205, %v6188
        %v6355 = vshrl.u32 %v6188, 16
        %v6356 = vshrl.u32 %v6205, 16
        %v6357 = vpack.i.b16 %v6356, %v6355
        %v6360 = vpack.i.b16 %v6239, %v6222
        %v6361 = vshrl.u32 %v6222, 16
        %v6362 = vshrl.u32 %v6239, 16
        %v6363 = vpack.i.b16 %v6362, %v6361
        %v6366 = vpack.i.b16 %v6273, %v6256
        %v6367 = vshrl.u32 %v6256, 16
        %v6368 = vshrl.u32 %v6273, 16
        %v6369 = vpack.i.b16 %v6368, %v6367
        %v6370 = vld [vmem:[#allocation3] sm:$0xff]
        %v6371 = vld [vmem:[#allocation3 + $0x8] sm:$0xff]
        %v6372 = vld [vmem:[#allocation3 + $0x10] sm:$0xff]
        %v6373 = vld [vmem:[#allocation3 + $0x18] sm:$0xff]
        %v6374 = vld [vmem:[#allocation3 + $0x20] sm:$0xff]
        %v6375 = vld [vmem:[#allocation3 + $0x28] sm:$0xff]
        %v6376 = vld [vmem:[#allocation3 + $0x30] sm:$0xff]
        %v6377 = vld [vmem:[#allocation3 + $0x38] sm:$0xff]
        %v6378 = vld [vmem:[#allocation3 + $0x40] sm:$0xff]
        %v6379 = vld [vmem:[#allocation3 + $0x48] sm:$0xff]
        %v6380 = vld [vmem:[#allocation3 + $0x50] sm:$0xff]
        %v6381 = vld [vmem:[#allocation3 + $0x58] sm:$0xff]
        %v6382 = vld [vmem:[#allocation3 + $0x60] sm:$0xff]
        %v6383 = vld [vmem:[#allocation3 + $0x68] sm:$0xff]
        %v6384 = vld [vmem:[#allocation3 + $0x70] sm:$0xff]
        %v6385 = vld [vmem:[#allocation3 + $0x78] sm:$0xff]
        %v6386 = vld [vmem:[#allocation3 + $0x80] sm:$0xff]
        %v6387 = vld [vmem:[#allocation3 + $0x88] sm:$0xff]
        %v6388 = vld [vmem:[#allocation3 + $0x90] sm:$0xff]
        %v6389 = vld [vmem:[#allocation3 + $0x98] sm:$0xff]
        %v6390 = vld [vmem:[#allocation3 + $0xa0] sm:$0xff]
        %v6391 = vld [vmem:[#allocation3 + $0xa8] sm:$0xff]
        %v6392 = vld [vmem:[#allocation3 + $0xb0] sm:$0xff]
        %v6393 = vld [vmem:[#allocation3 + $0xb8] sm:$0xff]
        %v6394 = vld [vmem:[#allocation3 + $0xc0] sm:$0xff]
        %v6395 = vld [vmem:[#allocation3 + $0xc8] sm:$0xff]
        %v6396 = vld [vmem:[#allocation3 + $0xd0] sm:$0xff]
        %v6397 = vld [vmem:[#allocation3 + $0xd8] sm:$0xff]
        %v6398 = vld [vmem:[#allocation3 + $0xe0] sm:$0xff]
        %v6399 = vld [vmem:[#allocation3 + $0xe8] sm:$0xff]
        %v6400 = vld [vmem:[#allocation3 + $0xf0] sm:$0xff]
        %v6401 = vld [vmem:[#allocation3 + $0xf8] sm:$0xff]
        %v6402 = vunpack.c.l.b16 %v3332
        %v6403 = vunpack.c.l.b16 %v3344
        %v6404 = vunpack.c.l.b16 %v3356
        %v6405 = vunpack.c.l.b16 %v3368
        %v6406 = vunpack.c.l.b16 %v3380
        %v6407 = vunpack.c.l.b16 %v3392
        %v6408 = vunpack.c.l.b16 %v3404
        %v6409 = vunpack.c.l.b16 %v3416
        %v6410 = vunpack.c.l.b16 %v3428
        %v6411 = vunpack.c.l.b16 %v3440
        %v6412 = vunpack.c.l.b16 %v3452
        %v6413 = vunpack.c.l.b16 %v3464
        %v6414 = vunpack.c.l.b16 %v3476
        %v6415 = vunpack.c.l.b16 %v3488
        %v6416 = vunpack.c.l.b16 %v3500
        %v6417 = vunpack.c.l.b16 %v3512
        %v6418 = vunpack.c.l.b16 %v3335
        %v6419 = vunpack.c.l.b16 %v3347
        %v6420 = vunpack.c.l.b16 %v3359
        %v6421 = vunpack.c.l.b16 %v3371
        %v6422 = vunpack.c.l.b16 %v3383
        %v6423 = vunpack.c.l.b16 %v3395
        %v6424 = vunpack.c.l.b16 %v3407
        %v6425 = vunpack.c.l.b16 %v3419
        %v6426 = vunpack.c.l.b16 %v3431
        %v6427 = vunpack.c.l.b16 %v3443
        %v6428 = vunpack.c.l.b16 %v3455
        %v6429 = vunpack.c.l.b16 %v3467
        %v6430 = vunpack.c.l.b16 %v3479
        %v6431 = vunpack.c.l.b16 %v3491
        %v6432 = vunpack.c.l.b16 %v3503
        %v6433 = vunpack.c.l.b16 %v3515
        %v6434 = vpack.c.b16 %v6403, %v6402
        %v6435 = vpack.c.b16 %v6405, %v6404
        %v6436 = vpack.c.b16 %v6407, %v6406
        %v6437 = vpack.c.b16 %v6409, %v6408
        %v6438 = vpack.c.b16 %v6411, %v6410
        %v6439 = vpack.c.b16 %v6413, %v6412
        %v6440 = vpack.c.b16 %v6415, %v6414
        %v6441 = vpack.c.b16 %v6417, %v6416
        %v6442 = vpack.c.b16 %v6419, %v6418
        %v6443 = vpack.c.b16 %v6421, %v6420
        %v6444 = vpack.c.b16 %v6423, %v6422
        %v6445 = vpack.c.b16 %v6425, %v6424
        %v6446 = vpack.c.b16 %v6427, %v6426
        %v6447 = vpack.c.b16 %v6429, %v6428
        %v6448 = vpack.c.b16 %v6431, %v6430
        %v6449 = vpack.c.b16 %v6433, %v6432
        %v6450 = vunpack.c.l.b16 %v4820
        %v6451 = vunpack.c.l.b16 %v4826
        %v6452 = vunpack.c.l.b16 %v4832
        %v6453 = vunpack.c.l.b16 %v4838
        %v6454 = vunpack.c.l.b16 %v4844
        %v6455 = vunpack.c.l.b16 %v4850
        %v6456 = vunpack.c.l.b16 %v4856
        %v6457 = vunpack.c.l.b16 %v4862
        %v6458 = vunpack.c.l.b16 %v4868
        %v6459 = vunpack.c.l.b16 %v4874
        %v6460 = vunpack.c.l.b16 %v4880
        %v6461 = vunpack.c.l.b16 %v4886
        %v6462 = vunpack.c.l.b16 %v4892
        %v6463 = vunpack.c.l.b16 %v4898
        %v6464 = vunpack.c.l.b16 %v4904
        %v6465 = vunpack.c.l.b16 %v4910
        %v6466 = vpack.c.b16 %v6451, %v6450
        %v6467 = vpack.c.b16 %v6453, %v6452
        %v6468 = vpack.c.b16 %v6455, %v6454
        %v6469 = vpack.c.b16 %v6457, %v6456
        %v6470 = vpack.c.b16 %v6459, %v6458
        %v6471 = vpack.c.b16 %v6461, %v6460
        %v6472 = vpack.c.b16 %v6463, %v6462
        %v6473 = vpack.c.b16 %v6465, %v6464
        %vm6474 = vcmask 261120
        %v6476 = vsel %vm6474, %v6434, 0
        %v6479 = vsel %vm6474, %v6435, 0
        %v6482 = vsel %vm6474, %v6436, 0
        %v6485 = vsel %vm6474, %v6437, 0
        %v6488 = vsel %vm6474, %v6438, 0
        %v6491 = vsel %vm6474, %v6439, 0
        %v6494 = vsel %vm6474, %v6440, 0
        %v6497 = vsel %vm6474, %v6441, 0
        %v6500 = vsel %vm6474, %v6442, 0
        %v6503 = vsel %vm6474, %v6443, 0
        %v6506 = vsel %vm6474, %v6444, 0
        %v6509 = vsel %vm6474, %v6445, 0
        %v6512 = vsel %vm6474, %v6446, 0
        %v6515 = vsel %vm6474, %v6447, 0
        %v6518 = vsel %vm6474, %v6448, 0
        %v6521 = vsel %vm6474, %v6449, 0
        %v6524 = vsel %vm6474, %v6466, 0
        %v6527 = vsel %vm6474, %v6467, 0
        %v6530 = vsel %vm6474, %v6468, 0
        %v6533 = vsel %vm6474, %v6469, 0
        %v6536 = vsel %vm6474, %v6470, 0
        %v6539 = vsel %vm6474, %v6471, 0
        %v6542 = vsel %vm6474, %v6472, 0
        %v6545 = vsel %vm6474, %v6473, 0
        %6547 = vmatpush.bf16.xpose.msra.mxu0 %v6545
        %6548 = vmatpush.bf16.xpose.msra.mxu0 %v6542
        %6549 = vmatpush.bf16.xpose.msra.mxu0 %v6539
        %6550 = vmatpush.bf16.xpose.msra.mxu0 %v6536
        %6551 = vmatpush.bf16.xpose.msra.mxu0 %v6533
        %6552 = vmatpush.bf16.xpose.msra.mxu0 %v6530
        %6553 = vmatpush.bf16.xpose.msra.mxu0 %v6527
        %6554 = vmatpush.bf16.xpose.msra.mxu0 %v6524
        %6555 = vmatmul.bf16.gmra.mxu0 %v6476
        %v6556 = vpop.f32.mrf.mxu0
        %v6557 = vadd.f32 %v6370, %v6556
        %v6558 = vpop.f32.mrf.mxu0
        %v6559 = vadd.f32 %v6371, %v6558
        %6560 = vmatmul.bf16.gmra.mxu0 %v6479
        %v6561 = vpop.f32.mrf.mxu0
        %v6562 = vadd.f32 %v6372, %v6561
        %v6563 = vpop.f32.mrf.mxu0
        %v6564 = vadd.f32 %v6373, %v6563
        %6565 = vmatmul.bf16.gmra.mxu0 %v6482
        %v6566 = vpop.f32.mrf.mxu0
        %v6567 = vadd.f32 %v6374, %v6566
        %v6568 = vpop.f32.mrf.mxu0
        %v6569 = vadd.f32 %v6375, %v6568
        %6570 = vmatmul.bf16.gmra.mxu0 %v6485
        %v6571 = vpop.f32.mrf.mxu0
        %v6572 = vadd.f32 %v6376, %v6571
        %v6573 = vpop.f32.mrf.mxu0
        %v6574 = vadd.f32 %v6377, %v6573
        %6575 = vmatmul.bf16.gmra.mxu0 %v6488
        %v6576 = vpop.f32.mrf.mxu0
        %v6577 = vadd.f32 %v6378, %v6576
        %v6578 = vpop.f32.mrf.mxu0
        %v6579 = vadd.f32 %v6379, %v6578
        %6580 = vmatmul.bf16.gmra.mxu0 %v6491
        %v6581 = vpop.f32.mrf.mxu0
        %v6582 = vadd.f32 %v6380, %v6581
        %v6583 = vpop.f32.mrf.mxu0
        %v6584 = vadd.f32 %v6381, %v6583
        %6585 = vmatmul.bf16.gmra.mxu0 %v6494
        %v6586 = vpop.f32.mrf.mxu0
        %v6587 = vadd.f32 %v6382, %v6586
        %v6588 = vpop.f32.mrf.mxu0
        %v6589 = vadd.f32 %v6383, %v6588
        %6590 = vmatmul.bf16.gmra.mxu0 %v6497
        %v6591 = vpop.f32.mrf.mxu0
        %v6592 = vadd.f32 %v6384, %v6591
        %v6593 = vpop.f32.mrf.mxu0
        %v6594 = vadd.f32 %v6385, %v6593
        %6595 = vmatmul.bf16.gmra.mxu0 %v6500
        %v6596 = vpop.f32.mrf.mxu0
        %v6597 = vadd.f32 %v6386, %v6596
        %v6598 = vpop.f32.mrf.mxu0
        %v6599 = vadd.f32 %v6387, %v6598
        %6600 = vmatmul.bf16.gmra.mxu0 %v6503
        %v6601 = vpop.f32.mrf.mxu0
        %v6602 = vadd.f32 %v6388, %v6601
        %v6603 = vpop.f32.mrf.mxu0
        %v6604 = vadd.f32 %v6389, %v6603
        %6605 = vmatmul.bf16.gmra.mxu0 %v6506
        %v6606 = vpop.f32.mrf.mxu0
        %v6607 = vadd.f32 %v6390, %v6606
        %v6608 = vpop.f32.mrf.mxu0
        %v6609 = vadd.f32 %v6391, %v6608
        %6610 = vmatmul.bf16.gmra.mxu0 %v6509
        %v6611 = vpop.f32.mrf.mxu0
        %v6612 = vadd.f32 %v6392, %v6611
        %v6613 = vpop.f32.mrf.mxu0
        %v6614 = vadd.f32 %v6393, %v6613
        %6615 = vmatmul.bf16.gmra.mxu0 %v6512
        %v6616 = vpop.f32.mrf.mxu0
        %v6617 = vadd.f32 %v6394, %v6616
        %v6618 = vpop.f32.mrf.mxu0
        %v6619 = vadd.f32 %v6395, %v6618
        %6620 = vmatmul.bf16.gmra.mxu0 %v6515
        %v6621 = vpop.f32.mrf.mxu0
        %v6622 = vadd.f32 %v6396, %v6621
        %v6623 = vpop.f32.mrf.mxu0
        %v6624 = vadd.f32 %v6397, %v6623
        %6625 = vmatmul.bf16.gmra.mxu0 %v6518
        %v6626 = vpop.f32.mrf.mxu0
        %v6627 = vadd.f32 %v6398, %v6626
        %v6628 = vpop.f32.mrf.mxu0
        %v6629 = vadd.f32 %v6399, %v6628
        %6630 = vmatmul.bf16.gmra.mxu0 %v6521
        %v6631 = vpop.f32.mrf.mxu0
        %v6632 = vadd.f32 %v6400, %v6631
        %v6633 = vpop.f32.mrf.mxu0
        %v6634 = vadd.f32 %v6401, %v6633
        %6635 = vdwg.mxu0
        %v6636 = vunpack.c.l.b16 %v3338
        %v6637 = vunpack.c.l.b16 %v3350
        %v6638 = vunpack.c.l.b16 %v3362
        %v6639 = vunpack.c.l.b16 %v3374
        %v6640 = vunpack.c.l.b16 %v3386
        %v6641 = vunpack.c.l.b16 %v3398
        %v6642 = vunpack.c.l.b16 %v3410
        %v6643 = vunpack.c.l.b16 %v3422
        %v6644 = vunpack.c.l.b16 %v3434
        %v6645 = vunpack.c.l.b16 %v3446
        %v6646 = vunpack.c.l.b16 %v3458
        %v6647 = vunpack.c.l.b16 %v3470
        %v6648 = vunpack.c.l.b16 %v3482
        %v6649 = vunpack.c.l.b16 %v3494
        %v6650 = vunpack.c.l.b16 %v3506
        %v6651 = vunpack.c.l.b16 %v3518
        %v6652 = vunpack.c.l.b16 %v3341
        %v6653 = vunpack.c.l.b16 %v3353
        %v6654 = vunpack.c.l.b16 %v3365
        %v6655 = vunpack.c.l.b16 %v3377
        %v6656 = vunpack.c.l.b16 %v3389
        %v6657 = vunpack.c.l.b16 %v3401
        %v6658 = vunpack.c.l.b16 %v3413
        %v6659 = vunpack.c.l.b16 %v3425
        %v6660 = vunpack.c.l.b16 %v3437
        %v6661 = vunpack.c.l.b16 %v3449
        %v6662 = vunpack.c.l.b16 %v3461
        %v6663 = vunpack.c.l.b16 %v3473
        %v6664 = vunpack.c.l.b16 %v3485
        %v6665 = vunpack.c.l.b16 %v3497
        %v6666 = vunpack.c.l.b16 %v3509
        %v6667 = vunpack.c.l.b16 %v3521
        %v6668 = vpack.c.b16 %v6637, %v6636
        %v6669 = vpack.c.b16 %v6639, %v6638
        %v6670 = vpack.c.b16 %v6641, %v6640
        %v6671 = vpack.c.b16 %v6643, %v6642
        %v6672 = vpack.c.b16 %v6645, %v6644
        %v6673 = vpack.c.b16 %v6647, %v6646
        %v6674 = vpack.c.b16 %v6649, %v6648
        %v6675 = vpack.c.b16 %v6651, %v6650
        %v6676 = vpack.c.b16 %v6653, %v6652
        %v6677 = vpack.c.b16 %v6655, %v6654
        %v6678 = vpack.c.b16 %v6657, %v6656
        %v6679 = vpack.c.b16 %v6659, %v6658
        %v6680 = vpack.c.b16 %v6661, %v6660
        %v6681 = vpack.c.b16 %v6663, %v6662
        %v6682 = vpack.c.b16 %v6665, %v6664
        %v6683 = vpack.c.b16 %v6667, %v6666
        %v6684 = vunpack.c.l.b16 %v4823
        %v6685 = vunpack.c.l.b16 %v4829
        %v6686 = vunpack.c.l.b16 %v4835
        %v6687 = vunpack.c.l.b16 %v4841
        %v6688 = vunpack.c.l.b16 %v4847
        %v6689 = vunpack.c.l.b16 %v4853
        %v6690 = vunpack.c.l.b16 %v4859
        %v6691 = vunpack.c.l.b16 %v4865
        %v6692 = vunpack.c.l.b16 %v4871
        %v6693 = vunpack.c.l.b16 %v4877
        %v6694 = vunpack.c.l.b16 %v4883
        %v6695 = vunpack.c.l.b16 %v4889
        %v6696 = vunpack.c.l.b16 %v4895
        %v6697 = vunpack.c.l.b16 %v4901
        %v6698 = vunpack.c.l.b16 %v4907
        %v6699 = vunpack.c.l.b16 %v4913
        %v6700 = vpack.c.b16 %v6685, %v6684
        %v6701 = vpack.c.b16 %v6687, %v6686
        %v6702 = vpack.c.b16 %v6689, %v6688
        %v6703 = vpack.c.b16 %v6691, %v6690
        %v6704 = vpack.c.b16 %v6693, %v6692
        %v6705 = vpack.c.b16 %v6695, %v6694
        %v6706 = vpack.c.b16 %v6697, %v6696
        %v6707 = vpack.c.b16 %v6699, %v6698
        %v6709 = vsel %vm6474, %v6668, 0
        %v6712 = vsel %vm6474, %v6669, 0
        %v6715 = vsel %vm6474, %v6670, 0
        %v6718 = vsel %vm6474, %v6671, 0
        %v6721 = vsel %vm6474, %v6672, 0
        %v6724 = vsel %vm6474, %v6673, 0
        %v6727 = vsel %vm6474, %v6674, 0
        %v6730 = vsel %vm6474, %v6675, 0
        %v6733 = vsel %vm6474, %v6676, 0
        %v6736 = vsel %vm6474, %v6677, 0
        %v6739 = vsel %vm6474, %v6678, 0
        %v6742 = vsel %vm6474, %v6679, 0
        %v6745 = vsel %vm6474, %v6680, 0
        %v6748 = vsel %vm6474, %v6681, 0
        %v6751 = vsel %vm6474, %v6682, 0
        %v6754 = vsel %vm6474, %v6683, 0
        %v6757 = vsel %vm6474, %v6700, 0
        %v6760 = vsel %vm6474, %v6701, 0
        %v6763 = vsel %vm6474, %v6702, 0
        %v6766 = vsel %vm6474, %v6703, 0
        %v6769 = vsel %vm6474, %v6704, 0
        %v6772 = vsel %vm6474, %v6705, 0
        %v6775 = vsel %vm6474, %v6706, 0
        %v6778 = vsel %vm6474, %v6707, 0
        %6780 = vmatpush.bf16.xpose.msra.mxu0 %v6778
        %6781 = vmatpush.bf16.xpose.msra.mxu0 %v6775
        %6782 = vmatpush.bf16.xpose.msra.mxu0 %v6772
        %6783 = vmatpush.bf16.xpose.msra.mxu0 %v6769
        %6784 = vmatpush.bf16.xpose.msra.mxu0 %v6766
        %6785 = vmatpush.bf16.xpose.msra.mxu0 %v6763
        %6786 = vmatpush.bf16.xpose.msra.mxu0 %v6760
        %6787 = vmatpush.bf16.xpose.msra.mxu0 %v6757
        %6788 = vmatmul.bf16.gmra.mxu0 %v6709
        %v6789 = vpop.f32.mrf.mxu0
        %v6790 = vadd.f32 %v6370, %v6789
        %v6791 = vpop.f32.mrf.mxu0
        %v6792 = vadd.f32 %v6371, %v6791
        %6793 = vmatmul.bf16.gmra.mxu0 %v6712
        %v6794 = vpop.f32.mrf.mxu0
        %v6795 = vadd.f32 %v6372, %v6794
        %v6796 = vpop.f32.mrf.mxu0
        %v6797 = vadd.f32 %v6373, %v6796
        %6798 = vmatmul.bf16.gmra.mxu0 %v6715
        %v6799 = vpop.f32.mrf.mxu0
        %v6800 = vadd.f32 %v6374, %v6799
        %v6801 = vpop.f32.mrf.mxu0
        %v6802 = vadd.f32 %v6375, %v6801
        %6803 = vmatmul.bf16.gmra.mxu0 %v6718
        %v6804 = vpop.f32.mrf.mxu0
        %v6805 = vadd.f32 %v6376, %v6804
        %v6806 = vpop.f32.mrf.mxu0
        %v6807 = vadd.f32 %v6377, %v6806
        %6808 = vmatmul.bf16.gmra.mxu0 %v6721
        %v6809 = vpop.f32.mrf.mxu0
        %v6810 = vadd.f32 %v6378, %v6809
        %v6811 = vpop.f32.mrf.mxu0
        %v6812 = vadd.f32 %v6379, %v6811
        %6813 = vmatmul.bf16.gmra.mxu0 %v6724
        %v6814 = vpop.f32.mrf.mxu0
        %v6815 = vadd.f32 %v6380, %v6814
        %v6816 = vpop.f32.mrf.mxu0
        %v6817 = vadd.f32 %v6381, %v6816
        %6818 = vmatmul.bf16.gmra.mxu0 %v6727
        %v6819 = vpop.f32.mrf.mxu0
        %v6820 = vadd.f32 %v6382, %v6819
        %v6821 = vpop.f32.mrf.mxu0
        %v6822 = vadd.f32 %v6383, %v6821
        %6823 = vmatmul.bf16.gmra.mxu0 %v6730
        %v6824 = vpop.f32.mrf.mxu0
        %v6825 = vadd.f32 %v6384, %v6824
        %v6826 = vpop.f32.mrf.mxu0
        %v6827 = vadd.f32 %v6385, %v6826
        %6828 = vmatmul.bf16.gmra.mxu0 %v6733
        %v6829 = vpop.f32.mrf.mxu0
        %v6830 = vadd.f32 %v6386, %v6829
        %v6831 = vpop.f32.mrf.mxu0
        %v6832 = vadd.f32 %v6387, %v6831
        %6833 = vmatmul.bf16.gmra.mxu0 %v6736
        %v6834 = vpop.f32.mrf.mxu0
        %v6835 = vadd.f32 %v6388, %v6834
        %v6836 = vpop.f32.mrf.mxu0
        %v6837 = vadd.f32 %v6389, %v6836
        %6838 = vmatmul.bf16.gmra.mxu0 %v6739
        %v6839 = vpop.f32.mrf.mxu0
        %v6840 = vadd.f32 %v6390, %v6839
        %v6841 = vpop.f32.mrf.mxu0
        %v6842 = vadd.f32 %v6391, %v6841
        %6843 = vmatmul.bf16.gmra.mxu0 %v6742
        %v6844 = vpop.f32.mrf.mxu0
        %v6845 = vadd.f32 %v6392, %v6844
        %v6846 = vpop.f32.mrf.mxu0
        %v6847 = vadd.f32 %v6393, %v6846
        %6848 = vmatmul.bf16.gmra.mxu0 %v6745
        %v6849 = vpop.f32.mrf.mxu0
        %v6850 = vadd.f32 %v6394, %v6849
        %v6851 = vpop.f32.mrf.mxu0
        %v6852 = vadd.f32 %v6395, %v6851
        %6853 = vmatmul.bf16.gmra.mxu0 %v6748
        %v6854 = vpop.f32.mrf.mxu0
        %v6855 = vadd.f32 %v6396, %v6854
        %v6856 = vpop.f32.mrf.mxu0
        %v6857 = vadd.f32 %v6397, %v6856
        %6858 = vmatmul.bf16.gmra.mxu0 %v6751
        %v6859 = vpop.f32.mrf.mxu0
        %v6860 = vadd.f32 %v6398, %v6859
        %v6861 = vpop.f32.mrf.mxu0
        %v6862 = vadd.f32 %v6399, %v6861
        %6863 = vmatmul.bf16.gmra.mxu0 %v6754
        %v6864 = vpop.f32.mrf.mxu0
        %v6865 = vadd.f32 %v6400, %v6864
        %v6866 = vpop.f32.mrf.mxu0
        %v6867 = vadd.f32 %v6401, %v6866
        %6868 = vdwg.mxu0
        %6869 = vmax.xlane.f32.xlu0 %v6557
        %v6870 = vpop.xlane.xlu0 %6869
        %6871 = vmax.xlane.f32.xlu0 %v6559
        %v6872 = vpop.xlane.xlu0 %6871
        %6873 = vmax.xlane.f32.xlu0 %v6562
        %v6874 = vpop.xlane.xlu0 %6873
        %6875 = vmax.xlane.f32.xlu0 %v6564
        %v6876 = vpop.xlane.xlu0 %6875
        %6877 = vmax.xlane.f32.xlu0 %v6567
        %v6878 = vpop.xlane.xlu0 %6877
        %6879 = vmax.xlane.f32.xlu0 %v6569
        %v6880 = vpop.xlane.xlu0 %6879
        %6881 = vmax.xlane.f32.xlu0 %v6572
        %v6882 = vpop.xlane.xlu0 %6881
        %6883 = vmax.xlane.f32.xlu0 %v6574
        %v6884 = vpop.xlane.xlu0 %6883
        %6885 = vmax.xlane.f32.xlu0 %v6577
        %v6886 = vpop.xlane.xlu0 %6885
        %6887 = vmax.xlane.f32.xlu0 %v6579
        %v6888 = vpop.xlane.xlu0 %6887
        %6889 = vmax.xlane.f32.xlu0 %v6582
        %v6890 = vpop.xlane.xlu0 %6889
        %6891 = vmax.xlane.f32.xlu0 %v6584
        %v6892 = vpop.xlane.xlu0 %6891
        %6893 = vmax.xlane.f32.xlu0 %v6587
        %v6894 = vpop.xlane.xlu0 %6893
        %6895 = vmax.xlane.f32.xlu0 %v6589
        %v6896 = vpop.xlane.xlu0 %6895
        %6897 = vmax.xlane.f32.xlu0 %v6592
        %v6898 = vpop.xlane.xlu0 %6897
        %6899 = vmax.xlane.f32.xlu0 %v6594
        %v6900 = vpop.xlane.xlu0 %6899
        %6901 = vmax.xlane.f32.xlu0 %v6597
        %v6902 = vpop.xlane.xlu0 %6901
        %6903 = vmax.xlane.f32.xlu0 %v6599
        %v6904 = vpop.xlane.xlu0 %6903
        %6905 = vmax.xlane.f32.xlu0 %v6602
        %v6906 = vpop.xlane.xlu0 %6905
        %6907 = vmax.xlane.f32.xlu0 %v6604
        %v6908 = vpop.xlane.xlu0 %6907
        %6909 = vmax.xlane.f32.xlu0 %v6607
        %v6910 = vpop.xlane.xlu0 %6909
        %6911 = vmax.xlane.f32.xlu0 %v6609
        %v6912 = vpop.xlane.xlu0 %6911
        %6913 = vmax.xlane.f32.xlu0 %v6612
        %v6914 = vpop.xlane.xlu0 %6913
        %6915 = vmax.xlane.f32.xlu0 %v6614
        %v6916 = vpop.xlane.xlu0 %6915
        %6917 = vmax.xlane.f32.xlu0 %v6617
        %v6918 = vpop.xlane.xlu0 %6917
        %6919 = vmax.xlane.f32.xlu0 %v6619
        %v6920 = vpop.xlane.xlu0 %6919
        %6921 = vmax.xlane.f32.xlu0 %v6622
        %v6922 = vpop.xlane.xlu0 %6921
        %6923 = vmax.xlane.f32.xlu0 %v6624
        %v6924 = vpop.xlane.xlu0 %6923
        %6925 = vmax.xlane.f32.xlu0 %v6627
        %v6926 = vpop.xlane.xlu0 %6925
        %6927 = vmax.xlane.f32.xlu0 %v6629
        %v6928 = vpop.xlane.xlu0 %6927
        %6929 = vmax.xlane.f32.xlu0 %v6632
        %v6930 = vpop.xlane.xlu0 %6929
        %6931 = vmax.xlane.f32.xlu0 %v6634
        %v6932 = vpop.xlane.xlu0 %6931
        %6933 = vmax.xlane.f32.xlu0 %v6790
        %v6934 = vpop.xlane.xlu0 %6933
        %6935 = vmax.xlane.f32.xlu0 %v6792
        %v6936 = vpop.xlane.xlu0 %6935
        %6937 = vmax.xlane.f32.xlu0 %v6795
        %v6938 = vpop.xlane.xlu0 %6937
        %6939 = vmax.xlane.f32.xlu0 %v6797
        %v6940 = vpop.xlane.xlu0 %6939
        %6941 = vmax.xlane.f32.xlu0 %v6800
        %v6942 = vpop.xlane.xlu0 %6941
        %6943 = vmax.xlane.f32.xlu0 %v6802
        %v6944 = vpop.xlane.xlu0 %6943
        %6945 = vmax.xlane.f32.xlu0 %v6805
        %v6946 = vpop.xlane.xlu0 %6945
        %6947 = vmax.xlane.f32.xlu0 %v6807
        %v6948 = vpop.xlane.xlu0 %6947
        %6949 = vmax.xlane.f32.xlu0 %v6810
        %v6950 = vpop.xlane.xlu0 %6949
        %6951 = vmax.xlane.f32.xlu0 %v6812
        %v6952 = vpop.xlane.xlu0 %6951
        %6953 = vmax.xlane.f32.xlu0 %v6815
        %v6954 = vpop.xlane.xlu0 %6953
        %6955 = vmax.xlane.f32.xlu0 %v6817
        %v6956 = vpop.xlane.xlu0 %6955
        %6957 = vmax.xlane.f32.xlu0 %v6820
        %v6958 = vpop.xlane.xlu0 %6957
        %6959 = vmax.xlane.f32.xlu0 %v6822
        %v6960 = vpop.xlane.xlu0 %6959
        %6961 = vmax.xlane.f32.xlu0 %v6825
        %v6962 = vpop.xlane.xlu0 %6961
        %6963 = vmax.xlane.f32.xlu0 %v6827
        %v6964 = vpop.xlane.xlu0 %6963
        %6965 = vmax.xlane.f32.xlu0 %v6830
        %v6966 = vpop.xlane.xlu0 %6965
        %6967 = vmax.xlane.f32.xlu0 %v6832
        %v6968 = vpop.xlane.xlu0 %6967
        %6969 = vmax.xlane.f32.xlu0 %v6835
        %v6970 = vpop.xlane.xlu0 %6969
        %6971 = vmax.xlane.f32.xlu0 %v6837
        %v6972 = vpop.xlane.xlu0 %6971
        %6973 = vmax.xlane.f32.xlu0 %v6840
        %v6974 = vpop.xlane.xlu0 %6973
        %6975 = vmax.xlane.f32.xlu0 %v6842
        %v6976 = vpop.xlane.xlu0 %6975
        %6977 = vmax.xlane.f32.xlu0 %v6845
        %v6978 = vpop.xlane.xlu0 %6977
        %6979 = vmax.xlane.f32.xlu0 %v6847
        %v6980 = vpop.xlane.xlu0 %6979
        %6981 = vmax.xlane.f32.xlu0 %v6850
        %v6982 = vpop.xlane.xlu0 %6981
        %6983 = vmax.xlane.f32.xlu0 %v6852
        %v6984 = vpop.xlane.xlu0 %6983
        %6985 = vmax.xlane.f32.xlu0 %v6855
        %v6986 = vpop.xlane.xlu0 %6985
        %6987 = vmax.xlane.f32.xlu0 %v6857
        %v6988 = vpop.xlane.xlu0 %6987
        %6989 = vmax.xlane.f32.xlu0 %v6860
        %v6990 = vpop.xlane.xlu0 %6989
        %6991 = vmax.xlane.f32.xlu0 %v6862
        %v6992 = vpop.xlane.xlu0 %6991
        %6993 = vmax.xlane.f32.xlu0 %v6865
        %v6994 = vpop.xlane.xlu0 %6993
        %6995 = vmax.xlane.f32.xlu0 %v6867
        %v6996 = vpop.xlane.xlu0 %6995
        %v6997 = vsub.f32 %v6557, %v6870
        %v6998 = vsub.f32 %v6559, %v6872
        %v6999 = vsub.f32 %v6562, %v6874
        %v7000 = vsub.f32 %v6564, %v6876
        %v7001 = vsub.f32 %v6567, %v6878
        %v7002 = vsub.f32 %v6569, %v6880
        %v7003 = vsub.f32 %v6572, %v6882
        %v7004 = vsub.f32 %v6574, %v6884
        %v7005 = vsub.f32 %v6577, %v6886
        %v7006 = vsub.f32 %v6579, %v6888
        %v7007 = vsub.f32 %v6582, %v6890
        %v7008 = vsub.f32 %v6584, %v6892
        %v7009 = vsub.f32 %v6587, %v6894
        %v7010 = vsub.f32 %v6589, %v6896
        %v7011 = vsub.f32 %v6592, %v6898
        %v7012 = vsub.f32 %v6594, %v6900
        %v7013 = vsub.f32 %v6597, %v6902
        %v7014 = vsub.f32 %v6599, %v6904
        %v7015 = vsub.f32 %v6602, %v6906
        %v7016 = vsub.f32 %v6604, %v6908
        %v7017 = vsub.f32 %v6607, %v6910
        %v7018 = vsub.f32 %v6609, %v6912
        %v7019 = vsub.f32 %v6612, %v6914
        %v7020 = vsub.f32 %v6614, %v6916
        %v7021 = vsub.f32 %v6617, %v6918
        %v7022 = vsub.f32 %v6619, %v6920
        %v7023 = vsub.f32 %v6622, %v6922
        %v7024 = vsub.f32 %v6624, %v6924
        %v7025 = vsub.f32 %v6627, %v6926
        %v7026 = vsub.f32 %v6629, %v6928
        %v7027 = vsub.f32 %v6632, %v6930
        %v7028 = vsub.f32 %v6634, %v6932
        %v7029 = vsub.f32 %v6790, %v6934
        %v7030 = vsub.f32 %v6792, %v6936
        %v7031 = vsub.f32 %v6795, %v6938
        %v7032 = vsub.f32 %v6797, %v6940
        %v7033 = vsub.f32 %v6800, %v6942
        %v7034 = vsub.f32 %v6802, %v6944
        %v7035 = vsub.f32 %v6805, %v6946
        %v7036 = vsub.f32 %v6807, %v6948
        %v7037 = vsub.f32 %v6810, %v6950
        %v7038 = vsub.f32 %v6812, %v6952
        %v7039 = vsub.f32 %v6815, %v6954
        %v7040 = vsub.f32 %v6817, %v6956
        %v7041 = vsub.f32 %v6820, %v6958
        %v7042 = vsub.f32 %v6822, %v6960
        %v7043 = vsub.f32 %v6825, %v6962
        %v7044 = vsub.f32 %v6827, %v6964
        %v7045 = vsub.f32 %v6830, %v6966
        %v7046 = vsub.f32 %v6832, %v6968
        %v7047 = vsub.f32 %v6835, %v6970
        %v7048 = vsub.f32 %v6837, %v6972
        %v7049 = vsub.f32 %v6840, %v6974
        %v7050 = vsub.f32 %v6842, %v6976
        %v7051 = vsub.f32 %v6845, %v6978
        %v7052 = vsub.f32 %v6847, %v6980
        %v7053 = vsub.f32 %v6850, %v6982
        %v7054 = vsub.f32 %v6852, %v6984
        %v7055 = vsub.f32 %v6855, %v6986
        %v7056 = vsub.f32 %v6857, %v6988
        %v7057 = vsub.f32 %v6860, %v6990
        %v7058 = vsub.f32 %v6862, %v6992
        %v7059 = vsub.f32 %v6865, %v6994
        %v7060 = vsub.f32 %v6867, %v6996
        %v7061 = vmul.f32 %v6997, 1.442695
        %v7062 = vpow.pop %v7061
        %v7063 = vmul.f32 %v6998, 1.442695
        %v7064 = vpow.pop %v7063
        %v7065 = vmul.f32 %v6999, 1.442695
        %v7066 = vpow.pop %v7065
        %v7067 = vmul.f32 %v7000, 1.442695
        %v7068 = vpow.pop %v7067
        %v7069 = vmul.f32 %v7001, 1.442695
        %v7070 = vpow.pop %v7069
        %v7071 = vmul.f32 %v7002, 1.442695
        %v7072 = vpow.pop %v7071
        %v7073 = vmul.f32 %v7003, 1.442695
        %v7074 = vpow.pop %v7073
        %v7075 = vmul.f32 %v7004, 1.442695
        %v7076 = vpow.pop %v7075
        %v7077 = vmul.f32 %v7005, 1.442695
        %v7078 = vpow.pop %v7077
        %v7079 = vmul.f32 %v7006, 1.442695
        %v7080 = vpow.pop %v7079
        %v7081 = vmul.f32 %v7007, 1.442695
        %v7082 = vpow.pop %v7081
        %v7083 = vmul.f32 %v7008, 1.442695
        %v7084 = vpow.pop %v7083
        %v7085 = vmul.f32 %v7009, 1.442695
        %v7086 = vpow.pop %v7085
        %v7087 = vmul.f32 %v7010, 1.442695
        %v7088 = vpow.pop %v7087
        %v7089 = vmul.f32 %v7011, 1.442695
        %v7090 = vpow.pop %v7089
        %v7091 = vmul.f32 %v7012, 1.442695
        %v7092 = vpow.pop %v7091
        %v7093 = vmul.f32 %v7013, 1.442695
        %v7094 = vpow.pop %v7093
        %v7095 = vmul.f32 %v7014, 1.442695
        %v7096 = vpow.pop %v7095
        %v7097 = vmul.f32 %v7015, 1.442695
        %v7098 = vpow.pop %v7097
        %v7099 = vmul.f32 %v7016, 1.442695
        %v7100 = vpow.pop %v7099
        %v7101 = vmul.f32 %v7017, 1.442695
        %v7102 = vpow.pop %v7101
        %v7103 = vmul.f32 %v7018, 1.442695
        %v7104 = vpow.pop %v7103
        %v7105 = vmul.f32 %v7019, 1.442695
        %v7106 = vpow.pop %v7105
        %v7107 = vmul.f32 %v7020, 1.442695
        %v7108 = vpow.pop %v7107
        %v7109 = vmul.f32 %v7021, 1.442695
        %v7110 = vpow.pop %v7109
        %v7111 = vmul.f32 %v7022, 1.442695
        %v7112 = vpow.pop %v7111
        %v7113 = vmul.f32 %v7023, 1.442695
        %v7114 = vpow.pop %v7113
        %v7115 = vmul.f32 %v7024, 1.442695
        %v7116 = vpow.pop %v7115
        %v7117 = vmul.f32 %v7025, 1.442695
        %v7118 = vpow.pop %v7117
        %v7119 = vmul.f32 %v7026, 1.442695
        %v7120 = vpow.pop %v7119
        %v7121 = vmul.f32 %v7027, 1.442695
        %v7122 = vpow.pop %v7121
        %v7123 = vmul.f32 %v7028, 1.442695
        %v7124 = vpow.pop %v7123
        %v7125 = vmul.f32 %v7029, 1.442695
        %v7126 = vpow.pop %v7125
        %v7127 = vmul.f32 %v7030, 1.442695
        %v7128 = vpow.pop %v7127
        %v7129 = vmul.f32 %v7031, 1.442695
        %v7130 = vpow.pop %v7129
        %v7131 = vmul.f32 %v7032, 1.442695
        %v7132 = vpow.pop %v7131
        %v7133 = vmul.f32 %v7033, 1.442695
        %v7134 = vpow.pop %v7133
        %v7135 = vmul.f32 %v7034, 1.442695
        %v7136 = vpow.pop %v7135
        %v7137 = vmul.f32 %v7035, 1.442695
        %v7138 = vpow.pop %v7137
        %v7139 = vmul.f32 %v7036, 1.442695
        %v7140 = vpow.pop %v7139
        %v7141 = vmul.f32 %v7037, 1.442695
        %v7142 = vpow.pop %v7141
        %v7143 = vmul.f32 %v7038, 1.442695
        %v7144 = vpow.pop %v7143
        %v7145 = vmul.f32 %v7039, 1.442695
        %v7146 = vpow.pop %v7145
        %v7147 = vmul.f32 %v7040, 1.442695
        %v7148 = vpow.pop %v7147
        %v7149 = vmul.f32 %v7041, 1.442695
        %v7150 = vpow.pop %v7149
        %v7151 = vmul.f32 %v7042, 1.442695
        %v7152 = vpow.pop %v7151
        %v7153 = vmul.f32 %v7043, 1.442695
        %v7154 = vpow.pop %v7153
        %v7155 = vmul.f32 %v7044, 1.442695
        %v7156 = vpow.pop %v7155
        %v7157 = vmul.f32 %v7045, 1.442695
        %v7158 = vpow.pop %v7157
        %v7159 = vmul.f32 %v7046, 1.442695
        %v7160 = vpow.pop %v7159
        %v7161 = vmul.f32 %v7047, 1.442695
        %v7162 = vpow.pop %v7161
        %v7163 = vmul.f32 %v7048, 1.442695
        %v7164 = vpow.pop %v7163
        %v7165 = vmul.f32 %v7049, 1.442695
        %v7166 = vpow.pop %v7165
        %v7167 = vmul.f32 %v7050, 1.442695
        %v7168 = vpow.pop %v7167
        %v7169 = vmul.f32 %v7051, 1.442695
        %v7170 = vpow.pop %v7169
        %v7171 = vmul.f32 %v7052, 1.442695
        %v7172 = vpow.pop %v7171
        %v7173 = vmul.f32 %v7053, 1.442695
        %v7174 = vpow.pop %v7173
        %v7175 = vmul.f32 %v7054, 1.442695
        %v7176 = vpow.pop %v7175
        %v7177 = vmul.f32 %v7055, 1.442695
        %v7178 = vpow.pop %v7177
        %v7179 = vmul.f32 %v7056, 1.442695
        %v7180 = vpow.pop %v7179
        %v7181 = vmul.f32 %v7057, 1.442695
        %v7182 = vpow.pop %v7181
        %v7183 = vmul.f32 %v7058, 1.442695
        %v7184 = vpow.pop %v7183
        %v7185 = vmul.f32 %v7059, 1.442695
        %v7186 = vpow.pop %v7185
        %v7187 = vmul.f32 %v7060, 1.442695
        %v7188 = vpow.pop %v7187
        %7189 = vadd.xlane.f32.xlu0 %v7062
        %v7190 = vpop.xlane.xlu0 %7189
        %7191 = vadd.xlane.f32.xlu0 %v7064
        %v7192 = vpop.xlane.xlu0 %7191
        %7193 = vadd.xlane.f32.xlu0 %v7066
        %v7194 = vpop.xlane.xlu0 %7193
        %7195 = vadd.xlane.f32.xlu0 %v7068
        %v7196 = vpop.xlane.xlu0 %7195
        %7197 = vadd.xlane.f32.xlu0 %v7070
        %v7198 = vpop.xlane.xlu0 %7197
        %7199 = vadd.xlane.f32.xlu0 %v7072
        %v7200 = vpop.xlane.xlu0 %7199
        %7201 = vadd.xlane.f32.xlu0 %v7074
        %v7202 = vpop.xlane.xlu0 %7201
        %7203 = vadd.xlane.f32.xlu0 %v7076
        %v7204 = vpop.xlane.xlu0 %7203
        %7205 = vadd.xlane.f32.xlu0 %v7078
        %v7206 = vpop.xlane.xlu0 %7205
        %7207 = vadd.xlane.f32.xlu0 %v7080
        %v7208 = vpop.xlane.xlu0 %7207
        %7209 = vadd.xlane.f32.xlu0 %v7082
        %v7210 = vpop.xlane.xlu0 %7209
        %7211 = vadd.xlane.f32.xlu0 %v7084
        %v7212 = vpop.xlane.xlu0 %7211
        %7213 = vadd.xlane.f32.xlu0 %v7086
        %v7214 = vpop.xlane.xlu0 %7213
        %7215 = vadd.xlane.f32.xlu0 %v7088
        %v7216 = vpop.xlane.xlu0 %7215
        %7217 = vadd.xlane.f32.xlu0 %v7090
        %v7218 = vpop.xlane.xlu0 %7217
        %7219 = vadd.xlane.f32.xlu0 %v7092
        %v7220 = vpop.xlane.xlu0 %7219
        %7221 = vadd.xlane.f32.xlu0 %v7094
        %v7222 = vpop.xlane.xlu0 %7221
        %7223 = vadd.xlane.f32.xlu0 %v7096
        %v7224 = vpop.xlane.xlu0 %7223
        %7225 = vadd.xlane.f32.xlu0 %v7098
        %v7226 = vpop.xlane.xlu0 %7225
        %7227 = vadd.xlane.f32.xlu0 %v7100
        %v7228 = vpop.xlane.xlu0 %7227
        %7229 = vadd.xlane.f32.xlu0 %v7102
        %v7230 = vpop.xlane.xlu0 %7229
        %7231 = vadd.xlane.f32.xlu0 %v7104
        %v7232 = vpop.xlane.xlu0 %7231
        %7233 = vadd.xlane.f32.xlu0 %v7106
        %v7234 = vpop.xlane.xlu0 %7233
        %7235 = vadd.xlane.f32.xlu0 %v7108
        %v7236 = vpop.xlane.xlu0 %7235
        %7237 = vadd.xlane.f32.xlu0 %v7110
        %v7238 = vpop.xlane.xlu0 %7237
        %7239 = vadd.xlane.f32.xlu0 %v7112
        %v7240 = vpop.xlane.xlu0 %7239
        %7241 = vadd.xlane.f32.xlu0 %v7114
        %v7242 = vpop.xlane.xlu0 %7241
        %7243 = vadd.xlane.f32.xlu0 %v7116
        %v7244 = vpop.xlane.xlu0 %7243
        %7245 = vadd.xlane.f32.xlu0 %v7118
        %v7246 = vpop.xlane.xlu0 %7245
        %7247 = vadd.xlane.f32.xlu0 %v7120
        %v7248 = vpop.xlane.xlu0 %7247
        %7249 = vadd.xlane.f32.xlu0 %v7122
        %v7250 = vpop.xlane.xlu0 %7249
        %7251 = vadd.xlane.f32.xlu0 %v7124
        %v7252 = vpop.xlane.xlu0 %7251
        %7253 = vadd.xlane.f32.xlu0 %v7126
        %v7254 = vpop.xlane.xlu0 %7253
        %7255 = vadd.xlane.f32.xlu0 %v7128
        %v7256 = vpop.xlane.xlu0 %7255
        %7257 = vadd.xlane.f32.xlu0 %v7130
        %v7258 = vpop.xlane.xlu0 %7257
        %7259 = vadd.xlane.f32.xlu0 %v7132
        %v7260 = vpop.xlane.xlu0 %7259
        %7261 = vadd.xlane.f32.xlu0 %v7134
        %v7262 = vpop.xlane.xlu0 %7261
        %7263 = vadd.xlane.f32.xlu0 %v7136
        %v7264 = vpop.xlane.xlu0 %7263
        %7265 = vadd.xlane.f32.xlu0 %v7138
        %v7266 = vpop.xlane.xlu0 %7265
        %7267 = vadd.xlane.f32.xlu0 %v7140
        %v7268 = vpop.xlane.xlu0 %7267
        %7269 = vadd.xlane.f32.xlu0 %v7142
        %v7270 = vpop.xlane.xlu0 %7269
        %7271 = vadd.xlane.f32.xlu0 %v7144
        %v7272 = vpop.xlane.xlu0 %7271
        %7273 = vadd.xlane.f32.xlu0 %v7146
        %v7274 = vpop.xlane.xlu0 %7273
        %7275 = vadd.xlane.f32.xlu0 %v7148
        %v7276 = vpop.xlane.xlu0 %7275
        %7277 = vadd.xlane.f32.xlu0 %v7150
        %v7278 = vpop.xlane.xlu0 %7277
        %7279 = vadd.xlane.f32.xlu0 %v7152
        %v7280 = vpop.xlane.xlu0 %7279
        %7281 = vadd.xlane.f32.xlu0 %v7154
        %v7282 = vpop.xlane.xlu0 %7281
        %7283 = vadd.xlane.f32.xlu0 %v7156
        %v7284 = vpop.xlane.xlu0 %7283
        %7285 = vadd.xlane.f32.xlu0 %v7158
        %v7286 = vpop.xlane.xlu0 %7285
        %7287 = vadd.xlane.f32.xlu0 %v7160
        %v7288 = vpop.xlane.xlu0 %7287
        %7289 = vadd.xlane.f32.xlu0 %v7162
        %v7290 = vpop.xlane.xlu0 %7289
        %7291 = vadd.xlane.f32.xlu0 %v7164
        %v7292 = vpop.xlane.xlu0 %7291
        %7293 = vadd.xlane.f32.xlu0 %v7166
        %v7294 = vpop.xlane.xlu0 %7293
        %7295 = vadd.xlane.f32.xlu0 %v7168
        %v7296 = vpop.xlane.xlu0 %7295
        %7297 = vadd.xlane.f32.xlu0 %v7170
        %v7298 = vpop.xlane.xlu0 %7297
        %7299 = vadd.xlane.f32.xlu0 %v7172
        %v7300 = vpop.xlane.xlu0 %7299
        %7301 = vadd.xlane.f32.xlu0 %v7174
        %v7302 = vpop.xlane.xlu0 %7301
        %7303 = vadd.xlane.f32.xlu0 %v7176
        %v7304 = vpop.xlane.xlu0 %7303
        %7305 = vadd.xlane.f32.xlu0 %v7178
        %v7306 = vpop.xlane.xlu0 %7305
        %7307 = vadd.xlane.f32.xlu0 %v7180
        %v7308 = vpop.xlane.xlu0 %7307
        %7309 = vadd.xlane.f32.xlu0 %v7182
        %v7310 = vpop.xlane.xlu0 %7309
        %7311 = vadd.xlane.f32.xlu0 %v7184
        %v7312 = vpop.xlane.xlu0 %7311
        %7313 = vadd.xlane.f32.xlu0 %v7186
        %v7314 = vpop.xlane.xlu0 %7313
        %7315 = vadd.xlane.f32.xlu0 %v7188
        %v7316 = vpop.xlane.xlu0 %7315
        %v7317 = vrcp.pop %v7190
        %v7318 = vrcp.pop %v7192
        %v7319 = vrcp.pop %v7194
        %v7320 = vrcp.pop %v7196
        %v7321 = vrcp.pop %v7198
        %v7322 = vrcp.pop %v7200
        %v7323 = vrcp.pop %v7202
        %v7324 = vrcp.pop %v7204
        %v7325 = vrcp.pop %v7206
        %v7326 = vrcp.pop %v7208
        %v7327 = vrcp.pop %v7210
        %v7328 = vrcp.pop %v7212
        %v7329 = vrcp.pop %v7214
        %v7330 = vrcp.pop %v7216
        %v7331 = vrcp.pop %v7218
        %v7332 = vrcp.pop %v7220
        %v7333 = vrcp.pop %v7222
        %v7334 = vrcp.pop %v7224
        %v7335 = vrcp.pop %v7226
        %v7336 = vrcp.pop %v7228
        %v7337 = vrcp.pop %v7230
        %v7338 = vrcp.pop %v7232
        %v7339 = vrcp.pop %v7234
        %v7340 = vrcp.pop %v7236
        %v7341 = vrcp.pop %v7238
        %v7342 = vrcp.pop %v7240
        %v7343 = vrcp.pop %v7242
        %v7344 = vrcp.pop %v7244
        %v7345 = vrcp.pop %v7246
        %v7346 = vrcp.pop %v7248
        %v7347 = vrcp.pop %v7250
        %v7348 = vrcp.pop %v7252
        %v7349 = vrcp.pop %v7254
        %v7350 = vrcp.pop %v7256
        %v7351 = vrcp.pop %v7258
        %v7352 = vrcp.pop %v7260
        %v7353 = vrcp.pop %v7262
        %v7354 = vrcp.pop %v7264
        %v7355 = vrcp.pop %v7266
        %v7356 = vrcp.pop %v7268
        %v7357 = vrcp.pop %v7270
        %v7358 = vrcp.pop %v7272
        %v7359 = vrcp.pop %v7274
        %v7360 = vrcp.pop %v7276
        %v7361 = vrcp.pop %v7278
        %v7362 = vrcp.pop %v7280
        %v7363 = vrcp.pop %v7282
        %v7364 = vrcp.pop %v7284
        %v7365 = vrcp.pop %v7286
        %v7366 = vrcp.pop %v7288
        %v7367 = vrcp.pop %v7290
        %v7368 = vrcp.pop %v7292
        %v7369 = vrcp.pop %v7294
        %v7370 = vrcp.pop %v7296
        %v7371 = vrcp.pop %v7298
        %v7372 = vrcp.pop %v7300
        %v7373 = vrcp.pop %v7302
        %v7374 = vrcp.pop %v7304
        %v7375 = vrcp.pop %v7306
        %v7376 = vrcp.pop %v7308
        %v7377 = vrcp.pop %v7310
        %v7378 = vrcp.pop %v7312
        %v7379 = vrcp.pop %v7314
        %v7380 = vrcp.pop %v7316
        %v7381 = vmul.f32 %v7062, %v7317
        %v7382 = vmul.f32 %v7064, %v7318
        %v7383 = vmul.f32 %v7066, %v7319
        %v7384 = vmul.f32 %v7068, %v7320
        %v7385 = vmul.f32 %v7070, %v7321
        %v7386 = vmul.f32 %v7072, %v7322
        %v7387 = vmul.f32 %v7074, %v7323
        %v7388 = vmul.f32 %v7076, %v7324
        %v7389 = vmul.f32 %v7078, %v7325
        %v7390 = vmul.f32 %v7080, %v7326
        %v7391 = vmul.f32 %v7082, %v7327
        %v7392 = vmul.f32 %v7084, %v7328
        %v7393 = vmul.f32 %v7086, %v7329
        %v7394 = vmul.f32 %v7088, %v7330
        %v7395 = vmul.f32 %v7090, %v7331
        %v7396 = vmul.f32 %v7092, %v7332
        %v7397 = vmul.f32 %v7094, %v7333
        %v7398 = vmul.f32 %v7096, %v7334
        %v7399 = vmul.f32 %v7098, %v7335
        %v7400 = vmul.f32 %v7100, %v7336
        %v7401 = vmul.f32 %v7102, %v7337
        %v7402 = vmul.f32 %v7104, %v7338
        %v7403 = vmul.f32 %v7106, %v7339
        %v7404 = vmul.f32 %v7108, %v7340
        %v7405 = vmul.f32 %v7110, %v7341
        %v7406 = vmul.f32 %v7112, %v7342
        %v7407 = vmul.f32 %v7114, %v7343
        %v7408 = vmul.f32 %v7116, %v7344
        %v7409 = vmul.f32 %v7118, %v7345
        %v7410 = vmul.f32 %v7120, %v7346
        %v7411 = vmul.f32 %v7122, %v7347
        %v7412 = vmul.f32 %v7124, %v7348
        %v7413 = vmul.f32 %v7126, %v7349
        %v7414 = vmul.f32 %v7128, %v7350
        %v7415 = vmul.f32 %v7130, %v7351
        %v7416 = vmul.f32 %v7132, %v7352
        %v7417 = vmul.f32 %v7134, %v7353
        %v7418 = vmul.f32 %v7136, %v7354
        %v7419 = vmul.f32 %v7138, %v7355
        %v7420 = vmul.f32 %v7140, %v7356
        %v7421 = vmul.f32 %v7142, %v7357
        %v7422 = vmul.f32 %v7144, %v7358
        %v7423 = vmul.f32 %v7146, %v7359
        %v7424 = vmul.f32 %v7148, %v7360
        %v7425 = vmul.f32 %v7150, %v7361
        %v7426 = vmul.f32 %v7152, %v7362
        %v7427 = vmul.f32 %v7154, %v7363
        %v7428 = vmul.f32 %v7156, %v7364
        %v7429 = vmul.f32 %v7158, %v7365
        %v7430 = vmul.f32 %v7160, %v7366
        %v7431 = vmul.f32 %v7162, %v7367
        %v7432 = vmul.f32 %v7164, %v7368
        %v7433 = vmul.f32 %v7166, %v7369
        %v7434 = vmul.f32 %v7168, %v7370
        %v7435 = vmul.f32 %v7170, %v7371
        %v7436 = vmul.f32 %v7172, %v7372
        %v7437 = vmul.f32 %v7174, %v7373
        %v7438 = vmul.f32 %v7176, %v7374
        %v7439 = vmul.f32 %v7178, %v7375
        %v7440 = vmul.f32 %v7180, %v7376
        %v7441 = vmul.f32 %v7182, %v7377
        %v7442 = vmul.f32 %v7184, %v7378
        %v7443 = vmul.f32 %v7186, %v7379
        %v7444 = vmul.f32 %v7188, %v7380
        %v7445 = vpack.c.bf16 %v7381, %v7381
        %v7446 = vpack.c.bf16 %v7382, %v7382
        %v7447 = vpack.c.bf16 %v7383, %v7383
        %v7448 = vpack.c.bf16 %v7384, %v7384
        %v7449 = vpack.c.bf16 %v7385, %v7385
        %v7450 = vpack.c.bf16 %v7386, %v7386
        %v7451 = vpack.c.bf16 %v7387, %v7387
        %v7452 = vpack.c.bf16 %v7388, %v7388
        %v7453 = vpack.c.bf16 %v7389, %v7389
        %v7454 = vpack.c.bf16 %v7390, %v7390
        %v7455 = vpack.c.bf16 %v7391, %v7391
        %v7456 = vpack.c.bf16 %v7392, %v7392
        %v7457 = vpack.c.bf16 %v7393, %v7393
        %v7458 = vpack.c.bf16 %v7394, %v7394
        %v7459 = vpack.c.bf16 %v7395, %v7395
        %v7460 = vpack.c.bf16 %v7396, %v7396
        %v7461 = vpack.c.bf16 %v7397, %v7397
        %v7462 = vpack.c.bf16 %v7398, %v7398
        %v7463 = vpack.c.bf16 %v7399, %v7399
        %v7464 = vpack.c.bf16 %v7400, %v7400
        %v7465 = vpack.c.bf16 %v7401, %v7401
        %v7466 = vpack.c.bf16 %v7402, %v7402
        %v7467 = vpack.c.bf16 %v7403, %v7403
        %v7468 = vpack.c.bf16 %v7404, %v7404
        %v7469 = vpack.c.bf16 %v7405, %v7405
        %v7470 = vpack.c.bf16 %v7406, %v7406
        %v7471 = vpack.c.bf16 %v7407, %v7407
        %v7472 = vpack.c.bf16 %v7408, %v7408
        %v7473 = vpack.c.bf16 %v7409, %v7409
        %v7474 = vpack.c.bf16 %v7410, %v7410
        %v7475 = vpack.c.bf16 %v7411, %v7411
        %v7476 = vpack.c.bf16 %v7412, %v7412
        %v7477 = vpack.c.bf16 %v7413, %v7413
        %v7478 = vpack.c.bf16 %v7414, %v7414
        %v7479 = vpack.c.bf16 %v7415, %v7415
        %v7480 = vpack.c.bf16 %v7416, %v7416
        %v7481 = vpack.c.bf16 %v7417, %v7417
        %v7482 = vpack.c.bf16 %v7418, %v7418
        %v7483 = vpack.c.bf16 %v7419, %v7419
        %v7484 = vpack.c.bf16 %v7420, %v7420
        %v7485 = vpack.c.bf16 %v7421, %v7421
        %v7486 = vpack.c.bf16 %v7422, %v7422
        %v7487 = vpack.c.bf16 %v7423, %v7423
        %v7488 = vpack.c.bf16 %v7424, %v7424
        %v7489 = vpack.c.bf16 %v7425, %v7425
        %v7490 = vpack.c.bf16 %v7426, %v7426
        %v7491 = vpack.c.bf16 %v7427, %v7427
        %v7492 = vpack.c.bf16 %v7428, %v7428
        %v7493 = vpack.c.bf16 %v7429, %v7429
        %v7494 = vpack.c.bf16 %v7430, %v7430
        %v7495 = vpack.c.bf16 %v7431, %v7431
        %v7496 = vpack.c.bf16 %v7432, %v7432
        %v7497 = vpack.c.bf16 %v7433, %v7433
        %v7498 = vpack.c.bf16 %v7434, %v7434
        %v7499 = vpack.c.bf16 %v7435, %v7435
        %v7500 = vpack.c.bf16 %v7436, %v7436
        %v7501 = vpack.c.bf16 %v7437, %v7437
        %v7502 = vpack.c.bf16 %v7438, %v7438
        %v7503 = vpack.c.bf16 %v7439, %v7439
        %v7504 = vpack.c.bf16 %v7440, %v7440
        %v7505 = vpack.c.bf16 %v7441, %v7441
        %v7506 = vpack.c.bf16 %v7442, %v7442
        %v7507 = vpack.c.bf16 %v7443, %v7443
        %v7508 = vpack.c.bf16 %v7444, %v7444
        %v7541 = vunpack.c.l.b16 %v7445
        %v7542 = vunpack.c.l.b16 %v7446
        %v7543 = vunpack.c.l.b16 %v7447
        %v7544 = vunpack.c.l.b16 %v7448
        %v7545 = vunpack.c.l.b16 %v7449
        %v7546 = vunpack.c.l.b16 %v7450
        %v7547 = vunpack.c.l.b16 %v7451
        %v7548 = vunpack.c.l.b16 %v7452
        %v7549 = vunpack.c.l.b16 %v7453
        %v7550 = vunpack.c.l.b16 %v7454
        %v7551 = vunpack.c.l.b16 %v7455
        %v7552 = vunpack.c.l.b16 %v7456
        %v7553 = vunpack.c.l.b16 %v7457
        %v7554 = vunpack.c.l.b16 %v7458
        %v7555 = vunpack.c.l.b16 %v7459
        %v7556 = vunpack.c.l.b16 %v7460
        %v7557 = vunpack.c.l.b16 %v7461
        %v7558 = vunpack.c.l.b16 %v7462
        %v7559 = vunpack.c.l.b16 %v7463
        %v7560 = vunpack.c.l.b16 %v7464
        %v7561 = vunpack.c.l.b16 %v7465
        %v7562 = vunpack.c.l.b16 %v7466
        %v7563 = vunpack.c.l.b16 %v7467
        %v7564 = vunpack.c.l.b16 %v7468
        %v7565 = vunpack.c.l.b16 %v7469
        %v7566 = vunpack.c.l.b16 %v7470
        %v7567 = vunpack.c.l.b16 %v7471
        %v7568 = vunpack.c.l.b16 %v7472
        %v7569 = vunpack.c.l.b16 %v7473
        %v7570 = vunpack.c.l.b16 %v7474
        %v7571 = vunpack.c.l.b16 %v7475
        %v7572 = vunpack.c.l.b16 %v7476
        %v7573 = vpack.c.b16 %v7542, %v7541
        %v7574 = vpack.c.b16 %v7544, %v7543
        %v7575 = vpack.c.b16 %v7546, %v7545
        %v7576 = vpack.c.b16 %v7548, %v7547
        %v7577 = vpack.c.b16 %v7550, %v7549
        %v7578 = vpack.c.b16 %v7552, %v7551
        %v7579 = vpack.c.b16 %v7554, %v7553
        %v7580 = vpack.c.b16 %v7556, %v7555
        %v7581 = vpack.c.b16 %v7558, %v7557
        %v7582 = vpack.c.b16 %v7560, %v7559
        %v7583 = vpack.c.b16 %v7562, %v7561
        %v7584 = vpack.c.b16 %v7564, %v7563
        %v7585 = vpack.c.b16 %v7566, %v7565
        %v7586 = vpack.c.b16 %v7568, %v7567
        %v7587 = vpack.c.b16 %v7570, %v7569
        %v7588 = vpack.c.b16 %v7572, %v7571
        %v7605 = vunpack.c.l.b16 %v6276
        %v7606 = vunpack.c.l.b16 %v6282
        %v7607 = vunpack.c.l.b16 %v6288
        %v7608 = vunpack.c.l.b16 %v6294
        %v7609 = vunpack.c.l.b16 %v6300
        %v7610 = vunpack.c.l.b16 %v6306
        %v7611 = vunpack.c.l.b16 %v6312
        %v7612 = vunpack.c.l.b16 %v6318
        %v7613 = vunpack.c.l.b16 %v6324
        %v7614 = vunpack.c.l.b16 %v6330
        %v7615 = vunpack.c.l.b16 %v6336
        %v7616 = vunpack.c.l.b16 %v6342
        %v7617 = vunpack.c.l.b16 %v6348
        %v7618 = vunpack.c.l.b16 %v6354
        %v7619 = vunpack.c.l.b16 %v6360
        %v7620 = vunpack.c.l.b16 %v6366
        %v7621 = vpack.c.b16 %v7606, %v7605
        %v7622 = vpack.c.b16 %v7608, %v7607
        %v7623 = vpack.c.b16 %v7610, %v7609
        %v7624 = vpack.c.b16 %v7612, %v7611
        %v7625 = vpack.c.b16 %v7614, %v7613
        %v7626 = vpack.c.b16 %v7616, %v7615
        %v7627 = vpack.c.b16 %v7618, %v7617
        %v7628 = vpack.c.b16 %v7620, %v7619
        %7637 = vmatpush.bf16.msra.mxu0 %v7628
        %7638 = vmatpush.bf16.msra.mxu0 %v7627
        %7639 = vmatpush.bf16.msra.mxu0 %v7626
        %7640 = vmatpush.bf16.msra.mxu0 %v7625
        %7641 = vmatpush.bf16.msra.mxu0 %v7624
        %7642 = vmatpush.bf16.msra.mxu0 %v7623
        %7643 = vmatpush.bf16.msra.mxu0 %v7622
        %7644 = vmatpush.bf16.msra.mxu0 %v7621
        %7645 = vmatmul.bf16.gmra.mxu0 %v7573
        %v7646 = vpop.f32.mrf.mxu0
        %v7647 = vadd.f32 0.0, %v7646
        %v7648 = vpop.f32.mrf.mxu0
        %v7649 = vadd.f32 0.0, %v7648
        %7650 = vmatmul.bf16.gmra.mxu0 %v7574
        %v7651 = vpop.f32.mrf.mxu0
        %v7652 = vadd.f32 0.0, %v7651
        %v7653 = vpop.f32.mrf.mxu0
        %v7654 = vadd.f32 0.0, %v7653
        %7655 = vmatmul.bf16.gmra.mxu0 %v7575
        %v7656 = vpop.f32.mrf.mxu0
        %v7657 = vadd.f32 0.0, %v7656
        %v7658 = vpop.f32.mrf.mxu0
        %v7659 = vadd.f32 0.0, %v7658
        %7660 = vmatmul.bf16.gmra.mxu0 %v7576
        %v7661 = vpop.f32.mrf.mxu0
        %v7662 = vadd.f32 0.0, %v7661
        %v7663 = vpop.f32.mrf.mxu0
        %v7664 = vadd.f32 0.0, %v7663
        %7665 = vmatmul.bf16.gmra.mxu0 %v7577
        %v7666 = vpop.f32.mrf.mxu0
        %v7667 = vadd.f32 0.0, %v7666
        %v7668 = vpop.f32.mrf.mxu0
        %v7669 = vadd.f32 0.0, %v7668
        %7670 = vmatmul.bf16.gmra.mxu0 %v7578
        %v7671 = vpop.f32.mrf.mxu0
        %v7672 = vadd.f32 0.0, %v7671
        %v7673 = vpop.f32.mrf.mxu0
        %v7674 = vadd.f32 0.0, %v7673
        %7675 = vmatmul.bf16.gmra.mxu0 %v7579
        %v7676 = vpop.f32.mrf.mxu0
        %v7677 = vadd.f32 0.0, %v7676
        %v7678 = vpop.f32.mrf.mxu0
        %v7679 = vadd.f32 0.0, %v7678
        %7680 = vmatmul.bf16.gmra.mxu0 %v7580
        %v7681 = vpop.f32.mrf.mxu0
        %v7682 = vadd.f32 0.0, %v7681
        %v7683 = vpop.f32.mrf.mxu0
        %v7684 = vadd.f32 0.0, %v7683
        %7685 = vmatmul.bf16.gmra.mxu0 %v7581
        %v7686 = vpop.f32.mrf.mxu0
        %v7687 = vadd.f32 0.0, %v7686
        %v7688 = vpop.f32.mrf.mxu0
        %v7689 = vadd.f32 0.0, %v7688
        %7690 = vmatmul.bf16.gmra.mxu0 %v7582
        %v7691 = vpop.f32.mrf.mxu0
        %v7692 = vadd.f32 0.0, %v7691
        %v7693 = vpop.f32.mrf.mxu0
        %v7694 = vadd.f32 0.0, %v7693
        %7695 = vmatmul.bf16.gmra.mxu0 %v7583
        %v7696 = vpop.f32.mrf.mxu0
        %v7697 = vadd.f32 0.0, %v7696
        %v7698 = vpop.f32.mrf.mxu0
        %v7699 = vadd.f32 0.0, %v7698
        %7700 = vmatmul.bf16.gmra.mxu0 %v7584
        %v7701 = vpop.f32.mrf.mxu0
        %v7702 = vadd.f32 0.0, %v7701
        %v7703 = vpop.f32.mrf.mxu0
        %v7704 = vadd.f32 0.0, %v7703
        %7705 = vmatmul.bf16.gmra.mxu0 %v7585
        %v7706 = vpop.f32.mrf.mxu0
        %v7707 = vadd.f32 0.0, %v7706
        %v7708 = vpop.f32.mrf.mxu0
        %v7709 = vadd.f32 0.0, %v7708
        %7710 = vmatmul.bf16.gmra.mxu0 %v7586
        %v7711 = vpop.f32.mrf.mxu0
        %v7712 = vadd.f32 0.0, %v7711
        %v7713 = vpop.f32.mrf.mxu0
        %v7714 = vadd.f32 0.0, %v7713
        %7715 = vmatmul.bf16.gmra.mxu0 %v7587
        %v7716 = vpop.f32.mrf.mxu0
        %v7717 = vadd.f32 0.0, %v7716
        %v7718 = vpop.f32.mrf.mxu0
        %v7719 = vadd.f32 0.0, %v7718
        %7720 = vmatmul.bf16.gmra.mxu0 %v7588
        %v7721 = vpop.f32.mrf.mxu0
        %v7722 = vadd.f32 0.0, %v7721
        %v7723 = vpop.f32.mrf.mxu0
        %v7724 = vadd.f32 0.0, %v7723
        %7725 = vdwg.mxu0
        %v7758 = vunpack.c.l.b16 %v7477
        %v7759 = vunpack.c.l.b16 %v7478
        %v7760 = vunpack.c.l.b16 %v7479
        %v7761 = vunpack.c.l.b16 %v7480
        %v7762 = vunpack.c.l.b16 %v7481
        %v7763 = vunpack.c.l.b16 %v7482
        %v7764 = vunpack.c.l.b16 %v7483
        %v7765 = vunpack.c.l.b16 %v7484
        %v7766 = vunpack.c.l.b16 %v7485
        %v7767 = vunpack.c.l.b16 %v7486
        %v7768 = vunpack.c.l.b16 %v7487
        %v7769 = vunpack.c.l.b16 %v7488
        %v7770 = vunpack.c.l.b16 %v7489
        %v7771 = vunpack.c.l.b16 %v7490
        %v7772 = vunpack.c.l.b16 %v7491
        %v7773 = vunpack.c.l.b16 %v7492
        %v7774 = vunpack.c.l.b16 %v7493
        %v7775 = vunpack.c.l.b16 %v7494
        %v7776 = vunpack.c.l.b16 %v7495
        %v7777 = vunpack.c.l.b16 %v7496
        %v7778 = vunpack.c.l.b16 %v7497
        %v7779 = vunpack.c.l.b16 %v7498
        %v7780 = vunpack.c.l.b16 %v7499
        %v7781 = vunpack.c.l.b16 %v7500
        %v7782 = vunpack.c.l.b16 %v7501
        %v7783 = vunpack.c.l.b16 %v7502
        %v7784 = vunpack.c.l.b16 %v7503
        %v7785 = vunpack.c.l.b16 %v7504
        %v7786 = vunpack.c.l.b16 %v7505
        %v7787 = vunpack.c.l.b16 %v7506
        %v7788 = vunpack.c.l.b16 %v7507
        %v7789 = vunpack.c.l.b16 %v7508
        %v7790 = vpack.c.b16 %v7759, %v7758
        %v7791 = vpack.c.b16 %v7761, %v7760
        %v7792 = vpack.c.b16 %v7763, %v7762
        %v7793 = vpack.c.b16 %v7765, %v7764
        %v7794 = vpack.c.b16 %v7767, %v7766
        %v7795 = vpack.c.b16 %v7769, %v7768
        %v7796 = vpack.c.b16 %v7771, %v7770
        %v7797 = vpack.c.b16 %v7773, %v7772
        %v7798 = vpack.c.b16 %v7775, %v7774
        %v7799 = vpack.c.b16 %v7777, %v7776
        %v7800 = vpack.c.b16 %v7779, %v7778
        %v7801 = vpack.c.b16 %v7781, %v7780
        %v7802 = vpack.c.b16 %v7783, %v7782
        %v7803 = vpack.c.b16 %v7785, %v7784
        %v7804 = vpack.c.b16 %v7787, %v7786
        %v7805 = vpack.c.b16 %v7789, %v7788
        %v7822 = vunpack.c.l.b16 %v6279
        %v7823 = vunpack.c.l.b16 %v6285
        %v7824 = vunpack.c.l.b16 %v6291
        %v7825 = vunpack.c.l.b16 %v6297
        %v7826 = vunpack.c.l.b16 %v6303
        %v7827 = vunpack.c.l.b16 %v6309
        %v7828 = vunpack.c.l.b16 %v6315
        %v7829 = vunpack.c.l.b16 %v6321
        %v7830 = vunpack.c.l.b16 %v6327
        %v7831 = vunpack.c.l.b16 %v6333
        %v7832 = vunpack.c.l.b16 %v6339
        %v7833 = vunpack.c.l.b16 %v6345
        %v7834 = vunpack.c.l.b16 %v6351
        %v7835 = vunpack.c.l.b16 %v6357
        %v7836 = vunpack.c.l.b16 %v6363
        %v7837 = vunpack.c.l.b16 %v6369
        %v7838 = vpack.c.b16 %v7823, %v7822
        %v7839 = vpack.c.b16 %v7825, %v7824
        %v7840 = vpack.c.b16 %v7827, %v7826
        %v7841 = vpack.c.b16 %v7829, %v7828
        %v7842 = vpack.c.b16 %v7831, %v7830
        %v7843 = vpack.c.b16 %v7833, %v7832
        %v7844 = vpack.c.b16 %v7835, %v7834
        %v7845 = vpack.c.b16 %v7837, %v7836
        %7854 = vmatpush.bf16.msra.mxu0 %v7845
        %7855 = vmatpush.bf16.msra.mxu0 %v7844
        %7856 = vmatpush.bf16.msra.mxu0 %v7843
        %7857 = vmatpush.bf16.msra.mxu0 %v7842
        %7858 = vmatpush.bf16.msra.mxu0 %v7841
        %7859 = vmatpush.bf16.msra.mxu0 %v7840
        %7860 = vmatpush.bf16.msra.mxu0 %v7839
        %7861 = vmatpush.bf16.msra.mxu0 %v7838
        %7862 = vmatmul.bf16.gmra.mxu0 %v7790
        %v7863 = vpop.f32.mrf.mxu0
        %v7864 = vadd.f32 0.0, %v7863
        %v7865 = vpop.f32.mrf.mxu0
        %v7866 = vadd.f32 0.0, %v7865
        %7867 = vmatmul.bf16.gmra.mxu0 %v7791
        %v7868 = vpop.f32.mrf.mxu0
        %v7869 = vadd.f32 0.0, %v7868
        %v7870 = vpop.f32.mrf.mxu0
        %v7871 = vadd.f32 0.0, %v7870
        %7872 = vmatmul.bf16.gmra.mxu0 %v7792
        %v7873 = vpop.f32.mrf.mxu0
        %v7874 = vadd.f32 0.0, %v7873
        %v7875 = vpop.f32.mrf.mxu0
        %v7876 = vadd.f32 0.0, %v7875
        %7877 = vmatmul.bf16.gmra.mxu0 %v7793
        %v7878 = vpop.f32.mrf.mxu0
        %v7879 = vadd.f32 0.0, %v7878
        %v7880 = vpop.f32.mrf.mxu0
        %v7881 = vadd.f32 0.0, %v7880
        %7882 = vmatmul.bf16.gmra.mxu0 %v7794
        %v7883 = vpop.f32.mrf.mxu0
        %v7884 = vadd.f32 0.0, %v7883
        %v7885 = vpop.f32.mrf.mxu0
        %v7886 = vadd.f32 0.0, %v7885
        %7887 = vmatmul.bf16.gmra.mxu0 %v7795
        %v7888 = vpop.f32.mrf.mxu0
        %v7889 = vadd.f32 0.0, %v7888
        %v7890 = vpop.f32.mrf.mxu0
        %v7891 = vadd.f32 0.0, %v7890
        %7892 = vmatmul.bf16.gmra.mxu0 %v7796
        %v7893 = vpop.f32.mrf.mxu0
        %v7894 = vadd.f32 0.0, %v7893
        %v7895 = vpop.f32.mrf.mxu0
        %v7896 = vadd.f32 0.0, %v7895
        %7897 = vmatmul.bf16.gmra.mxu0 %v7797
        %v7898 = vpop.f32.mrf.mxu0
        %v7899 = vadd.f32 0.0, %v7898
        %v7900 = vpop.f32.mrf.mxu0
        %v7901 = vadd.f32 0.0, %v7900
        %7902 = vmatmul.bf16.gmra.mxu0 %v7798
        %v7903 = vpop.f32.mrf.mxu0
        %v7904 = vadd.f32 0.0, %v7903
        %v7905 = vpop.f32.mrf.mxu0
        %v7906 = vadd.f32 0.0, %v7905
        %7907 = vmatmul.bf16.gmra.mxu0 %v7799
        %v7908 = vpop.f32.mrf.mxu0
        %v7909 = vadd.f32 0.0, %v7908
        %v7910 = vpop.f32.mrf.mxu0
        %v7911 = vadd.f32 0.0, %v7910
        %7912 = vmatmul.bf16.gmra.mxu0 %v7800
        %v7913 = vpop.f32.mrf.mxu0
        %v7914 = vadd.f32 0.0, %v7913
        %v7915 = vpop.f32.mrf.mxu0
        %v7916 = vadd.f32 0.0, %v7915
        %7917 = vmatmul.bf16.gmra.mxu0 %v7801
        %v7918 = vpop.f32.mrf.mxu0
        %v7919 = vadd.f32 0.0, %v7918
        %v7920 = vpop.f32.mrf.mxu0
        %v7921 = vadd.f32 0.0, %v7920
        %7922 = vmatmul.bf16.gmra.mxu0 %v7802
        %v7923 = vpop.f32.mrf.mxu0
        %v7924 = vadd.f32 0.0, %v7923
        %v7925 = vpop.f32.mrf.mxu0
        %v7926 = vadd.f32 0.0, %v7925
        %7927 = vmatmul.bf16.gmra.mxu0 %v7803
        %v7928 = vpop.f32.mrf.mxu0
        %v7929 = vadd.f32 0.0, %v7928
        %v7930 = vpop.f32.mrf.mxu0
        %v7931 = vadd.f32 0.0, %v7930
        %7932 = vmatmul.bf16.gmra.mxu0 %v7804
        %v7933 = vpop.f32.mrf.mxu0
        %v7934 = vadd.f32 0.0, %v7933
        %v7935 = vpop.f32.mrf.mxu0
        %v7936 = vadd.f32 0.0, %v7935
        %7937 = vmatmul.bf16.gmra.mxu0 %v7805
        %v7938 = vpop.f32.mrf.mxu0
        %v7939 = vadd.f32 0.0, %v7938
        %v7940 = vpop.f32.mrf.mxu0
        %v7941 = vadd.f32 0.0, %v7940
        %7942 = vdwg.mxu0
        %v7943 = vpack.c.bf16 %v7647, %v7647
        %v7944 = vpack.c.bf16 %v7649, %v7649
        %v7945 = vpack.c.bf16 %v7652, %v7652
        %v7946 = vpack.c.bf16 %v7654, %v7654
        %v7947 = vpack.c.bf16 %v7657, %v7657
        %v7948 = vpack.c.bf16 %v7659, %v7659
        %v7949 = vpack.c.bf16 %v7662, %v7662
        %v7950 = vpack.c.bf16 %v7664, %v7664
        %v7951 = vpack.c.bf16 %v7667, %v7667
        %v7952 = vpack.c.bf16 %v7669, %v7669
        %v7953 = vpack.c.bf16 %v7672, %v7672
        %v7954 = vpack.c.bf16 %v7674, %v7674
        %v7955 = vpack.c.bf16 %v7677, %v7677
        %v7956 = vpack.c.bf16 %v7679, %v7679
        %v7957 = vpack.c.bf16 %v7682, %v7682
        %v7958 = vpack.c.bf16 %v7684, %v7684
        %v7959 = vpack.c.bf16 %v7687, %v7687
        %v7960 = vpack.c.bf16 %v7689, %v7689
        %v7961 = vpack.c.bf16 %v7692, %v7692
        %v7962 = vpack.c.bf16 %v7694, %v7694
        %v7963 = vpack.c.bf16 %v7697, %v7697
        %v7964 = vpack.c.bf16 %v7699, %v7699
        %v7965 = vpack.c.bf16 %v7702, %v7702
        %v7966 = vpack.c.bf16 %v7704, %v7704
        %v7967 = vpack.c.bf16 %v7707, %v7707
        %v7968 = vpack.c.bf16 %v7709, %v7709
        %v7969 = vpack.c.bf16 %v7712, %v7712
        %v7970 = vpack.c.bf16 %v7714, %v7714
        %v7971 = vpack.c.bf16 %v7717, %v7717
        %v7972 = vpack.c.bf16 %v7719, %v7719
        %v7973 = vpack.c.bf16 %v7722, %v7722
        %v7974 = vpack.c.bf16 %v7724, %v7724
        %v7975 = vpack.c.bf16 %v7864, %v7864
        %v7976 = vpack.c.bf16 %v7866, %v7866
        %v7977 = vpack.c.bf16 %v7869, %v7869
        %v7978 = vpack.c.bf16 %v7871, %v7871
        %v7979 = vpack.c.bf16 %v7874, %v7874
        %v7980 = vpack.c.bf16 %v7876, %v7876
        %v7981 = vpack.c.bf16 %v7879, %v7879
        %v7982 = vpack.c.bf16 %v7881, %v7881
        %v7983 = vpack.c.bf16 %v7884, %v7884
        %v7984 = vpack.c.bf16 %v7886, %v7886
        %v7985 = vpack.c.bf16 %v7889, %v7889
        %v7986 = vpack.c.bf16 %v7891, %v7891
        %v7987 = vpack.c.bf16 %v7894, %v7894
        %v7988 = vpack.c.bf16 %v7896, %v7896
        %v7989 = vpack.c.bf16 %v7899, %v7899
        %v7990 = vpack.c.bf16 %v7901, %v7901
        %v7991 = vpack.c.bf16 %v7904, %v7904
        %v7992 = vpack.c.bf16 %v7906, %v7906
        %v7993 = vpack.c.bf16 %v7909, %v7909
        %v7994 = vpack.c.bf16 %v7911, %v7911
        %v7995 = vpack.c.bf16 %v7914, %v7914
        %v7996 = vpack.c.bf16 %v7916, %v7916
        %v7997 = vpack.c.bf16 %v7919, %v7919
        %v7998 = vpack.c.bf16 %v7921, %v7921
        %v7999 = vpack.c.bf16 %v7924, %v7924
        %v8000 = vpack.c.bf16 %v7926, %v7926
        %v8001 = vpack.c.bf16 %v7929, %v7929
        %v8002 = vpack.c.bf16 %v7931, %v7931
        %v8003 = vpack.c.bf16 %v7934, %v7934
        %v8004 = vpack.c.bf16 %v7936, %v7936
        %v8005 = vpack.c.bf16 %v7939, %v7939
        %v8006 = vpack.c.bf16 %v7941, %v7941
        %v8009 = vpack.i.b16 %v7959, %v7943
        %v8010 = vshrl.u32 %v7943, 16
        %v8011 = vshrl.u32 %v7959, 16
        %v8012 = vpack.i.b16 %v8011, %v8010
        %v8015 = vpack.i.b16 %v7991, %v7975
        %v8016 = vshrl.u32 %v7975, 16
        %v8017 = vshrl.u32 %v7991, 16
        %v8018 = vpack.i.b16 %v8017, %v8016
        %v8021 = vpack.i.b16 %v7960, %v7944
        %v8022 = vshrl.u32 %v7944, 16
        %v8023 = vshrl.u32 %v7960, 16
        %v8024 = vpack.i.b16 %v8023, %v8022
        %v8027 = vpack.i.b16 %v7992, %v7976
        %v8028 = vshrl.u32 %v7976, 16
        %v8029 = vshrl.u32 %v7992, 16
        %v8030 = vpack.i.b16 %v8029, %v8028
        %v8033 = vpack.i.b16 %v7961, %v7945
        %v8034 = vshrl.u32 %v7945, 16
        %v8035 = vshrl.u32 %v7961, 16
        %v8036 = vpack.i.b16 %v8035, %v8034
        %v8039 = vpack.i.b16 %v7993, %v7977
        %v8040 = vshrl.u32 %v7977, 16
        %v8041 = vshrl.u32 %v7993, 16
        %v8042 = vpack.i.b16 %v8041, %v8040
        %v8045 = vpack.i.b16 %v7962, %v7946
        %v8046 = vshrl.u32 %v7946, 16
        %v8047 = vshrl.u32 %v7962, 16
        %v8048 = vpack.i.b16 %v8047, %v8046
        %v8051 = vpack.i.b16 %v7994, %v7978
        %v8052 = vshrl.u32 %v7978, 16
        %v8053 = vshrl.u32 %v7994, 16
        %v8054 = vpack.i.b16 %v8053, %v8052
        %v8057 = vpack.i.b16 %v7963, %v7947
        %v8058 = vshrl.u32 %v7947, 16
        %v8059 = vshrl.u32 %v7963, 16
        %v8060 = vpack.i.b16 %v8059, %v8058
        %v8063 = vpack.i.b16 %v7995, %v7979
        %v8064 = vshrl.u32 %v7979, 16
        %v8065 = vshrl.u32 %v7995, 16
        %v8066 = vpack.i.b16 %v8065, %v8064
        %v8069 = vpack.i.b16 %v7964, %v7948
        %v8070 = vshrl.u32 %v7948, 16
        %v8071 = vshrl.u32 %v7964, 16
        %v8072 = vpack.i.b16 %v8071, %v8070
        %v8075 = vpack.i.b16 %v7996, %v7980
        %v8076 = vshrl.u32 %v7980, 16
        %v8077 = vshrl.u32 %v7996, 16
        %v8078 = vpack.i.b16 %v8077, %v8076
        %v8081 = vpack.i.b16 %v7965, %v7949
        %v8082 = vshrl.u32 %v7949, 16
        %v8083 = vshrl.u32 %v7965, 16
        %v8084 = vpack.i.b16 %v8083, %v8082
        %v8087 = vpack.i.b16 %v7997, %v7981
        %v8088 = vshrl.u32 %v7981, 16
        %v8089 = vshrl.u32 %v7997, 16
        %v8090 = vpack.i.b16 %v8089, %v8088
        %v8093 = vpack.i.b16 %v7966, %v7950
        %v8094 = vshrl.u32 %v7950, 16
        %v8095 = vshrl.u32 %v7966, 16
        %v8096 = vpack.i.b16 %v8095, %v8094
        %v8099 = vpack.i.b16 %v7998, %v7982
        %v8100 = vshrl.u32 %v7982, 16
        %v8101 = vshrl.u32 %v7998, 16
        %v8102 = vpack.i.b16 %v8101, %v8100
        %v8105 = vpack.i.b16 %v7967, %v7951
        %v8106 = vshrl.u32 %v7951, 16
        %v8107 = vshrl.u32 %v7967, 16
        %v8108 = vpack.i.b16 %v8107, %v8106
        %v8111 = vpack.i.b16 %v7999, %v7983
        %v8112 = vshrl.u32 %v7983, 16
        %v8113 = vshrl.u32 %v7999, 16
        %v8114 = vpack.i.b16 %v8113, %v8112
        %v8117 = vpack.i.b16 %v7968, %v7952
        %v8118 = vshrl.u32 %v7952, 16
        %v8119 = vshrl.u32 %v7968, 16
        %v8120 = vpack.i.b16 %v8119, %v8118
        %v8123 = vpack.i.b16 %v8000, %v7984
        %v8124 = vshrl.u32 %v7984, 16
        %v8125 = vshrl.u32 %v8000, 16
        %v8126 = vpack.i.b16 %v8125, %v8124
        %v8129 = vpack.i.b16 %v7969, %v7953
        %v8130 = vshrl.u32 %v7953, 16
        %v8131 = vshrl.u32 %v7969, 16
        %v8132 = vpack.i.b16 %v8131, %v8130
        %v8135 = vpack.i.b16 %v8001, %v7985
        %v8136 = vshrl.u32 %v7985, 16
        %v8137 = vshrl.u32 %v8001, 16
        %v8138 = vpack.i.b16 %v8137, %v8136
        %v8141 = vpack.i.b16 %v7970, %v7954
        %v8142 = vshrl.u32 %v7954, 16
        %v8143 = vshrl.u32 %v7970, 16
        %v8144 = vpack.i.b16 %v8143, %v8142
        %v8147 = vpack.i.b16 %v8002, %v7986
        %v8148 = vshrl.u32 %v7986, 16
        %v8149 = vshrl.u32 %v8002, 16
        %v8150 = vpack.i.b16 %v8149, %v8148
        %v8153 = vpack.i.b16 %v7971, %v7955
        %v8154 = vshrl.u32 %v7955, 16
        %v8155 = vshrl.u32 %v7971, 16
        %v8156 = vpack.i.b16 %v8155, %v8154
        %v8159 = vpack.i.b16 %v8003, %v7987
        %v8160 = vshrl.u32 %v7987, 16
        %v8161 = vshrl.u32 %v8003, 16
        %v8162 = vpack.i.b16 %v8161, %v8160
        %v8165 = vpack.i.b16 %v7972, %v7956
        %v8166 = vshrl.u32 %v7956, 16
        %v8167 = vshrl.u32 %v7972, 16
        %v8168 = vpack.i.b16 %v8167, %v8166
        %v8171 = vpack.i.b16 %v8004, %v7988
        %v8172 = vshrl.u32 %v7988, 16
        %v8173 = vshrl.u32 %v8004, 16
        %v8174 = vpack.i.b16 %v8173, %v8172
        %v8177 = vpack.i.b16 %v7973, %v7957
        %v8178 = vshrl.u32 %v7957, 16
        %v8179 = vshrl.u32 %v7973, 16
        %v8180 = vpack.i.b16 %v8179, %v8178
        %v8183 = vpack.i.b16 %v8005, %v7989
        %v8184 = vshrl.u32 %v7989, 16
        %v8185 = vshrl.u32 %v8005, 16
        %v8186 = vpack.i.b16 %v8185, %v8184
        %v8189 = vpack.i.b16 %v7974, %v7958
        %v8190 = vshrl.u32 %v7958, 16
        %v8191 = vshrl.u32 %v7974, 16
        %v8192 = vpack.i.b16 %v8191, %v8190
        %v8195 = vpack.i.b16 %v8006, %v7990
        %v8196 = vshrl.u32 %v7990, 16
        %v8197 = vshrl.u32 %v8006, 16
        %v8198 = vpack.i.b16 %v8197, %v8196
        %v8201 = vunpack.c.l.s4 1983009808
        %v8202 = vunpack.c.0.s8 %v8201
        %v8203 = vperm.slane %v8009, %v8202
        %v8206 = vunpack.c.l.s4 1983009808
        %v8207 = vunpack.c.0.s8 %v8206
        %v8208 = vperm.slane %v8015, %v8207
        %v8209 = vrot.slane %v8208, 4
        %v8210 = vsel %vm1900, %v8209, %v8203
        %v8211 = vrot.slane %v8203, 4
        %v8212 = vsel %vm1900, %v8208, %v8211
        %v8214 = vunpack.c.l.s4 1934713408
        %v8215 = vunpack.c.0.s8 %v8214
        %v8216 = vperm.slane %v8210, %v8215
        %v8218 = vunpack.c.l.s4 1934713408
        %v8219 = vunpack.c.0.s8 %v8218
        %v8220 = vperm.slane %v8212, %v8219
        %v8221 = vrot.slane %v8216, 4
        %v8222 = vsel %vm1900, 0, %v8221
        %v8223 = vrot.slane %v8220, 4
        %v8224 = vsel %vm1900, 0, %v8223
        %v8227 = vunpack.c.l.s4 1983009808
        %v8228 = vunpack.c.0.s8 %v8227
        %v8229 = vperm.slane %v8012, %v8228
        %v8232 = vunpack.c.l.s4 1983009808
        %v8233 = vunpack.c.0.s8 %v8232
        %v8234 = vperm.slane %v8018, %v8233
        %v8235 = vrot.slane %v8234, 4
        %v8236 = vsel %vm1900, %v8235, %v8229
        %v8237 = vrot.slane %v8229, 4
        %v8238 = vsel %vm1900, %v8234, %v8237
        %v8240 = vunpack.c.l.s4 1934713408
        %v8241 = vunpack.c.0.s8 %v8240
        %v8242 = vperm.slane %v8236, %v8241
        %v8244 = vunpack.c.l.s4 1934713408
        %v8245 = vunpack.c.0.s8 %v8244
        %v8246 = vperm.slane %v8238, %v8245
        %v8247 = vrot.slane %v8242, 4
        %v8248 = vsel %vm1900, 0, %v8247
        %v8249 = vrot.slane %v8246, 4
        %v8250 = vsel %vm1900, 0, %v8249
        %v8253 = vunpack.c.l.s4 1983009808
        %v8254 = vunpack.c.0.s8 %v8253
        %v8255 = vperm.slane %v8021, %v8254
        %v8258 = vunpack.c.l.s4 1983009808
        %v8259 = vunpack.c.0.s8 %v8258
        %v8260 = vperm.slane %v8027, %v8259
        %v8261 = vrot.slane %v8260, 4
        %v8262 = vsel %vm1900, %v8261, %v8255
        %v8263 = vrot.slane %v8255, 4
        %v8264 = vsel %vm1900, %v8260, %v8263
        %v8266 = vunpack.c.l.s4 1934713408
        %v8267 = vunpack.c.0.s8 %v8266
        %v8268 = vperm.slane %v8262, %v8267
        %v8270 = vunpack.c.l.s4 1934713408
        %v8271 = vunpack.c.0.s8 %v8270
        %v8272 = vperm.slane %v8264, %v8271
        %v8273 = vrot.slane %v8268, 4
        %v8274 = vsel %vm1900, 0, %v8273
        %v8275 = vrot.slane %v8272, 4
        %v8276 = vsel %vm1900, 0, %v8275
        %v8279 = vunpack.c.l.s4 1983009808
        %v8280 = vunpack.c.0.s8 %v8279
        %v8281 = vperm.slane %v8024, %v8280
        %v8284 = vunpack.c.l.s4 1983009808
        %v8285 = vunpack.c.0.s8 %v8284
        %v8286 = vperm.slane %v8030, %v8285
        %v8287 = vrot.slane %v8286, 4
        %v8288 = vsel %vm1900, %v8287, %v8281
        %v8289 = vrot.slane %v8281, 4
        %v8290 = vsel %vm1900, %v8286, %v8289
        %v8292 = vunpack.c.l.s4 1934713408
        %v8293 = vunpack.c.0.s8 %v8292
        %v8294 = vperm.slane %v8288, %v8293
        %v8296 = vunpack.c.l.s4 1934713408
        %v8297 = vunpack.c.0.s8 %v8296
        %v8298 = vperm.slane %v8290, %v8297
        %v8299 = vrot.slane %v8294, 4
        %v8300 = vsel %vm1900, 0, %v8299
        %v8301 = vrot.slane %v8298, 4
        %v8302 = vsel %vm1900, 0, %v8301
        %v8305 = vunpack.c.l.s4 1983009808
        %v8306 = vunpack.c.0.s8 %v8305
        %v8307 = vperm.slane %v8033, %v8306
        %v8310 = vunpack.c.l.s4 1983009808
        %v8311 = vunpack.c.0.s8 %v8310
        %v8312 = vperm.slane %v8039, %v8311
        %v8313 = vrot.slane %v8312, 4
        %v8314 = vsel %vm1900, %v8313, %v8307
        %v8315 = vrot.slane %v8307, 4
        %v8316 = vsel %vm1900, %v8312, %v8315
        %v8318 = vunpack.c.l.s4 1934713408
        %v8319 = vunpack.c.0.s8 %v8318
        %v8320 = vperm.slane %v8314, %v8319
        %v8322 = vunpack.c.l.s4 1934713408
        %v8323 = vunpack.c.0.s8 %v8322
        %v8324 = vperm.slane %v8316, %v8323
        %v8325 = vrot.slane %v8320, 4
        %v8326 = vsel %vm1900, 0, %v8325
        %v8327 = vrot.slane %v8324, 4
        %v8328 = vsel %vm1900, 0, %v8327
        %v8331 = vunpack.c.l.s4 1983009808
        %v8332 = vunpack.c.0.s8 %v8331
        %v8333 = vperm.slane %v8036, %v8332
        %v8336 = vunpack.c.l.s4 1983009808
        %v8337 = vunpack.c.0.s8 %v8336
        %v8338 = vperm.slane %v8042, %v8337
        %v8339 = vrot.slane %v8338, 4
        %v8340 = vsel %vm1900, %v8339, %v8333
        %v8341 = vrot.slane %v8333, 4
        %v8342 = vsel %vm1900, %v8338, %v8341
        %v8344 = vunpack.c.l.s4 1934713408
        %v8345 = vunpack.c.0.s8 %v8344
        %v8346 = vperm.slane %v8340, %v8345
        %v8348 = vunpack.c.l.s4 1934713408
        %v8349 = vunpack.c.0.s8 %v8348
        %v8350 = vperm.slane %v8342, %v8349
        %v8351 = vrot.slane %v8346, 4
        %v8352 = vsel %vm1900, 0, %v8351
        %v8353 = vrot.slane %v8350, 4
        %v8354 = vsel %vm1900, 0, %v8353
        %v8357 = vunpack.c.l.s4 1983009808
        %v8358 = vunpack.c.0.s8 %v8357
        %v8359 = vperm.slane %v8045, %v8358
        %v8362 = vunpack.c.l.s4 1983009808
        %v8363 = vunpack.c.0.s8 %v8362
        %v8364 = vperm.slane %v8051, %v8363
        %v8365 = vrot.slane %v8364, 4
        %v8366 = vsel %vm1900, %v8365, %v8359
        %v8367 = vrot.slane %v8359, 4
        %v8368 = vsel %vm1900, %v8364, %v8367
        %v8370 = vunpack.c.l.s4 1934713408
        %v8371 = vunpack.c.0.s8 %v8370
        %v8372 = vperm.slane %v8366, %v8371
        %v8374 = vunpack.c.l.s4 1934713408
        %v8375 = vunpack.c.0.s8 %v8374
        %v8376 = vperm.slane %v8368, %v8375
        %v8377 = vrot.slane %v8372, 4
        %v8378 = vsel %vm1900, 0, %v8377
        %v8379 = vrot.slane %v8376, 4
        %v8380 = vsel %vm1900, 0, %v8379
        %v8383 = vunpack.c.l.s4 1983009808
        %v8384 = vunpack.c.0.s8 %v8383
        %v8385 = vperm.slane %v8048, %v8384
        %v8388 = vunpack.c.l.s4 1983009808
        %v8389 = vunpack.c.0.s8 %v8388
        %v8390 = vperm.slane %v8054, %v8389
        %v8391 = vrot.slane %v8390, 4
        %v8392 = vsel %vm1900, %v8391, %v8385
        %v8393 = vrot.slane %v8385, 4
        %v8394 = vsel %vm1900, %v8390, %v8393
        %v8396 = vunpack.c.l.s4 1934713408
        %v8397 = vunpack.c.0.s8 %v8396
        %v8398 = vperm.slane %v8392, %v8397
        %v8400 = vunpack.c.l.s4 1934713408
        %v8401 = vunpack.c.0.s8 %v8400
        %v8402 = vperm.slane %v8394, %v8401
        %v8403 = vrot.slane %v8398, 4
        %v8404 = vsel %vm1900, 0, %v8403
        %v8405 = vrot.slane %v8402, 4
        %v8406 = vsel %vm1900, 0, %v8405
        %v8409 = vunpack.c.l.s4 1983009808
        %v8410 = vunpack.c.0.s8 %v8409
        %v8411 = vperm.slane %v8057, %v8410
        %v8414 = vunpack.c.l.s4 1983009808
        %v8415 = vunpack.c.0.s8 %v8414
        %v8416 = vperm.slane %v8063, %v8415
        %v8417 = vrot.slane %v8416, 4
        %v8418 = vsel %vm1900, %v8417, %v8411
        %v8419 = vrot.slane %v8411, 4
        %v8420 = vsel %vm1900, %v8416, %v8419
        %v8422 = vunpack.c.l.s4 1934713408
        %v8423 = vunpack.c.0.s8 %v8422
        %v8424 = vperm.slane %v8418, %v8423
        %v8426 = vunpack.c.l.s4 1934713408
        %v8427 = vunpack.c.0.s8 %v8426
        %v8428 = vperm.slane %v8420, %v8427
        %v8429 = vrot.slane %v8424, 4
        %v8430 = vsel %vm1900, 0, %v8429
        %v8431 = vrot.slane %v8428, 4
        %v8432 = vsel %vm1900, 0, %v8431
        %v8435 = vunpack.c.l.s4 1983009808
        %v8436 = vunpack.c.0.s8 %v8435
        %v8437 = vperm.slane %v8060, %v8436
        %v8440 = vunpack.c.l.s4 1983009808
        %v8441 = vunpack.c.0.s8 %v8440
        %v8442 = vperm.slane %v8066, %v8441
        %v8443 = vrot.slane %v8442, 4
        %v8444 = vsel %vm1900, %v8443, %v8437
        %v8445 = vrot.slane %v8437, 4
        %v8446 = vsel %vm1900, %v8442, %v8445
        %v8448 = vunpack.c.l.s4 1934713408
        %v8449 = vunpack.c.0.s8 %v8448
        %v8450 = vperm.slane %v8444, %v8449
        %v8452 = vunpack.c.l.s4 1934713408
        %v8453 = vunpack.c.0.s8 %v8452
        %v8454 = vperm.slane %v8446, %v8453
        %v8455 = vrot.slane %v8450, 4
        %v8456 = vsel %vm1900, 0, %v8455
        %v8457 = vrot.slane %v8454, 4
        %v8458 = vsel %vm1900, 0, %v8457
        %v8461 = vunpack.c.l.s4 1983009808
        %v8462 = vunpack.c.0.s8 %v8461
        %v8463 = vperm.slane %v8069, %v8462
        %v8466 = vunpack.c.l.s4 1983009808
        %v8467 = vunpack.c.0.s8 %v8466
        %v8468 = vperm.slane %v8075, %v8467
        %v8469 = vrot.slane %v8468, 4
        %v8470 = vsel %vm1900, %v8469, %v8463
        %v8471 = vrot.slane %v8463, 4
        %v8472 = vsel %vm1900, %v8468, %v8471
        %v8474 = vunpack.c.l.s4 1934713408
        %v8475 = vunpack.c.0.s8 %v8474
        %v8476 = vperm.slane %v8470, %v8475
        %v8478 = vunpack.c.l.s4 1934713408
        %v8479 = vunpack.c.0.s8 %v8478
        %v8480 = vperm.slane %v8472, %v8479
        %v8481 = vrot.slane %v8476, 4
        %v8482 = vsel %vm1900, 0, %v8481
        %v8483 = vrot.slane %v8480, 4
        %v8484 = vsel %vm1900, 0, %v8483
        %v8487 = vunpack.c.l.s4 1983009808
        %v8488 = vunpack.c.0.s8 %v8487
        %v8489 = vperm.slane %v8072, %v8488
        %v8492 = vunpack.c.l.s4 1983009808
        %v8493 = vunpack.c.0.s8 %v8492
        %v8494 = vperm.slane %v8078, %v8493
        %v8495 = vrot.slane %v8494, 4
        %v8496 = vsel %vm1900, %v8495, %v8489
        %v8497 = vrot.slane %v8489, 4
        %v8498 = vsel %vm1900, %v8494, %v8497
        %v8500 = vunpack.c.l.s4 1934713408
        %v8501 = vunpack.c.0.s8 %v8500
        %v8502 = vperm.slane %v8496, %v8501
        %v8504 = vunpack.c.l.s4 1934713408
        %v8505 = vunpack.c.0.s8 %v8504
        %v8506 = vperm.slane %v8498, %v8505
        %v8507 = vrot.slane %v8502, 4
        %v8508 = vsel %vm1900, 0, %v8507
        %v8509 = vrot.slane %v8506, 4
        %v8510 = vsel %vm1900, 0, %v8509
        %v8513 = vunpack.c.l.s4 1983009808
        %v8514 = vunpack.c.0.s8 %v8513
        %v8515 = vperm.slane %v8081, %v8514
        %v8518 = vunpack.c.l.s4 1983009808
        %v8519 = vunpack.c.0.s8 %v8518
        %v8520 = vperm.slane %v8087, %v8519
        %v8521 = vrot.slane %v8520, 4
        %v8522 = vsel %vm1900, %v8521, %v8515
        %v8523 = vrot.slane %v8515, 4
        %v8524 = vsel %vm1900, %v8520, %v8523
        %v8526 = vunpack.c.l.s4 1934713408
        %v8527 = vunpack.c.0.s8 %v8526
        %v8528 = vperm.slane %v8522, %v8527
        %v8530 = vunpack.c.l.s4 1934713408
        %v8531 = vunpack.c.0.s8 %v8530
        %v8532 = vperm.slane %v8524, %v8531
        %v8533 = vrot.slane %v8528, 4
        %v8534 = vsel %vm1900, 0, %v8533
        %v8535 = vrot.slane %v8532, 4
        %v8536 = vsel %vm1900, 0, %v8535
        %v8539 = vunpack.c.l.s4 1983009808
        %v8540 = vunpack.c.0.s8 %v8539
        %v8541 = vperm.slane %v8084, %v8540
        %v8544 = vunpack.c.l.s4 1983009808
        %v8545 = vunpack.c.0.s8 %v8544
        %v8546 = vperm.slane %v8090, %v8545
        %v8547 = vrot.slane %v8546, 4
        %v8548 = vsel %vm1900, %v8547, %v8541
        %v8549 = vrot.slane %v8541, 4
        %v8550 = vsel %vm1900, %v8546, %v8549
        %v8552 = vunpack.c.l.s4 1934713408
        %v8553 = vunpack.c.0.s8 %v8552
        %v8554 = vperm.slane %v8548, %v8553
        %v8556 = vunpack.c.l.s4 1934713408
        %v8557 = vunpack.c.0.s8 %v8556
        %v8558 = vperm.slane %v8550, %v8557
        %v8559 = vrot.slane %v8554, 4
        %v8560 = vsel %vm1900, 0, %v8559
        %v8561 = vrot.slane %v8558, 4
        %v8562 = vsel %vm1900, 0, %v8561
        %v8565 = vunpack.c.l.s4 1983009808
        %v8566 = vunpack.c.0.s8 %v8565
        %v8567 = vperm.slane %v8093, %v8566
        %v8570 = vunpack.c.l.s4 1983009808
        %v8571 = vunpack.c.0.s8 %v8570
        %v8572 = vperm.slane %v8099, %v8571
        %v8573 = vrot.slane %v8572, 4
        %v8574 = vsel %vm1900, %v8573, %v8567
        %v8575 = vrot.slane %v8567, 4
        %v8576 = vsel %vm1900, %v8572, %v8575
        %v8578 = vunpack.c.l.s4 1934713408
        %v8579 = vunpack.c.0.s8 %v8578
        %v8580 = vperm.slane %v8574, %v8579
        %v8582 = vunpack.c.l.s4 1934713408
        %v8583 = vunpack.c.0.s8 %v8582
        %v8584 = vperm.slane %v8576, %v8583
        %v8585 = vrot.slane %v8580, 4
        %v8586 = vsel %vm1900, 0, %v8585
        %v8587 = vrot.slane %v8584, 4
        %v8588 = vsel %vm1900, 0, %v8587
        %v8591 = vunpack.c.l.s4 1983009808
        %v8592 = vunpack.c.0.s8 %v8591
        %v8593 = vperm.slane %v8096, %v8592
        %v8596 = vunpack.c.l.s4 1983009808
        %v8597 = vunpack.c.0.s8 %v8596
        %v8598 = vperm.slane %v8102, %v8597
        %v8599 = vrot.slane %v8598, 4
        %v8600 = vsel %vm1900, %v8599, %v8593
        %v8601 = vrot.slane %v8593, 4
        %v8602 = vsel %vm1900, %v8598, %v8601
        %v8604 = vunpack.c.l.s4 1934713408
        %v8605 = vunpack.c.0.s8 %v8604
        %v8606 = vperm.slane %v8600, %v8605
        %v8608 = vunpack.c.l.s4 1934713408
        %v8609 = vunpack.c.0.s8 %v8608
        %v8610 = vperm.slane %v8602, %v8609
        %v8611 = vrot.slane %v8606, 4
        %v8612 = vsel %vm1900, 0, %v8611
        %v8613 = vrot.slane %v8610, 4
        %v8614 = vsel %vm1900, 0, %v8613
        %v8617 = vunpack.c.l.s4 1983009808
        %v8618 = vunpack.c.0.s8 %v8617
        %v8619 = vperm.slane %v8105, %v8618
        %v8622 = vunpack.c.l.s4 1983009808
        %v8623 = vunpack.c.0.s8 %v8622
        %v8624 = vperm.slane %v8111, %v8623
        %v8625 = vrot.slane %v8624, 4
        %v8626 = vsel %vm1900, %v8625, %v8619
        %v8627 = vrot.slane %v8619, 4
        %v8628 = vsel %vm1900, %v8624, %v8627
        %v8630 = vunpack.c.l.s4 1934713408
        %v8631 = vunpack.c.0.s8 %v8630
        %v8632 = vperm.slane %v8626, %v8631
        %v8634 = vunpack.c.l.s4 1934713408
        %v8635 = vunpack.c.0.s8 %v8634
        %v8636 = vperm.slane %v8628, %v8635
        %v8637 = vrot.slane %v8632, 4
        %v8638 = vsel %vm1900, 0, %v8637
        %v8639 = vrot.slane %v8636, 4
        %v8640 = vsel %vm1900, 0, %v8639
        %v8643 = vunpack.c.l.s4 1983009808
        %v8644 = vunpack.c.0.s8 %v8643
        %v8645 = vperm.slane %v8108, %v8644
        %v8648 = vunpack.c.l.s4 1983009808
        %v8649 = vunpack.c.0.s8 %v8648
        %v8650 = vperm.slane %v8114, %v8649
        %v8651 = vrot.slane %v8650, 4
        %v8652 = vsel %vm1900, %v8651, %v8645
        %v8653 = vrot.slane %v8645, 4
        %v8654 = vsel %vm1900, %v8650, %v8653
        %v8656 = vunpack.c.l.s4 1934713408
        %v8657 = vunpack.c.0.s8 %v8656
        %v8658 = vperm.slane %v8652, %v8657
        %v8660 = vunpack.c.l.s4 1934713408
        %v8661 = vunpack.c.0.s8 %v8660
        %v8662 = vperm.slane %v8654, %v8661
        %v8663 = vrot.slane %v8658, 4
        %v8664 = vsel %vm1900, 0, %v8663
        %v8665 = vrot.slane %v8662, 4
        %v8666 = vsel %vm1900, 0, %v8665
        %v8669 = vunpack.c.l.s4 1983009808
        %v8670 = vunpack.c.0.s8 %v8669
        %v8671 = vperm.slane %v8117, %v8670
        %v8674 = vunpack.c.l.s4 1983009808
        %v8675 = vunpack.c.0.s8 %v8674
        %v8676 = vperm.slane %v8123, %v8675
        %v8677 = vrot.slane %v8676, 4
        %v8678 = vsel %vm1900, %v8677, %v8671
        %v8679 = vrot.slane %v8671, 4
        %v8680 = vsel %vm1900, %v8676, %v8679
        %v8682 = vunpack.c.l.s4 1934713408
        %v8683 = vunpack.c.0.s8 %v8682
        %v8684 = vperm.slane %v8678, %v8683
        %v8686 = vunpack.c.l.s4 1934713408
        %v8687 = vunpack.c.0.s8 %v8686
        %v8688 = vperm.slane %v8680, %v8687
        %v8689 = vrot.slane %v8684, 4
        %v8690 = vsel %vm1900, 0, %v8689
        %v8691 = vrot.slane %v8688, 4
        %v8692 = vsel %vm1900, 0, %v8691
        %v8695 = vunpack.c.l.s4 1983009808
        %v8696 = vunpack.c.0.s8 %v8695
        %v8697 = vperm.slane %v8120, %v8696
        %v8700 = vunpack.c.l.s4 1983009808
        %v8701 = vunpack.c.0.s8 %v8700
        %v8702 = vperm.slane %v8126, %v8701
        %v8703 = vrot.slane %v8702, 4
        %v8704 = vsel %vm1900, %v8703, %v8697
        %v8705 = vrot.slane %v8697, 4
        %v8706 = vsel %vm1900, %v8702, %v8705
        %v8708 = vunpack.c.l.s4 1934713408
        %v8709 = vunpack.c.0.s8 %v8708
        %v8710 = vperm.slane %v8704, %v8709
        %v8712 = vunpack.c.l.s4 1934713408
        %v8713 = vunpack.c.0.s8 %v8712
        %v8714 = vperm.slane %v8706, %v8713
        %v8715 = vrot.slane %v8710, 4
        %v8716 = vsel %vm1900, 0, %v8715
        %v8717 = vrot.slane %v8714, 4
        %v8718 = vsel %vm1900, 0, %v8717
        %v8721 = vunpack.c.l.s4 1983009808
        %v8722 = vunpack.c.0.s8 %v8721
        %v8723 = vperm.slane %v8129, %v8722
        %v8726 = vunpack.c.l.s4 1983009808
        %v8727 = vunpack.c.0.s8 %v8726
        %v8728 = vperm.slane %v8135, %v8727
        %v8729 = vrot.slane %v8728, 4
        %v8730 = vsel %vm1900, %v8729, %v8723
        %v8731 = vrot.slane %v8723, 4
        %v8732 = vsel %vm1900, %v8728, %v8731
        %v8734 = vunpack.c.l.s4 1934713408
        %v8735 = vunpack.c.0.s8 %v8734
        %v8736 = vperm.slane %v8730, %v8735
        %v8738 = vunpack.c.l.s4 1934713408
        %v8739 = vunpack.c.0.s8 %v8738
        %v8740 = vperm.slane %v8732, %v8739
        %v8741 = vrot.slane %v8736, 4
        %v8742 = vsel %vm1900, 0, %v8741
        %v8743 = vrot.slane %v8740, 4
        %v8744 = vsel %vm1900, 0, %v8743
        %v8747 = vunpack.c.l.s4 1983009808
        %v8748 = vunpack.c.0.s8 %v8747
        %v8749 = vperm.slane %v8132, %v8748
        %v8752 = vunpack.c.l.s4 1983009808
        %v8753 = vunpack.c.0.s8 %v8752
        %v8754 = vperm.slane %v8138, %v8753
        %v8755 = vrot.slane %v8754, 4
        %v8756 = vsel %vm1900, %v8755, %v8749
        %v8757 = vrot.slane %v8749, 4
        %v8758 = vsel %vm1900, %v8754, %v8757
        %v8760 = vunpack.c.l.s4 1934713408
        %v8761 = vunpack.c.0.s8 %v8760
        %v8762 = vperm.slane %v8756, %v8761
        %v8764 = vunpack.c.l.s4 1934713408
        %v8765 = vunpack.c.0.s8 %v8764
        %v8766 = vperm.slane %v8758, %v8765
        %v8767 = vrot.slane %v8762, 4
        %v8768 = vsel %vm1900, 0, %v8767
        %v8769 = vrot.slane %v8766, 4
        %v8770 = vsel %vm1900, 0, %v8769
        %v8773 = vunpack.c.l.s4 1983009808
        %v8774 = vunpack.c.0.s8 %v8773
        %v8775 = vperm.slane %v8141, %v8774
        %v8778 = vunpack.c.l.s4 1983009808
        %v8779 = vunpack.c.0.s8 %v8778
        %v8780 = vperm.slane %v8147, %v8779
        %v8781 = vrot.slane %v8780, 4
        %v8782 = vsel %vm1900, %v8781, %v8775
        %v8783 = vrot.slane %v8775, 4
        %v8784 = vsel %vm1900, %v8780, %v8783
        %v8786 = vunpack.c.l.s4 1934713408
        %v8787 = vunpack.c.0.s8 %v8786
        %v8788 = vperm.slane %v8782, %v8787
        %v8790 = vunpack.c.l.s4 1934713408
        %v8791 = vunpack.c.0.s8 %v8790
        %v8792 = vperm.slane %v8784, %v8791
        %v8793 = vrot.slane %v8788, 4
        %v8794 = vsel %vm1900, 0, %v8793
        %v8795 = vrot.slane %v8792, 4
        %v8796 = vsel %vm1900, 0, %v8795
        %v8799 = vunpack.c.l.s4 1983009808
        %v8800 = vunpack.c.0.s8 %v8799
        %v8801 = vperm.slane %v8144, %v8800
        %v8804 = vunpack.c.l.s4 1983009808
        %v8805 = vunpack.c.0.s8 %v8804
        %v8806 = vperm.slane %v8150, %v8805
        %v8807 = vrot.slane %v8806, 4
        %v8808 = vsel %vm1900, %v8807, %v8801
        %v8809 = vrot.slane %v8801, 4
        %v8810 = vsel %vm1900, %v8806, %v8809
        %v8812 = vunpack.c.l.s4 1934713408
        %v8813 = vunpack.c.0.s8 %v8812
        %v8814 = vperm.slane %v8808, %v8813
        %v8816 = vunpack.c.l.s4 1934713408
        %v8817 = vunpack.c.0.s8 %v8816
        %v8818 = vperm.slane %v8810, %v8817
        %v8819 = vrot.slane %v8814, 4
        %v8820 = vsel %vm1900, 0, %v8819
        %v8821 = vrot.slane %v8818, 4
        %v8822 = vsel %vm1900, 0, %v8821
        %v8825 = vunpack.c.l.s4 1983009808
        %v8826 = vunpack.c.0.s8 %v8825
        %v8827 = vperm.slane %v8153, %v8826
        %v8830 = vunpack.c.l.s4 1983009808
        %v8831 = vunpack.c.0.s8 %v8830
        %v8832 = vperm.slane %v8159, %v8831
        %v8833 = vrot.slane %v8832, 4
        %v8834 = vsel %vm1900, %v8833, %v8827
        %v8835 = vrot.slane %v8827, 4
        %v8836 = vsel %vm1900, %v8832, %v8835
        %v8838 = vunpack.c.l.s4 1934713408
        %v8839 = vunpack.c.0.s8 %v8838
        %v8840 = vperm.slane %v8834, %v8839
        %v8842 = vunpack.c.l.s4 1934713408
        %v8843 = vunpack.c.0.s8 %v8842
        %v8844 = vperm.slane %v8836, %v8843
        %v8845 = vrot.slane %v8840, 4
        %v8846 = vsel %vm1900, 0, %v8845
        %v8847 = vrot.slane %v8844, 4
        %v8848 = vsel %vm1900, 0, %v8847
        %v8851 = vunpack.c.l.s4 1983009808
        %v8852 = vunpack.c.0.s8 %v8851
        %v8853 = vperm.slane %v8156, %v8852
        %v8856 = vunpack.c.l.s4 1983009808
        %v8857 = vunpack.c.0.s8 %v8856
        %v8858 = vperm.slane %v8162, %v8857
        %v8859 = vrot.slane %v8858, 4
        %v8860 = vsel %vm1900, %v8859, %v8853
        %v8861 = vrot.slane %v8853, 4
        %v8862 = vsel %vm1900, %v8858, %v8861
        %v8864 = vunpack.c.l.s4 1934713408
        %v8865 = vunpack.c.0.s8 %v8864
        %v8866 = vperm.slane %v8860, %v8865
        %v8868 = vunpack.c.l.s4 1934713408
        %v8869 = vunpack.c.0.s8 %v8868
        %v8870 = vperm.slane %v8862, %v8869
        %v8871 = vrot.slane %v8866, 4
        %v8872 = vsel %vm1900, 0, %v8871
        %v8873 = vrot.slane %v8870, 4
        %v8874 = vsel %vm1900, 0, %v8873
        %v8877 = vunpack.c.l.s4 1983009808
        %v8878 = vunpack.c.0.s8 %v8877
        %v8879 = vperm.slane %v8165, %v8878
        %v8882 = vunpack.c.l.s4 1983009808
        %v8883 = vunpack.c.0.s8 %v8882
        %v8884 = vperm.slane %v8171, %v8883
        %v8885 = vrot.slane %v8884, 4
        %v8886 = vsel %vm1900, %v8885, %v8879
        %v8887 = vrot.slane %v8879, 4
        %v8888 = vsel %vm1900, %v8884, %v8887
        %v8890 = vunpack.c.l.s4 1934713408
        %v8891 = vunpack.c.0.s8 %v8890
        %v8892 = vperm.slane %v8886, %v8891
        %v8894 = vunpack.c.l.s4 1934713408
        %v8895 = vunpack.c.0.s8 %v8894
        %v8896 = vperm.slane %v8888, %v8895
        %v8897 = vrot.slane %v8892, 4
        %v8898 = vsel %vm1900, 0, %v8897
        %v8899 = vrot.slane %v8896, 4
        %v8900 = vsel %vm1900, 0, %v8899
        %v8903 = vunpack.c.l.s4 1983009808
        %v8904 = vunpack.c.0.s8 %v8903
        %v8905 = vperm.slane %v8168, %v8904
        %v8908 = vunpack.c.l.s4 1983009808
        %v8909 = vunpack.c.0.s8 %v8908
        %v8910 = vperm.slane %v8174, %v8909
        %v8911 = vrot.slane %v8910, 4
        %v8912 = vsel %vm1900, %v8911, %v8905
        %v8913 = vrot.slane %v8905, 4
        %v8914 = vsel %vm1900, %v8910, %v8913
        %v8916 = vunpack.c.l.s4 1934713408
        %v8917 = vunpack.c.0.s8 %v8916
        %v8918 = vperm.slane %v8912, %v8917
        %v8920 = vunpack.c.l.s4 1934713408
        %v8921 = vunpack.c.0.s8 %v8920
        %v8922 = vperm.slane %v8914, %v8921
        %v8923 = vrot.slane %v8918, 4
        %v8924 = vsel %vm1900, 0, %v8923
        %v8925 = vrot.slane %v8922, 4
        %v8926 = vsel %vm1900, 0, %v8925
        %v8929 = vunpack.c.l.s4 1983009808
        %v8930 = vunpack.c.0.s8 %v8929
        %v8931 = vperm.slane %v8177, %v8930
        %v8934 = vunpack.c.l.s4 1983009808
        %v8935 = vunpack.c.0.s8 %v8934
        %v8936 = vperm.slane %v8183, %v8935
        %v8937 = vrot.slane %v8936, 4
        %v8938 = vsel %vm1900, %v8937, %v8931
        %v8939 = vrot.slane %v8931, 4
        %v8940 = vsel %vm1900, %v8936, %v8939
        %v8942 = vunpack.c.l.s4 1934713408
        %v8943 = vunpack.c.0.s8 %v8942
        %v8944 = vperm.slane %v8938, %v8943
        %v8946 = vunpack.c.l.s4 1934713408
        %v8947 = vunpack.c.0.s8 %v8946
        %v8948 = vperm.slane %v8940, %v8947
        %v8949 = vrot.slane %v8944, 4
        %v8950 = vsel %vm1900, 0, %v8949
        %v8951 = vrot.slane %v8948, 4
        %v8952 = vsel %vm1900, 0, %v8951
        %v8955 = vunpack.c.l.s4 1983009808
        %v8956 = vunpack.c.0.s8 %v8955
        %v8957 = vperm.slane %v8180, %v8956
        %v8960 = vunpack.c.l.s4 1983009808
        %v8961 = vunpack.c.0.s8 %v8960
        %v8962 = vperm.slane %v8186, %v8961
        %v8963 = vrot.slane %v8962, 4
        %v8964 = vsel %vm1900, %v8963, %v8957
        %v8965 = vrot.slane %v8957, 4
        %v8966 = vsel %vm1900, %v8962, %v8965
        %v8968 = vunpack.c.l.s4 1934713408
        %v8969 = vunpack.c.0.s8 %v8968
        %v8970 = vperm.slane %v8964, %v8969
        %v8972 = vunpack.c.l.s4 1934713408
        %v8973 = vunpack.c.0.s8 %v8972
        %v8974 = vperm.slane %v8966, %v8973
        %v8975 = vrot.slane %v8970, 4
        %v8976 = vsel %vm1900, 0, %v8975
        %v8977 = vrot.slane %v8974, 4
        %v8978 = vsel %vm1900, 0, %v8977
        %v8981 = vunpack.c.l.s4 1983009808
        %v8982 = vunpack.c.0.s8 %v8981
        %v8983 = vperm.slane %v8189, %v8982
        %v8986 = vunpack.c.l.s4 1983009808
        %v8987 = vunpack.c.0.s8 %v8986
        %v8988 = vperm.slane %v8195, %v8987
        %v8989 = vrot.slane %v8988, 4
        %v8990 = vsel %vm1900, %v8989, %v8983
        %v8991 = vrot.slane %v8983, 4
        %v8992 = vsel %vm1900, %v8988, %v8991
        %v8994 = vunpack.c.l.s4 1934713408
        %v8995 = vunpack.c.0.s8 %v8994
        %v8996 = vperm.slane %v8990, %v8995
        %v8998 = vunpack.c.l.s4 1934713408
        %v8999 = vunpack.c.0.s8 %v8998
        %v9000 = vperm.slane %v8992, %v8999
        %v9001 = vrot.slane %v8996, 4
        %v9002 = vsel %vm1900, 0, %v9001
        %v9003 = vrot.slane %v9000, 4
        %v9004 = vsel %vm1900, 0, %v9003
        %v9007 = vunpack.c.l.s4 1983009808
        %v9008 = vunpack.c.0.s8 %v9007
        %v9009 = vperm.slane %v8192, %v9008
        %v9012 = vunpack.c.l.s4 1983009808
        %v9013 = vunpack.c.0.s8 %v9012
        %v9014 = vperm.slane %v8198, %v9013
        %v9015 = vrot.slane %v9014, 4
        %v9016 = vsel %vm1900, %v9015, %v9009
        %v9017 = vrot.slane %v9009, 4
        %v9018 = vsel %vm1900, %v9014, %v9017
        %v9020 = vunpack.c.l.s4 1934713408
        %v9021 = vunpack.c.0.s8 %v9020
        %v9022 = vperm.slane %v9016, %v9021
        %v9024 = vunpack.c.l.s4 1934713408
        %v9025 = vunpack.c.0.s8 %v9024
        %v9026 = vperm.slane %v9018, %v9025
        %v9027 = vrot.slane %v9022, 4
        %v9028 = vsel %vm1900, 0, %v9027
        %v9029 = vrot.slane %v9026, 4
        %v9030 = vsel %vm1900, 0, %v9029
        %v9031 = vsel %vm1900, %v8223, %v8216
        %v9033 = vunpack.c.l.s4 1983009808
        %v9034 = vunpack.c.0.s8 %v9033
        %v9035 = vperm.slane %v9031, %v9034
        %v9036 = vrot.slane %v8224, 4
        %v9037 = vsel %vm1900, %v9036, %v8222
        %v9039 = vunpack.c.l.s4 1983009808
        %v9040 = vunpack.c.0.s8 %v9039
        %v9041 = vperm.slane %v9037, %v9040
        %v9042 = vrot.slane %v9041, 4
        %v9043 = vsel %vm1900, %v9042, %v9035
        %v9045 = vunpack.c.l.s4 1934713408
        %v9046 = vunpack.c.0.s8 %v9045
        %v9047 = vperm.slane %v9043, %v9046
        %v9048 = vrot.slane %v9047, 4
        %v9049 = vsel %vm1900, 0, %v9048
        %v9050 = vsel %vm1900, %v8249, %v8242
        %v9052 = vunpack.c.l.s4 1983009808
        %v9053 = vunpack.c.0.s8 %v9052
        %v9054 = vperm.slane %v9050, %v9053
        %v9055 = vrot.slane %v8250, 4
        %v9056 = vsel %vm1900, %v9055, %v8248
        %v9058 = vunpack.c.l.s4 1983009808
        %v9059 = vunpack.c.0.s8 %v9058
        %v9060 = vperm.slane %v9056, %v9059
        %v9061 = vrot.slane %v9060, 4
        %v9062 = vsel %vm1900, %v9061, %v9054
        %v9064 = vunpack.c.l.s4 1934713408
        %v9065 = vunpack.c.0.s8 %v9064
        %v9066 = vperm.slane %v9062, %v9065
        %v9067 = vrot.slane %v9066, 4
        %v9068 = vsel %vm1900, 0, %v9067
        %v9069 = vsel %vm1900, %v8275, %v8268
        %v9071 = vunpack.c.l.s4 1983009808
        %v9072 = vunpack.c.0.s8 %v9071
        %v9073 = vperm.slane %v9069, %v9072
        %v9074 = vrot.slane %v8276, 4
        %v9075 = vsel %vm1900, %v9074, %v8274
        %v9077 = vunpack.c.l.s4 1983009808
        %v9078 = vunpack.c.0.s8 %v9077
        %v9079 = vperm.slane %v9075, %v9078
        %v9080 = vrot.slane %v9079, 4
        %v9081 = vsel %vm1900, %v9080, %v9073
        %v9083 = vunpack.c.l.s4 1934713408
        %v9084 = vunpack.c.0.s8 %v9083
        %v9085 = vperm.slane %v9081, %v9084
        %v9086 = vrot.slane %v9085, 4
        %v9087 = vsel %vm1900, 0, %v9086
        %v9088 = vsel %vm1900, %v8301, %v8294
        %v9090 = vunpack.c.l.s4 1983009808
        %v9091 = vunpack.c.0.s8 %v9090
        %v9092 = vperm.slane %v9088, %v9091
        %v9093 = vrot.slane %v8302, 4
        %v9094 = vsel %vm1900, %v9093, %v8300
        %v9096 = vunpack.c.l.s4 1983009808
        %v9097 = vunpack.c.0.s8 %v9096
        %v9098 = vperm.slane %v9094, %v9097
        %v9099 = vrot.slane %v9098, 4
        %v9100 = vsel %vm1900, %v9099, %v9092
        %v9102 = vunpack.c.l.s4 1934713408
        %v9103 = vunpack.c.0.s8 %v9102
        %v9104 = vperm.slane %v9100, %v9103
        %v9105 = vrot.slane %v9104, 4
        %v9106 = vsel %vm1900, 0, %v9105
        %v9107 = vsel %vm1900, %v8327, %v8320
        %v9109 = vunpack.c.l.s4 1983009808
        %v9110 = vunpack.c.0.s8 %v9109
        %v9111 = vperm.slane %v9107, %v9110
        %v9112 = vrot.slane %v8328, 4
        %v9113 = vsel %vm1900, %v9112, %v8326
        %v9115 = vunpack.c.l.s4 1983009808
        %v9116 = vunpack.c.0.s8 %v9115
        %v9117 = vperm.slane %v9113, %v9116
        %v9118 = vrot.slane %v9117, 4
        %v9119 = vsel %vm1900, %v9118, %v9111
        %v9121 = vunpack.c.l.s4 1934713408
        %v9122 = vunpack.c.0.s8 %v9121
        %v9123 = vperm.slane %v9119, %v9122
        %v9124 = vrot.slane %v9123, 4
        %v9125 = vsel %vm1900, 0, %v9124
        %v9126 = vsel %vm1900, %v8353, %v8346
        %v9128 = vunpack.c.l.s4 1983009808
        %v9129 = vunpack.c.0.s8 %v9128
        %v9130 = vperm.slane %v9126, %v9129
        %v9131 = vrot.slane %v8354, 4
        %v9132 = vsel %vm1900, %v9131, %v8352
        %v9134 = vunpack.c.l.s4 1983009808
        %v9135 = vunpack.c.0.s8 %v9134
        %v9136 = vperm.slane %v9132, %v9135
        %v9137 = vrot.slane %v9136, 4
        %v9138 = vsel %vm1900, %v9137, %v9130
        %v9140 = vunpack.c.l.s4 1934713408
        %v9141 = vunpack.c.0.s8 %v9140
        %v9142 = vperm.slane %v9138, %v9141
        %v9143 = vrot.slane %v9142, 4
        %v9144 = vsel %vm1900, 0, %v9143
        %v9145 = vsel %vm1900, %v8379, %v8372
        %v9147 = vunpack.c.l.s4 1983009808
        %v9148 = vunpack.c.0.s8 %v9147
        %v9149 = vperm.slane %v9145, %v9148
        %v9150 = vrot.slane %v8380, 4
        %v9151 = vsel %vm1900, %v9150, %v8378
        %v9153 = vunpack.c.l.s4 1983009808
        %v9154 = vunpack.c.0.s8 %v9153
        %v9155 = vperm.slane %v9151, %v9154
        %v9156 = vrot.slane %v9155, 4
        %v9157 = vsel %vm1900, %v9156, %v9149
        %v9159 = vunpack.c.l.s4 1934713408
        %v9160 = vunpack.c.0.s8 %v9159
        %v9161 = vperm.slane %v9157, %v9160
        %v9162 = vrot.slane %v9161, 4
        %v9163 = vsel %vm1900, 0, %v9162
        %v9164 = vsel %vm1900, %v8405, %v8398
        %v9166 = vunpack.c.l.s4 1983009808
        %v9167 = vunpack.c.0.s8 %v9166
        %v9168 = vperm.slane %v9164, %v9167
        %v9169 = vrot.slane %v8406, 4
        %v9170 = vsel %vm1900, %v9169, %v8404
        %v9172 = vunpack.c.l.s4 1983009808
        %v9173 = vunpack.c.0.s8 %v9172
        %v9174 = vperm.slane %v9170, %v9173
        %v9175 = vrot.slane %v9174, 4
        %v9176 = vsel %vm1900, %v9175, %v9168
        %v9178 = vunpack.c.l.s4 1934713408
        %v9179 = vunpack.c.0.s8 %v9178
        %v9180 = vperm.slane %v9176, %v9179
        %v9181 = vrot.slane %v9180, 4
        %v9182 = vsel %vm1900, 0, %v9181
        %v9183 = vsel %vm1900, %v8431, %v8424
        %v9185 = vunpack.c.l.s4 1983009808
        %v9186 = vunpack.c.0.s8 %v9185
        %v9187 = vperm.slane %v9183, %v9186
        %v9188 = vrot.slane %v8432, 4
        %v9189 = vsel %vm1900, %v9188, %v8430
        %v9191 = vunpack.c.l.s4 1983009808
        %v9192 = vunpack.c.0.s8 %v9191
        %v9193 = vperm.slane %v9189, %v9192
        %v9194 = vrot.slane %v9193, 4
        %v9195 = vsel %vm1900, %v9194, %v9187
        %v9197 = vunpack.c.l.s4 1934713408
        %v9198 = vunpack.c.0.s8 %v9197
        %v9199 = vperm.slane %v9195, %v9198
        %v9200 = vrot.slane %v9199, 4
        %v9201 = vsel %vm1900, 0, %v9200
        %v9202 = vsel %vm1900, %v8457, %v8450
        %v9204 = vunpack.c.l.s4 1983009808
        %v9205 = vunpack.c.0.s8 %v9204
        %v9206 = vperm.slane %v9202, %v9205
        %v9207 = vrot.slane %v8458, 4
        %v9208 = vsel %vm1900, %v9207, %v8456
        %v9210 = vunpack.c.l.s4 1983009808
        %v9211 = vunpack.c.0.s8 %v9210
        %v9212 = vperm.slane %v9208, %v9211
        %v9213 = vrot.slane %v9212, 4
        %v9214 = vsel %vm1900, %v9213, %v9206
        %v9216 = vunpack.c.l.s4 1934713408
        %v9217 = vunpack.c.0.s8 %v9216
        %v9218 = vperm.slane %v9214, %v9217
        %v9219 = vrot.slane %v9218, 4
        %v9220 = vsel %vm1900, 0, %v9219
        %v9221 = vsel %vm1900, %v8483, %v8476
        %v9223 = vunpack.c.l.s4 1983009808
        %v9224 = vunpack.c.0.s8 %v9223
        %v9225 = vperm.slane %v9221, %v9224
        %v9226 = vrot.slane %v8484, 4
        %v9227 = vsel %vm1900, %v9226, %v8482
        %v9229 = vunpack.c.l.s4 1983009808
        %v9230 = vunpack.c.0.s8 %v9229
        %v9231 = vperm.slane %v9227, %v9230
        %v9232 = vrot.slane %v9231, 4
        %v9233 = vsel %vm1900, %v9232, %v9225
        %v9235 = vunpack.c.l.s4 1934713408
        %v9236 = vunpack.c.0.s8 %v9235
        %v9237 = vperm.slane %v9233, %v9236
        %v9238 = vrot.slane %v9237, 4
        %v9239 = vsel %vm1900, 0, %v9238
        %v9240 = vsel %vm1900, %v8509, %v8502
        %v9242 = vunpack.c.l.s4 1983009808
        %v9243 = vunpack.c.0.s8 %v9242
        %v9244 = vperm.slane %v9240, %v9243
        %v9245 = vrot.slane %v8510, 4
        %v9246 = vsel %vm1900, %v9245, %v8508
        %v9248 = vunpack.c.l.s4 1983009808
        %v9249 = vunpack.c.0.s8 %v9248
        %v9250 = vperm.slane %v9246, %v9249
        %v9251 = vrot.slane %v9250, 4
        %v9252 = vsel %vm1900, %v9251, %v9244
        %v9254 = vunpack.c.l.s4 1934713408
        %v9255 = vunpack.c.0.s8 %v9254
        %v9256 = vperm.slane %v9252, %v9255
        %v9257 = vrot.slane %v9256, 4
        %v9258 = vsel %vm1900, 0, %v9257
        %v9259 = vsel %vm1900, %v8535, %v8528
        %v9261 = vunpack.c.l.s4 1983009808
        %v9262 = vunpack.c.0.s8 %v9261
        %v9263 = vperm.slane %v9259, %v9262
        %v9264 = vrot.slane %v8536, 4
        %v9265 = vsel %vm1900, %v9264, %v8534
        %v9267 = vunpack.c.l.s4 1983009808
        %v9268 = vunpack.c.0.s8 %v9267
        %v9269 = vperm.slane %v9265, %v9268
        %v9270 = vrot.slane %v9269, 4
        %v9271 = vsel %vm1900, %v9270, %v9263
        %v9273 = vunpack.c.l.s4 1934713408
        %v9274 = vunpack.c.0.s8 %v9273
        %v9275 = vperm.slane %v9271, %v9274
        %v9276 = vrot.slane %v9275, 4
        %v9277 = vsel %vm1900, 0, %v9276
        %v9278 = vsel %vm1900, %v8561, %v8554
        %v9280 = vunpack.c.l.s4 1983009808
        %v9281 = vunpack.c.0.s8 %v9280
        %v9282 = vperm.slane %v9278, %v9281
        %v9283 = vrot.slane %v8562, 4
        %v9284 = vsel %vm1900, %v9283, %v8560
        %v9286 = vunpack.c.l.s4 1983009808
        %v9287 = vunpack.c.0.s8 %v9286
        %v9288 = vperm.slane %v9284, %v9287
        %v9289 = vrot.slane %v9288, 4
        %v9290 = vsel %vm1900, %v9289, %v9282
        %v9292 = vunpack.c.l.s4 1934713408
        %v9293 = vunpack.c.0.s8 %v9292
        %v9294 = vperm.slane %v9290, %v9293
        %v9295 = vrot.slane %v9294, 4
        %v9296 = vsel %vm1900, 0, %v9295
        %v9297 = vsel %vm1900, %v8587, %v8580
        %v9299 = vunpack.c.l.s4 1983009808
        %v9300 = vunpack.c.0.s8 %v9299
        %v9301 = vperm.slane %v9297, %v9300
        %v9302 = vrot.slane %v8588, 4
        %v9303 = vsel %vm1900, %v9302, %v8586
        %v9305 = vunpack.c.l.s4 1983009808
        %v9306 = vunpack.c.0.s8 %v9305
        %v9307 = vperm.slane %v9303, %v9306
        %v9308 = vrot.slane %v9307, 4
        %v9309 = vsel %vm1900, %v9308, %v9301
        %v9311 = vunpack.c.l.s4 1934713408
        %v9312 = vunpack.c.0.s8 %v9311
        %v9313 = vperm.slane %v9309, %v9312
        %v9314 = vrot.slane %v9313, 4
        %v9315 = vsel %vm1900, 0, %v9314
        %v9316 = vsel %vm1900, %v8613, %v8606
        %v9318 = vunpack.c.l.s4 1983009808
        %v9319 = vunpack.c.0.s8 %v9318
        %v9320 = vperm.slane %v9316, %v9319
        %v9321 = vrot.slane %v8614, 4
        %v9322 = vsel %vm1900, %v9321, %v8612
        %v9324 = vunpack.c.l.s4 1983009808
        %v9325 = vunpack.c.0.s8 %v9324
        %v9326 = vperm.slane %v9322, %v9325
        %v9327 = vrot.slane %v9326, 4
        %v9328 = vsel %vm1900, %v9327, %v9320
        %v9330 = vunpack.c.l.s4 1934713408
        %v9331 = vunpack.c.0.s8 %v9330
        %v9332 = vperm.slane %v9328, %v9331
        %v9333 = vrot.slane %v9332, 4
        %v9334 = vsel %vm1900, 0, %v9333
        %v9335 = vsel %vm1900, %v8639, %v8632
        %v9337 = vunpack.c.l.s4 1983009808
        %v9338 = vunpack.c.0.s8 %v9337
        %v9339 = vperm.slane %v9335, %v9338
        %v9340 = vrot.slane %v8640, 4
        %v9341 = vsel %vm1900, %v9340, %v8638
        %v9343 = vunpack.c.l.s4 1983009808
        %v9344 = vunpack.c.0.s8 %v9343
        %v9345 = vperm.slane %v9341, %v9344
        %v9346 = vrot.slane %v9345, 4
        %v9347 = vsel %vm1900, %v9346, %v9339
        %v9349 = vunpack.c.l.s4 1934713408
        %v9350 = vunpack.c.0.s8 %v9349
        %v9351 = vperm.slane %v9347, %v9350
        %v9352 = vrot.slane %v9351, 4
        %v9353 = vsel %vm1900, 0, %v9352
        %v9354 = vsel %vm1900, %v8665, %v8658
        %v9356 = vunpack.c.l.s4 1983009808
        %v9357 = vunpack.c.0.s8 %v9356
        %v9358 = vperm.slane %v9354, %v9357
        %v9359 = vrot.slane %v8666, 4
        %v9360 = vsel %vm1900, %v9359, %v8664
        %v9362 = vunpack.c.l.s4 1983009808
        %v9363 = vunpack.c.0.s8 %v9362
        %v9364 = vperm.slane %v9360, %v9363
        %v9365 = vrot.slane %v9364, 4
        %v9366 = vsel %vm1900, %v9365, %v9358
        %v9368 = vunpack.c.l.s4 1934713408
        %v9369 = vunpack.c.0.s8 %v9368
        %v9370 = vperm.slane %v9366, %v9369
        %v9371 = vrot.slane %v9370, 4
        %v9372 = vsel %vm1900, 0, %v9371
        %v9373 = vsel %vm1900, %v8691, %v8684
        %v9375 = vunpack.c.l.s4 1983009808
        %v9376 = vunpack.c.0.s8 %v9375
        %v9377 = vperm.slane %v9373, %v9376
        %v9378 = vrot.slane %v8692, 4
        %v9379 = vsel %vm1900, %v9378, %v8690
        %v9381 = vunpack.c.l.s4 1983009808
        %v9382 = vunpack.c.0.s8 %v9381
        %v9383 = vperm.slane %v9379, %v9382
        %v9384 = vrot.slane %v9383, 4
        %v9385 = vsel %vm1900, %v9384, %v9377
        %v9387 = vunpack.c.l.s4 1934713408
        %v9388 = vunpack.c.0.s8 %v9387
        %v9389 = vperm.slane %v9385, %v9388
        %v9390 = vrot.slane %v9389, 4
        %v9391 = vsel %vm1900, 0, %v9390
        %v9392 = vsel %vm1900, %v8717, %v8710
        %v9394 = vunpack.c.l.s4 1983009808
        %v9395 = vunpack.c.0.s8 %v9394
        %v9396 = vperm.slane %v9392, %v9395
        %v9397 = vrot.slane %v8718, 4
        %v9398 = vsel %vm1900, %v9397, %v8716
        %v9400 = vunpack.c.l.s4 1983009808
        %v9401 = vunpack.c.0.s8 %v9400
        %v9402 = vperm.slane %v9398, %v9401
        %v9403 = vrot.slane %v9402, 4
        %v9404 = vsel %vm1900, %v9403, %v9396
        %v9406 = vunpack.c.l.s4 1934713408
        %v9407 = vunpack.c.0.s8 %v9406
        %v9408 = vperm.slane %v9404, %v9407
        %v9409 = vrot.slane %v9408, 4
        %v9410 = vsel %vm1900, 0, %v9409
        %v9411 = vsel %vm1900, %v8743, %v8736
        %v9413 = vunpack.c.l.s4 1983009808
        %v9414 = vunpack.c.0.s8 %v9413
        %v9415 = vperm.slane %v9411, %v9414
        %v9416 = vrot.slane %v8744, 4
        %v9417 = vsel %vm1900, %v9416, %v8742
        %v9419 = vunpack.c.l.s4 1983009808
        %v9420 = vunpack.c.0.s8 %v9419
        %v9421 = vperm.slane %v9417, %v9420
        %v9422 = vrot.slane %v9421, 4
        %v9423 = vsel %vm1900, %v9422, %v9415
        %v9425 = vunpack.c.l.s4 1934713408
        %v9426 = vunpack.c.0.s8 %v9425
        %v9427 = vperm.slane %v9423, %v9426
        %v9428 = vrot.slane %v9427, 4
        %v9429 = vsel %vm1900, 0, %v9428
        %v9430 = vsel %vm1900, %v8769, %v8762
        %v9432 = vunpack.c.l.s4 1983009808
        %v9433 = vunpack.c.0.s8 %v9432
        %v9434 = vperm.slane %v9430, %v9433
        %v9435 = vrot.slane %v8770, 4
        %v9436 = vsel %vm1900, %v9435, %v8768
        %v9438 = vunpack.c.l.s4 1983009808
        %v9439 = vunpack.c.0.s8 %v9438
        %v9440 = vperm.slane %v9436, %v9439
        %v9441 = vrot.slane %v9440, 4
        %v9442 = vsel %vm1900, %v9441, %v9434
        %v9444 = vunpack.c.l.s4 1934713408
        %v9445 = vunpack.c.0.s8 %v9444
        %v9446 = vperm.slane %v9442, %v9445
        %v9447 = vrot.slane %v9446, 4
        %v9448 = vsel %vm1900, 0, %v9447
        %v9449 = vsel %vm1900, %v8795, %v8788
        %v9451 = vunpack.c.l.s4 1983009808
        %v9452 = vunpack.c.0.s8 %v9451
        %v9453 = vperm.slane %v9449, %v9452
        %v9454 = vrot.slane %v8796, 4
        %v9455 = vsel %vm1900, %v9454, %v8794
        %v9457 = vunpack.c.l.s4 1983009808
        %v9458 = vunpack.c.0.s8 %v9457
        %v9459 = vperm.slane %v9455, %v9458
        %v9460 = vrot.slane %v9459, 4
        %v9461 = vsel %vm1900, %v9460, %v9453
        %v9463 = vunpack.c.l.s4 1934713408
        %v9464 = vunpack.c.0.s8 %v9463
        %v9465 = vperm.slane %v9461, %v9464
        %v9466 = vrot.slane %v9465, 4
        %v9467 = vsel %vm1900, 0, %v9466
        %v9468 = vsel %vm1900, %v8821, %v8814
        %v9470 = vunpack.c.l.s4 1983009808
        %v9471 = vunpack.c.0.s8 %v9470
        %v9472 = vperm.slane %v9468, %v9471
        %v9473 = vrot.slane %v8822, 4
        %v9474 = vsel %vm1900, %v9473, %v8820
        %v9476 = vunpack.c.l.s4 1983009808
        %v9477 = vunpack.c.0.s8 %v9476
        %v9478 = vperm.slane %v9474, %v9477
        %v9479 = vrot.slane %v9478, 4
        %v9480 = vsel %vm1900, %v9479, %v9472
        %v9482 = vunpack.c.l.s4 1934713408
        %v9483 = vunpack.c.0.s8 %v9482
        %v9484 = vperm.slane %v9480, %v9483
        %v9485 = vrot.slane %v9484, 4
        %v9486 = vsel %vm1900, 0, %v9485
        %v9487 = vsel %vm1900, %v8847, %v8840
        %v9489 = vunpack.c.l.s4 1983009808
        %v9490 = vunpack.c.0.s8 %v9489
        %v9491 = vperm.slane %v9487, %v9490
        %v9492 = vrot.slane %v8848, 4
        %v9493 = vsel %vm1900, %v9492, %v8846
        %v9495 = vunpack.c.l.s4 1983009808
        %v9496 = vunpack.c.0.s8 %v9495
        %v9497 = vperm.slane %v9493, %v9496
        %v9498 = vrot.slane %v9497, 4
        %v9499 = vsel %vm1900, %v9498, %v9491
        %v9501 = vunpack.c.l.s4 1934713408
        %v9502 = vunpack.c.0.s8 %v9501
        %v9503 = vperm.slane %v9499, %v9502
        %v9504 = vrot.slane %v9503, 4
        %v9505 = vsel %vm1900, 0, %v9504
        %v9506 = vsel %vm1900, %v8873, %v8866
        %v9508 = vunpack.c.l.s4 1983009808
        %v9509 = vunpack.c.0.s8 %v9508
        %v9510 = vperm.slane %v9506, %v9509
        %v9511 = vrot.slane %v8874, 4
        %v9512 = vsel %vm1900, %v9511, %v8872
        %v9514 = vunpack.c.l.s4 1983009808
        %v9515 = vunpack.c.0.s8 %v9514
        %v9516 = vperm.slane %v9512, %v9515
        %v9517 = vrot.slane %v9516, 4
        %v9518 = vsel %vm1900, %v9517, %v9510
        %v9520 = vunpack.c.l.s4 1934713408
        %v9521 = vunpack.c.0.s8 %v9520
        %v9522 = vperm.slane %v9518, %v9521
        %v9523 = vrot.slane %v9522, 4
        %v9524 = vsel %vm1900, 0, %v9523
        %v9525 = vsel %vm1900, %v8899, %v8892
        %v9527 = vunpack.c.l.s4 1983009808
        %v9528 = vunpack.c.0.s8 %v9527
        %v9529 = vperm.slane %v9525, %v9528
        %v9530 = vrot.slane %v8900, 4
        %v9531 = vsel %vm1900, %v9530, %v8898
        %v9533 = vunpack.c.l.s4 1983009808
        %v9534 = vunpack.c.0.s8 %v9533
        %v9535 = vperm.slane %v9531, %v9534
        %v9536 = vrot.slane %v9535, 4
        %v9537 = vsel %vm1900, %v9536, %v9529
        %v9539 = vunpack.c.l.s4 1934713408
        %v9540 = vunpack.c.0.s8 %v9539
        %v9541 = vperm.slane %v9537, %v9540
        %v9542 = vrot.slane %v9541, 4
        %v9543 = vsel %vm1900, 0, %v9542
        %v9544 = vsel %vm1900, %v8925, %v8918
        %v9546 = vunpack.c.l.s4 1983009808
        %v9547 = vunpack.c.0.s8 %v9546
        %v9548 = vperm.slane %v9544, %v9547
        %v9549 = vrot.slane %v8926, 4
        %v9550 = vsel %vm1900, %v9549, %v8924
        %v9552 = vunpack.c.l.s4 1983009808
        %v9553 = vunpack.c.0.s8 %v9552
        %v9554 = vperm.slane %v9550, %v9553
        %v9555 = vrot.slane %v9554, 4
        %v9556 = vsel %vm1900, %v9555, %v9548
        %v9558 = vunpack.c.l.s4 1934713408
        %v9559 = vunpack.c.0.s8 %v9558
        %v9560 = vperm.slane %v9556, %v9559
        %v9561 = vrot.slane %v9560, 4
        %v9562 = vsel %vm1900, 0, %v9561
        %v9563 = vsel %vm1900, %v8951, %v8944
        %v9565 = vunpack.c.l.s4 1983009808
        %v9566 = vunpack.c.0.s8 %v9565
        %v9567 = vperm.slane %v9563, %v9566
        %v9568 = vrot.slane %v8952, 4
        %v9569 = vsel %vm1900, %v9568, %v8950
        %v9571 = vunpack.c.l.s4 1983009808
        %v9572 = vunpack.c.0.s8 %v9571
        %v9573 = vperm.slane %v9569, %v9572
        %v9574 = vrot.slane %v9573, 4
        %v9575 = vsel %vm1900, %v9574, %v9567
        %v9577 = vunpack.c.l.s4 1934713408
        %v9578 = vunpack.c.0.s8 %v9577
        %v9579 = vperm.slane %v9575, %v9578
        %v9580 = vrot.slane %v9579, 4
        %v9581 = vsel %vm1900, 0, %v9580
        %v9582 = vsel %vm1900, %v8977, %v8970
        %v9584 = vunpack.c.l.s4 1983009808
        %v9585 = vunpack.c.0.s8 %v9584
        %v9586 = vperm.slane %v9582, %v9585
        %v9587 = vrot.slane %v8978, 4
        %v9588 = vsel %vm1900, %v9587, %v8976
        %v9590 = vunpack.c.l.s4 1983009808
        %v9591 = vunpack.c.0.s8 %v9590
        %v9592 = vperm.slane %v9588, %v9591
        %v9593 = vrot.slane %v9592, 4
        %v9594 = vsel %vm1900, %v9593, %v9586
        %v9596 = vunpack.c.l.s4 1934713408
        %v9597 = vunpack.c.0.s8 %v9596
        %v9598 = vperm.slane %v9594, %v9597
        %v9599 = vrot.slane %v9598, 4
        %v9600 = vsel %vm1900, 0, %v9599
        %v9601 = vsel %vm1900, %v9003, %v8996
        %v9603 = vunpack.c.l.s4 1983009808
        %v9604 = vunpack.c.0.s8 %v9603
        %v9605 = vperm.slane %v9601, %v9604
        %v9606 = vrot.slane %v9004, 4
        %v9607 = vsel %vm1900, %v9606, %v9002
        %v9609 = vunpack.c.l.s4 1983009808
        %v9610 = vunpack.c.0.s8 %v9609
        %v9611 = vperm.slane %v9607, %v9610
        %v9612 = vrot.slane %v9611, 4
        %v9613 = vsel %vm1900, %v9612, %v9605
        %v9615 = vunpack.c.l.s4 1934713408
        %v9616 = vunpack.c.0.s8 %v9615
        %v9617 = vperm.slane %v9613, %v9616
        %v9618 = vrot.slane %v9617, 4
        %v9619 = vsel %vm1900, 0, %v9618
        %v9620 = vsel %vm1900, %v9029, %v9022
        %v9622 = vunpack.c.l.s4 1983009808
        %v9623 = vunpack.c.0.s8 %v9622
        %v9624 = vperm.slane %v9620, %v9623
        %v9625 = vrot.slane %v9030, 4
        %v9626 = vsel %vm1900, %v9625, %v9028
        %v9628 = vunpack.c.l.s4 1983009808
        %v9629 = vunpack.c.0.s8 %v9628
        %v9630 = vperm.slane %v9626, %v9629
        %v9631 = vrot.slane %v9630, 4
        %v9632 = vsel %vm1900, %v9631, %v9624
        %v9634 = vunpack.c.l.s4 1934713408
        %v9635 = vunpack.c.0.s8 %v9634
        %v9636 = vperm.slane %v9632, %v9635
        %v9637 = vrot.slane %v9636, 4
        %v9638 = vsel %vm1900, 0, %v9637
        %v9641 = vpack.i.b16 %v9066, %v9047
        %v9642 = vshrl.u32 %v9047, 16
        %v9643 = vshrl.u32 %v9066, 16
        %v9644 = vpack.i.b16 %v9643, %v9642
        %v9647 = vpack.i.b16 %v9068, %v9049
        %v9648 = vshrl.u32 %v9049, 16
        %v9649 = vshrl.u32 %v9068, 16
        %v9650 = vpack.i.b16 %v9649, %v9648
        %v9653 = vpack.i.b16 %v9104, %v9085
        %v9654 = vshrl.u32 %v9085, 16
        %v9655 = vshrl.u32 %v9104, 16
        %v9656 = vpack.i.b16 %v9655, %v9654
        %v9659 = vpack.i.b16 %v9106, %v9087
        %v9660 = vshrl.u32 %v9087, 16
        %v9661 = vshrl.u32 %v9106, 16
        %v9662 = vpack.i.b16 %v9661, %v9660
        %v9665 = vpack.i.b16 %v9142, %v9123
        %v9666 = vshrl.u32 %v9123, 16
        %v9667 = vshrl.u32 %v9142, 16
        %v9668 = vpack.i.b16 %v9667, %v9666
        %v9671 = vpack.i.b16 %v9144, %v9125
        %v9672 = vshrl.u32 %v9125, 16
        %v9673 = vshrl.u32 %v9144, 16
        %v9674 = vpack.i.b16 %v9673, %v9672
        %v9677 = vpack.i.b16 %v9180, %v9161
        %v9678 = vshrl.u32 %v9161, 16
        %v9679 = vshrl.u32 %v9180, 16
        %v9680 = vpack.i.b16 %v9679, %v9678
        %v9683 = vpack.i.b16 %v9182, %v9163
        %v9684 = vshrl.u32 %v9163, 16
        %v9685 = vshrl.u32 %v9182, 16
        %v9686 = vpack.i.b16 %v9685, %v9684
        %v9689 = vpack.i.b16 %v9218, %v9199
        %v9690 = vshrl.u32 %v9199, 16
        %v9691 = vshrl.u32 %v9218, 16
        %v9692 = vpack.i.b16 %v9691, %v9690
        %v9695 = vpack.i.b16 %v9220, %v9201
        %v9696 = vshrl.u32 %v9201, 16
        %v9697 = vshrl.u32 %v9220, 16
        %v9698 = vpack.i.b16 %v9697, %v9696
        %v9701 = vpack.i.b16 %v9256, %v9237
        %v9702 = vshrl.u32 %v9237, 16
        %v9703 = vshrl.u32 %v9256, 16
        %v9704 = vpack.i.b16 %v9703, %v9702
        %v9707 = vpack.i.b16 %v9258, %v9239
        %v9708 = vshrl.u32 %v9239, 16
        %v9709 = vshrl.u32 %v9258, 16
        %v9710 = vpack.i.b16 %v9709, %v9708
        %v9713 = vpack.i.b16 %v9294, %v9275
        %v9714 = vshrl.u32 %v9275, 16
        %v9715 = vshrl.u32 %v9294, 16
        %v9716 = vpack.i.b16 %v9715, %v9714
        %v9719 = vpack.i.b16 %v9296, %v9277
        %v9720 = vshrl.u32 %v9277, 16
        %v9721 = vshrl.u32 %v9296, 16
        %v9722 = vpack.i.b16 %v9721, %v9720
        %v9725 = vpack.i.b16 %v9332, %v9313
        %v9726 = vshrl.u32 %v9313, 16
        %v9727 = vshrl.u32 %v9332, 16
        %v9728 = vpack.i.b16 %v9727, %v9726
        %v9731 = vpack.i.b16 %v9334, %v9315
        %v9732 = vshrl.u32 %v9315, 16
        %v9733 = vshrl.u32 %v9334, 16
        %v9734 = vpack.i.b16 %v9733, %v9732
        %v9737 = vpack.i.b16 %v9370, %v9351
        %v9738 = vshrl.u32 %v9351, 16
        %v9739 = vshrl.u32 %v9370, 16
        %v9740 = vpack.i.b16 %v9739, %v9738
        %v9743 = vpack.i.b16 %v9372, %v9353
        %v9744 = vshrl.u32 %v9353, 16
        %v9745 = vshrl.u32 %v9372, 16
        %v9746 = vpack.i.b16 %v9745, %v9744
        %v9749 = vpack.i.b16 %v9408, %v9389
        %v9750 = vshrl.u32 %v9389, 16
        %v9751 = vshrl.u32 %v9408, 16
        %v9752 = vpack.i.b16 %v9751, %v9750
        %v9755 = vpack.i.b16 %v9410, %v9391
        %v9756 = vshrl.u32 %v9391, 16
        %v9757 = vshrl.u32 %v9410, 16
        %v9758 = vpack.i.b16 %v9757, %v9756
        %v9761 = vpack.i.b16 %v9446, %v9427
        %v9762 = vshrl.u32 %v9427, 16
        %v9763 = vshrl.u32 %v9446, 16
        %v9764 = vpack.i.b16 %v9763, %v9762
        %v9767 = vpack.i.b16 %v9448, %v9429
        %v9768 = vshrl.u32 %v9429, 16
        %v9769 = vshrl.u32 %v9448, 16
        %v9770 = vpack.i.b16 %v9769, %v9768
        %v9773 = vpack.i.b16 %v9484, %v9465
        %v9774 = vshrl.u32 %v9465, 16
        %v9775 = vshrl.u32 %v9484, 16
        %v9776 = vpack.i.b16 %v9775, %v9774
        %v9779 = vpack.i.b16 %v9486, %v9467
        %v9780 = vshrl.u32 %v9467, 16
        %v9781 = vshrl.u32 %v9486, 16
        %v9782 = vpack.i.b16 %v9781, %v9780
        %v9785 = vpack.i.b16 %v9522, %v9503
        %v9786 = vshrl.u32 %v9503, 16
        %v9787 = vshrl.u32 %v9522, 16
        %v9788 = vpack.i.b16 %v9787, %v9786
        %v9791 = vpack.i.b16 %v9524, %v9505
        %v9792 = vshrl.u32 %v9505, 16
        %v9793 = vshrl.u32 %v9524, 16
        %v9794 = vpack.i.b16 %v9793, %v9792
        %v9797 = vpack.i.b16 %v9560, %v9541
        %v9798 = vshrl.u32 %v9541, 16
        %v9799 = vshrl.u32 %v9560, 16
        %v9800 = vpack.i.b16 %v9799, %v9798
        %v9803 = vpack.i.b16 %v9562, %v9543
        %v9804 = vshrl.u32 %v9543, 16
        %v9805 = vshrl.u32 %v9562, 16
        %v9806 = vpack.i.b16 %v9805, %v9804
        %v9809 = vpack.i.b16 %v9598, %v9579
        %v9810 = vshrl.u32 %v9579, 16
        %v9811 = vshrl.u32 %v9598, 16
        %v9812 = vpack.i.b16 %v9811, %v9810
        %v9815 = vpack.i.b16 %v9600, %v9581
        %v9816 = vshrl.u32 %v9581, 16
        %v9817 = vshrl.u32 %v9600, 16
        %v9818 = vpack.i.b16 %v9817, %v9816
        %v9821 = vpack.i.b16 %v9636, %v9617
        %v9822 = vshrl.u32 %v9617, 16
        %v9823 = vshrl.u32 %v9636, 16
        %v9824 = vpack.i.b16 %v9823, %v9822
        %v9827 = vpack.i.b16 %v9638, %v9619
        %v9828 = vshrl.u32 %v9619, 16
        %v9829 = vshrl.u32 %v9638, 16
        %v9830 = vpack.i.b16 %v9829, %v9828
        %v9831 = vunpack.c.l.b16 %v9641
        %v9832 = vunpack.c.l.b16 %v9653
        %v9833 = vunpack.c.l.b16 %v9665
        %v9834 = vunpack.c.l.b16 %v9677
        %v9835 = vunpack.c.l.b16 %v9689
        %v9836 = vunpack.c.l.b16 %v9701
        %v9837 = vunpack.c.l.b16 %v9713
        %v9838 = vunpack.c.l.b16 %v9725
        %v9839 = vunpack.c.l.b16 %v9737
        %v9840 = vunpack.c.l.b16 %v9749
        %v9841 = vunpack.c.l.b16 %v9761
        %v9842 = vunpack.c.l.b16 %v9773
        %v9843 = vunpack.c.l.b16 %v9785
        %v9844 = vunpack.c.l.b16 %v9797
        %v9845 = vunpack.c.l.b16 %v9809
        %v9846 = vunpack.c.l.b16 %v9821
        %v9847 = vpack.c.b16 %v9832, %v9831
        %v9848 = vpack.c.b16 %v9834, %v9833
        %v9849 = vpack.c.b16 %v9836, %v9835
        %v9850 = vpack.c.b16 %v9838, %v9837
        %v9851 = vpack.c.b16 %v9840, %v9839
        %v9852 = vpack.c.b16 %v9842, %v9841
        %v9853 = vpack.c.b16 %v9844, %v9843
        %v9854 = vpack.c.b16 %v9846, %v9845
        %v9855 = vunpack.c.l.b16 %v9644
        %v9856 = vunpack.c.l.b16 %v9656
        %v9857 = vunpack.c.l.b16 %v9668
        %v9858 = vunpack.c.l.b16 %v9680
        %v9859 = vunpack.c.l.b16 %v9692
        %v9860 = vunpack.c.l.b16 %v9704
        %v9861 = vunpack.c.l.b16 %v9716
        %v9862 = vunpack.c.l.b16 %v9728
        %v9863 = vunpack.c.l.b16 %v9740
        %v9864 = vunpack.c.l.b16 %v9752
        %v9865 = vunpack.c.l.b16 %v9764
        %v9866 = vunpack.c.l.b16 %v9776
        %v9867 = vunpack.c.l.b16 %v9788
        %v9868 = vunpack.c.l.b16 %v9800
        %v9869 = vunpack.c.l.b16 %v9812
        %v9870 = vunpack.c.l.b16 %v9824
        %v9871 = vpack.c.b16 %v9856, %v9855
        %v9872 = vpack.c.b16 %v9858, %v9857
        %v9873 = vpack.c.b16 %v9860, %v9859
        %v9874 = vpack.c.b16 %v9862, %v9861
        %v9875 = vpack.c.b16 %v9864, %v9863
        %v9876 = vpack.c.b16 %v9866, %v9865
        %v9877 = vpack.c.b16 %v9868, %v9867
        %v9878 = vpack.c.b16 %v9870, %v9869
        %9879 = vrot.lane.b32.xlu0 %v9871, 32
        %v9880 = vpop.permute.xlu0 %9879
        %9881 = vrot.lane.b32.xlu0 %v9872, 32
        %v9882 = vpop.permute.xlu0 %9881
        %9883 = vrot.lane.b32.xlu0 %v9873, 32
        %v9884 = vpop.permute.xlu0 %9883
        %9885 = vrot.lane.b32.xlu0 %v9874, 32
        %v9886 = vpop.permute.xlu0 %9885
        %9887 = vrot.lane.b32.xlu0 %v9875, 32
        %v9888 = vpop.permute.xlu0 %9887
        %9889 = vrot.lane.b32.xlu0 %v9876, 32
        %v9890 = vpop.permute.xlu0 %9889
        %9891 = vrot.lane.b32.xlu0 %v9877, 32
        %v9892 = vpop.permute.xlu0 %9891
        %9893 = vrot.lane.b32.xlu0 %v9878, 32
        %v9894 = vpop.permute.xlu0 %9893
        %v9895 = vunpack.c.l.b16 %v9647
        %v9896 = vunpack.c.l.b16 %v9659
        %v9897 = vunpack.c.l.b16 %v9671
        %v9898 = vunpack.c.l.b16 %v9683
        %v9899 = vunpack.c.l.b16 %v9695
        %v9900 = vunpack.c.l.b16 %v9707
        %v9901 = vunpack.c.l.b16 %v9719
        %v9902 = vunpack.c.l.b16 %v9731
        %v9903 = vunpack.c.l.b16 %v9743
        %v9904 = vunpack.c.l.b16 %v9755
        %v9905 = vunpack.c.l.b16 %v9767
        %v9906 = vunpack.c.l.b16 %v9779
        %v9907 = vunpack.c.l.b16 %v9791
        %v9908 = vunpack.c.l.b16 %v9803
        %v9909 = vunpack.c.l.b16 %v9815
        %v9910 = vunpack.c.l.b16 %v9827
        %v9911 = vpack.c.b16 %v9896, %v9895
        %v9912 = vpack.c.b16 %v9898, %v9897
        %v9913 = vpack.c.b16 %v9900, %v9899
        %v9914 = vpack.c.b16 %v9902, %v9901
        %v9915 = vpack.c.b16 %v9904, %v9903
        %v9916 = vpack.c.b16 %v9906, %v9905
        %v9917 = vpack.c.b16 %v9908, %v9907
        %v9918 = vpack.c.b16 %v9910, %v9909
        %9919 = vrot.lane.b32.xlu0 %v9911, 64
        %v9920 = vpop.permute.xlu0 %9919
        %9921 = vrot.lane.b32.xlu0 %v9912, 64
        %v9922 = vpop.permute.xlu0 %9921
        %9923 = vrot.lane.b32.xlu0 %v9913, 64
        %v9924 = vpop.permute.xlu0 %9923
        %9925 = vrot.lane.b32.xlu0 %v9914, 64
        %v9926 = vpop.permute.xlu0 %9925
        %9927 = vrot.lane.b32.xlu0 %v9915, 64
        %v9928 = vpop.permute.xlu0 %9927
        %9929 = vrot.lane.b32.xlu0 %v9916, 64
        %v9930 = vpop.permute.xlu0 %9929
        %9931 = vrot.lane.b32.xlu0 %v9917, 64
        %v9932 = vpop.permute.xlu0 %9931
        %9933 = vrot.lane.b32.xlu0 %v9918, 64
        %v9934 = vpop.permute.xlu0 %9933
        %v9935 = vunpack.c.l.b16 %v9650
        %v9936 = vunpack.c.l.b16 %v9662
        %v9937 = vunpack.c.l.b16 %v9674
        %v9938 = vunpack.c.l.b16 %v9686
        %v9939 = vunpack.c.l.b16 %v9698
        %v9940 = vunpack.c.l.b16 %v9710
        %v9941 = vunpack.c.l.b16 %v9722
        %v9942 = vunpack.c.l.b16 %v9734
        %v9943 = vunpack.c.l.b16 %v9746
        %v9944 = vunpack.c.l.b16 %v9758
        %v9945 = vunpack.c.l.b16 %v9770
        %v9946 = vunpack.c.l.b16 %v9782
        %v9947 = vunpack.c.l.b16 %v9794
        %v9948 = vunpack.c.l.b16 %v9806
        %v9949 = vunpack.c.l.b16 %v9818
        %v9950 = vunpack.c.l.b16 %v9830
        %v9951 = vpack.c.b16 %v9936, %v9935
        %v9952 = vpack.c.b16 %v9938, %v9937
        %v9953 = vpack.c.b16 %v9940, %v9939
        %v9954 = vpack.c.b16 %v9942, %v9941
        %v9955 = vpack.c.b16 %v9944, %v9943
        %v9956 = vpack.c.b16 %v9946, %v9945
        %v9957 = vpack.c.b16 %v9948, %v9947
        %v9958 = vpack.c.b16 %v9950, %v9949
        %9959 = vrot.lane.b32.xlu0 %v9951, 96
        %v9960 = vpop.permute.xlu0 %9959
        %9961 = vrot.lane.b32.xlu0 %v9952, 96
        %v9962 = vpop.permute.xlu0 %9961
        %9963 = vrot.lane.b32.xlu0 %v9953, 96
        %v9964 = vpop.permute.xlu0 %9963
        %9965 = vrot.lane.b32.xlu0 %v9954, 96
        %v9966 = vpop.permute.xlu0 %9965
        %9967 = vrot.lane.b32.xlu0 %v9955, 96
        %v9968 = vpop.permute.xlu0 %9967
        %9969 = vrot.lane.b32.xlu0 %v9956, 96
        %v9970 = vpop.permute.xlu0 %9969
        %9971 = vrot.lane.b32.xlu0 %v9957, 96
        %v9972 = vpop.permute.xlu0 %9971
        %9973 = vrot.lane.b32.xlu0 %v9958, 96
        %v9974 = vpop.permute.xlu0 %9973
        %v9977 = vsel %vm6474, %v9847, %v9880
        %v9980 = vsel %vm6474, %v9848, %v9882
        %v9983 = vsel %vm6474, %v9849, %v9884
        %v9986 = vsel %vm6474, %v9850, %v9886
        %v9989 = vsel %vm6474, %v9851, %v9888
        %v9992 = vsel %vm6474, %v9852, %v9890
        %v9995 = vsel %vm6474, %v9853, %v9892
        %v9998 = vsel %vm6474, %v9854, %v9894
        %vm9999 = vcmask 523264
        %v10001 = vsel %vm9999, %v9977, %v9920
        %v10003 = vsel %vm9999, %v9980, %v9922
        %v10005 = vsel %vm9999, %v9983, %v9924
        %v10007 = vsel %vm9999, %v9986, %v9926
        %v10009 = vsel %vm9999, %v9989, %v9928
        %v10011 = vsel %vm9999, %v9992, %v9930
        %v10013 = vsel %vm9999, %v9995, %v9932
        %v10015 = vsel %vm9999, %v9998, %v9934
        %vm10016 = vcmask 785408
        %v10018 = vsel %vm10016, %v10001, %v9960
        %v10021 = vsel %vm10016, %v10003, %v9962
        %v10024 = vsel %vm10016, %v10005, %v9964
        %v10027 = vsel %vm10016, %v10007, %v9966
        %v10030 = vsel %vm10016, %v10009, %v9968
        %v10033 = vsel %vm10016, %v10011, %v9970
        %v10036 = vsel %vm10016, %v10013, %v9972
        %v10039 = vsel %vm10016, %v10015, %v9974
        %v10041 = vld [vmem:[%s265 + $0x8] sm:$0xf]
        %v10042 = vld [vmem:[%s265 + $0x24] sm:$0xf]
        %v10043 = vld [vmem:[%s265 + $0x40] sm:$0xf]
        %v10044 = vld [vmem:[%s265 + $0x5c] sm:$0xf]
        %v10045 = vld [vmem:[%s265 + $0x78] sm:$0xf]
        %v10046 = vld [vmem:[%s265 + $0x94] sm:$0xf]
        %v10047 = vld [vmem:[%s265 + $0xb0] sm:$0xf]
        %v10048 = vld [vmem:[%s265 + $0xcc] sm:$0xf]
        %v10049 = vld [vmem:[%s265 + $0xe8] sm:$0xf]
        %v10050 = vld [vmem:[%s265 + $0x104] sm:$0xf]
        %v10051 = vld [vmem:[%s265 + $0x120] sm:$0xf]
        %v10052 = vld [vmem:[%s265 + $0x13c] sm:$0xf]
        %v10053 = vld [vmem:[%s265 + $0x158] sm:$0xf]
        %v10054 = vld [vmem:[%s265 + $0x174] sm:$0xf]
        %v10055 = vld [vmem:[%s265 + $0x190] sm:$0xf]
        %v10056 = vld [vmem:[%s265 + $0x1ac] sm:$0xf]
        %v10073 = vunpack.c.l.b16 %v10041
        %v10074 = vunpack.c.l.b16 %v10042
        %v10075 = vunpack.c.l.b16 %v10043
        %v10076 = vunpack.c.l.b16 %v10044
        %v10077 = vunpack.c.l.b16 %v10045
        %v10078 = vunpack.c.l.b16 %v10046
        %v10079 = vunpack.c.l.b16 %v10047
        %v10080 = vunpack.c.l.b16 %v10048
        %v10081 = vunpack.c.l.b16 %v10049
        %v10082 = vunpack.c.l.b16 %v10050
        %v10083 = vunpack.c.l.b16 %v10051
        %v10084 = vunpack.c.l.b16 %v10052
        %v10085 = vunpack.c.l.b16 %v10053
        %v10086 = vunpack.c.l.b16 %v10054
        %v10087 = vunpack.c.l.b16 %v10055
        %v10088 = vunpack.c.l.b16 %v10056
        %v10089 = vpack.c.b16 %v10074, %v10073
        %v10090 = vpack.c.b16 %v10076, %v10075
        %v10091 = vpack.c.b16 %v10078, %v10077
        %v10092 = vpack.c.b16 %v10080, %v10079
        %v10093 = vpack.c.b16 %v10082, %v10081
        %v10094 = vpack.c.b16 %v10084, %v10083
        %v10095 = vpack.c.b16 %v10086, %v10085
        %v10096 = vpack.c.b16 %v10088, %v10087
        %10105 = vmatpush.bf16.msra.mxu0 %v10096
        %10106 = vmatpush.bf16.msra.mxu0 %v10095
        %10107 = vmatpush.bf16.msra.mxu0 %v10094
        %10108 = vmatpush.bf16.msra.mxu0 %v10093
        %10109 = vmatpush.bf16.msra.mxu0 %v10092
        %10110 = vmatpush.bf16.msra.mxu0 %v10091
        %10111 = vmatpush.bf16.msra.mxu0 %v10090
        %10112 = vmatpush.bf16.msra.mxu0 %v10089
        %10113 = vmatmul.bf16.gmra.mxu0 %v10018
        %v10114 = vpop.f32.mrf.mxu0
        %v10115 = vadd.f32 %v395, %v10114
        %v10116 = vpop.f32.mrf.mxu0
        %v10117 = vadd.f32 %v396, %v10116
        %10118 = vmatmul.bf16.gmra.mxu0 %v10021
        %v10119 = vpop.f32.mrf.mxu0
        %v10120 = vadd.f32 %v397, %v10119
        %v10121 = vpop.f32.mrf.mxu0
        %v10122 = vadd.f32 %v398, %v10121
        %10123 = vmatmul.bf16.gmra.mxu0 %v10024
        %v10124 = vpop.f32.mrf.mxu0
        %v10125 = vadd.f32 %v399, %v10124
        %v10126 = vpop.f32.mrf.mxu0
        %v10127 = vadd.f32 %v400, %v10126
        %10128 = vmatmul.bf16.gmra.mxu0 %v10027
        %v10129 = vpop.f32.mrf.mxu0
        %v10130 = vadd.f32 %v401, %v10129
        %v10131 = vpop.f32.mrf.mxu0
        %v10132 = vadd.f32 %v402, %v10131
        %10133 = vmatmul.bf16.gmra.mxu0 %v10030
        %v10134 = vpop.f32.mrf.mxu0
        %v10135 = vadd.f32 %v403, %v10134
        %v10136 = vpop.f32.mrf.mxu0
        %v10137 = vadd.f32 %v404, %v10136
        %10138 = vmatmul.bf16.gmra.mxu0 %v10033
        %v10139 = vpop.f32.mrf.mxu0
        %v10140 = vadd.f32 %v405, %v10139
        %v10141 = vpop.f32.mrf.mxu0
        %v10142 = vadd.f32 %v406, %v10141
        %10143 = vmatmul.bf16.gmra.mxu0 %v10036
        %v10144 = vpop.f32.mrf.mxu0
        %v10145 = vadd.f32 %v407, %v10144
        %v10146 = vpop.f32.mrf.mxu0
        %v10147 = vadd.f32 %v408, %v10146
        %10148 = vmatmul.bf16.gmra.mxu0 %v10039
        %v10149 = vpop.f32.mrf.mxu0
        %v10150 = vadd.f32 %v409, %v10149
        %v10151 = vpop.f32.mrf.mxu0
        %v10152 = vadd.f32 %v410, %v10151
        %10153 = vdwg.mxu0
        %v10154 = vmul.f32 %v10115, %v10115
        %v10155 = vmul.f32 %v10117, %v10117
        %v10156 = vmul.f32 %v10120, %v10120
        %v10157 = vmul.f32 %v10122, %v10122
        %v10158 = vmul.f32 %v10125, %v10125
        %v10159 = vmul.f32 %v10127, %v10127
        %v10160 = vmul.f32 %v10130, %v10130
        %v10161 = vmul.f32 %v10132, %v10132
        %v10162 = vmul.f32 %v10135, %v10135
        %v10163 = vmul.f32 %v10137, %v10137
        %v10164 = vmul.f32 %v10140, %v10140
        %v10165 = vmul.f32 %v10142, %v10142
        %v10166 = vmul.f32 %v10145, %v10145
        %v10167 = vmul.f32 %v10147, %v10147
        %v10168 = vmul.f32 %v10150, %v10150
        %v10169 = vmul.f32 %v10152, %v10152
        %10170 = vadd.xlane.f32.xlu0 %v10154
        %v10171 = vpop.xlane.xlu0 %10170
        %10172 = vadd.xlane.f32.xlu0 %v10155
        %v10173 = vpop.xlane.xlu0 %10172
        %10174 = vadd.xlane.f32.xlu0 %v10156
        %v10175 = vpop.xlane.xlu0 %10174
        %10176 = vadd.xlane.f32.xlu0 %v10157
        %v10177 = vpop.xlane.xlu0 %10176
        %10178 = vadd.xlane.f32.xlu0 %v10158
        %v10179 = vpop.xlane.xlu0 %10178
        %10180 = vadd.xlane.f32.xlu0 %v10159
        %v10181 = vpop.xlane.xlu0 %10180
        %10182 = vadd.xlane.f32.xlu0 %v10160
        %v10183 = vpop.xlane.xlu0 %10182
        %10184 = vadd.xlane.f32.xlu0 %v10161
        %v10185 = vpop.xlane.xlu0 %10184
        %10186 = vadd.xlane.f32.xlu0 %v10162
        %v10187 = vpop.xlane.xlu0 %10186
        %10188 = vadd.xlane.f32.xlu0 %v10163
        %v10189 = vpop.xlane.xlu0 %10188
        %10190 = vadd.xlane.f32.xlu0 %v10164
        %v10191 = vpop.xlane.xlu0 %10190
        %10192 = vadd.xlane.f32.xlu0 %v10165
        %v10193 = vpop.xlane.xlu0 %10192
        %10194 = vadd.xlane.f32.xlu0 %v10166
        %v10195 = vpop.xlane.xlu0 %10194
        %10196 = vadd.xlane.f32.xlu0 %v10167
        %v10197 = vpop.xlane.xlu0 %10196
        %10198 = vadd.xlane.f32.xlu0 %v10168
        %v10199 = vpop.xlane.xlu0 %10198
        %10200 = vadd.xlane.f32.xlu0 %v10169
        %v10201 = vpop.xlane.xlu0 %10200
        %v10202 = vmul.f32 %v10171, %v466
        %v10203 = vmul.f32 %v10173, %v466
        %v10204 = vmul.f32 %v10175, %v466
        %v10205 = vmul.f32 %v10177, %v466
        %v10206 = vmul.f32 %v10179, %v466
        %v10207 = vmul.f32 %v10181, %v466
        %v10208 = vmul.f32 %v10183, %v466
        %v10209 = vmul.f32 %v10185, %v466
        %v10210 = vmul.f32 %v10187, %v466
        %v10211 = vmul.f32 %v10189, %v466
        %v10212 = vmul.f32 %v10191, %v466
        %v10213 = vmul.f32 %v10193, %v466
        %v10214 = vmul.f32 %v10195, %v466
        %v10215 = vmul.f32 %v10197, %v466
        %v10216 = vmul.f32 %v10199, %v466
        %v10217 = vmul.f32 %v10201, %v466
        %v10218 = vadd.f32 %v10202, 1e-06
        %v10219 = vadd.f32 %v10203, 1e-06
        %v10220 = vadd.f32 %v10204, 1e-06
        %v10221 = vadd.f32 %v10205, 1e-06
        %v10222 = vadd.f32 %v10206, 1e-06
        %v10223 = vadd.f32 %v10207, 1e-06
        %v10224 = vadd.f32 %v10208, 1e-06
        %v10225 = vadd.f32 %v10209, 1e-06
        %v10226 = vadd.f32 %v10210, 1e-06
        %v10227 = vadd.f32 %v10211, 1e-06
        %v10228 = vadd.f32 %v10212, 1e-06
        %v10229 = vadd.f32 %v10213, 1e-06
        %v10230 = vadd.f32 %v10214, 1e-06
        %v10231 = vadd.f32 %v10215, 1e-06
        %v10232 = vadd.f32 %v10216, 1e-06
        %v10233 = vadd.f32 %v10217, 1e-06
        %v10234 = vrsqrt.pop %v10218
        %v10235 = vmul.f32 %v10234, %v10218
        %v10236 = vmul.f32 %v10235, %v10234
        %v10237 = vmul.f32 0.5, %v10236
        %v10238 = vsub.f32 1.5, %v10237
        %v10239 = vmul.f32 %v10234, %v10238
        %vm10240 = vweird.f32 %v10218
        %vm10241 = vweird.f32 %v10234
        %vm10242 = vmor %vm10240, %vm10241
        %v10243 = vsel %vm10242, %v10234, %v10239
        %v10244 = vrsqrt.pop %v10219
        %v10245 = vmul.f32 %v10244, %v10219
        %v10246 = vmul.f32 %v10245, %v10244
        %v10247 = vmul.f32 0.5, %v10246
        %v10248 = vsub.f32 1.5, %v10247
        %v10249 = vmul.f32 %v10244, %v10248
        %vm10250 = vweird.f32 %v10219
        %vm10251 = vweird.f32 %v10244
        %vm10252 = vmor %vm10250, %vm10251
        %v10253 = vsel %vm10252, %v10244, %v10249
        %v10254 = vrsqrt.pop %v10220
        %v10255 = vmul.f32 %v10254, %v10220
        %v10256 = vmul.f32 %v10255, %v10254
        %v10257 = vmul.f32 0.5, %v10256
        %v10258 = vsub.f32 1.5, %v10257
        %v10259 = vmul.f32 %v10254, %v10258
        %vm10260 = vweird.f32 %v10220
        %vm10261 = vweird.f32 %v10254
        %vm10262 = vmor %vm10260, %vm10261
        %v10263 = vsel %vm10262, %v10254, %v10259
        %v10264 = vrsqrt.pop %v10221
        %v10265 = vmul.f32 %v10264, %v10221
        %v10266 = vmul.f32 %v10265, %v10264
        %v10267 = vmul.f32 0.5, %v10266
        %v10268 = vsub.f32 1.5, %v10267
        %v10269 = vmul.f32 %v10264, %v10268
        %vm10270 = vweird.f32 %v10221
        %vm10271 = vweird.f32 %v10264
        %vm10272 = vmor %vm10270, %vm10271
        %v10273 = vsel %vm10272, %v10264, %v10269
        %v10274 = vrsqrt.pop %v10222
        %v10275 = vmul.f32 %v10274, %v10222
        %v10276 = vmul.f32 %v10275, %v10274
        %v10277 = vmul.f32 0.5, %v10276
        %v10278 = vsub.f32 1.5, %v10277
        %v10279 = vmul.f32 %v10274, %v10278
        %vm10280 = vweird.f32 %v10222
        %vm10281 = vweird.f32 %v10274
        %vm10282 = vmor %vm10280, %vm10281
        %v10283 = vsel %vm10282, %v10274, %v10279
        %v10284 = vrsqrt.pop %v10223
        %v10285 = vmul.f32 %v10284, %v10223
        %v10286 = vmul.f32 %v10285, %v10284
        %v10287 = vmul.f32 0.5, %v10286
        %v10288 = vsub.f32 1.5, %v10287
        %v10289 = vmul.f32 %v10284, %v10288
        %vm10290 = vweird.f32 %v10223
        %vm10291 = vweird.f32 %v10284
        %vm10292 = vmor %vm10290, %vm10291
        %v10293 = vsel %vm10292, %v10284, %v10289
        %v10294 = vrsqrt.pop %v10224
        %v10295 = vmul.f32 %v10294, %v10224
        %v10296 = vmul.f32 %v10295, %v10294
        %v10297 = vmul.f32 0.5, %v10296
        %v10298 = vsub.f32 1.5, %v10297
        %v10299 = vmul.f32 %v10294, %v10298
        %vm10300 = vweird.f32 %v10224
        %vm10301 = vweird.f32 %v10294
        %vm10302 = vmor %vm10300, %vm10301
        %v10303 = vsel %vm10302, %v10294, %v10299
        %v10304 = vrsqrt.pop %v10225
        %v10305 = vmul.f32 %v10304, %v10225
        %v10306 = vmul.f32 %v10305, %v10304
        %v10307 = vmul.f32 0.5, %v10306
        %v10308 = vsub.f32 1.5, %v10307
        %v10309 = vmul.f32 %v10304, %v10308
        %vm10310 = vweird.f32 %v10225
        %vm10311 = vweird.f32 %v10304
        %vm10312 = vmor %vm10310, %vm10311
        %v10313 = vsel %vm10312, %v10304, %v10309
        %v10314 = vrsqrt.pop %v10226
        %v10315 = vmul.f32 %v10314, %v10226
        %v10316 = vmul.f32 %v10315, %v10314
        %v10317 = vmul.f32 0.5, %v10316
        %v10318 = vsub.f32 1.5, %v10317
        %v10319 = vmul.f32 %v10314, %v10318
        %vm10320 = vweird.f32 %v10226
        %vm10321 = vweird.f32 %v10314
        %vm10322 = vmor %vm10320, %vm10321
        %v10323 = vsel %vm10322, %v10314, %v10319
        %v10324 = vrsqrt.pop %v10227
        %v10325 = vmul.f32 %v10324, %v10227
        %v10326 = vmul.f32 %v10325, %v10324
        %v10327 = vmul.f32 0.5, %v10326
        %v10328 = vsub.f32 1.5, %v10327
        %v10329 = vmul.f32 %v10324, %v10328
        %vm10330 = vweird.f32 %v10227
        %vm10331 = vweird.f32 %v10324
        %vm10332 = vmor %vm10330, %vm10331
        %v10333 = vsel %vm10332, %v10324, %v10329
        %v10334 = vrsqrt.pop %v10228
        %v10335 = vmul.f32 %v10334, %v10228
        %v10336 = vmul.f32 %v10335, %v10334
        %v10337 = vmul.f32 0.5, %v10336
        %v10338 = vsub.f32 1.5, %v10337
        %v10339 = vmul.f32 %v10334, %v10338
        %vm10340 = vweird.f32 %v10228
        %vm10341 = vweird.f32 %v10334
        %vm10342 = vmor %vm10340, %vm10341
        %v10343 = vsel %vm10342, %v10334, %v10339
        %v10344 = vrsqrt.pop %v10229
        %v10345 = vmul.f32 %v10344, %v10229
        %v10346 = vmul.f32 %v10345, %v10344
        %v10347 = vmul.f32 0.5, %v10346
        %v10348 = vsub.f32 1.5, %v10347
        %v10349 = vmul.f32 %v10344, %v10348
        %vm10350 = vweird.f32 %v10229
        %vm10351 = vweird.f32 %v10344
        %vm10352 = vmor %vm10350, %vm10351
        %v10353 = vsel %vm10352, %v10344, %v10349
        %v10354 = vrsqrt.pop %v10230
        %v10355 = vmul.f32 %v10354, %v10230
        %v10356 = vmul.f32 %v10355, %v10354
        %v10357 = vmul.f32 0.5, %v10356
        %v10358 = vsub.f32 1.5, %v10357
        %v10359 = vmul.f32 %v10354, %v10358
        %vm10360 = vweird.f32 %v10230
        %vm10361 = vweird.f32 %v10354
        %vm10362 = vmor %vm10360, %vm10361
        %v10363 = vsel %vm10362, %v10354, %v10359
        %v10364 = vrsqrt.pop %v10231
        %v10365 = vmul.f32 %v10364, %v10231
        %v10366 = vmul.f32 %v10365, %v10364
        %v10367 = vmul.f32 0.5, %v10366
        %v10368 = vsub.f32 1.5, %v10367
        %v10369 = vmul.f32 %v10364, %v10368
        %vm10370 = vweird.f32 %v10231
        %vm10371 = vweird.f32 %v10364
        %vm10372 = vmor %vm10370, %vm10371
        %v10373 = vsel %vm10372, %v10364, %v10369
        %v10374 = vrsqrt.pop %v10232
        %v10375 = vmul.f32 %v10374, %v10232
        %v10376 = vmul.f32 %v10375, %v10374
        %v10377 = vmul.f32 0.5, %v10376
        %v10378 = vsub.f32 1.5, %v10377
        %v10379 = vmul.f32 %v10374, %v10378
        %vm10380 = vweird.f32 %v10232
        %vm10381 = vweird.f32 %v10374
        %vm10382 = vmor %vm10380, %vm10381
        %v10383 = vsel %vm10382, %v10374, %v10379
        %v10384 = vrsqrt.pop %v10233
        %v10385 = vmul.f32 %v10384, %v10233
        %v10386 = vmul.f32 %v10385, %v10384
        %v10387 = vmul.f32 0.5, %v10386
        %v10388 = vsub.f32 1.5, %v10387
        %v10389 = vmul.f32 %v10384, %v10388
        %vm10390 = vweird.f32 %v10233
        %vm10391 = vweird.f32 %v10384
        %vm10392 = vmor %vm10390, %vm10391
        %v10393 = vsel %vm10392, %v10384, %v10389
        %v10394 = vmul.f32 %v10115, %v10243
        %v10395 = vmul.f32 %v10117, %v10253
        %v10396 = vmul.f32 %v10120, %v10263
        %v10397 = vmul.f32 %v10122, %v10273
        %v10398 = vmul.f32 %v10125, %v10283
        %v10399 = vmul.f32 %v10127, %v10293
        %v10400 = vmul.f32 %v10130, %v10303
        %v10401 = vmul.f32 %v10132, %v10313
        %v10402 = vmul.f32 %v10135, %v10323
        %v10403 = vmul.f32 %v10137, %v10333
        %v10404 = vmul.f32 %v10140, %v10343
        %v10405 = vmul.f32 %v10142, %v10353
        %v10406 = vmul.f32 %v10145, %v10363
        %v10407 = vmul.f32 %v10147, %v10373
        %v10408 = vmul.f32 %v10150, %v10383
        %v10409 = vmul.f32 %v10152, %v10393
        %v10410 = vperm.slane %v411, 1
        %v10411 = vmul.f32 %v10394, %v10410
        %v10412 = vmul.f32 %v10395, %v10410
        %v10413 = vmul.f32 %v10396, %v10410
        %v10414 = vmul.f32 %v10397, %v10410
        %v10415 = vmul.f32 %v10398, %v10410
        %v10416 = vmul.f32 %v10399, %v10410
        %v10417 = vmul.f32 %v10400, %v10410
        %v10418 = vmul.f32 %v10401, %v10410
        %v10419 = vmul.f32 %v10402, %v10410
        %v10420 = vmul.f32 %v10403, %v10410
        %v10421 = vmul.f32 %v10404, %v10410
        %v10422 = vmul.f32 %v10405, %v10410
        %v10423 = vmul.f32 %v10406, %v10410
        %v10424 = vmul.f32 %v10407, %v10410
        %v10425 = vmul.f32 %v10408, %v10410
        %v10426 = vmul.f32 %v10409, %v10410
        %v10427 = vpack.c.bf16 %v10412, %v10411
        %v10428 = vpack.c.bf16 %v10414, %v10413
        %v10429 = vpack.c.bf16 %v10416, %v10415
        %v10430 = vpack.c.bf16 %v10418, %v10417
        %v10431 = vpack.c.bf16 %v10420, %v10419
        %v10432 = vpack.c.bf16 %v10422, %v10421
        %v10433 = vpack.c.bf16 %v10424, %v10423
        %v10434 = vpack.c.bf16 %v10426, %v10425
        %v10435 = vld [vmem:[%s265 + $0xc] sm:$0xff]
        %v10436 = vld [vmem:[%s265 + $0x14] sm:$0xff]
        %v10437 = vld [vmem:[%s265 + $0x28] sm:$0xff]
        %v10438 = vld [vmem:[%s265 + $0x30] sm:$0xff]
        %v10439 = vld [vmem:[%s265 + $0x44] sm:$0xff]
        %v10440 = vld [vmem:[%s265 + $0x4c] sm:$0xff]
        %v10441 = vld [vmem:[%s265 + $0x60] sm:$0xff]
        %v10442 = vld [vmem:[%s265 + $0x68] sm:$0xff]
        %v10443 = vld [vmem:[%s265 + $0x7c] sm:$0xff]
        %v10444 = vld [vmem:[%s265 + $0x84] sm:$0xff]
        %v10445 = vld [vmem:[%s265 + $0x98] sm:$0xff]
        %v10446 = vld [vmem:[%s265 + $0xa0] sm:$0xff]
        %v10447 = vld [vmem:[%s265 + $0xb4] sm:$0xff]
        %v10448 = vld [vmem:[%s265 + $0xbc] sm:$0xff]
        %v10449 = vld [vmem:[%s265 + $0xd0] sm:$0xff]
        %v10450 = vld [vmem:[%s265 + $0xd8] sm:$0xff]
        %v10451 = vld [vmem:[%s265 + $0xec] sm:$0xff]
        %v10452 = vld [vmem:[%s265 + $0xf4] sm:$0xff]
        %v10453 = vld [vmem:[%s265 + $0x108] sm:$0xff]
        %v10454 = vld [vmem:[%s265 + $0x110] sm:$0xff]
        %v10455 = vld [vmem:[%s265 + $0x124] sm:$0xff]
        %v10456 = vld [vmem:[%s265 + $0x12c] sm:$0xff]
        %v10457 = vld [vmem:[%s265 + $0x140] sm:$0xff]
        %v10458 = vld [vmem:[%s265 + $0x148] sm:$0xff]
        %v10459 = vld [vmem:[%s265 + $0x15c] sm:$0xff]
        %v10460 = vld [vmem:[%s265 + $0x164] sm:$0xff]
        %v10461 = vld [vmem:[%s265 + $0x178] sm:$0xff]
        %v10462 = vld [vmem:[%s265 + $0x180] sm:$0xff]
        %v10463 = vld [vmem:[%s265 + $0x194] sm:$0xff]
        %v10464 = vld [vmem:[%s265 + $0x19c] sm:$0xff]
        %v10465 = vld [vmem:[%s265 + $0x1b0] sm:$0xff]
        %v10466 = vld [vmem:[%s265 + $0x1b8] sm:$0xff]
        %v10499 = vunpack.c.l.b16 %v10435
        %v10500 = vunpack.c.h.b16 %v10435
        %v10501 = vunpack.c.l.b16 %v10436
        %v10502 = vunpack.c.h.b16 %v10436
        %v10503 = vunpack.c.l.b16 %v10437
        %v10504 = vunpack.c.h.b16 %v10437
        %v10505 = vunpack.c.l.b16 %v10438
        %v10506 = vunpack.c.h.b16 %v10438
        %v10507 = vunpack.c.l.b16 %v10439
        %v10508 = vunpack.c.h.b16 %v10439
        %v10509 = vunpack.c.l.b16 %v10440
        %v10510 = vunpack.c.h.b16 %v10440
        %v10511 = vunpack.c.l.b16 %v10441
        %v10512 = vunpack.c.h.b16 %v10441
        %v10513 = vunpack.c.l.b16 %v10442
        %v10514 = vunpack.c.h.b16 %v10442
        %v10515 = vunpack.c.l.b16 %v10443
        %v10516 = vunpack.c.h.b16 %v10443
        %v10517 = vunpack.c.l.b16 %v10444
        %v10518 = vunpack.c.h.b16 %v10444
        %v10519 = vunpack.c.l.b16 %v10445
        %v10520 = vunpack.c.h.b16 %v10445
        %v10521 = vunpack.c.l.b16 %v10446
        %v10522 = vunpack.c.h.b16 %v10446
        %v10523 = vunpack.c.l.b16 %v10447
        %v10524 = vunpack.c.h.b16 %v10447
        %v10525 = vunpack.c.l.b16 %v10448
        %v10526 = vunpack.c.h.b16 %v10448
        %v10527 = vunpack.c.l.b16 %v10449
        %v10528 = vunpack.c.h.b16 %v10449
        %v10529 = vunpack.c.l.b16 %v10450
        %v10530 = vunpack.c.h.b16 %v10450
        %v10531 = vunpack.c.l.b16 %v10451
        %v10532 = vunpack.c.h.b16 %v10451
        %v10533 = vunpack.c.l.b16 %v10452
        %v10534 = vunpack.c.h.b16 %v10452
        %v10535 = vunpack.c.l.b16 %v10453
        %v10536 = vunpack.c.h.b16 %v10453
        %v10537 = vunpack.c.l.b16 %v10454
        %v10538 = vunpack.c.h.b16 %v10454
        %v10539 = vunpack.c.l.b16 %v10455
        %v10540 = vunpack.c.h.b16 %v10455
        %v10541 = vunpack.c.l.b16 %v10456
        %v10542 = vunpack.c.h.b16 %v10456
        %v10543 = vunpack.c.l.b16 %v10457
        %v10544 = vunpack.c.h.b16 %v10457
        %v10545 = vunpack.c.l.b16 %v10458
        %v10546 = vunpack.c.h.b16 %v10458
        %v10547 = vunpack.c.l.b16 %v10459
        %v10548 = vunpack.c.h.b16 %v10459
        %v10549 = vunpack.c.l.b16 %v10460
        %v10550 = vunpack.c.h.b16 %v10460
        %v10551 = vunpack.c.l.b16 %v10461
        %v10552 = vunpack.c.h.b16 %v10461
        %v10553 = vunpack.c.l.b16 %v10462
        %v10554 = vunpack.c.h.b16 %v10462
        %v10555 = vunpack.c.l.b16 %v10463
        %v10556 = vunpack.c.h.b16 %v10463
        %v10557 = vunpack.c.l.b16 %v10464
        %v10558 = vunpack.c.h.b16 %v10464
        %v10559 = vunpack.c.l.b16 %v10465
        %v10560 = vunpack.c.h.b16 %v10465
        %v10561 = vunpack.c.l.b16 %v10466
        %v10562 = vunpack.c.h.b16 %v10466
        %v10563 = vpack.c.b16 %v10503, %v10499
        %v10564 = vpack.c.b16 %v10504, %v10500
        %v10565 = vpack.c.b16 %v10505, %v10501
        %v10566 = vpack.c.b16 %v10506, %v10502
        %v10567 = vpack.c.b16 %v10511, %v10507
        %v10568 = vpack.c.b16 %v10512, %v10508
        %v10569 = vpack.c.b16 %v10513, %v10509
        %v10570 = vpack.c.b16 %v10514, %v10510
        %v10571 = vpack.c.b16 %v10519, %v10515
        %v10572 = vpack.c.b16 %v10520, %v10516
        %v10573 = vpack.c.b16 %v10521, %v10517
        %v10574 = vpack.c.b16 %v10522, %v10518
        %v10575 = vpack.c.b16 %v10527, %v10523
        %v10576 = vpack.c.b16 %v10528, %v10524
        %v10577 = vpack.c.b16 %v10529, %v10525
        %v10578 = vpack.c.b16 %v10530, %v10526
        %v10579 = vpack.c.b16 %v10535, %v10531
        %v10580 = vpack.c.b16 %v10536, %v10532
        %v10581 = vpack.c.b16 %v10537, %v10533
        %v10582 = vpack.c.b16 %v10538, %v10534
        %v10583 = vpack.c.b16 %v10543, %v10539
        %v10584 = vpack.c.b16 %v10544, %v10540
        %v10585 = vpack.c.b16 %v10545, %v10541
        %v10586 = vpack.c.b16 %v10546, %v10542
        %v10587 = vpack.c.b16 %v10551, %v10547
        %v10588 = vpack.c.b16 %v10552, %v10548
        %v10589 = vpack.c.b16 %v10553, %v10549
        %v10590 = vpack.c.b16 %v10554, %v10550
        %v10591 = vpack.c.b16 %v10559, %v10555
        %v10592 = vpack.c.b16 %v10560, %v10556
        %v10593 = vpack.c.b16 %v10561, %v10557
        %v10594 = vpack.c.b16 %v10562, %v10558
        %10627 = vmatpush.bf16.msra.mxu0 %v10591
        %10628 = vmatpush.bf16.msra.mxu0 %v10587
        %10629 = vmatpush.bf16.msra.mxu0 %v10583
        %10630 = vmatpush.bf16.msra.mxu0 %v10579
        %10631 = vmatpush.bf16.msra.mxu0 %v10575
        %10632 = vmatpush.bf16.msra.mxu0 %v10571
        %10633 = vmatpush.bf16.msra.mxu0 %v10567
        %10634 = vmatpush.bf16.msra.mxu0 %v10563
        %10635 = vmatmul.bf16.gmra.mxu0 %v10427
        %v10636 = vpop.f32.mrf.mxu0
        %v10637 = vadd.f32 0.0, %v10636
        %v10638 = vpop.f32.mrf.mxu0
        %v10639 = vadd.f32 0.0, %v10638
        %10640 = vmatmul.bf16.gmra.mxu0 %v10428
        %v10641 = vpop.f32.mrf.mxu0
        %v10642 = vadd.f32 0.0, %v10641
        %v10643 = vpop.f32.mrf.mxu0
        %v10644 = vadd.f32 0.0, %v10643
        %10645 = vmatmul.bf16.gmra.mxu0 %v10429
        %v10646 = vpop.f32.mrf.mxu0
        %v10647 = vadd.f32 0.0, %v10646
        %v10648 = vpop.f32.mrf.mxu0
        %v10649 = vadd.f32 0.0, %v10648
        %10650 = vmatmul.bf16.gmra.mxu0 %v10430
        %v10651 = vpop.f32.mrf.mxu0
        %v10652 = vadd.f32 0.0, %v10651
        %v10653 = vpop.f32.mrf.mxu0
        %v10654 = vadd.f32 0.0, %v10653
        %10655 = vmatmul.bf16.gmra.mxu0 %v10431
        %v10656 = vpop.f32.mrf.mxu0
        %v10657 = vadd.f32 0.0, %v10656
        %v10658 = vpop.f32.mrf.mxu0
        %v10659 = vadd.f32 0.0, %v10658
        %10660 = vmatmul.bf16.gmra.mxu0 %v10432
        %v10661 = vpop.f32.mrf.mxu0
        %v10662 = vadd.f32 0.0, %v10661
        %v10663 = vpop.f32.mrf.mxu0
        %v10664 = vadd.f32 0.0, %v10663
        %10665 = vmatmul.bf16.gmra.mxu0 %v10433
        %v10666 = vpop.f32.mrf.mxu0
        %v10667 = vadd.f32 0.0, %v10666
        %v10668 = vpop.f32.mrf.mxu0
        %v10669 = vadd.f32 0.0, %v10668
        %10670 = vmatmul.bf16.gmra.mxu0 %v10434
        %v10671 = vpop.f32.mrf.mxu0
        %v10672 = vadd.f32 0.0, %v10671
        %v10673 = vpop.f32.mrf.mxu0
        %v10674 = vadd.f32 0.0, %v10673
        %10675 = vdwg.mxu0
        %10676 = vmatpush.bf16.msra.mxu0 %v10592
        %10677 = vmatpush.bf16.msra.mxu0 %v10588
        %10678 = vmatpush.bf16.msra.mxu0 %v10584
        %10679 = vmatpush.bf16.msra.mxu0 %v10580
        %10680 = vmatpush.bf16.msra.mxu0 %v10576
        %10681 = vmatpush.bf16.msra.mxu0 %v10572
        %10682 = vmatpush.bf16.msra.mxu0 %v10568
        %10683 = vmatpush.bf16.msra.mxu0 %v10564
        %10684 = vmatmul.bf16.gmra.mxu0 %v10427
        %v10685 = vpop.f32.mrf.mxu0
        %v10686 = vadd.f32 0.0, %v10685
        %v10687 = vpop.f32.mrf.mxu0
        %v10688 = vadd.f32 0.0, %v10687
        %10689 = vmatmul.bf16.gmra.mxu0 %v10428
        %v10690 = vpop.f32.mrf.mxu0
        %v10691 = vadd.f32 0.0, %v10690
        %v10692 = vpop.f32.mrf.mxu0
        %v10693 = vadd.f32 0.0, %v10692
        %10694 = vmatmul.bf16.gmra.mxu0 %v10429
        %v10695 = vpop.f32.mrf.mxu0
        %v10696 = vadd.f32 0.0, %v10695
        %v10697 = vpop.f32.mrf.mxu0
        %v10698 = vadd.f32 0.0, %v10697
        %10699 = vmatmul.bf16.gmra.mxu0 %v10430
        %v10700 = vpop.f32.mrf.mxu0
        %v10701 = vadd.f32 0.0, %v10700
        %v10702 = vpop.f32.mrf.mxu0
        %v10703 = vadd.f32 0.0, %v10702
        %10704 = vmatmul.bf16.gmra.mxu0 %v10431
        %v10705 = vpop.f32.mrf.mxu0
        %v10706 = vadd.f32 0.0, %v10705
        %v10707 = vpop.f32.mrf.mxu0
        %v10708 = vadd.f32 0.0, %v10707
        %10709 = vmatmul.bf16.gmra.mxu0 %v10432
        %v10710 = vpop.f32.mrf.mxu0
        %v10711 = vadd.f32 0.0, %v10710
        %v10712 = vpop.f32.mrf.mxu0
        %v10713 = vadd.f32 0.0, %v10712
        %10714 = vmatmul.bf16.gmra.mxu0 %v10433
        %v10715 = vpop.f32.mrf.mxu0
        %v10716 = vadd.f32 0.0, %v10715
        %v10717 = vpop.f32.mrf.mxu0
        %v10718 = vadd.f32 0.0, %v10717
        %10719 = vmatmul.bf16.gmra.mxu0 %v10434
        %v10720 = vpop.f32.mrf.mxu0
        %v10721 = vadd.f32 0.0, %v10720
        %v10722 = vpop.f32.mrf.mxu0
        %v10723 = vadd.f32 0.0, %v10722
        %10724 = vdwg.mxu0
        %10725 = vmatpush.bf16.msra.mxu0 %v10593
        %10726 = vmatpush.bf16.msra.mxu0 %v10589
        %10727 = vmatpush.bf16.msra.mxu0 %v10585
        %10728 = vmatpush.bf16.msra.mxu0 %v10581
        %10729 = vmatpush.bf16.msra.mxu0 %v10577
        %10730 = vmatpush.bf16.msra.mxu0 %v10573
        %10731 = vmatpush.bf16.msra.mxu0 %v10569
        %10732 = vmatpush.bf16.msra.mxu0 %v10565
        %10733 = vmatmul.bf16.gmra.mxu0 %v10427
        %v10734 = vpop.f32.mrf.mxu0
        %v10735 = vadd.f32 0.0, %v10734
        %v10736 = vpop.f32.mrf.mxu0
        %v10737 = vadd.f32 0.0, %v10736
        %10738 = vmatmul.bf16.gmra.mxu0 %v10428
        %v10739 = vpop.f32.mrf.mxu0
        %v10740 = vadd.f32 0.0, %v10739
        %v10741 = vpop.f32.mrf.mxu0
        %v10742 = vadd.f32 0.0, %v10741
        %10743 = vmatmul.bf16.gmra.mxu0 %v10429
        %v10744 = vpop.f32.mrf.mxu0
        %v10745 = vadd.f32 0.0, %v10744
        %v10746 = vpop.f32.mrf.mxu0
        %v10747 = vadd.f32 0.0, %v10746
        %10748 = vmatmul.bf16.gmra.mxu0 %v10430
        %v10749 = vpop.f32.mrf.mxu0
        %v10750 = vadd.f32 0.0, %v10749
        %v10751 = vpop.f32.mrf.mxu0
        %v10752 = vadd.f32 0.0, %v10751
        %10753 = vmatmul.bf16.gmra.mxu0 %v10431
        %v10754 = vpop.f32.mrf.mxu0
        %v10755 = vadd.f32 0.0, %v10754
        %v10756 = vpop.f32.mrf.mxu0
        %v10757 = vadd.f32 0.0, %v10756
        %10758 = vmatmul.bf16.gmra.mxu0 %v10432
        %v10759 = vpop.f32.mrf.mxu0
        %v10760 = vadd.f32 0.0, %v10759
        %v10761 = vpop.f32.mrf.mxu0
        %v10762 = vadd.f32 0.0, %v10761
        %10763 = vmatmul.bf16.gmra.mxu0 %v10433
        %v10764 = vpop.f32.mrf.mxu0
        %v10765 = vadd.f32 0.0, %v10764
        %v10766 = vpop.f32.mrf.mxu0
        %v10767 = vadd.f32 0.0, %v10766
        %10768 = vmatmul.bf16.gmra.mxu0 %v10434
        %v10769 = vpop.f32.mrf.mxu0
        %v10770 = vadd.f32 0.0, %v10769
        %v10771 = vpop.f32.mrf.mxu0
        %v10772 = vadd.f32 0.0, %v10771
        %10773 = vdwg.mxu0
        %10774 = vmatpush.bf16.msra.mxu0 %v10594
        %10775 = vmatpush.bf16.msra.mxu0 %v10590
        %10776 = vmatpush.bf16.msra.mxu0 %v10586
        %10777 = vmatpush.bf16.msra.mxu0 %v10582
        %10778 = vmatpush.bf16.msra.mxu0 %v10578
        %10779 = vmatpush.bf16.msra.mxu0 %v10574
        %10780 = vmatpush.bf16.msra.mxu0 %v10570
        %10781 = vmatpush.bf16.msra.mxu0 %v10566
        %10782 = vmatmul.bf16.gmra.mxu0 %v10427
        %v10783 = vpop.f32.mrf.mxu0
        %v10784 = vadd.f32 0.0, %v10783
        %v10785 = vpop.f32.mrf.mxu0
        %v10786 = vadd.f32 0.0, %v10785
        %10787 = vmatmul.bf16.gmra.mxu0 %v10428
        %v10788 = vpop.f32.mrf.mxu0
        %v10789 = vadd.f32 0.0, %v10788
        %v10790 = vpop.f32.mrf.mxu0
        %v10791 = vadd.f32 0.0, %v10790
        %10792 = vmatmul.bf16.gmra.mxu0 %v10429
        %v10793 = vpop.f32.mrf.mxu0
        %v10794 = vadd.f32 0.0, %v10793
        %v10795 = vpop.f32.mrf.mxu0
        %v10796 = vadd.f32 0.0, %v10795
        %10797 = vmatmul.bf16.gmra.mxu0 %v10430
        %v10798 = vpop.f32.mrf.mxu0
        %v10799 = vadd.f32 0.0, %v10798
        %v10800 = vpop.f32.mrf.mxu0
        %v10801 = vadd.f32 0.0, %v10800
        %10802 = vmatmul.bf16.gmra.mxu0 %v10431
        %v10803 = vpop.f32.mrf.mxu0
        %v10804 = vadd.f32 0.0, %v10803
        %v10805 = vpop.f32.mrf.mxu0
        %v10806 = vadd.f32 0.0, %v10805
        %10807 = vmatmul.bf16.gmra.mxu0 %v10432
        %v10808 = vpop.f32.mrf.mxu0
        %v10809 = vadd.f32 0.0, %v10808
        %v10810 = vpop.f32.mrf.mxu0
        %v10811 = vadd.f32 0.0, %v10810
        %10812 = vmatmul.bf16.gmra.mxu0 %v10433
        %v10813 = vpop.f32.mrf.mxu0
        %v10814 = vadd.f32 0.0, %v10813
        %v10815 = vpop.f32.mrf.mxu0
        %v10816 = vadd.f32 0.0, %v10815
        %10817 = vmatmul.bf16.gmra.mxu0 %v10434
        %v10818 = vpop.f32.mrf.mxu0
        %v10819 = vadd.f32 0.0, %v10818
        %v10820 = vpop.f32.mrf.mxu0
        %v10821 = vadd.f32 0.0, %v10820
        %10822 = vdwg.mxu0
        %v10823 = vxor.u32 %v10637, 2147483648
        %v10824 = vxor.u32 %v10686, 2147483648
        %v10825 = vxor.u32 %v10639, 2147483648
        %v10826 = vxor.u32 %v10688, 2147483648
        %v10827 = vxor.u32 %v10642, 2147483648
        %v10828 = vxor.u32 %v10691, 2147483648
        %v10829 = vxor.u32 %v10644, 2147483648
        %v10830 = vxor.u32 %v10693, 2147483648
        %v10831 = vxor.u32 %v10647, 2147483648
        %v10832 = vxor.u32 %v10696, 2147483648
        %v10833 = vxor.u32 %v10649, 2147483648
        %v10834 = vxor.u32 %v10698, 2147483648
        %v10835 = vxor.u32 %v10652, 2147483648
        %v10836 = vxor.u32 %v10701, 2147483648
        %v10837 = vxor.u32 %v10654, 2147483648
        %v10838 = vxor.u32 %v10703, 2147483648
        %v10839 = vxor.u32 %v10657, 2147483648
        %v10840 = vxor.u32 %v10706, 2147483648
        %v10841 = vxor.u32 %v10659, 2147483648
        %v10842 = vxor.u32 %v10708, 2147483648
        %v10843 = vxor.u32 %v10662, 2147483648
        %v10844 = vxor.u32 %v10711, 2147483648
        %v10845 = vxor.u32 %v10664, 2147483648
        %v10846 = vxor.u32 %v10713, 2147483648
        %v10847 = vxor.u32 %v10667, 2147483648
        %v10848 = vxor.u32 %v10716, 2147483648
        %v10849 = vxor.u32 %v10669, 2147483648
        %v10850 = vxor.u32 %v10718, 2147483648
        %v10851 = vxor.u32 %v10672, 2147483648
        %v10852 = vxor.u32 %v10721, 2147483648
        %v10853 = vxor.u32 %v10674, 2147483648
        %v10854 = vxor.u32 %v10723, 2147483648
        %v10855 = vmul.f32 %v10823, 1.442695
        %v10856 = vpow.pop %v10855
        %v10857 = vmul.f32 %v10824, 1.442695
        %v10858 = vpow.pop %v10857
        %v10859 = vmul.f32 %v10825, 1.442695
        %v10860 = vpow.pop %v10859
        %v10861 = vmul.f32 %v10826, 1.442695
        %v10862 = vpow.pop %v10861
        %v10863 = vmul.f32 %v10827, 1.442695
        %v10864 = vpow.pop %v10863
        %v10865 = vmul.f32 %v10828, 1.442695
        %v10866 = vpow.pop %v10865
        %v10867 = vmul.f32 %v10829, 1.442695
        %v10868 = vpow.pop %v10867
        %v10869 = vmul.f32 %v10830, 1.442695
        %v10870 = vpow.pop %v10869
        %v10871 = vmul.f32 %v10831, 1.442695
        %v10872 = vpow.pop %v10871
        %v10873 = vmul.f32 %v10832, 1.442695
        %v10874 = vpow.pop %v10873
        %v10875 = vmul.f32 %v10833, 1.442695
        %v10876 = vpow.pop %v10875
        %v10877 = vmul.f32 %v10834, 1.442695
        %v10878 = vpow.pop %v10877
        %v10879 = vmul.f32 %v10835, 1.442695
        %v10880 = vpow.pop %v10879
        %v10881 = vmul.f32 %v10836, 1.442695
        %v10882 = vpow.pop %v10881
        %v10883 = vmul.f32 %v10837, 1.442695
        %v10884 = vpow.pop %v10883
        %v10885 = vmul.f32 %v10838, 1.442695
        %v10886 = vpow.pop %v10885
        %v10887 = vmul.f32 %v10839, 1.442695
        %v10888 = vpow.pop %v10887
        %v10889 = vmul.f32 %v10840, 1.442695
        %v10890 = vpow.pop %v10889
        %v10891 = vmul.f32 %v10841, 1.442695
        %v10892 = vpow.pop %v10891
        %v10893 = vmul.f32 %v10842, 1.442695
        %v10894 = vpow.pop %v10893
        %v10895 = vmul.f32 %v10843, 1.442695
        %v10896 = vpow.pop %v10895
        %v10897 = vmul.f32 %v10844, 1.442695
        %v10898 = vpow.pop %v10897
        %v10899 = vmul.f32 %v10845, 1.442695
        %v10900 = vpow.pop %v10899
        %v10901 = vmul.f32 %v10846, 1.442695
        %v10902 = vpow.pop %v10901
        %v10903 = vmul.f32 %v10847, 1.442695
        %v10904 = vpow.pop %v10903
        %v10905 = vmul.f32 %v10848, 1.442695
        %v10906 = vpow.pop %v10905
        %v10907 = vmul.f32 %v10849, 1.442695
        %v10908 = vpow.pop %v10907
        %v10909 = vmul.f32 %v10850, 1.442695
        %v10910 = vpow.pop %v10909
        %v10911 = vmul.f32 %v10851, 1.442695
        %v10912 = vpow.pop %v10911
        %v10913 = vmul.f32 %v10852, 1.442695
        %v10914 = vpow.pop %v10913
        %v10915 = vmul.f32 %v10853, 1.442695
        %v10916 = vpow.pop %v10915
        %v10917 = vmul.f32 %v10854, 1.442695
        %v10918 = vpow.pop %v10917
        %v10919 = vadd.f32 %v10856, 1.0
        %v10920 = vadd.f32 %v10858, 1.0
        %v10921 = vadd.f32 %v10860, 1.0
        %v10922 = vadd.f32 %v10862, 1.0
        %v10923 = vadd.f32 %v10864, 1.0
        %v10924 = vadd.f32 %v10866, 1.0
        %v10925 = vadd.f32 %v10868, 1.0
        %v10926 = vadd.f32 %v10870, 1.0
        %v10927 = vadd.f32 %v10872, 1.0
        %v10928 = vadd.f32 %v10874, 1.0
        %v10929 = vadd.f32 %v10876, 1.0
        %v10930 = vadd.f32 %v10878, 1.0
        %v10931 = vadd.f32 %v10880, 1.0
        %v10932 = vadd.f32 %v10882, 1.0
        %v10933 = vadd.f32 %v10884, 1.0
        %v10934 = vadd.f32 %v10886, 1.0
        %v10935 = vadd.f32 %v10888, 1.0
        %v10936 = vadd.f32 %v10890, 1.0
        %v10937 = vadd.f32 %v10892, 1.0
        %v10938 = vadd.f32 %v10894, 1.0
        %v10939 = vadd.f32 %v10896, 1.0
        %v10940 = vadd.f32 %v10898, 1.0
        %v10941 = vadd.f32 %v10900, 1.0
        %v10942 = vadd.f32 %v10902, 1.0
        %v10943 = vadd.f32 %v10904, 1.0
        %v10944 = vadd.f32 %v10906, 1.0
        %v10945 = vadd.f32 %v10908, 1.0
        %v10946 = vadd.f32 %v10910, 1.0
        %v10947 = vadd.f32 %v10912, 1.0
        %v10948 = vadd.f32 %v10914, 1.0
        %v10949 = vadd.f32 %v10916, 1.0
        %v10950 = vadd.f32 %v10918, 1.0
        %v10951 = vrcp.pop %v10919
        %v10952 = vmul.f32 %v10919, %v10951
        %v10953 = vsub.f32 1.0, %v10952
        %v10954 = vmul.f32 %v10951, %v10953
        %v10955 = vadd.f32 %v10951, %v10954
        %vm10956 = vweird.f32 %v10919
        %vm10957 = vweird.f32 %v10951
        %vm10958 = vmor %vm10956, %vm10957
        %v10959 = vsel %vm10958, %v10951, %v10955
        %v10960 = vand.u32 2147483647, %v10919
        %vm10961 = vcmp.eq.f32.partialorder %v10960, 8.507059e+37
        %v10962 = vand.u32 %v10919, 2147483648
        %v10963 = vor.u32 1.1754944e-38, %v10962
        %v10964 = vsel %vm10961, %v10963, %v10959
        %v10965 = vmul.f32 1.0, %v10964
        %v10966 = vrcp.pop %v10920
        %v10967 = vmul.f32 %v10920, %v10966
        %v10968 = vsub.f32 1.0, %v10967
        %v10969 = vmul.f32 %v10966, %v10968
        %v10970 = vadd.f32 %v10966, %v10969
        %vm10971 = vweird.f32 %v10920
        %vm10972 = vweird.f32 %v10966
        %vm10973 = vmor %vm10971, %vm10972
        %v10974 = vsel %vm10973, %v10966, %v10970
        %v10975 = vand.u32 2147483647, %v10920
        %vm10976 = vcmp.eq.f32.partialorder %v10975, 8.507059e+37
        %v10977 = vand.u32 %v10920, 2147483648
        %v10978 = vor.u32 1.1754944e-38, %v10977
        %v10979 = vsel %vm10976, %v10978, %v10974
        %v10980 = vmul.f32 1.0, %v10979
        %v10981 = vrcp.pop %v10921
        %v10982 = vmul.f32 %v10921, %v10981
        %v10983 = vsub.f32 1.0, %v10982
        %v10984 = vmul.f32 %v10981, %v10983
        %v10985 = vadd.f32 %v10981, %v10984
        %vm10986 = vweird.f32 %v10921
        %vm10987 = vweird.f32 %v10981
        %vm10988 = vmor %vm10986, %vm10987
        %v10989 = vsel %vm10988, %v10981, %v10985
        %v10990 = vand.u32 2147483647, %v10921
        %vm10991 = vcmp.eq.f32.partialorder %v10990, 8.507059e+37
        %v10992 = vand.u32 %v10921, 2147483648
        %v10993 = vor.u32 1.1754944e-38, %v10992
        %v10994 = vsel %vm10991, %v10993, %v10989
        %v10995 = vmul.f32 1.0, %v10994
        %v10996 = vrcp.pop %v10922
        %v10997 = vmul.f32 %v10922, %v10996
        %v10998 = vsub.f32 1.0, %v10997
        %v10999 = vmul.f32 %v10996, %v10998
        %v11000 = vadd.f32 %v10996, %v10999
        %vm11001 = vweird.f32 %v10922
        %vm11002 = vweird.f32 %v10996
        %vm11003 = vmor %vm11001, %vm11002
        %v11004 = vsel %vm11003, %v10996, %v11000
        %v11005 = vand.u32 2147483647, %v10922
        %vm11006 = vcmp.eq.f32.partialorder %v11005, 8.507059e+37
        %v11007 = vand.u32 %v10922, 2147483648
        %v11008 = vor.u32 1.1754944e-38, %v11007
        %v11009 = vsel %vm11006, %v11008, %v11004
        %v11010 = vmul.f32 1.0, %v11009
        %v11011 = vrcp.pop %v10923
        %v11012 = vmul.f32 %v10923, %v11011
        %v11013 = vsub.f32 1.0, %v11012
        %v11014 = vmul.f32 %v11011, %v11013
        %v11015 = vadd.f32 %v11011, %v11014
        %vm11016 = vweird.f32 %v10923
        %vm11017 = vweird.f32 %v11011
        %vm11018 = vmor %vm11016, %vm11017
        %v11019 = vsel %vm11018, %v11011, %v11015
        %v11020 = vand.u32 2147483647, %v10923
        %vm11021 = vcmp.eq.f32.partialorder %v11020, 8.507059e+37
        %v11022 = vand.u32 %v10923, 2147483648
        %v11023 = vor.u32 1.1754944e-38, %v11022
        %v11024 = vsel %vm11021, %v11023, %v11019
        %v11025 = vmul.f32 1.0, %v11024
        %v11026 = vrcp.pop %v10924
        %v11027 = vmul.f32 %v10924, %v11026
        %v11028 = vsub.f32 1.0, %v11027
        %v11029 = vmul.f32 %v11026, %v11028
        %v11030 = vadd.f32 %v11026, %v11029
        %vm11031 = vweird.f32 %v10924
        %vm11032 = vweird.f32 %v11026
        %vm11033 = vmor %vm11031, %vm11032
        %v11034 = vsel %vm11033, %v11026, %v11030
        %v11035 = vand.u32 2147483647, %v10924
        %vm11036 = vcmp.eq.f32.partialorder %v11035, 8.507059e+37
        %v11037 = vand.u32 %v10924, 2147483648
        %v11038 = vor.u32 1.1754944e-38, %v11037
        %v11039 = vsel %vm11036, %v11038, %v11034
        %v11040 = vmul.f32 1.0, %v11039
        %v11041 = vrcp.pop %v10925
        %v11042 = vmul.f32 %v10925, %v11041
        %v11043 = vsub.f32 1.0, %v11042
        %v11044 = vmul.f32 %v11041, %v11043
        %v11045 = vadd.f32 %v11041, %v11044
        %vm11046 = vweird.f32 %v10925
        %vm11047 = vweird.f32 %v11041
        %vm11048 = vmor %vm11046, %vm11047
        %v11049 = vsel %vm11048, %v11041, %v11045
        %v11050 = vand.u32 2147483647, %v10925
        %vm11051 = vcmp.eq.f32.partialorder %v11050, 8.507059e+37
        %v11052 = vand.u32 %v10925, 2147483648
        %v11053 = vor.u32 1.1754944e-38, %v11052
        %v11054 = vsel %vm11051, %v11053, %v11049
        %v11055 = vmul.f32 1.0, %v11054
        %v11056 = vrcp.pop %v10926
        %v11057 = vmul.f32 %v10926, %v11056
        %v11058 = vsub.f32 1.0, %v11057
        %v11059 = vmul.f32 %v11056, %v11058
        %v11060 = vadd.f32 %v11056, %v11059
        %vm11061 = vweird.f32 %v10926
        %vm11062 = vweird.f32 %v11056
        %vm11063 = vmor %vm11061, %vm11062
        %v11064 = vsel %vm11063, %v11056, %v11060
        %v11065 = vand.u32 2147483647, %v10926
        %vm11066 = vcmp.eq.f32.partialorder %v11065, 8.507059e+37
        %v11067 = vand.u32 %v10926, 2147483648
        %v11068 = vor.u32 1.1754944e-38, %v11067
        %v11069 = vsel %vm11066, %v11068, %v11064
        %v11070 = vmul.f32 1.0, %v11069
        %v11071 = vrcp.pop %v10927
        %v11072 = vmul.f32 %v10927, %v11071
        %v11073 = vsub.f32 1.0, %v11072
        %v11074 = vmul.f32 %v11071, %v11073
        %v11075 = vadd.f32 %v11071, %v11074
        %vm11076 = vweird.f32 %v10927
        %vm11077 = vweird.f32 %v11071
        %vm11078 = vmor %vm11076, %vm11077
        %v11079 = vsel %vm11078, %v11071, %v11075
        %v11080 = vand.u32 2147483647, %v10927
        %vm11081 = vcmp.eq.f32.partialorder %v11080, 8.507059e+37
        %v11082 = vand.u32 %v10927, 2147483648
        %v11083 = vor.u32 1.1754944e-38, %v11082
        %v11084 = vsel %vm11081, %v11083, %v11079
        %v11085 = vmul.f32 1.0, %v11084
        %v11086 = vrcp.pop %v10928
        %v11087 = vmul.f32 %v10928, %v11086
        %v11088 = vsub.f32 1.0, %v11087
        %v11089 = vmul.f32 %v11086, %v11088
        %v11090 = vadd.f32 %v11086, %v11089
        %vm11091 = vweird.f32 %v10928
        %vm11092 = vweird.f32 %v11086
        %vm11093 = vmor %vm11091, %vm11092
        %v11094 = vsel %vm11093, %v11086, %v11090
        %v11095 = vand.u32 2147483647, %v10928
        %vm11096 = vcmp.eq.f32.partialorder %v11095, 8.507059e+37
        %v11097 = vand.u32 %v10928, 2147483648
        %v11098 = vor.u32 1.1754944e-38, %v11097
        %v11099 = vsel %vm11096, %v11098, %v11094
        %v11100 = vmul.f32 1.0, %v11099
        %v11101 = vrcp.pop %v10929
        %v11102 = vmul.f32 %v10929, %v11101
        %v11103 = vsub.f32 1.0, %v11102
        %v11104 = vmul.f32 %v11101, %v11103
        %v11105 = vadd.f32 %v11101, %v11104
        %vm11106 = vweird.f32 %v10929
        %vm11107 = vweird.f32 %v11101
        %vm11108 = vmor %vm11106, %vm11107
        %v11109 = vsel %vm11108, %v11101, %v11105
        %v11110 = vand.u32 2147483647, %v10929
        %vm11111 = vcmp.eq.f32.partialorder %v11110, 8.507059e+37
        %v11112 = vand.u32 %v10929, 2147483648
        %v11113 = vor.u32 1.1754944e-38, %v11112
        %v11114 = vsel %vm11111, %v11113, %v11109
        %v11115 = vmul.f32 1.0, %v11114
        %v11116 = vrcp.pop %v10930
        %v11117 = vmul.f32 %v10930, %v11116
        %v11118 = vsub.f32 1.0, %v11117
        %v11119 = vmul.f32 %v11116, %v11118
        %v11120 = vadd.f32 %v11116, %v11119
        %vm11121 = vweird.f32 %v10930
        %vm11122 = vweird.f32 %v11116
        %vm11123 = vmor %vm11121, %vm11122
        %v11124 = vsel %vm11123, %v11116, %v11120
        %v11125 = vand.u32 2147483647, %v10930
        %vm11126 = vcmp.eq.f32.partialorder %v11125, 8.507059e+37
        %v11127 = vand.u32 %v10930, 2147483648
        %v11128 = vor.u32 1.1754944e-38, %v11127
        %v11129 = vsel %vm11126, %v11128, %v11124
        %v11130 = vmul.f32 1.0, %v11129
        %v11131 = vrcp.pop %v10931
        %v11132 = vmul.f32 %v10931, %v11131
        %v11133 = vsub.f32 1.0, %v11132
        %v11134 = vmul.f32 %v11131, %v11133
        %v11135 = vadd.f32 %v11131, %v11134
        %vm11136 = vweird.f32 %v10931
        %vm11137 = vweird.f32 %v11131
        %vm11138 = vmor %vm11136, %vm11137
        %v11139 = vsel %vm11138, %v11131, %v11135
        %v11140 = vand.u32 2147483647, %v10931
        %vm11141 = vcmp.eq.f32.partialorder %v11140, 8.507059e+37
        %v11142 = vand.u32 %v10931, 2147483648
        %v11143 = vor.u32 1.1754944e-38, %v11142
        %v11144 = vsel %vm11141, %v11143, %v11139
        %v11145 = vmul.f32 1.0, %v11144
        %v11146 = vrcp.pop %v10932
        %v11147 = vmul.f32 %v10932, %v11146
        %v11148 = vsub.f32 1.0, %v11147
        %v11149 = vmul.f32 %v11146, %v11148
        %v11150 = vadd.f32 %v11146, %v11149
        %vm11151 = vweird.f32 %v10932
        %vm11152 = vweird.f32 %v11146
        %vm11153 = vmor %vm11151, %vm11152
        %v11154 = vsel %vm11153, %v11146, %v11150
        %v11155 = vand.u32 2147483647, %v10932
        %vm11156 = vcmp.eq.f32.partialorder %v11155, 8.507059e+37
        %v11157 = vand.u32 %v10932, 2147483648
        %v11158 = vor.u32 1.1754944e-38, %v11157
        %v11159 = vsel %vm11156, %v11158, %v11154
        %v11160 = vmul.f32 1.0, %v11159
        %v11161 = vrcp.pop %v10933
        %v11162 = vmul.f32 %v10933, %v11161
        %v11163 = vsub.f32 1.0, %v11162
        %v11164 = vmul.f32 %v11161, %v11163
        %v11165 = vadd.f32 %v11161, %v11164
        %vm11166 = vweird.f32 %v10933
        %vm11167 = vweird.f32 %v11161
        %vm11168 = vmor %vm11166, %vm11167
        %v11169 = vsel %vm11168, %v11161, %v11165
        %v11170 = vand.u32 2147483647, %v10933
        %vm11171 = vcmp.eq.f32.partialorder %v11170, 8.507059e+37
        %v11172 = vand.u32 %v10933, 2147483648
        %v11173 = vor.u32 1.1754944e-38, %v11172
        %v11174 = vsel %vm11171, %v11173, %v11169
        %v11175 = vmul.f32 1.0, %v11174
        %v11176 = vrcp.pop %v10934
        %v11177 = vmul.f32 %v10934, %v11176
        %v11178 = vsub.f32 1.0, %v11177
        %v11179 = vmul.f32 %v11176, %v11178
        %v11180 = vadd.f32 %v11176, %v11179
        %vm11181 = vweird.f32 %v10934
        %vm11182 = vweird.f32 %v11176
        %vm11183 = vmor %vm11181, %vm11182
        %v11184 = vsel %vm11183, %v11176, %v11180
        %v11185 = vand.u32 2147483647, %v10934
        %vm11186 = vcmp.eq.f32.partialorder %v11185, 8.507059e+37
        %v11187 = vand.u32 %v10934, 2147483648
        %v11188 = vor.u32 1.1754944e-38, %v11187
        %v11189 = vsel %vm11186, %v11188, %v11184
        %v11190 = vmul.f32 1.0, %v11189
        %v11191 = vrcp.pop %v10935
        %v11192 = vmul.f32 %v10935, %v11191
        %v11193 = vsub.f32 1.0, %v11192
        %v11194 = vmul.f32 %v11191, %v11193
        %v11195 = vadd.f32 %v11191, %v11194
        %vm11196 = vweird.f32 %v10935
        %vm11197 = vweird.f32 %v11191
        %vm11198 = vmor %vm11196, %vm11197
        %v11199 = vsel %vm11198, %v11191, %v11195
        %v11200 = vand.u32 2147483647, %v10935
        %vm11201 = vcmp.eq.f32.partialorder %v11200, 8.507059e+37
        %v11202 = vand.u32 %v10935, 2147483648
        %v11203 = vor.u32 1.1754944e-38, %v11202
        %v11204 = vsel %vm11201, %v11203, %v11199
        %v11205 = vmul.f32 1.0, %v11204
        %v11206 = vrcp.pop %v10936
        %v11207 = vmul.f32 %v10936, %v11206
        %v11208 = vsub.f32 1.0, %v11207
        %v11209 = vmul.f32 %v11206, %v11208
        %v11210 = vadd.f32 %v11206, %v11209
        %vm11211 = vweird.f32 %v10936
        %vm11212 = vweird.f32 %v11206
        %vm11213 = vmor %vm11211, %vm11212
        %v11214 = vsel %vm11213, %v11206, %v11210
        %v11215 = vand.u32 2147483647, %v10936
        %vm11216 = vcmp.eq.f32.partialorder %v11215, 8.507059e+37
        %v11217 = vand.u32 %v10936, 2147483648
        %v11218 = vor.u32 1.1754944e-38, %v11217
        %v11219 = vsel %vm11216, %v11218, %v11214
        %v11220 = vmul.f32 1.0, %v11219
        %v11221 = vrcp.pop %v10937
        %v11222 = vmul.f32 %v10937, %v11221
        %v11223 = vsub.f32 1.0, %v11222
        %v11224 = vmul.f32 %v11221, %v11223
        %v11225 = vadd.f32 %v11221, %v11224
        %vm11226 = vweird.f32 %v10937
        %vm11227 = vweird.f32 %v11221
        %vm11228 = vmor %vm11226, %vm11227
        %v11229 = vsel %vm11228, %v11221, %v11225
        %v11230 = vand.u32 2147483647, %v10937
        %vm11231 = vcmp.eq.f32.partialorder %v11230, 8.507059e+37
        %v11232 = vand.u32 %v10937, 2147483648
        %v11233 = vor.u32 1.1754944e-38, %v11232
        %v11234 = vsel %vm11231, %v11233, %v11229
        %v11235 = vmul.f32 1.0, %v11234
        %v11236 = vrcp.pop %v10938
        %v11237 = vmul.f32 %v10938, %v11236
        %v11238 = vsub.f32 1.0, %v11237
        %v11239 = vmul.f32 %v11236, %v11238
        %v11240 = vadd.f32 %v11236, %v11239
        %vm11241 = vweird.f32 %v10938
        %vm11242 = vweird.f32 %v11236
        %vm11243 = vmor %vm11241, %vm11242
        %v11244 = vsel %vm11243, %v11236, %v11240
        %v11245 = vand.u32 2147483647, %v10938
        %vm11246 = vcmp.eq.f32.partialorder %v11245, 8.507059e+37
        %v11247 = vand.u32 %v10938, 2147483648
        %v11248 = vor.u32 1.1754944e-38, %v11247
        %v11249 = vsel %vm11246, %v11248, %v11244
        %v11250 = vmul.f32 1.0, %v11249
        %v11251 = vrcp.pop %v10939
        %v11252 = vmul.f32 %v10939, %v11251
        %v11253 = vsub.f32 1.0, %v11252
        %v11254 = vmul.f32 %v11251, %v11253
        %v11255 = vadd.f32 %v11251, %v11254
        %vm11256 = vweird.f32 %v10939
        %vm11257 = vweird.f32 %v11251
        %vm11258 = vmor %vm11256, %vm11257
        %v11259 = vsel %vm11258, %v11251, %v11255
        %v11260 = vand.u32 2147483647, %v10939
        %vm11261 = vcmp.eq.f32.partialorder %v11260, 8.507059e+37
        %v11262 = vand.u32 %v10939, 2147483648
        %v11263 = vor.u32 1.1754944e-38, %v11262
        %v11264 = vsel %vm11261, %v11263, %v11259
        %v11265 = vmul.f32 1.0, %v11264
        %v11266 = vrcp.pop %v10940
        %v11267 = vmul.f32 %v10940, %v11266
        %v11268 = vsub.f32 1.0, %v11267
        %v11269 = vmul.f32 %v11266, %v11268
        %v11270 = vadd.f32 %v11266, %v11269
        %vm11271 = vweird.f32 %v10940
        %vm11272 = vweird.f32 %v11266
        %vm11273 = vmor %vm11271, %vm11272
        %v11274 = vsel %vm11273, %v11266, %v11270
        %v11275 = vand.u32 2147483647, %v10940
        %vm11276 = vcmp.eq.f32.partialorder %v11275, 8.507059e+37
        %v11277 = vand.u32 %v10940, 2147483648
        %v11278 = vor.u32 1.1754944e-38, %v11277
        %v11279 = vsel %vm11276, %v11278, %v11274
        %v11280 = vmul.f32 1.0, %v11279
        %v11281 = vrcp.pop %v10941
        %v11282 = vmul.f32 %v10941, %v11281
        %v11283 = vsub.f32 1.0, %v11282
        %v11284 = vmul.f32 %v11281, %v11283
        %v11285 = vadd.f32 %v11281, %v11284
        %vm11286 = vweird.f32 %v10941
        %vm11287 = vweird.f32 %v11281
        %vm11288 = vmor %vm11286, %vm11287
        %v11289 = vsel %vm11288, %v11281, %v11285
        %v11290 = vand.u32 2147483647, %v10941
        %vm11291 = vcmp.eq.f32.partialorder %v11290, 8.507059e+37
        %v11292 = vand.u32 %v10941, 2147483648
        %v11293 = vor.u32 1.1754944e-38, %v11292
        %v11294 = vsel %vm11291, %v11293, %v11289
        %v11295 = vmul.f32 1.0, %v11294
        %v11296 = vrcp.pop %v10942
        %v11297 = vmul.f32 %v10942, %v11296
        %v11298 = vsub.f32 1.0, %v11297
        %v11299 = vmul.f32 %v11296, %v11298
        %v11300 = vadd.f32 %v11296, %v11299
        %vm11301 = vweird.f32 %v10942
        %vm11302 = vweird.f32 %v11296
        %vm11303 = vmor %vm11301, %vm11302
        %v11304 = vsel %vm11303, %v11296, %v11300
        %v11305 = vand.u32 2147483647, %v10942
        %vm11306 = vcmp.eq.f32.partialorder %v11305, 8.507059e+37
        %v11307 = vand.u32 %v10942, 2147483648
        %v11308 = vor.u32 1.1754944e-38, %v11307
        %v11309 = vsel %vm11306, %v11308, %v11304
        %v11310 = vmul.f32 1.0, %v11309
        %v11311 = vrcp.pop %v10943
        %v11312 = vmul.f32 %v10943, %v11311
        %v11313 = vsub.f32 1.0, %v11312
        %v11314 = vmul.f32 %v11311, %v11313
        %v11315 = vadd.f32 %v11311, %v11314
        %vm11316 = vweird.f32 %v10943
        %vm11317 = vweird.f32 %v11311
        %vm11318 = vmor %vm11316, %vm11317
        %v11319 = vsel %vm11318, %v11311, %v11315
        %v11320 = vand.u32 2147483647, %v10943
        %vm11321 = vcmp.eq.f32.partialorder %v11320, 8.507059e+37
        %v11322 = vand.u32 %v10943, 2147483648
        %v11323 = vor.u32 1.1754944e-38, %v11322
        %v11324 = vsel %vm11321, %v11323, %v11319
        %v11325 = vmul.f32 1.0, %v11324
        %v11326 = vrcp.pop %v10944
        %v11327 = vmul.f32 %v10944, %v11326
        %v11328 = vsub.f32 1.0, %v11327
        %v11329 = vmul.f32 %v11326, %v11328
        %v11330 = vadd.f32 %v11326, %v11329
        %vm11331 = vweird.f32 %v10944
        %vm11332 = vweird.f32 %v11326
        %vm11333 = vmor %vm11331, %vm11332
        %v11334 = vsel %vm11333, %v11326, %v11330
        %v11335 = vand.u32 2147483647, %v10944
        %vm11336 = vcmp.eq.f32.partialorder %v11335, 8.507059e+37
        %v11337 = vand.u32 %v10944, 2147483648
        %v11338 = vor.u32 1.1754944e-38, %v11337
        %v11339 = vsel %vm11336, %v11338, %v11334
        %v11340 = vmul.f32 1.0, %v11339
        %v11341 = vrcp.pop %v10945
        %v11342 = vmul.f32 %v10945, %v11341
        %v11343 = vsub.f32 1.0, %v11342
        %v11344 = vmul.f32 %v11341, %v11343
        %v11345 = vadd.f32 %v11341, %v11344
        %vm11346 = vweird.f32 %v10945
        %vm11347 = vweird.f32 %v11341
        %vm11348 = vmor %vm11346, %vm11347
        %v11349 = vsel %vm11348, %v11341, %v11345
        %v11350 = vand.u32 2147483647, %v10945
        %vm11351 = vcmp.eq.f32.partialorder %v11350, 8.507059e+37
        %v11352 = vand.u32 %v10945, 2147483648
        %v11353 = vor.u32 1.1754944e-38, %v11352
        %v11354 = vsel %vm11351, %v11353, %v11349
        %v11355 = vmul.f32 1.0, %v11354
        %v11356 = vrcp.pop %v10946
        %v11357 = vmul.f32 %v10946, %v11356
        %v11358 = vsub.f32 1.0, %v11357
        %v11359 = vmul.f32 %v11356, %v11358
        %v11360 = vadd.f32 %v11356, %v11359
        %vm11361 = vweird.f32 %v10946
        %vm11362 = vweird.f32 %v11356
        %vm11363 = vmor %vm11361, %vm11362
        %v11364 = vsel %vm11363, %v11356, %v11360
        %v11365 = vand.u32 2147483647, %v10946
        %vm11366 = vcmp.eq.f32.partialorder %v11365, 8.507059e+37
        %v11367 = vand.u32 %v10946, 2147483648
        %v11368 = vor.u32 1.1754944e-38, %v11367
        %v11369 = vsel %vm11366, %v11368, %v11364
        %v11370 = vmul.f32 1.0, %v11369
        %v11371 = vrcp.pop %v10947
        %v11372 = vmul.f32 %v10947, %v11371
        %v11373 = vsub.f32 1.0, %v11372
        %v11374 = vmul.f32 %v11371, %v11373
        %v11375 = vadd.f32 %v11371, %v11374
        %vm11376 = vweird.f32 %v10947
        %vm11377 = vweird.f32 %v11371
        %vm11378 = vmor %vm11376, %vm11377
        %v11379 = vsel %vm11378, %v11371, %v11375
        %v11380 = vand.u32 2147483647, %v10947
        %vm11381 = vcmp.eq.f32.partialorder %v11380, 8.507059e+37
        %v11382 = vand.u32 %v10947, 2147483648
        %v11383 = vor.u32 1.1754944e-38, %v11382
        %v11384 = vsel %vm11381, %v11383, %v11379
        %v11385 = vmul.f32 1.0, %v11384
        %v11386 = vrcp.pop %v10948
        %v11387 = vmul.f32 %v10948, %v11386
        %v11388 = vsub.f32 1.0, %v11387
        %v11389 = vmul.f32 %v11386, %v11388
        %v11390 = vadd.f32 %v11386, %v11389
        %vm11391 = vweird.f32 %v10948
        %vm11392 = vweird.f32 %v11386
        %vm11393 = vmor %vm11391, %vm11392
        %v11394 = vsel %vm11393, %v11386, %v11390
        %v11395 = vand.u32 2147483647, %v10948
        %vm11396 = vcmp.eq.f32.partialorder %v11395, 8.507059e+37
        %v11397 = vand.u32 %v10948, 2147483648
        %v11398 = vor.u32 1.1754944e-38, %v11397
        %v11399 = vsel %vm11396, %v11398, %v11394
        %v11400 = vmul.f32 1.0, %v11399
        %v11401 = vrcp.pop %v10949
        %v11402 = vmul.f32 %v10949, %v11401
        %v11403 = vsub.f32 1.0, %v11402
        %v11404 = vmul.f32 %v11401, %v11403
        %v11405 = vadd.f32 %v11401, %v11404
        %vm11406 = vweird.f32 %v10949
        %vm11407 = vweird.f32 %v11401
        %vm11408 = vmor %vm11406, %vm11407
        %v11409 = vsel %vm11408, %v11401, %v11405
        %v11410 = vand.u32 2147483647, %v10949
        %vm11411 = vcmp.eq.f32.partialorder %v11410, 8.507059e+37
        %v11412 = vand.u32 %v10949, 2147483648
        %v11413 = vor.u32 1.1754944e-38, %v11412
        %v11414 = vsel %vm11411, %v11413, %v11409
        %v11415 = vmul.f32 1.0, %v11414
        %v11416 = vrcp.pop %v10950
        %v11417 = vmul.f32 %v10950, %v11416
        %v11418 = vsub.f32 1.0, %v11417
        %v11419 = vmul.f32 %v11416, %v11418
        %v11420 = vadd.f32 %v11416, %v11419
        %vm11421 = vweird.f32 %v10950
        %vm11422 = vweird.f32 %v11416
        %vm11423 = vmor %vm11421, %vm11422
        %v11424 = vsel %vm11423, %v11416, %v11420
        %v11425 = vand.u32 2147483647, %v10950
        %vm11426 = vcmp.eq.f32.partialorder %v11425, 8.507059e+37
        %v11427 = vand.u32 %v10950, 2147483648
        %v11428 = vor.u32 1.1754944e-38, %v11427
        %v11429 = vsel %vm11426, %v11428, %v11424
        %v11430 = vmul.f32 1.0, %v11429
        %v11431 = vmul.f32 %v10637, %v10965
        %v11432 = vmul.f32 %v10686, %v10980
        %v11433 = vmul.f32 %v10639, %v10995
        %v11434 = vmul.f32 %v10688, %v11010
        %v11435 = vmul.f32 %v10642, %v11025
        %v11436 = vmul.f32 %v10691, %v11040
        %v11437 = vmul.f32 %v10644, %v11055
        %v11438 = vmul.f32 %v10693, %v11070
        %v11439 = vmul.f32 %v10647, %v11085
        %v11440 = vmul.f32 %v10696, %v11100
        %v11441 = vmul.f32 %v10649, %v11115
        %v11442 = vmul.f32 %v10698, %v11130
        %v11443 = vmul.f32 %v10652, %v11145
        %v11444 = vmul.f32 %v10701, %v11160
        %v11445 = vmul.f32 %v10654, %v11175
        %v11446 = vmul.f32 %v10703, %v11190
        %v11447 = vmul.f32 %v10657, %v11205
        %v11448 = vmul.f32 %v10706, %v11220
        %v11449 = vmul.f32 %v10659, %v11235
        %v11450 = vmul.f32 %v10708, %v11250
        %v11451 = vmul.f32 %v10662, %v11265
        %v11452 = vmul.f32 %v10711, %v11280
        %v11453 = vmul.f32 %v10664, %v11295
        %v11454 = vmul.f32 %v10713, %v11310
        %v11455 = vmul.f32 %v10667, %v11325
        %v11456 = vmul.f32 %v10716, %v11340
        %v11457 = vmul.f32 %v10669, %v11355
        %v11458 = vmul.f32 %v10718, %v11370
        %v11459 = vmul.f32 %v10672, %v11385
        %v11460 = vmul.f32 %v10721, %v11400
        %v11461 = vmul.f32 %v10674, %v11415
        %v11462 = vmul.f32 %v10723, %v11430
        %v11463 = vmul.f32 %v11431, %v10735
        %v11464 = vmul.f32 %v11432, %v10784
        %v11465 = vmul.f32 %v11433, %v10737
        %v11466 = vmul.f32 %v11434, %v10786
        %v11467 = vmul.f32 %v11435, %v10740
        %v11468 = vmul.f32 %v11436, %v10789
        %v11469 = vmul.f32 %v11437, %v10742
        %v11470 = vmul.f32 %v11438, %v10791
        %v11471 = vmul.f32 %v11439, %v10745
        %v11472 = vmul.f32 %v11440, %v10794
        %v11473 = vmul.f32 %v11441, %v10747
        %v11474 = vmul.f32 %v11442, %v10796
        %v11475 = vmul.f32 %v11443, %v10750
        %v11476 = vmul.f32 %v11444, %v10799
        %v11477 = vmul.f32 %v11445, %v10752
        %v11478 = vmul.f32 %v11446, %v10801
        %v11479 = vmul.f32 %v11447, %v10755
        %v11480 = vmul.f32 %v11448, %v10804
        %v11481 = vmul.f32 %v11449, %v10757
        %v11482 = vmul.f32 %v11450, %v10806
        %v11483 = vmul.f32 %v11451, %v10760
        %v11484 = vmul.f32 %v11452, %v10809
        %v11485 = vmul.f32 %v11453, %v10762
        %v11486 = vmul.f32 %v11454, %v10811
        %v11487 = vmul.f32 %v11455, %v10765
        %v11488 = vmul.f32 %v11456, %v10814
        %v11489 = vmul.f32 %v11457, %v10767
        %v11490 = vmul.f32 %v11458, %v10816
        %v11491 = vmul.f32 %v11459, %v10770
        %v11492 = vmul.f32 %v11460, %v10819
        %v11493 = vmul.f32 %v11461, %v10772
        %v11494 = vmul.f32 %v11462, %v10821
        %v11495 = vpack.c.bf16 %v11465, %v11463
        %v11496 = vpack.c.bf16 %v11466, %v11464
        %v11497 = vpack.c.bf16 %v11469, %v11467
        %v11498 = vpack.c.bf16 %v11470, %v11468
        %v11499 = vpack.c.bf16 %v11473, %v11471
        %v11500 = vpack.c.bf16 %v11474, %v11472
        %v11501 = vpack.c.bf16 %v11477, %v11475
        %v11502 = vpack.c.bf16 %v11478, %v11476
        %v11503 = vpack.c.bf16 %v11481, %v11479
        %v11504 = vpack.c.bf16 %v11482, %v11480
        %v11505 = vpack.c.bf16 %v11485, %v11483
        %v11506 = vpack.c.bf16 %v11486, %v11484
        %v11507 = vpack.c.bf16 %v11489, %v11487
        %v11508 = vpack.c.bf16 %v11490, %v11488
        %v11509 = vpack.c.bf16 %v11493, %v11491
        %v11510 = vpack.c.bf16 %v11494, %v11492
        %v11511 = vld [vmem:[%s270] sm:$0xf]
        %v11512 = vld [vmem:[%s270 + $0x4] sm:$0xf]
        %v11513 = vld [vmem:[%s270 + $0x8] sm:$0xf]
        %v11514 = vld [vmem:[%s270 + $0xc] sm:$0xf]
        %v11515 = vld [vmem:[%s270 + $0x10] sm:$0xf]
        %v11516 = vld [vmem:[%s270 + $0x14] sm:$0xf]
        %v11517 = vld [vmem:[%s270 + $0x18] sm:$0xf]
        %v11518 = vld [vmem:[%s270 + $0x1c] sm:$0xf]
        %v11519 = vld [vmem:[%s270 + $0x20] sm:$0xf]
        %v11520 = vld [vmem:[%s270 + $0x24] sm:$0xf]
        %v11521 = vld [vmem:[%s270 + $0x28] sm:$0xf]
        %v11522 = vld [vmem:[%s270 + $0x2c] sm:$0xf]
        %v11523 = vld [vmem:[%s270 + $0x30] sm:$0xf]
        %v11524 = vld [vmem:[%s270 + $0x34] sm:$0xf]
        %v11525 = vld [vmem:[%s270 + $0x38] sm:$0xf]
        %v11526 = vld [vmem:[%s270 + $0x3c] sm:$0xf]
        %v11527 = vld [vmem:[%s270 + $0x40] sm:$0xf]
        %v11528 = vld [vmem:[%s270 + $0x44] sm:$0xf]
        %v11529 = vld [vmem:[%s270 + $0x48] sm:$0xf]
        %v11530 = vld [vmem:[%s270 + $0x4c] sm:$0xf]
        %v11531 = vld [vmem:[%s270 + $0x50] sm:$0xf]
        %v11532 = vld [vmem:[%s270 + $0x54] sm:$0xf]
        %v11533 = vld [vmem:[%s270 + $0x58] sm:$0xf]
        %v11534 = vld [vmem:[%s270 + $0x5c] sm:$0xf]
        %v11535 = vld [vmem:[%s270 + $0x60] sm:$0xf]
        %v11536 = vld [vmem:[%s270 + $0x64] sm:$0xf]
        %v11537 = vld [vmem:[%s270 + $0x68] sm:$0xf]
        %v11538 = vld [vmem:[%s270 + $0x6c] sm:$0xf]
        %v11539 = vld [vmem:[%s270 + $0x70] sm:$0xf]
        %v11540 = vld [vmem:[%s270 + $0x74] sm:$0xf]
        %v11541 = vld [vmem:[%s270 + $0x78] sm:$0xf]
        %v11542 = vld [vmem:[%s270 + $0x7c] sm:$0xf]
        %v11575 = vunpack.c.l.b16 %v11511
        %v11576 = vunpack.c.l.b16 %v11512
        %v11577 = vunpack.c.l.b16 %v11513
        %v11578 = vunpack.c.l.b16 %v11514
        %v11579 = vunpack.c.l.b16 %v11515
        %v11580 = vunpack.c.l.b16 %v11516
        %v11581 = vunpack.c.l.b16 %v11517
        %v11582 = vunpack.c.l.b16 %v11518
        %v11583 = vunpack.c.l.b16 %v11519
        %v11584 = vunpack.c.l.b16 %v11520
        %v11585 = vunpack.c.l.b16 %v11521
        %v11586 = vunpack.c.l.b16 %v11522
        %v11587 = vunpack.c.l.b16 %v11523
        %v11588 = vunpack.c.l.b16 %v11524
        %v11589 = vunpack.c.l.b16 %v11525
        %v11590 = vunpack.c.l.b16 %v11526
        %v11591 = vunpack.c.l.b16 %v11527
        %v11592 = vunpack.c.l.b16 %v11528
        %v11593 = vunpack.c.l.b16 %v11529
        %v11594 = vunpack.c.l.b16 %v11530
        %v11595 = vunpack.c.l.b16 %v11531
        %v11596 = vunpack.c.l.b16 %v11532
        %v11597 = vunpack.c.l.b16 %v11533
        %v11598 = vunpack.c.l.b16 %v11534
        %v11599 = vunpack.c.l.b16 %v11535
        %v11600 = vunpack.c.l.b16 %v11536
        %v11601 = vunpack.c.l.b16 %v11537
        %v11602 = vunpack.c.l.b16 %v11538
        %v11603 = vunpack.c.l.b16 %v11539
        %v11604 = vunpack.c.l.b16 %v11540
        %v11605 = vunpack.c.l.b16 %v11541
        %v11606 = vunpack.c.l.b16 %v11542
        %v11607 = vpack.c.b16 %v11576, %v11575
        %v11608 = vpack.c.b16 %v11578, %v11577
        %v11609 = vpack.c.b16 %v11580, %v11579
        %v11610 = vpack.c.b16 %v11582, %v11581
        %v11611 = vpack.c.b16 %v11584, %v11583
        %v11612 = vpack.c.b16 %v11586, %v11585
        %v11613 = vpack.c.b16 %v11588, %v11587
        %v11614 = vpack.c.b16 %v11590, %v11589
        %v11615 = vpack.c.b16 %v11592, %v11591
        %v11616 = vpack.c.b16 %v11594, %v11593
        %v11617 = vpack.c.b16 %v11596, %v11595
        %v11618 = vpack.c.b16 %v11598, %v11597
        %v11619 = vpack.c.b16 %v11600, %v11599
        %v11620 = vpack.c.b16 %v11602, %v11601
        %v11621 = vpack.c.b16 %v11604, %v11603
        %v11622 = vpack.c.b16 %v11606, %v11605
        %11639 = vmatpush.bf16.msra.mxu0 %v11614
        %11640 = vmatpush.bf16.msra.mxu0 %v11613
        %11641 = vmatpush.bf16.msra.mxu0 %v11612
        %11642 = vmatpush.bf16.msra.mxu0 %v11611
        %11643 = vmatpush.bf16.msra.mxu0 %v11610
        %11644 = vmatpush.bf16.msra.mxu0 %v11609
        %11645 = vmatpush.bf16.msra.mxu0 %v11608
        %11646 = vmatpush.bf16.msra.mxu0 %v11607
        %11647 = vmatmul.bf16.gmra.mxu0 %v11495
        %v11648 = vpop.f32.mrf.mxu0
        %v11649 = vadd.f32 %v10115, %v11648
        %v11650 = vpop.f32.mrf.mxu0
        %v11651 = vadd.f32 %v10117, %v11650
        %11652 = vmatmul.bf16.gmra.mxu0 %v11497
        %v11653 = vpop.f32.mrf.mxu0
        %v11654 = vadd.f32 %v10120, %v11653
        %v11655 = vpop.f32.mrf.mxu0
        %v11656 = vadd.f32 %v10122, %v11655
        %11657 = vmatmul.bf16.gmra.mxu0 %v11499
        %v11658 = vpop.f32.mrf.mxu0
        %v11659 = vadd.f32 %v10125, %v11658
        %v11660 = vpop.f32.mrf.mxu0
        %v11661 = vadd.f32 %v10127, %v11660
        %11662 = vmatmul.bf16.gmra.mxu0 %v11501
        %v11663 = vpop.f32.mrf.mxu0
        %v11664 = vadd.f32 %v10130, %v11663
        %v11665 = vpop.f32.mrf.mxu0
        %v11666 = vadd.f32 %v10132, %v11665
        %11667 = vmatmul.bf16.gmra.mxu0 %v11503
        %v11668 = vpop.f32.mrf.mxu0
        %v11669 = vadd.f32 %v10135, %v11668
        %v11670 = vpop.f32.mrf.mxu0
        %v11671 = vadd.f32 %v10137, %v11670
        %11672 = vmatmul.bf16.gmra.mxu0 %v11505
        %v11673 = vpop.f32.mrf.mxu0
        %v11674 = vadd.f32 %v10140, %v11673
        %v11675 = vpop.f32.mrf.mxu0
        %v11676 = vadd.f32 %v10142, %v11675
        %11677 = vmatmul.bf16.gmra.mxu0 %v11507
        %v11678 = vpop.f32.mrf.mxu0
        %v11679 = vadd.f32 %v10145, %v11678
        %v11680 = vpop.f32.mrf.mxu0
        %v11681 = vadd.f32 %v10147, %v11680
        %11682 = vmatmul.bf16.gmra.mxu0 %v11509
        %v11683 = vpop.f32.mrf.mxu0
        %v11684 = vadd.f32 %v10150, %v11683
        %v11685 = vpop.f32.mrf.mxu0
        %v11686 = vadd.f32 %v10152, %v11685
        %11687 = vdwg.mxu0
        %11688 = vmatpush.bf16.msra.mxu0 %v11622
        %11689 = vmatpush.bf16.msra.mxu0 %v11621
        %11690 = vmatpush.bf16.msra.mxu0 %v11620
        %11691 = vmatpush.bf16.msra.mxu0 %v11619
        %11692 = vmatpush.bf16.msra.mxu0 %v11618
        %11693 = vmatpush.bf16.msra.mxu0 %v11617
        %11694 = vmatpush.bf16.msra.mxu0 %v11616
        %11695 = vmatpush.bf16.msra.mxu0 %v11615
        %11696 = vmatmul.bf16.gmra.mxu0 %v11496
        %v11697 = vpop.f32.mrf.mxu0
        %v11698 = vadd.f32 %v11649, %v11697
        %v11699 = vpop.f32.mrf.mxu0
        %v11700 = vadd.f32 %v11651, %v11699
        %11701 = vmatmul.bf16.gmra.mxu0 %v11498
        %v11702 = vpop.f32.mrf.mxu0
        %v11703 = vadd.f32 %v11654, %v11702
        %v11704 = vpop.f32.mrf.mxu0
        %v11705 = vadd.f32 %v11656, %v11704
        %11706 = vmatmul.bf16.gmra.mxu0 %v11500
        %v11707 = vpop.f32.mrf.mxu0
        %v11708 = vadd.f32 %v11659, %v11707
        %v11709 = vpop.f32.mrf.mxu0
        %v11710 = vadd.f32 %v11661, %v11709
        %11711 = vmatmul.bf16.gmra.mxu0 %v11502
        %v11712 = vpop.f32.mrf.mxu0
        %v11713 = vadd.f32 %v11664, %v11712
        %v11714 = vpop.f32.mrf.mxu0
        %v11715 = vadd.f32 %v11666, %v11714
        %11716 = vmatmul.bf16.gmra.mxu0 %v11504
        %v11717 = vpop.f32.mrf.mxu0
        %v11718 = vadd.f32 %v11669, %v11717
        %v11719 = vpop.f32.mrf.mxu0
        %v11720 = vadd.f32 %v11671, %v11719
        %11721 = vmatmul.bf16.gmra.mxu0 %v11506
        %v11722 = vpop.f32.mrf.mxu0
        %v11723 = vadd.f32 %v11674, %v11722
        %v11724 = vpop.f32.mrf.mxu0
        %v11725 = vadd.f32 %v11676, %v11724
        %11726 = vmatmul.bf16.gmra.mxu0 %v11508
        %v11727 = vpop.f32.mrf.mxu0
        %v11728 = vadd.f32 %v11679, %v11727
        %v11729 = vpop.f32.mrf.mxu0
        %v11730 = vadd.f32 %v11681, %v11729
        %11731 = vmatmul.bf16.gmra.mxu0 %v11510
        %v11732 = vpop.f32.mrf.mxu0
        %v11733 = vadd.f32 %v11684, %v11732
        %v11734 = vpop.f32.mrf.mxu0
        %v11735 = vadd.f32 %v11686, %v11734
        %11736 = vdwg.mxu0
        %11737 = vst [vmem:[#allocation2] sm:$0xff] %v11698
        %11738 = vst [vmem:[#allocation2 + $0x8] sm:$0xff] %v11700
        %11739 = vst [vmem:[#allocation2 + $0x10] sm:$0xff] %v11703
        %11740 = vst [vmem:[#allocation2 + $0x18] sm:$0xff] %v11705
        %11741 = vst [vmem:[#allocation2 + $0x20] sm:$0xff] %v11708
        %11742 = vst [vmem:[#allocation2 + $0x28] sm:$0xff] %v11710
        %11743 = vst [vmem:[#allocation2 + $0x30] sm:$0xff] %v11713
        %11744 = vst [vmem:[#allocation2 + $0x38] sm:$0xff] %v11715
        %11745 = vst [vmem:[#allocation2 + $0x40] sm:$0xff] %v11718
        %11746 = vst [vmem:[#allocation2 + $0x48] sm:$0xff] %v11720
        %11747 = vst [vmem:[#allocation2 + $0x50] sm:$0xff] %v11723
        %11748 = vst [vmem:[#allocation2 + $0x58] sm:$0xff] %v11725
        %11749 = vst [vmem:[#allocation2 + $0x60] sm:$0xff] %v11728
        %11750 = vst [vmem:[#allocation2 + $0x68] sm:$0xff] %v11730
        %11751 = vst [vmem:[#allocation2 + $0x70] sm:$0xff] %v11733
        %11752 = vst [vmem:[#allocation2 + $0x78] sm:$0xff] %v11735
        %p11753 = scmp.eq.s32.totalorder %s18, 1
        // Predicated region
        $region49: #{llama_forward.1} parent=43 // pred_check
          %p11754 = pneg %p11753
        $region50: #{llama_forward.1} parent=43 // pred_check_branch
          %11756 = sbr.rel (%p11754) target = $region52
        $region51: #{llama_forward.1} parent=43 // pred_region
          %v11757 = vld [vmem:[%s5] sm:$0x1]
          %v11758 = vmul.f32 %v11698, %v11698
          %v11759 = vmul.f32 %v11700, %v11700
          %v11760 = vmul.f32 %v11703, %v11703
          %v11761 = vmul.f32 %v11705, %v11705
          %v11762 = vmul.f32 %v11708, %v11708
          %v11763 = vmul.f32 %v11710, %v11710
          %v11764 = vmul.f32 %v11713, %v11713
          %v11765 = vmul.f32 %v11715, %v11715
          %v11766 = vmul.f32 %v11718, %v11718
          %v11767 = vmul.f32 %v11720, %v11720
          %v11768 = vmul.f32 %v11723, %v11723
          %v11769 = vmul.f32 %v11725, %v11725
          %v11770 = vmul.f32 %v11728, %v11728
          %v11771 = vmul.f32 %v11730, %v11730
          %v11772 = vmul.f32 %v11733, %v11733
          %v11773 = vmul.f32 %v11735, %v11735
          %11774 = vadd.xlane.f32.xlu0 %v11758
          %v11775 = vpop.xlane.xlu0 %11774
          %11776 = vadd.xlane.f32.xlu0 %v11759
          %v11777 = vpop.xlane.xlu0 %11776
          %11778 = vadd.xlane.f32.xlu0 %v11760
          %v11779 = vpop.xlane.xlu0 %11778
          %11780 = vadd.xlane.f32.xlu0 %v11761
          %v11781 = vpop.xlane.xlu0 %11780
          %11782 = vadd.xlane.f32.xlu0 %v11762
          %v11783 = vpop.xlane.xlu0 %11782
          %11784 = vadd.xlane.f32.xlu0 %v11763
          %v11785 = vpop.xlane.xlu0 %11784
          %11786 = vadd.xlane.f32.xlu0 %v11764
          %v11787 = vpop.xlane.xlu0 %11786
          %11788 = vadd.xlane.f32.xlu0 %v11765
          %v11789 = vpop.xlane.xlu0 %11788
          %11790 = vadd.xlane.f32.xlu0 %v11766
          %v11791 = vpop.xlane.xlu0 %11790
          %11792 = vadd.xlane.f32.xlu0 %v11767
          %v11793 = vpop.xlane.xlu0 %11792
          %11794 = vadd.xlane.f32.xlu0 %v11768
          %v11795 = vpop.xlane.xlu0 %11794
          %11796 = vadd.xlane.f32.xlu0 %v11769
          %v11797 = vpop.xlane.xlu0 %11796
          %11798 = vadd.xlane.f32.xlu0 %v11770
          %v11799 = vpop.xlane.xlu0 %11798
          %11800 = vadd.xlane.f32.xlu0 %v11771
          %v11801 = vpop.xlane.xlu0 %11800
          %11802 = vadd.xlane.f32.xlu0 %v11772
          %v11803 = vpop.xlane.xlu0 %11802
          %11804 = vadd.xlane.f32.xlu0 %v11773
          %v11805 = vpop.xlane.xlu0 %11804
          %v11806 = vmul.f32 %v11775, %v466
          %v11807 = vmul.f32 %v11777, %v466
          %v11808 = vmul.f32 %v11779, %v466
          %v11809 = vmul.f32 %v11781, %v466
          %v11810 = vmul.f32 %v11783, %v466
          %v11811 = vmul.f32 %v11785, %v466
          %v11812 = vmul.f32 %v11787, %v466
          %v11813 = vmul.f32 %v11789, %v466
          %v11814 = vmul.f32 %v11791, %v466
          %v11815 = vmul.f32 %v11793, %v466
          %v11816 = vmul.f32 %v11795, %v466
          %v11817 = vmul.f32 %v11797, %v466
          %v11818 = vmul.f32 %v11799, %v466
          %v11819 = vmul.f32 %v11801, %v466
          %v11820 = vmul.f32 %v11803, %v466
          %v11821 = vmul.f32 %v11805, %v466
          %v11822 = vadd.f32 %v11806, 1e-06
          %v11823 = vadd.f32 %v11807, 1e-06
          %v11824 = vadd.f32 %v11808, 1e-06
          %v11825 = vadd.f32 %v11809, 1e-06
          %v11826 = vadd.f32 %v11810, 1e-06
          %v11827 = vadd.f32 %v11811, 1e-06
          %v11828 = vadd.f32 %v11812, 1e-06
          %v11829 = vadd.f32 %v11813, 1e-06
          %v11830 = vadd.f32 %v11814, 1e-06
          %v11831 = vadd.f32 %v11815, 1e-06
          %v11832 = vadd.f32 %v11816, 1e-06
          %v11833 = vadd.f32 %v11817, 1e-06
          %v11834 = vadd.f32 %v11818, 1e-06
          %v11835 = vadd.f32 %v11819, 1e-06
          %v11836 = vadd.f32 %v11820, 1e-06
          %v11837 = vadd.f32 %v11821, 1e-06
          %v11838 = vrsqrt.pop %v11822
          %v11839 = vmul.f32 %v11838, %v11822
          %v11840 = vmul.f32 %v11839, %v11838
          %v11841 = vmul.f32 0.5, %v11840
          %v11842 = vsub.f32 1.5, %v11841
          %v11843 = vmul.f32 %v11838, %v11842
          %vm11844 = vweird.f32 %v11822
          %vm11845 = vweird.f32 %v11838
          %vm11846 = vmor %vm11844, %vm11845
          %v11847 = vsel %vm11846, %v11838, %v11843
          %v11848 = vrsqrt.pop %v11823
          %v11849 = vmul.f32 %v11848, %v11823
          %v11850 = vmul.f32 %v11849, %v11848
          %v11851 = vmul.f32 0.5, %v11850
          %v11852 = vsub.f32 1.5, %v11851
          %v11853 = vmul.f32 %v11848, %v11852
          %vm11854 = vweird.f32 %v11823
          %vm11855 = vweird.f32 %v11848
          %vm11856 = vmor %vm11854, %vm11855
          %v11857 = vsel %vm11856, %v11848, %v11853
          %v11858 = vrsqrt.pop %v11824
          %v11859 = vmul.f32 %v11858, %v11824
          %v11860 = vmul.f32 %v11859, %v11858
          %v11861 = vmul.f32 0.5, %v11860
          %v11862 = vsub.f32 1.5, %v11861
          %v11863 = vmul.f32 %v11858, %v11862
          %vm11864 = vweird.f32 %v11824
          %vm11865 = vweird.f32 %v11858
          %vm11866 = vmor %vm11864, %vm11865
          %v11867 = vsel %vm11866, %v11858, %v11863
          %v11868 = vrsqrt.pop %v11825
          %v11869 = vmul.f32 %v11868, %v11825
          %v11870 = vmul.f32 %v11869, %v11868
          %v11871 = vmul.f32 0.5, %v11870
          %v11872 = vsub.f32 1.5, %v11871
          %v11873 = vmul.f32 %v11868, %v11872
          %vm11874 = vweird.f32 %v11825
          %vm11875 = vweird.f32 %v11868
          %vm11876 = vmor %vm11874, %vm11875
          %v11877 = vsel %vm11876, %v11868, %v11873
          %v11878 = vrsqrt.pop %v11826
          %v11879 = vmul.f32 %v11878, %v11826
          %v11880 = vmul.f32 %v11879, %v11878
          %v11881 = vmul.f32 0.5, %v11880
          %v11882 = vsub.f32 1.5, %v11881
          %v11883 = vmul.f32 %v11878, %v11882
          %vm11884 = vweird.f32 %v11826
          %vm11885 = vweird.f32 %v11878
          %vm11886 = vmor %vm11884, %vm11885
          %v11887 = vsel %vm11886, %v11878, %v11883
          %v11888 = vrsqrt.pop %v11827
          %v11889 = vmul.f32 %v11888, %v11827
          %v11890 = vmul.f32 %v11889, %v11888
          %v11891 = vmul.f32 0.5, %v11890
          %v11892 = vsub.f32 1.5, %v11891
          %v11893 = vmul.f32 %v11888, %v11892
          %vm11894 = vweird.f32 %v11827
          %vm11895 = vweird.f32 %v11888
          %vm11896 = vmor %vm11894, %vm11895
          %v11897 = vsel %vm11896, %v11888, %v11893
          %v11898 = vrsqrt.pop %v11828
          %v11899 = vmul.f32 %v11898, %v11828
          %v11900 = vmul.f32 %v11899, %v11898
          %v11901 = vmul.f32 0.5, %v11900
          %v11902 = vsub.f32 1.5, %v11901
          %v11903 = vmul.f32 %v11898, %v11902
          %vm11904 = vweird.f32 %v11828
          %vm11905 = vweird.f32 %v11898
          %vm11906 = vmor %vm11904, %vm11905
          %v11907 = vsel %vm11906, %v11898, %v11903
          %v11908 = vrsqrt.pop %v11829
          %v11909 = vmul.f32 %v11908, %v11829
          %v11910 = vmul.f32 %v11909, %v11908
          %v11911 = vmul.f32 0.5, %v11910
          %v11912 = vsub.f32 1.5, %v11911
          %v11913 = vmul.f32 %v11908, %v11912
          %vm11914 = vweird.f32 %v11829
          %vm11915 = vweird.f32 %v11908
          %vm11916 = vmor %vm11914, %vm11915
          %v11917 = vsel %vm11916, %v11908, %v11913
          %v11918 = vrsqrt.pop %v11830
          %v11919 = vmul.f32 %v11918, %v11830
          %v11920 = vmul.f32 %v11919, %v11918
          %v11921 = vmul.f32 0.5, %v11920
          %v11922 = vsub.f32 1.5, %v11921
          %v11923 = vmul.f32 %v11918, %v11922
          %vm11924 = vweird.f32 %v11830
          %vm11925 = vweird.f32 %v11918
          %vm11926 = vmor %vm11924, %vm11925
          %v11927 = vsel %vm11926, %v11918, %v11923
          %v11928 = vrsqrt.pop %v11831
          %v11929 = vmul.f32 %v11928, %v11831
          %v11930 = vmul.f32 %v11929, %v11928
          %v11931 = vmul.f32 0.5, %v11930
          %v11932 = vsub.f32 1.5, %v11931
          %v11933 = vmul.f32 %v11928, %v11932
          %vm11934 = vweird.f32 %v11831
          %vm11935 = vweird.f32 %v11928
          %vm11936 = vmor %vm11934, %vm11935
          %v11937 = vsel %vm11936, %v11928, %v11933
          %v11938 = vrsqrt.pop %v11832
          %v11939 = vmul.f32 %v11938, %v11832
          %v11940 = vmul.f32 %v11939, %v11938
          %v11941 = vmul.f32 0.5, %v11940
          %v11942 = vsub.f32 1.5, %v11941
          %v11943 = vmul.f32 %v11938, %v11942
          %vm11944 = vweird.f32 %v11832
          %vm11945 = vweird.f32 %v11938
          %vm11946 = vmor %vm11944, %vm11945
          %v11947 = vsel %vm11946, %v11938, %v11943
          %v11948 = vrsqrt.pop %v11833
          %v11949 = vmul.f32 %v11948, %v11833
          %v11950 = vmul.f32 %v11949, %v11948
          %v11951 = vmul.f32 0.5, %v11950
          %v11952 = vsub.f32 1.5, %v11951
          %v11953 = vmul.f32 %v11948, %v11952
          %vm11954 = vweird.f32 %v11833
          %vm11955 = vweird.f32 %v11948
          %vm11956 = vmor %vm11954, %vm11955
          %v11957 = vsel %vm11956, %v11948, %v11953
          %v11958 = vrsqrt.pop %v11834
          %v11959 = vmul.f32 %v11958, %v11834
          %v11960 = vmul.f32 %v11959, %v11958
          %v11961 = vmul.f32 0.5, %v11960
          %v11962 = vsub.f32 1.5, %v11961
          %v11963 = vmul.f32 %v11958, %v11962
          %vm11964 = vweird.f32 %v11834
          %vm11965 = vweird.f32 %v11958
          %vm11966 = vmor %vm11964, %vm11965
          %v11967 = vsel %vm11966, %v11958, %v11963
          %v11968 = vrsqrt.pop %v11835
          %v11969 = vmul.f32 %v11968, %v11835
          %v11970 = vmul.f32 %v11969, %v11968
          %v11971 = vmul.f32 0.5, %v11970
          %v11972 = vsub.f32 1.5, %v11971
          %v11973 = vmul.f32 %v11968, %v11972
          %vm11974 = vweird.f32 %v11835
          %vm11975 = vweird.f32 %v11968
          %vm11976 = vmor %vm11974, %vm11975
          %v11977 = vsel %vm11976, %v11968, %v11973
          %v11978 = vrsqrt.pop %v11836
          %v11979 = vmul.f32 %v11978, %v11836
          %v11980 = vmul.f32 %v11979, %v11978
          %v11981 = vmul.f32 0.5, %v11980
          %v11982 = vsub.f32 1.5, %v11981
          %v11983 = vmul.f32 %v11978, %v11982
          %vm11984 = vweird.f32 %v11836
          %vm11985 = vweird.f32 %v11978
          %vm11986 = vmor %vm11984, %vm11985
          %v11987 = vsel %vm11986, %v11978, %v11983
          %v11988 = vrsqrt.pop %v11837
          %v11989 = vmul.f32 %v11988, %v11837
          %v11990 = vmul.f32 %v11989, %v11988
          %v11991 = vmul.f32 0.5, %v11990
          %v11992 = vsub.f32 1.5, %v11991
          %v11993 = vmul.f32 %v11988, %v11992
          %vm11994 = vweird.f32 %v11837
          %vm11995 = vweird.f32 %v11988
          %vm11996 = vmor %vm11994, %vm11995
          %v11997 = vsel %vm11996, %v11988, %v11993
          %v11998 = vmul.f32 %v11698, %v11847
          %v11999 = vmul.f32 %v11700, %v11857
          %v12000 = vmul.f32 %v11703, %v11867
          %v12001 = vmul.f32 %v11705, %v11877
          %v12002 = vmul.f32 %v11708, %v11887
          %v12003 = vmul.f32 %v11710, %v11897
          %v12004 = vmul.f32 %v11713, %v11907
          %v12005 = vmul.f32 %v11715, %v11917
          %v12006 = vmul.f32 %v11718, %v11927
          %v12007 = vmul.f32 %v11720, %v11937
          %v12008 = vmul.f32 %v11723, %v11947
          %v12009 = vmul.f32 %v11725, %v11957
          %v12010 = vmul.f32 %v11728, %v11967
          %v12011 = vmul.f32 %v11730, %v11977
          %v12012 = vmul.f32 %v11733, %v11987
          %v12013 = vmul.f32 %v11735, %v11997
          %v12015 = vperm.slane %v11757, 0
          %v12017 = vmul.f32 %v11998, %v12015
          %v12018 = vmul.f32 %v11999, %v12015
          %v12019 = vmul.f32 %v12000, %v12015
          %v12020 = vmul.f32 %v12001, %v12015
          %v12021 = vmul.f32 %v12002, %v12015
          %v12022 = vmul.f32 %v12003, %v12015
          %v12023 = vmul.f32 %v12004, %v12015
          %v12024 = vmul.f32 %v12005, %v12015
          %v12025 = vmul.f32 %v12006, %v12015
          %v12026 = vmul.f32 %v12007, %v12015
          %v12027 = vmul.f32 %v12008, %v12015
          %v12028 = vmul.f32 %v12009, %v12015
          %v12029 = vmul.f32 %v12010, %v12015
          %v12030 = vmul.f32 %v12011, %v12015
          %v12031 = vmul.f32 %v12012, %v12015
          %v12032 = vmul.f32 %v12013, %v12015
          %12033 = vst [vmem:[#allocation4] sm:$0xff] %v12017
          %12034 = vst [vmem:[#allocation4 + $0x8] sm:$0xff] %v12018
          %12035 = vst [vmem:[#allocation4 + $0x10] sm:$0xff] %v12019
          %12036 = vst [vmem:[#allocation4 + $0x18] sm:$0xff] %v12020
          %12037 = vst [vmem:[#allocation4 + $0x20] sm:$0xff] %v12021
          %12038 = vst [vmem:[#allocation4 + $0x28] sm:$0xff] %v12022
          %12039 = vst [vmem:[#allocation4 + $0x30] sm:$0xff] %v12023
          %12040 = vst [vmem:[#allocation4 + $0x38] sm:$0xff] %v12024
          %12041 = vst [vmem:[#allocation4 + $0x40] sm:$0xff] %v12025
          %12042 = vst [vmem:[#allocation4 + $0x48] sm:$0xff] %v12026
          %12043 = vst [vmem:[#allocation4 + $0x50] sm:$0xff] %v12027
          %12044 = vst [vmem:[#allocation4 + $0x58] sm:$0xff] %v12028
          %12045 = vst [vmem:[#allocation4 + $0x60] sm:$0xff] %v12029
          %12046 = vst [vmem:[#allocation4 + $0x68] sm:$0xff] %v12030
          %12047 = vst [vmem:[#allocation4 + $0x70] sm:$0xff] %v12031
          %12048 = vst [vmem:[#allocation4 + $0x78] sm:$0xff] %v12032
        $region52: #{llama_forward.1} parent=43 // pred_fallthru
          _
        // Predicated region
        $region53: #{llama_forward.1} parent=43 // pred_check
          %p12049 = pneg %p172
        $region54: #{llama_forward.1} parent=43 // pred_check_branch
          %12051 = sbr.rel (%p12049) target = $region56
        $region55: #{llama_forward.1} parent=43 // pred_region
          %12053 = vsyncadd [#allocation5], 0
          %s12054 = sshll.u32 [#allocation4], 4
          %s12055 = int_to_ptr.vmem [resolvable:$true] %s12054
          %s12056 = sshll.u32 %s6, 4
          %s12057 = int_to_ptr.hbm [resolvable:$true] %s12056
          %12062 = dma.vmem_to_hbm [thread:$0]  %s12055, 2048, %s12057, [#allocation5], 128, 128, 8
        $region56: #{llama_forward.1} parent=43 // pred_fallthru
          _
        // Predicated region
        $region57: #{llama_forward.1} parent=43 // pred_check
          %p12063 = pneg %p172
        $region58: #{llama_forward.1} parent=43 // pred_check_branch
          %12065 = sbr.rel (%p12063) target = $region60
        $region59: #{llama_forward.1} parent=43 // pred_region
          %12067 = dma.done [#allocation5], 2048
        $region60: #{llama_forward.1} parent=43 // pred_fallthru
          _
      $region44: #{llama_forward.1} parent=5 // pred_fallthru
        _
      %p12068 = scmp.le.s32.totalorder 2, %s13
      // Predicated region
      $region61: #{llama_forward.1} parent=5 // pred_check
        %p12069 = pneg %p12068
      $region62: #{llama_forward.1} parent=5 // pred_check_branch
        %12071 = sbr.rel (%p12069) target = $region64
      $region63: #{llama_forward.1} parent=5 // pred_region
        %s12072 = ssub.s32 %s13, 2
      $region64: #{llama_forward.1} parent=5 // pred_fallthru
        _
    $region6: #{llama_forward.1} parent=1 // loop_footer
      %s17 = sadd.s32 1, %s13
    $region7: #{llama_forward.1} parent=1 // loop_footer_branch
      %12 = sbr.rel target = $region3
    $region8: #{llama_forward.1} parent=1 // loop_exit
      _
    %12073 = vsyncpa [#allocation5], 1
    %s12074 = scalar_lea.sflag [#allocation5], 1
    %12075 = vsyncpa %s12074, 1

</llo_original>
